<compile_context>
chip_gen: v5e
topology: v5e:2x2
jax: 0.10.0
libtpu: 0.0.40
codegen_flags: <defaults>
</compile_context>

<pallas_src>
import functools

import jax
import jax.numpy as jnp
from jax.experimental import pallas as pl
from jax.experimental.pallas import tpu as pltpu


# -----------------------------------------------------------------------------
# Fused Pallas kernel
# -----------------------------------------------------------------------------
def _wdsr_kernel(x_ref, mask_ref,
                 head_w_ref, head_b_ref,
                 w1s_ref, b1s_ref, w2s_ref, b2s_ref,
                 tail_w_ref, tail_b_ref,
                 skip_w_ref, skip_b_ref,
                 mean_ref,
                 o_ref,
                 *, Wp4, res_scale):
    # x_ref:      (1, 3, P) f32   normalized input, 2-px zero pad, flattened
    # mask_ref:   (1, P)    f32   1.0 on the central HxW pixels, else 0.0
    # head_w_ref: (9, 64, 3) f32      head_b_ref: (64, 1) f32
    # w1s_ref:    (n_res, 72, 64) bf16  b1s_ref: (n_res, 8, 1) f32
    # w2s_ref:    (n_res, 64, 72) bf16  b2s_ref: (n_res, 64, 1) f32
    # tail_w_ref: (9, 48, 64) bf16     tail_b_ref: (48, 1) f32
    # skip_w_ref: (25, 48, 3) f32      skip_b_ref: (48, 1) f32
    # mean_ref:   (48, 1) f32   (per pre-shuffle channel mean)
    # o_ref:      (1, 48, P) f32
    P = x_ref.shape[-1]
    n_feats = head_w_ref.shape[1]
    block_feats = b1s_ref.shape[1]
    out_feats = skip_w_ref.shape[1]
    n_res = w1s_ref.shape[0]

    x = x_ref[0]                      # (3, P) f32
    mask = mask_ref[...]              # (1, P) f32

    offs3 = tuple(dh * Wp4 + dw for dh in (-1, 0, 1) for dw in (-1, 0, 1))
    offs5 = tuple(dh * Wp4 + dw for dh in (-2, -1, 0, 1, 2)
                  for dw in (-2, -1, 0, 1, 2))

    def shifted(v, off):
        # shifted[..., p] == v[..., p + off].  Central output pixels never
        # read wrapped lanes, so a plain static lane rotation is exact.
        if off == 0:
            return v
        return pltpu.roll(v, shift=(-off) % P, axis=1)

    # Shifted copies of the tiny (3, P) input, shared by skip and head convs.
    xs = {off: shifted(x, off) for off in offs5}

    # ---- skip branch: 5x5 conv (3 -> 48), 25 per-tap (48,3)@(3,P) dots ----
    s = jnp.zeros((out_feats, P), jnp.float32)
    for t, off in enumerate(offs5):
        s = s + jnp.dot(skip_w_ref[t], xs[off],
                        preferred_element_type=jnp.float32)
    s = s + skip_b_ref[...]

    # ---- head: 3x3 conv (3 -> 64), 9 per-tap (64,3)@(3,P) dots ----
    h = jnp.zeros((n_feats, P), jnp.float32)
    for t, off in enumerate(offs3):
        h = h + jnp.dot(head_w_ref[t], xs[off],
                        preferred_element_type=jnp.float32)
    h = (h + head_b_ref[...]) * mask          # zero the halo ring for the body

    # ---- body: n_res residual blocks, weights indexed dynamically ----
    def block(i, h):
        h_bf = h.astype(jnp.bfloat16)
        # conv1 (64->8): one (72,64)@(64,P) matmul; taps realigned by nine
        # cheap (8,P) lane rolls on the XLU (no im2col scatter).
        p1 = jnp.dot(w1s_ref[i], h_bf, preferred_element_type=jnp.float32)
        m = jnp.zeros((block_feats, P), jnp.float32)
        for t, off in enumerate(offs3):
            m = m + shifted(p1[t * block_feats:(t + 1) * block_feats], off)
        m = jnp.maximum(m + b1s_ref[i], 0.0) * mask
        # conv2 (8->64): stack the 9 rolled taps (sublane-aligned 8-row
        # pieces) into a (72,P) operand, then one (64,72)@(72,P) matmul.
        mstack = jnp.concatenate([shifted(m, off) for off in offs3],
                                 axis=0).astype(jnp.bfloat16)
        r = jnp.dot(w2s_ref[i], mstack, preferred_element_type=jnp.float32)
        # residual update in f32; re-zero the halo for the next conv.
        return (h + res_scale * (r + b2s_ref[i])) * mask

    h = jax.lax.fori_loop(0, n_res, block, h)

    # ---- tail: 3x3 conv (64 -> 48), 9 per-tap (48,64)@(64,P) dots ----
    h_bf = h.astype(jnp.bfloat16)
    t_acc = jnp.zeros((out_feats, P), jnp.float32)
    for t, off in enumerate(offs3):
        c = jnp.dot(tail_w_ref[t], h_bf, preferred_element_type=jnp.float32)
        t_acc = t_acc + shifted(c, off)
    t_acc = t_acc + tail_b_ref[...]

    # ---- fused epilogue: skip add + de-normalization; lane-dense store ----
    o_ref[0] = ((t_acc + s) * 127.5 + mean_ref[...]).astype(o_ref.dtype)


# -----------------------------------------------------------------------------
# Plain-JAX glue: padding/flattening, weight re-layout, pixel shuffle, init
# -----------------------------------------------------------------------------
def _xavier_conv(key, kh, kw, cin, cout):
    # xavier_normal with gain = calculate_gain('relu') = sqrt(2)
    fan_in, fan_out = cin * kh * kw, cout * kh * kw
    std = jnp.sqrt(2.0) * jnp.sqrt(2.0 / (fan_in + fan_out))
    return std * jax.random.normal(key, (kh, kw, cin, cout), jnp.float32)


def init_params(key, *, scale=4, n_res=8, n_feats=64, block_feats=8,
                n_colors=3, kernel_size=3,
                mean=(99.00332925, 124.7647323, 128.69159715)):
    out_feats = scale * scale * n_colors
    params = {"mean": jnp.asarray(mean, jnp.float32)}
    keys = jax.random.split(key, 4 + 2 * n_res)
    ki = iter(range(len(keys)))

    def bias(k, n):
        return 0.0001 + 0.01 * jax.random.normal(k, (n,), jnp.float32)

    k = keys[next(ki)]
    params["head_w"] = _xavier_conv(k, 3, 3, n_colors, n_feats)
    params["head_b"] = bias(jax.random.fold_in(k, 1), n_feats)

    for i in range(n_res):
        k1 = keys[next(ki)]
        params[f"b{i}_w1"] = _xavier_conv(k1, kernel_size, kernel_size,
                                          n_feats, block_feats)
        params[f"b{i}_b1"] = bias(jax.random.fold_in(k1, 1), block_feats)
        k2 = keys[next(ki)]
        params[f"b{i}_w2"] = _xavier_conv(k2, kernel_size, kernel_size,
                                          block_feats, n_feats)
        params[f"b{i}_b2"] = bias(jax.random.fold_in(k2, 1), n_feats)

    k = keys[next(ki)]
    params["tail_w"] = _xavier_conv(k, 3, 3, n_feats, out_feats)
    params["tail_b"] = bias(jax.random.fold_in(k, 1), out_feats)

    k = keys[next(ki)]
    params["skip_w"] = _xavier_conv(k, 5, 5, n_colors, out_feats)
    params["skip_b"] = bias(jax.random.fold_in(k, 1), out_feats)
    return params


def model_forward(x_nchw, params, *, scale=4, n_res=8, n_feats=64,
                  block_feats=8, res_scale=1.0):
    mean = params["mean"]                       # (3,)
    N, C, H, W = x_nchw.shape
    out_feats = scale * scale * C
    Wp4 = W + 4
    P_real = (H + 4) * Wp4
    P = ((P_real + 127) // 128) * 128           # lane-dense padded spatial

    # Normalize + 2-px zero pad once; flatten padded spatial onto the lane axis.
    xn = (x_nchw - mean[None, :, None, None]) / 127.5           # (N,3,H,W)
    xp = jnp.pad(xn, ((0, 0), (0, 0), (2, 2), (2, 2)))          # (N,3,H+4,W+4)
    x_pad = jnp.pad(xp.reshape(N, C, P_real),
                    ((0, 0), (0, 0), (0, P - P_real)))          # (N,3,P) f32

    # Interior mask on the padded/flattened grid (1 on the central HxW pixels).
    idx = jnp.arange(P)
    yy, xx = idx // Wp4, idx % Wp4
    mask = (((yy >= 2) & (yy < H + 2) & (xx >= 2) & (xx < W + 2))
            .astype(jnp.float32).reshape(1, P))

    # Re-layout weights from (kh,kw,cin,cout) to per-tap (Cout,Cin) operands.
    bf16 = jnp.bfloat16
    head_wt = params["head_w"].transpose(0, 1, 3, 2).reshape(9, n_feats, C)
    head_b = params["head_b"].reshape(n_feats, 1)
    skip_wt = params["skip_w"].transpose(0, 1, 3, 2).reshape(25, out_feats, C)
    skip_b = params["skip_b"].reshape(out_feats, 1)
    w1s = jnp.stack([params[f"b{i}_w1"].transpose(0, 1, 3, 2)
                     .reshape(9 * block_feats, n_feats)
                     for i in range(n_res)]).astype(bf16)       # (n_res,72,64)
    b1s = jnp.stack([params[f"b{i}_b1"].reshape(block_feats, 1)
                     for i in range(n_res)])                    # (n_res,8,1)
    w2s = jnp.stack([params[f"b{i}_w2"].transpose(3, 0, 1, 2)
                     .reshape(n_feats, 9 * block_feats)
                     for i in range(n_res)]).astype(bf16)       # (n_res,64,72)
    b2s = jnp.stack([params[f"b{i}_b2"].reshape(n_feats, 1)
                     for i in range(n_res)])                    # (n_res,64,1)
    tail_wt = (params["tail_w"].transpose(0, 1, 3, 2)
               .reshape(9, out_feats, n_feats).astype(bf16))    # (9,48,64)
    tail_b = params["tail_b"].reshape(out_feats, 1)
    # Pre-shuffle channel c*r*r + i*r + j belongs to color c -> repeat mean r*r.
    mean48 = jnp.repeat(mean, scale * scale).reshape(out_feats, 1)

    kernel = functools.partial(_wdsr_kernel, Wp4=Wp4, res_scale=res_scale)

    c2 = lambda n: (0, 0)
    c3 = lambda n: (0, 0, 0)

    u = pl.pallas_call(
        kernel,
        out_shape=jax.ShapeDtypeStruct((N, out_feats, P), jnp.float32),
        grid=(N,),
        in_specs=[
            pl.BlockSpec((1, C, P), lambda n: (n, 0, 0)),   # x_pad
            pl.BlockSpec((1, P), c2),                       # mask
            pl.BlockSpec(head_wt.shape, c3),
            pl.BlockSpec(head_b.shape, c2),
            pl.BlockSpec(w1s.shape, c3),
            pl.BlockSpec(b1s.shape, c3),
            pl.BlockSpec(w2s.shape, c3),
            pl.BlockSpec(b2s.shape, c3),
            pl.BlockSpec(tail_wt.shape, c3),
            pl.BlockSpec(tail_b.shape, c2),
            pl.BlockSpec(skip_wt.shape, c3),
            pl.BlockSpec(skip_b.shape, c2),
            pl.BlockSpec(mean48.shape, c2),
        ],
        out_specs=pl.BlockSpec((1, out_feats, P), lambda n: (n, 0, 0)),
        compiler_params=pltpu.CompilerParams(
            dimension_semantics=("parallel",),
            vmem_limit_bytes=64 * 1024 * 1024),
    )(x_pad, mask, head_wt, head_b, w1s, b1s, w2s, b2s,
      tail_wt, tail_b, skip_wt, skip_b, mean48)

    # Crop the padded/flattened output back to (N, 48, H, W), then PixelShuffle
    # (both are pure index permutations, left to XLA).
    u = u[:, :, :P_real].reshape(N, out_feats, H + 4, Wp4)[:, :, 2:2 + H,
                                                           2:2 + W]
    r = scale
    u = u.reshape(N, C, r, r, H, W).transpose(0, 1, 4, 2, 5, 3)
    return u.reshape(N, C, H * r, W * r)        # NCHW, like the PyTorch module


if __name__ == "__main__":
    key = jax.random.PRNGKey(0)
    pkey, xkey = jax.random.split(key)

    # Module hyperparameters (defaults), small spatial size.
    B, C, H, W = 2, 3, 8, 8
    params = init_params(pkey)

    x = 255.0 * jax.random.uniform(xkey, (B, C, H, W), jnp.float32)

    fwd = jax.jit(functools.partial(model_forward, scale=4, n_res=8,
                                    res_scale=1.0))
    y = fwd(x, params)
    jax.block_until_ready(y)
    assert y.shape == (B, C, H * 4, W * 4), y.shape
    print("KERNEL_OK")
</pallas_src>

<mosaic_0001>
module attributes {stable_mosaic.version = 11 : i64} {
  func.func @_wdsr_kernel(%arg0: i32, %arg1: memref<1x3x256xf32, #tpu.memory_space<vmem>>, %arg2: memref<1x256xf32, #tpu.memory_space<vmem>>, %arg3: memref<9x64x3xf32, #tpu.memory_space<vmem>>, %arg4: memref<64x1xf32, #tpu.memory_space<vmem>>, %arg5: memref<8x72x64xbf16, #tpu.memory_space<vmem>>, %arg6: memref<8x8x1xf32, #tpu.memory_space<vmem>>, %arg7: memref<8x64x72xbf16, #tpu.memory_space<vmem>>, %arg8: memref<8x64x1xf32, #tpu.memory_space<vmem>>, %arg9: memref<9x48x64xbf16, #tpu.memory_space<vmem>>, %arg10: memref<48x1xf32, #tpu.memory_space<vmem>>, %arg11: memref<25x48x3xf32, #tpu.memory_space<vmem>>, %arg12: memref<48x1xf32, #tpu.memory_space<vmem>>, %arg13: memref<48x1xf32, #tpu.memory_space<vmem>>, %arg14: memref<1x48x256xf32, #tpu.memory_space<vmem>>) attributes {dimension_semantics = [#tpu.dimension_semantics<parallel>], iteration_bounds = array<i64: 2>, scalar_prefetch = 0 : i64, scratch_operands = 0 : i64, tpu.core_type = #tpu.core_type<tc>, window_params = [{transform_indices = @transform_0, window_bounds = array<i64: 1, 3, 256>}, {pipeline_mode = #tpu.pipeline_mode<synchronous>, transform_indices = @transform_1, window_bounds = array<i64: 1, 256>}, {pipeline_mode = #tpu.pipeline_mode<synchronous>, transform_indices = @transform_2, window_bounds = array<i64: 9, 64, 3>}, {pipeline_mode = #tpu.pipeline_mode<synchronous>, transform_indices = @transform_3, window_bounds = array<i64: 64, 1>}, {pipeline_mode = #tpu.pipeline_mode<synchronous>, transform_indices = @transform_4, window_bounds = array<i64: 8, 72, 64>}, {pipeline_mode = #tpu.pipeline_mode<synchronous>, transform_indices = @transform_5, window_bounds = array<i64: 8, 8, 1>}, {pipeline_mode = #tpu.pipeline_mode<synchronous>, transform_indices = @transform_6, window_bounds = array<i64: 8, 64, 72>}, {pipeline_mode = #tpu.pipeline_mode<synchronous>, transform_indices = @transform_7, window_bounds = array<i64: 8, 64, 1>}, {pipeline_mode = #tpu.pipeline_mode<synchronous>, transform_indices = @transform_8, window_bounds = array<i64: 9, 48, 64>}, {pipeline_mode = #tpu.pipeline_mode<synchronous>, transform_indices = @transform_9, window_bounds = array<i64: 48, 1>}, {pipeline_mode = #tpu.pipeline_mode<synchronous>, transform_indices = @transform_10, window_bounds = array<i64: 25, 48, 3>}, {pipeline_mode = #tpu.pipeline_mode<synchronous>, transform_indices = @transform_11, window_bounds = array<i64: 48, 1>}, {pipeline_mode = #tpu.pipeline_mode<synchronous>, transform_indices = @transform_12, window_bounds = array<i64: 48, 1>}, {transform_indices = @transform_13, window_bounds = array<i64: 1, 48, 256>}]} {
    %c0 = arith.constant 0 : index
    %c0_0 = arith.constant 0 : index
    %c0_1 = arith.constant 0 : index
    %0 = vector.load %arg1[%c0, %c0_0, %c0_1] : memref<1x3x256xf32, #tpu.memory_space<vmem>>, vector<1x3x256xf32>
    %1 = vector.shape_cast %0 : vector<1x3x256xf32> to vector<3x256xf32>
    %c0_2 = arith.constant 0 : index
    %c0_3 = arith.constant 0 : index
    %2 = vector.load %arg2[%c0_2, %c0_3] : memref<1x256xf32, #tpu.memory_space<vmem>>, vector<1x256xf32>
    %c26_i32 = arith.constant 26 : i32
    %3 = tpu.dynamic_rotate %1 by %c26_i32 dim 1 : vector<3x256xf32>, i32 -> vector<3x256xf32>
    %c25_i32 = arith.constant 25 : i32
    %4 = tpu.dynamic_rotate %1 by %c25_i32 dim 1 : vector<3x256xf32>, i32 -> vector<3x256xf32>
    %c24_i32 = arith.constant 24 : i32
    %5 = tpu.dynamic_rotate %1 by %c24_i32 dim 1 : vector<3x256xf32>, i32 -> vector<3x256xf32>
    %c23_i32 = arith.constant 23 : i32
    %6 = tpu.dynamic_rotate %1 by %c23_i32 dim 1 : vector<3x256xf32>, i32 -> vector<3x256xf32>
    %c22_i32 = arith.constant 22 : i32
    %7 = tpu.dynamic_rotate %1 by %c22_i32 dim 1 : vector<3x256xf32>, i32 -> vector<3x256xf32>
    %c14_i32 = arith.constant 14 : i32
    %8 = tpu.dynamic_rotate %1 by %c14_i32 dim 1 : vector<3x256xf32>, i32 -> vector<3x256xf32>
    %c13_i32 = arith.constant 13 : i32
    %9 = tpu.dynamic_rotate %1 by %c13_i32 dim 1 : vector<3x256xf32>, i32 -> vector<3x256xf32>
    %c12_i32 = arith.constant 12 : i32
    %10 = tpu.dynamic_rotate %1 by %c12_i32 dim 1 : vector<3x256xf32>, i32 -> vector<3x256xf32>
    %c11_i32 = arith.constant 11 : i32
    %11 = tpu.dynamic_rotate %1 by %c11_i32 dim 1 : vector<3x256xf32>, i32 -> vector<3x256xf32>
    %c10_i32 = arith.constant 10 : i32
    %12 = tpu.dynamic_rotate %1 by %c10_i32 dim 1 : vector<3x256xf32>, i32 -> vector<3x256xf32>
    %c2_i32 = arith.constant 2 : i32
    %13 = tpu.dynamic_rotate %1 by %c2_i32 dim 1 : vector<3x256xf32>, i32 -> vector<3x256xf32>
    %c1_i32 = arith.constant 1 : i32
    %14 = tpu.dynamic_rotate %1 by %c1_i32 dim 1 : vector<3x256xf32>, i32 -> vector<3x256xf32>
    %c255_i32 = arith.constant 255 : i32
    %15 = tpu.dynamic_rotate %1 by %c255_i32 dim 1 : vector<3x256xf32>, i32 -> vector<3x256xf32>
    %c254_i32 = arith.constant 254 : i32
    %16 = tpu.dynamic_rotate %1 by %c254_i32 dim 1 : vector<3x256xf32>, i32 -> vector<3x256xf32>
    %c246_i32 = arith.constant 246 : i32
    %17 = tpu.dynamic_rotate %1 by %c246_i32 dim 1 : vector<3x256xf32>, i32 -> vector<3x256xf32>
    %c245_i32 = arith.constant 245 : i32
    %18 = tpu.dynamic_rotate %1 by %c245_i32 dim 1 : vector<3x256xf32>, i32 -> vector<3x256xf32>
    %c244_i32 = arith.constant 244 : i32
    %19 = tpu.dynamic_rotate %1 by %c244_i32 dim 1 : vector<3x256xf32>, i32 -> vector<3x256xf32>
    %c243_i32 = arith.constant 243 : i32
    %20 = tpu.dynamic_rotate %1 by %c243_i32 dim 1 : vector<3x256xf32>, i32 -> vector<3x256xf32>
    %c242_i32 = arith.constant 242 : i32
    %21 = tpu.dynamic_rotate %1 by %c242_i32 dim 1 : vector<3x256xf32>, i32 -> vector<3x256xf32>
    %c234_i32 = arith.constant 234 : i32
    %22 = tpu.dynamic_rotate %1 by %c234_i32 dim 1 : vector<3x256xf32>, i32 -> vector<3x256xf32>
    %c233_i32 = arith.constant 233 : i32
    %23 = tpu.dynamic_rotate %1 by %c233_i32 dim 1 : vector<3x256xf32>, i32 -> vector<3x256xf32>
    %c232_i32 = arith.constant 232 : i32
    %24 = tpu.dynamic_rotate %1 by %c232_i32 dim 1 : vector<3x256xf32>, i32 -> vector<3x256xf32>
    %c231_i32 = arith.constant 231 : i32
    %25 = tpu.dynamic_rotate %1 by %c231_i32 dim 1 : vector<3x256xf32>, i32 -> vector<3x256xf32>
    %c230_i32 = arith.constant 230 : i32
    %26 = tpu.dynamic_rotate %1 by %c230_i32 dim 1 : vector<3x256xf32>, i32 -> vector<3x256xf32>
    %cst = arith.constant 0.000000e+00 : f32
    %27 = vector.broadcast %cst : f32 to vector<48x256xf32>
    %c0_4 = arith.constant 0 : index
    %c0_5 = arith.constant 0 : index
    %c0_6 = arith.constant 0 : index
    %28 = vector.load %arg11[%c0_4, %c0_5, %c0_6] : memref<25x48x3xf32, #tpu.memory_space<vmem>>, vector<1x48x3xf32>
    %29 = vector.shape_cast %28 : vector<1x48x3xf32> to vector<48x3xf32>
    %cst_7 = arith.constant dense<0.000000e+00> : vector<48x256xf32>
    %30 = tpu.matmul %29, %3, %cst_7 {dimension_numbers = #tpu.dot_dimension_numbers<[1], [0], [0], [1], [0, 0, 1, 1], [], []>} : vector<48x3xf32>, vector<3x256xf32>, vector<48x256xf32> -> vector<48x256xf32>
    %31 = arith.addf %27, %30 : vector<48x256xf32>
    %c1 = arith.constant 1 : index
    %c0_8 = arith.constant 0 : index
    %c0_9 = arith.constant 0 : index
    %32 = vector.load %arg11[%c1, %c0_8, %c0_9] : memref<25x48x3xf32, #tpu.memory_space<vmem>>, vector<1x48x3xf32>
    %33 = vector.shape_cast %32 : vector<1x48x3xf32> to vector<48x3xf32>
    %cst_10 = arith.constant dense<0.000000e+00> : vector<48x256xf32>
    %34 = tpu.matmul %33, %4, %cst_10 {dimension_numbers = #tpu.dot_dimension_numbers<[1], [0], [0], [1], [0, 0, 1, 1], [], []>} : vector<48x3xf32>, vector<3x256xf32>, vector<48x256xf32> -> vector<48x256xf32>
    %35 = arith.addf %31, %34 : vector<48x256xf32>
    %c2 = arith.constant 2 : index
    %c0_11 = arith.constant 0 : index
    %c0_12 = arith.constant 0 : index
    %36 = vector.load %arg11[%c2, %c0_11, %c0_12] : memref<25x48x3xf32, #tpu.memory_space<vmem>>, vector<1x48x3xf32>
    %37 = vector.shape_cast %36 : vector<1x48x3xf32> to vector<48x3xf32>
    %cst_13 = arith.constant dense<0.000000e+00> : vector<48x256xf32>
    %38 = tpu.matmul %37, %5, %cst_13 {dimension_numbers = #tpu.dot_dimension_numbers<[1], [0], [0], [1], [0, 0, 1, 1], [], []>} : vector<48x3xf32>, vector<3x256xf32>, vector<48x256xf32> -> vector<48x256xf32>
    %39 = arith.addf %35, %38 : vector<48x256xf32>
    %c3 = arith.constant 3 : index
    %c0_14 = arith.constant 0 : index
    %c0_15 = arith.constant 0 : index
    %40 = vector.load %arg11[%c3, %c0_14, %c0_15] : memref<25x48x3xf32, #tpu.memory_space<vmem>>, vector<1x48x3xf32>
    %41 = vector.shape_cast %40 : vector<1x48x3xf32> to vector<48x3xf32>
    %cst_16 = arith.constant dense<0.000000e+00> : vector<48x256xf32>
    %42 = tpu.matmul %41, %6, %cst_16 {dimension_numbers = #tpu.dot_dimension_numbers<[1], [0], [0], [1], [0, 0, 1, 1], [], []>} : vector<48x3xf32>, vector<3x256xf32>, vector<48x256xf32> -> vector<48x256xf32>
    %43 = arith.addf %39, %42 : vector<48x256xf32>
    %c4 = arith.constant 4 : index
    %c0_17 = arith.constant 0 : index
    %c0_18 = arith.constant 0 : index
    %44 = vector.load %arg11[%c4, %c0_17, %c0_18] : memref<25x48x3xf32, #tpu.memory_space<vmem>>, vector<1x48x3xf32>
    %45 = vector.shape_cast %44 : vector<1x48x3xf32> to vector<48x3xf32>
    %cst_19 = arith.constant dense<0.000000e+00> : vector<48x256xf32>
    %46 = tpu.matmul %45, %7, %cst_19 {dimension_numbers = #tpu.dot_dimension_numbers<[1], [0], [0], [1], [0, 0, 1, 1], [], []>} : vector<48x3xf32>, vector<3x256xf32>, vector<48x256xf32> -> vector<48x256xf32>
    %47 = arith.addf %43, %46 : vector<48x256xf32>
    %c5 = arith.constant 5 : index
    %c0_20 = arith.constant 0 : index
    %c0_21 = arith.constant 0 : index
    %48 = vector.load %arg11[%c5, %c0_20, %c0_21] : memref<25x48x3xf32, #tpu.memory_space<vmem>>, vector<1x48x3xf32>
    %49 = vector.shape_cast %48 : vector<1x48x3xf32> to vector<48x3xf32>
    %cst_22 = arith.constant dense<0.000000e+00> : vector<48x256xf32>
    %50 = tpu.matmul %49, %8, %cst_22 {dimension_numbers = #tpu.dot_dimension_numbers<[1], [0], [0], [1], [0, 0, 1, 1], [], []>} : vector<48x3xf32>, vector<3x256xf32>, vector<48x256xf32> -> vector<48x256xf32>
    %51 = arith.addf %47, %50 : vector<48x256xf32>
    %c6 = arith.constant 6 : index
    %c0_23 = arith.constant 0 : index
    %c0_24 = arith.constant 0 : index
    %52 = vector.load %arg11[%c6, %c0_23, %c0_24] : memref<25x48x3xf32, #tpu.memory_space<vmem>>, vector<1x48x3xf32>
    %53 = vector.shape_cast %52 : vector<1x48x3xf32> to vector<48x3xf32>
    %cst_25 = arith.constant dense<0.000000e+00> : vector<48x256xf32>
    %54 = tpu.matmul %53, %9, %cst_25 {dimension_numbers = #tpu.dot_dimension_numbers<[1], [0], [0], [1], [0, 0, 1, 1], [], []>} : vector<48x3xf32>, vector<3x256xf32>, vector<48x256xf32> -> vector<48x256xf32>
    %55 = arith.addf %51, %54 : vector<48x256xf32>
    %c7 = arith.constant 7 : index
    %c0_26 = arith.constant 0 : index
    %c0_27 = arith.constant 0 : index
    %56 = vector.load %arg11[%c7, %c0_26, %c0_27] : memref<25x48x3xf32, #tpu.memory_space<vmem>>, vector<1x48x3xf32>
    %57 = vector.shape_cast %56 : vector<1x48x3xf32> to vector<48x3xf32>
    %cst_28 = arith.constant dense<0.000000e+00> : vector<48x256xf32>
    %58 = tpu.matmul %57, %10, %cst_28 {dimension_numbers = #tpu.dot_dimension_numbers<[1], [0], [0], [1], [0, 0, 1, 1], [], []>} : vector<48x3xf32>, vector<3x256xf32>, vector<48x256xf32> -> vector<48x256xf32>
    %59 = arith.addf %55, %58 : vector<48x256xf32>
    %c8 = arith.constant 8 : index
    %c0_29 = arith.constant 0 : index
    %c0_30 = arith.constant 0 : index
    %60 = vector.load %arg11[%c8, %c0_29, %c0_30] : memref<25x48x3xf32, #tpu.memory_space<vmem>>, vector<1x48x3xf32>
    %61 = vector.shape_cast %60 : vector<1x48x3xf32> to vector<48x3xf32>
    %cst_31 = arith.constant dense<0.000000e+00> : vector<48x256xf32>
    %62 = tpu.matmul %61, %11, %cst_31 {dimension_numbers = #tpu.dot_dimension_numbers<[1], [0], [0], [1], [0, 0, 1, 1], [], []>} : vector<48x3xf32>, vector<3x256xf32>, vector<48x256xf32> -> vector<48x256xf32>
    %63 = arith.addf %59, %62 : vector<48x256xf32>
    %c9 = arith.constant 9 : index
    %c0_32 = arith.constant 0 : index
    %c0_33 = arith.constant 0 : index
    %64 = vector.load %arg11[%c9, %c0_32, %c0_33] : memref<25x48x3xf32, #tpu.memory_space<vmem>>, vector<1x48x3xf32>
    %65 = vector.shape_cast %64 : vector<1x48x3xf32> to vector<48x3xf32>
    %cst_34 = arith.constant dense<0.000000e+00> : vector<48x256xf32>
    %66 = tpu.matmul %65, %12, %cst_34 {dimension_numbers = #tpu.dot_dimension_numbers<[1], [0], [0], [1], [0, 0, 1, 1], [], []>} : vector<48x3xf32>, vector<3x256xf32>, vector<48x256xf32> -> vector<48x256xf32>
    %67 = arith.addf %63, %66 : vector<48x256xf32>
    %c10 = arith.constant 10 : index
    %c0_35 = arith.constant 0 : index
    %c0_36 = arith.constant 0 : index
    %68 = vector.load %arg11[%c10, %c0_35, %c0_36] : memref<25x48x3xf32, #tpu.memory_space<vmem>>, vector<1x48x3xf32>
    %69 = vector.shape_cast %68 : vector<1x48x3xf32> to vector<48x3xf32>
    %cst_37 = arith.constant dense<0.000000e+00> : vector<48x256xf32>
    %70 = tpu.matmul %69, %13, %cst_37 {dimension_numbers = #tpu.dot_dimension_numbers<[1], [0], [0], [1], [0, 0, 1, 1], [], []>} : vector<48x3xf32>, vector<3x256xf32>, vector<48x256xf32> -> vector<48x256xf32>
    %71 = arith.addf %67, %70 : vector<48x256xf32>
    %c11 = arith.constant 11 : index
    %c0_38 = arith.constant 0 : index
    %c0_39 = arith.constant 0 : index
    %72 = vector.load %arg11[%c11, %c0_38, %c0_39] : memref<25x48x3xf32, #tpu.memory_space<vmem>>, vector<1x48x3xf32>
    %73 = vector.shape_cast %72 : vector<1x48x3xf32> to vector<48x3xf32>
    %cst_40 = arith.constant dense<0.000000e+00> : vector<48x256xf32>
    %74 = tpu.matmul %73, %14, %cst_40 {dimension_numbers = #tpu.dot_dimension_numbers<[1], [0], [0], [1], [0, 0, 1, 1], [], []>} : vector<48x3xf32>, vector<3x256xf32>, vector<48x256xf32> -> vector<48x256xf32>
    %75 = arith.addf %71, %74 : vector<48x256xf32>
    %c12 = arith.constant 12 : index
    %c0_41 = arith.constant 0 : index
    %c0_42 = arith.constant 0 : index
    %76 = vector.load %arg11[%c12, %c0_41, %c0_42] : memref<25x48x3xf32, #tpu.memory_space<vmem>>, vector<1x48x3xf32>
    %77 = vector.shape_cast %76 : vector<1x48x3xf32> to vector<48x3xf32>
    %cst_43 = arith.constant dense<0.000000e+00> : vector<48x256xf32>
    %78 = tpu.matmul %77, %1, %cst_43 {dimension_numbers = #tpu.dot_dimension_numbers<[1], [0], [0], [1], [0, 0, 1, 1], [], []>} : vector<48x3xf32>, vector<3x256xf32>, vector<48x256xf32> -> vector<48x256xf32>
    %79 = arith.addf %75, %78 : vector<48x256xf32>
    %c13 = arith.constant 13 : index
    %c0_44 = arith.constant 0 : index
    %c0_45 = arith.constant 0 : index
    %80 = vector.load %arg11[%c13, %c0_44, %c0_45] : memref<25x48x3xf32, #tpu.memory_space<vmem>>, vector<1x48x3xf32>
    %81 = vector.shape_cast %80 : vector<1x48x3xf32> to vector<48x3xf32>
    %cst_46 = arith.constant dense<0.000000e+00> : vector<48x256xf32>
    %82 = tpu.matmul %81, %15, %cst_46 {dimension_numbers = #tpu.dot_dimension_numbers<[1], [0], [0], [1], [0, 0, 1, 1], [], []>} : vector<48x3xf32>, vector<3x256xf32>, vector<48x256xf32> -> vector<48x256xf32>
    %83 = arith.addf %79, %82 : vector<48x256xf32>
    %c14 = arith.constant 14 : index
    %c0_47 = arith.constant 0 : index
    %c0_48 = arith.constant 0 : index
    %84 = vector.load %arg11[%c14, %c0_47, %c0_48] : memref<25x48x3xf32, #tpu.memory_space<vmem>>, vector<1x48x3xf32>
    %85 = vector.shape_cast %84 : vector<1x48x3xf32> to vector<48x3xf32>
    %cst_49 = arith.constant dense<0.000000e+00> : vector<48x256xf32>
    %86 = tpu.matmul %85, %16, %cst_49 {dimension_numbers = #tpu.dot_dimension_numbers<[1], [0], [0], [1], [0, 0, 1, 1], [], []>} : vector<48x3xf32>, vector<3x256xf32>, vector<48x256xf32> -> vector<48x256xf32>
    %87 = arith.addf %83, %86 : vector<48x256xf32>
    %c15 = arith.constant 15 : index
    %c0_50 = arith.constant 0 : index
    %c0_51 = arith.constant 0 : index
    %88 = vector.load %arg11[%c15, %c0_50, %c0_51] : memref<25x48x3xf32, #tpu.memory_space<vmem>>, vector<1x48x3xf32>
    %89 = vector.shape_cast %88 : vector<1x48x3xf32> to vector<48x3xf32>
    %cst_52 = arith.constant dense<0.000000e+00> : vector<48x256xf32>
    %90 = tpu.matmul %89, %17, %cst_52 {dimension_numbers = #tpu.dot_dimension_numbers<[1], [0], [0], [1], [0, 0, 1, 1], [], []>} : vector<48x3xf32>, vector<3x256xf32>, vector<48x256xf32> -> vector<48x256xf32>
    %91 = arith.addf %87, %90 : vector<48x256xf32>
    %c16 = arith.constant 16 : index
    %c0_53 = arith.constant 0 : index
    %c0_54 = arith.constant 0 : index
    %92 = vector.load %arg11[%c16, %c0_53, %c0_54] : memref<25x48x3xf32, #tpu.memory_space<vmem>>, vector<1x48x3xf32>
    %93 = vector.shape_cast %92 : vector<1x48x3xf32> to vector<48x3xf32>
    %cst_55 = arith.constant dense<0.000000e+00> : vector<48x256xf32>
    %94 = tpu.matmul %93, %18, %cst_55 {dimension_numbers = #tpu.dot_dimension_numbers<[1], [0], [0], [1], [0, 0, 1, 1], [], []>} : vector<48x3xf32>, vector<3x256xf32>, vector<48x256xf32> -> vector<48x256xf32>
    %95 = arith.addf %91, %94 : vector<48x256xf32>
    %c17 = arith.constant 17 : index
    %c0_56 = arith.constant 0 : index
    %c0_57 = arith.constant 0 : index
    %96 = vector.load %arg11[%c17, %c0_56, %c0_57] : memref<25x48x3xf32, #tpu.memory_space<vmem>>, vector<1x48x3xf32>
    %97 = vector.shape_cast %96 : vector<1x48x3xf32> to vector<48x3xf32>
    %cst_58 = arith.constant dense<0.000000e+00> : vector<48x256xf32>
    %98 = tpu.matmul %97, %19, %cst_58 {dimension_numbers = #tpu.dot_dimension_numbers<[1], [0], [0], [1], [0, 0, 1, 1], [], []>} : vector<48x3xf32>, vector<3x256xf32>, vector<48x256xf32> -> vector<48x256xf32>
    %99 = arith.addf %95, %98 : vector<48x256xf32>
    %c18 = arith.constant 18 : index
    %c0_59 = arith.constant 0 : index
    %c0_60 = arith.constant 0 : index
    %100 = vector.load %arg11[%c18, %c0_59, %c0_60] : memref<25x48x3xf32, #tpu.memory_space<vmem>>, vector<1x48x3xf32>
    %101 = vector.shape_cast %100 : vector<1x48x3xf32> to vector<48x3xf32>
    %cst_61 = arith.constant dense<0.000000e+00> : vector<48x256xf32>
    %102 = tpu.matmul %101, %20, %cst_61 {dimension_numbers = #tpu.dot_dimension_numbers<[1], [0], [0], [1], [0, 0, 1, 1], [], []>} : vector<48x3xf32>, vector<3x256xf32>, vector<48x256xf32> -> vector<48x256xf32>
    %103 = arith.addf %99, %102 : vector<48x256xf32>
    %c19 = arith.constant 19 : index
    %c0_62 = arith.constant 0 : index
    %c0_63 = arith.constant 0 : index
    %104 = vector.load %arg11[%c19, %c0_62, %c0_63] : memref<25x48x3xf32, #tpu.memory_space<vmem>>, vector<1x48x3xf32>
    %105 = vector.shape_cast %104 : vector<1x48x3xf32> to vector<48x3xf32>
    %cst_64 = arith.constant dense<0.000000e+00> : vector<48x256xf32>
    %106 = tpu.matmul %105, %21, %cst_64 {dimension_numbers = #tpu.dot_dimension_numbers<[1], [0], [0], [1], [0, 0, 1, 1], [], []>} : vector<48x3xf32>, vector<3x256xf32>, vector<48x256xf32> -> vector<48x256xf32>
    %107 = arith.addf %103, %106 : vector<48x256xf32>
    %c20 = arith.constant 20 : index
    %c0_65 = arith.constant 0 : index
    %c0_66 = arith.constant 0 : index
    %108 = vector.load %arg11[%c20, %c0_65, %c0_66] : memref<25x48x3xf32, #tpu.memory_space<vmem>>, vector<1x48x3xf32>
    %109 = vector.shape_cast %108 : vector<1x48x3xf32> to vector<48x3xf32>
    %cst_67 = arith.constant dense<0.000000e+00> : vector<48x256xf32>
    %110 = tpu.matmul %109, %22, %cst_67 {dimension_numbers = #tpu.dot_dimension_numbers<[1], [0], [0], [1], [0, 0, 1, 1], [], []>} : vector<48x3xf32>, vector<3x256xf32>, vector<48x256xf32> -> vector<48x256xf32>
    %111 = arith.addf %107, %110 : vector<48x256xf32>
    %c21 = arith.constant 21 : index
    %c0_68 = arith.constant 0 : index
    %c0_69 = arith.constant 0 : index
    %112 = vector.load %arg11[%c21, %c0_68, %c0_69] : memref<25x48x3xf32, #tpu.memory_space<vmem>>, vector<1x48x3xf32>
    %113 = vector.shape_cast %112 : vector<1x48x3xf32> to vector<48x3xf32>
    %cst_70 = arith.constant dense<0.000000e+00> : vector<48x256xf32>
    %114 = tpu.matmul %113, %23, %cst_70 {dimension_numbers = #tpu.dot_dimension_numbers<[1], [0], [0], [1], [0, 0, 1, 1], [], []>} : vector<48x3xf32>, vector<3x256xf32>, vector<48x256xf32> -> vector<48x256xf32>
    %115 = arith.addf %111, %114 : vector<48x256xf32>
    %c22 = arith.constant 22 : index
    %c0_71 = arith.constant 0 : index
    %c0_72 = arith.constant 0 : index
    %116 = vector.load %arg11[%c22, %c0_71, %c0_72] : memref<25x48x3xf32, #tpu.memory_space<vmem>>, vector<1x48x3xf32>
    %117 = vector.shape_cast %116 : vector<1x48x3xf32> to vector<48x3xf32>
    %cst_73 = arith.constant dense<0.000000e+00> : vector<48x256xf32>
    %118 = tpu.matmul %117, %24, %cst_73 {dimension_numbers = #tpu.dot_dimension_numbers<[1], [0], [0], [1], [0, 0, 1, 1], [], []>} : vector<48x3xf32>, vector<3x256xf32>, vector<48x256xf32> -> vector<48x256xf32>
    %119 = arith.addf %115, %118 : vector<48x256xf32>
    %c23 = arith.constant 23 : index
    %c0_74 = arith.constant 0 : index
    %c0_75 = arith.constant 0 : index
    %120 = vector.load %arg11[%c23, %c0_74, %c0_75] : memref<25x48x3xf32, #tpu.memory_space<vmem>>, vector<1x48x3xf32>
    %121 = vector.shape_cast %120 : vector<1x48x3xf32> to vector<48x3xf32>
    %cst_76 = arith.constant dense<0.000000e+00> : vector<48x256xf32>
    %122 = tpu.matmul %121, %25, %cst_76 {dimension_numbers = #tpu.dot_dimension_numbers<[1], [0], [0], [1], [0, 0, 1, 1], [], []>} : vector<48x3xf32>, vector<3x256xf32>, vector<48x256xf32> -> vector<48x256xf32>
    %123 = arith.addf %119, %122 : vector<48x256xf32>
    %c24 = arith.constant 24 : index
    %c0_77 = arith.constant 0 : index
    %c0_78 = arith.constant 0 : index
    %124 = vector.load %arg11[%c24, %c0_77, %c0_78] : memref<25x48x3xf32, #tpu.memory_space<vmem>>, vector<1x48x3xf32>
    %125 = vector.shape_cast %124 : vector<1x48x3xf32> to vector<48x3xf32>
    %cst_79 = arith.constant dense<0.000000e+00> : vector<48x256xf32>
    %126 = tpu.matmul %125, %26, %cst_79 {dimension_numbers = #tpu.dot_dimension_numbers<[1], [0], [0], [1], [0, 0, 1, 1], [], []>} : vector<48x3xf32>, vector<3x256xf32>, vector<48x256xf32> -> vector<48x256xf32>
    %127 = arith.addf %123, %126 : vector<48x256xf32>
    %c0_80 = arith.constant 0 : index
    %c0_81 = arith.constant 0 : index
    %128 = vector.load %arg12[%c0_80, %c0_81] : memref<48x1xf32, #tpu.memory_space<vmem>>, vector<48x1xf32>
    %129 = vector.broadcast %128 : vector<48x1xf32> to vector<48x256xf32>
    %130 = arith.addf %127, %129 : vector<48x256xf32>
    %cst_82 = arith.constant 0.000000e+00 : f32
    %131 = vector.broadcast %cst_82 : f32 to vector<64x256xf32>
    %c0_83 = arith.constant 0 : index
    %c0_84 = arith.constant 0 : index
    %c0_85 = arith.constant 0 : index
    %132 = vector.load %arg3[%c0_83, %c0_84, %c0_85] : memref<9x64x3xf32, #tpu.memory_space<vmem>>, vector<1x64x3xf32>
    %133 = vector.shape_cast %132 : vector<1x64x3xf32> to vector<64x3xf32>
    %cst_86 = arith.constant dense<0.000000e+00> : vector<64x256xf32>
    %134 = tpu.matmul %133, %9, %cst_86 {dimension_numbers = #tpu.dot_dimension_numbers<[1], [0], [0], [1], [0, 0, 1, 1], [], []>} : vector<64x3xf32>, vector<3x256xf32>, vector<64x256xf32> -> vector<64x256xf32>
    %135 = arith.addf %131, %134 : vector<64x256xf32>
    %c1_87 = arith.constant 1 : index
    %c0_88 = arith.constant 0 : index
    %c0_89 = arith.constant 0 : index
    %136 = vector.load %arg3[%c1_87, %c0_88, %c0_89] : memref<9x64x3xf32, #tpu.memory_space<vmem>>, vector<1x64x3xf32>
    %137 = vector.shape_cast %136 : vector<1x64x3xf32> to vector<64x3xf32>
    %cst_90 = arith.constant dense<0.000000e+00> : vector<64x256xf32>
    %138 = tpu.matmul %137, %10, %cst_90 {dimension_numbers = #tpu.dot_dimension_numbers<[1], [0], [0], [1], [0, 0, 1, 1], [], []>} : vector<64x3xf32>, vector<3x256xf32>, vector<64x256xf32> -> vector<64x256xf32>
    %139 = arith.addf %135, %138 : vector<64x256xf32>
    %c2_91 = arith.constant 2 : index
    %c0_92 = arith.constant 0 : index
    %c0_93 = arith.constant 0 : index
    %140 = vector.load %arg3[%c2_91, %c0_92, %c0_93] : memref<9x64x3xf32, #tpu.memory_space<vmem>>, vector<1x64x3xf32>
    %141 = vector.shape_cast %140 : vector<1x64x3xf32> to vector<64x3xf32>
    %cst_94 = arith.constant dense<0.000000e+00> : vector<64x256xf32>
    %142 = tpu.matmul %141, %11, %cst_94 {dimension_numbers = #tpu.dot_dimension_numbers<[1], [0], [0], [1], [0, 0, 1, 1], [], []>} : vector<64x3xf32>, vector<3x256xf32>, vector<64x256xf32> -> vector<64x256xf32>
    %143 = arith.addf %139, %142 : vector<64x256xf32>
    %c3_95 = arith.constant 3 : index
    %c0_96 = arith.constant 0 : index
    %c0_97 = arith.constant 0 : index
    %144 = vector.load %arg3[%c3_95, %c0_96, %c0_97] : memref<9x64x3xf32, #tpu.memory_space<vmem>>, vector<1x64x3xf32>
    %145 = vector.shape_cast %144 : vector<1x64x3xf32> to vector<64x3xf32>
    %cst_98 = arith.constant dense<0.000000e+00> : vector<64x256xf32>
    %146 = tpu.matmul %145, %14, %cst_98 {dimension_numbers = #tpu.dot_dimension_numbers<[1], [0], [0], [1], [0, 0, 1, 1], [], []>} : vector<64x3xf32>, vector<3x256xf32>, vector<64x256xf32> -> vector<64x256xf32>
    %147 = arith.addf %143, %146 : vector<64x256xf32>
    %c4_99 = arith.constant 4 : index
    %c0_100 = arith.constant 0 : index
    %c0_101 = arith.constant 0 : index
    %148 = vector.load %arg3[%c4_99, %c0_100, %c0_101] : memref<9x64x3xf32, #tpu.memory_space<vmem>>, vector<1x64x3xf32>
    %149 = vector.shape_cast %148 : vector<1x64x3xf32> to vector<64x3xf32>
    %cst_102 = arith.constant dense<0.000000e+00> : vector<64x256xf32>
    %150 = tpu.matmul %149, %1, %cst_102 {dimension_numbers = #tpu.dot_dimension_numbers<[1], [0], [0], [1], [0, 0, 1, 1], [], []>} : vector<64x3xf32>, vector<3x256xf32>, vector<64x256xf32> -> vector<64x256xf32>
    %151 = arith.addf %147, %150 : vector<64x256xf32>
    %c5_103 = arith.constant 5 : index
    %c0_104 = arith.constant 0 : index
    %c0_105 = arith.constant 0 : index
    %152 = vector.load %arg3[%c5_103, %c0_104, %c0_105] : memref<9x64x3xf32, #tpu.memory_space<vmem>>, vector<1x64x3xf32>
    %153 = vector.shape_cast %152 : vector<1x64x3xf32> to vector<64x3xf32>
    %cst_106 = arith.constant dense<0.000000e+00> : vector<64x256xf32>
    %154 = tpu.matmul %153, %15, %cst_106 {dimension_numbers = #tpu.dot_dimension_numbers<[1], [0], [0], [1], [0, 0, 1, 1], [], []>} : vector<64x3xf32>, vector<3x256xf32>, vector<64x256xf32> -> vector<64x256xf32>
    %155 = arith.addf %151, %154 : vector<64x256xf32>
    %c6_107 = arith.constant 6 : index
    %c0_108 = arith.constant 0 : index
    %c0_109 = arith.constant 0 : index
    %156 = vector.load %arg3[%c6_107, %c0_108, %c0_109] : memref<9x64x3xf32, #tpu.memory_space<vmem>>, vector<1x64x3xf32>
    %157 = vector.shape_cast %156 : vector<1x64x3xf32> to vector<64x3xf32>
    %cst_110 = arith.constant dense<0.000000e+00> : vector<64x256xf32>
    %158 = tpu.matmul %157, %18, %cst_110 {dimension_numbers = #tpu.dot_dimension_numbers<[1], [0], [0], [1], [0, 0, 1, 1], [], []>} : vector<64x3xf32>, vector<3x256xf32>, vector<64x256xf32> -> vector<64x256xf32>
    %159 = arith.addf %155, %158 : vector<64x256xf32>
    %c7_111 = arith.constant 7 : index
    %c0_112 = arith.constant 0 : index
    %c0_113 = arith.constant 0 : index
    %160 = vector.load %arg3[%c7_111, %c0_112, %c0_113] : memref<9x64x3xf32, #tpu.memory_space<vmem>>, vector<1x64x3xf32>
    %161 = vector.shape_cast %160 : vector<1x64x3xf32> to vector<64x3xf32>
    %cst_114 = arith.constant dense<0.000000e+00> : vector<64x256xf32>
    %162 = tpu.matmul %161, %19, %cst_114 {dimension_numbers = #tpu.dot_dimension_numbers<[1], [0], [0], [1], [0, 0, 1, 1], [], []>} : vector<64x3xf32>, vector<3x256xf32>, vector<64x256xf32> -> vector<64x256xf32>
    %163 = arith.addf %159, %162 : vector<64x256xf32>
    %c8_115 = arith.constant 8 : index
    %c0_116 = arith.constant 0 : index
    %c0_117 = arith.constant 0 : index
    %164 = vector.load %arg3[%c8_115, %c0_116, %c0_117] : memref<9x64x3xf32, #tpu.memory_space<vmem>>, vector<1x64x3xf32>
    %165 = vector.shape_cast %164 : vector<1x64x3xf32> to vector<64x3xf32>
    %cst_118 = arith.constant dense<0.000000e+00> : vector<64x256xf32>
    %166 = tpu.matmul %165, %20, %cst_118 {dimension_numbers = #tpu.dot_dimension_numbers<[1], [0], [0], [1], [0, 0, 1, 1], [], []>} : vector<64x3xf32>, vector<3x256xf32>, vector<64x256xf32> -> vector<64x256xf32>
    %167 = arith.addf %163, %166 : vector<64x256xf32>
    %c0_119 = arith.constant 0 : index
    %c0_120 = arith.constant 0 : index
    %168 = vector.load %arg4[%c0_119, %c0_120] : memref<64x1xf32, #tpu.memory_space<vmem>>, vector<64x1xf32>
    %169 = vector.broadcast %168 : vector<64x1xf32> to vector<64x256xf32>
    %170 = arith.addf %167, %169 : vector<64x256xf32>
    %171 = vector.broadcast %2 : vector<1x256xf32> to vector<64x256xf32>
    %172 = arith.mulf %170, %171 : vector<64x256xf32>
    %c0_i32 = arith.constant 0 : i32
    %c8_i32 = arith.constant 8 : i32
    %173 = arith.addi %c0_i32, %c8_i32 : i32
    %c1_i32_121 = arith.constant 1 : i32
    %174 = scf.for %arg15 = %c0_i32 to %173 step %c1_i32_121 iter_args(%arg16 = %172) -> (vector<64x256xf32>)  : i32 {
      %233 = arith.truncf %arg16 : vector<64x256xf32> to vector<64x256xbf16>
      %234 = arith.index_cast %arg15 : i32 to index
      %c0_176 = arith.constant 0 : index
      %c0_177 = arith.constant 0 : index
      %235 = vector.load %arg5[%234, %c0_176, %c0_177] : memref<8x72x64xbf16, #tpu.memory_space<vmem>>, vector<1x72x64xbf16>
      %236 = vector.shape_cast %235 : vector<1x72x64xbf16> to vector<72x64xbf16>
      %cst_178 = arith.constant dense<0.000000e+00> : vector<72x256xf32>
      %237 = tpu.matmul %236, %233, %cst_178 {dimension_numbers = #tpu.dot_dimension_numbers<[1], [0], [0], [1], [0, 0, 1, 1], [], []>} : vector<72x64xbf16>, vector<64x256xbf16>, vector<72x256xf32> -> vector<72x256xf32>
      %cst_179 = arith.constant 0.000000e+00 : f32
      %238 = vector.broadcast %cst_179 : f32 to vector<8x256xf32>
      %239 = vector.extract_strided_slice %237 {offsets = [0, 0], sizes = [8, 256], strides = [1, 1]} : vector<72x256xf32> to vector<8x256xf32>
      %c13_i32_180 = arith.constant 13 : i32
      %240 = tpu.dynamic_rotate %239 by %c13_i32_180 dim 1 : vector<8x256xf32>, i32 -> vector<8x256xf32>
      %241 = arith.addf %238, %240 : vector<8x256xf32>
      %242 = vector.extract_strided_slice %237 {offsets = [8, 0], sizes = [8, 256], strides = [1, 1]} : vector<72x256xf32> to vector<8x256xf32>
      %c12_i32_181 = arith.constant 12 : i32
      %243 = tpu.dynamic_rotate %242 by %c12_i32_181 dim 1 : vector<8x256xf32>, i32 -> vector<8x256xf32>
      %244 = arith.addf %241, %243 : vector<8x256xf32>
      %245 = vector.extract_strided_slice %237 {offsets = [16, 0], sizes = [8, 256], strides = [1, 1]} : vector<72x256xf32> to vector<8x256xf32>
      %c11_i32_182 = arith.constant 11 : i32
      %246 = tpu.dynamic_rotate %245 by %c11_i32_182 dim 1 : vector<8x256xf32>, i32 -> vector<8x256xf32>
      %247 = arith.addf %244, %246 : vector<8x256xf32>
      %248 = vector.extract_strided_slice %237 {offsets = [24, 0], sizes = [8, 256], strides = [1, 1]} : vector<72x256xf32> to vector<8x256xf32>
      %c1_i32_183 = arith.constant 1 : i32
      %249 = tpu.dynamic_rotate %248 by %c1_i32_183 dim 1 : vector<8x256xf32>, i32 -> vector<8x256xf32>
      %250 = arith.addf %247, %249 : vector<8x256xf32>
      %251 = vector.extract_strided_slice %237 {offsets = [32, 0], sizes = [8, 256], strides = [1, 1]} : vector<72x256xf32> to vector<8x256xf32>
      %252 = arith.addf %250, %251 : vector<8x256xf32>
      %253 = vector.extract_strided_slice %237 {offsets = [40, 0], sizes = [8, 256], strides = [1, 1]} : vector<72x256xf32> to vector<8x256xf32>
      %c255_i32_184 = arith.constant 255 : i32
      %254 = tpu.dynamic_rotate %253 by %c255_i32_184 dim 1 : vector<8x256xf32>, i32 -> vector<8x256xf32>
      %255 = arith.addf %252, %254 : vector<8x256xf32>
      %256 = vector.extract_strided_slice %237 {offsets = [48, 0], sizes = [8, 256], strides = [1, 1]} : vector<72x256xf32> to vector<8x256xf32>
      %c245_i32_185 = arith.constant 245 : i32
      %257 = tpu.dynamic_rotate %256 by %c245_i32_185 dim 1 : vector<8x256xf32>, i32 -> vector<8x256xf32>
      %258 = arith.addf %255, %257 : vector<8x256xf32>
      %259 = vector.extract_strided_slice %237 {offsets = [56, 0], sizes = [8, 256], strides = [1, 1]} : vector<72x256xf32> to vector<8x256xf32>
      %c244_i32_186 = arith.constant 244 : i32
      %260 = tpu.dynamic_rotate %259 by %c244_i32_186 dim 1 : vector<8x256xf32>, i32 -> vector<8x256xf32>
      %261 = arith.addf %258, %260 : vector<8x256xf32>
      %262 = vector.extract_strided_slice %237 {offsets = [64, 0], sizes = [8, 256], strides = [1, 1]} : vector<72x256xf32> to vector<8x256xf32>
      %c243_i32_187 = arith.constant 243 : i32
      %263 = tpu.dynamic_rotate %262 by %c243_i32_187 dim 1 : vector<8x256xf32>, i32 -> vector<8x256xf32>
      %264 = arith.addf %261, %263 : vector<8x256xf32>
      %265 = arith.index_cast %arg15 : i32 to index
      %c0_188 = arith.constant 0 : index
      %c0_189 = arith.constant 0 : index
      %266 = vector.load %arg6[%265, %c0_188, %c0_189] : memref<8x8x1xf32, #tpu.memory_space<vmem>>, vector<1x8x1xf32>
      %267 = vector.shape_cast %266 : vector<1x8x1xf32> to vector<8x1xf32>
      %268 = vector.broadcast %267 : vector<8x1xf32> to vector<8x256xf32>
      %269 = arith.addf %264, %268 : vector<8x256xf32>
      %cst_190 = arith.constant 0.000000e+00 : f32
      %270 = vector.broadcast %cst_190 : f32 to vector<8x256xf32>
      %271 = arith.maximumf %269, %270 : vector<8x256xf32>
      %272 = vector.broadcast %2 : vector<1x256xf32> to vector<8x256xf32>
      %273 = arith.mulf %271, %272 : vector<8x256xf32>
      %c13_i32_191 = arith.constant 13 : i32
      %274 = tpu.dynamic_rotate %273 by %c13_i32_191 dim 1 : vector<8x256xf32>, i32 -> vector<8x256xf32>
      %c12_i32_192 = arith.constant 12 : i32
      %275 = tpu.dynamic_rotate %273 by %c12_i32_192 dim 1 : vector<8x256xf32>, i32 -> vector<8x256xf32>
      %c11_i32_193 = arith.constant 11 : i32
      %276 = tpu.dynamic_rotate %273 by %c11_i32_193 dim 1 : vector<8x256xf32>, i32 -> vector<8x256xf32>
      %c1_i32_194 = arith.constant 1 : i32
      %277 = tpu.dynamic_rotate %273 by %c1_i32_194 dim 1 : vector<8x256xf32>, i32 -> vector<8x256xf32>
      %c255_i32_195 = arith.constant 255 : i32
      %278 = tpu.dynamic_rotate %273 by %c255_i32_195 dim 1 : vector<8x256xf32>, i32 -> vector<8x256xf32>
      %c245_i32_196 = arith.constant 245 : i32
      %279 = tpu.dynamic_rotate %273 by %c245_i32_196 dim 1 : vector<8x256xf32>, i32 -> vector<8x256xf32>
      %c244_i32_197 = arith.constant 244 : i32
      %280 = tpu.dynamic_rotate %273 by %c244_i32_197 dim 1 : vector<8x256xf32>, i32 -> vector<8x256xf32>
      %c243_i32_198 = arith.constant 243 : i32
      %281 = tpu.dynamic_rotate %273 by %c243_i32_198 dim 1 : vector<8x256xf32>, i32 -> vector<8x256xf32>
      %282 = tpu.concatenate %274, %275, %276, %277, %273, %278, %279, %280, %281 in 0 : vector<8x256xf32>, vector<8x256xf32>, vector<8x256xf32>, vector<8x256xf32>, vector<8x256xf32>, vector<8x256xf32>, vector<8x256xf32>, vector<8x256xf32>, vector<8x256xf32> -> vector<72x256xf32>
      %283 = arith.truncf %282 : vector<72x256xf32> to vector<72x256xbf16>
      %284 = arith.index_cast %arg15 : i32 to index
      %c0_199 = arith.constant 0 : index
      %c0_200 = arith.constant 0 : index
      %285 = vector.load %arg7[%284, %c0_199, %c0_200] : memref<8x64x72xbf16, #tpu.memory_space<vmem>>, vector<1x64x72xbf16>
      %286 = vector.shape_cast %285 : vector<1x64x72xbf16> to vector<64x72xbf16>
      %cst_201 = arith.constant dense<0.000000e+00> : vector<64x256xf32>
      %287 = tpu.matmul %286, %283, %cst_201 {dimension_numbers = #tpu.dot_dimension_numbers<[1], [0], [0], [1], [0, 0, 1, 1], [], []>} : vector<64x72xbf16>, vector<72x256xbf16>, vector<64x256xf32> -> vector<64x256xf32>
      %288 = arith.index_cast %arg15 : i32 to index
      %c0_202 = arith.constant 0 : index
      %c0_203 = arith.constant 0 : index
      %289 = vector.load %arg8[%288, %c0_202, %c0_203] : memref<8x64x1xf32, #tpu.memory_space<vmem>>, vector<1x64x1xf32>
      %290 = vector.shape_cast %289 : vector<1x64x1xf32> to vector<64x1xf32>
      %291 = vector.broadcast %290 : vector<64x1xf32> to vector<64x256xf32>
      %292 = arith.addf %287, %291 : vector<64x256xf32>
      %cst_204 = arith.constant 1.000000e+00 : f32
      %293 = vector.broadcast %cst_204 : f32 to vector<64x256xf32>
      %294 = arith.mulf %293, %292 : vector<64x256xf32>
      %295 = arith.addf %arg16, %294 : vector<64x256xf32>
      %296 = vector.broadcast %2 : vector<1x256xf32> to vector<64x256xf32>
      %297 = arith.mulf %295, %296 : vector<64x256xf32>
      scf.yield %297 : vector<64x256xf32>
    }
    %c8_i32_122 = arith.constant 8 : i32
    %175 = arith.truncf %174 : vector<64x256xf32> to vector<64x256xbf16>
    %cst_123 = arith.constant 0.000000e+00 : f32
    %176 = vector.broadcast %cst_123 : f32 to vector<48x256xf32>
    %c0_124 = arith.constant 0 : index
    %c0_125 = arith.constant 0 : index
    %c0_126 = arith.constant 0 : index
    %177 = vector.load %arg9[%c0_124, %c0_125, %c0_126] : memref<9x48x64xbf16, #tpu.memory_space<vmem>>, vector<1x48x64xbf16>
    %178 = vector.shape_cast %177 : vector<1x48x64xbf16> to vector<48x64xbf16>
    %cst_127 = arith.constant dense<0.000000e+00> : vector<48x256xf32>
    %179 = tpu.matmul %178, %175, %cst_127 {dimension_numbers = #tpu.dot_dimension_numbers<[1], [0], [0], [1], [0, 0, 1, 1], [], []>} : vector<48x64xbf16>, vector<64x256xbf16>, vector<48x256xf32> -> vector<48x256xf32>
    %c13_i32_128 = arith.constant 13 : i32
    %180 = tpu.dynamic_rotate %179 by %c13_i32_128 dim 1 : vector<48x256xf32>, i32 -> vector<48x256xf32>
    %181 = arith.addf %176, %180 : vector<48x256xf32>
    %c1_129 = arith.constant 1 : index
    %c0_130 = arith.constant 0 : index
    %c0_131 = arith.constant 0 : index
    %182 = vector.load %arg9[%c1_129, %c0_130, %c0_131] : memref<9x48x64xbf16, #tpu.memory_space<vmem>>, vector<1x48x64xbf16>
    %183 = vector.shape_cast %182 : vector<1x48x64xbf16> to vector<48x64xbf16>
    %cst_132 = arith.constant dense<0.000000e+00> : vector<48x256xf32>
    %184 = tpu.matmul %183, %175, %cst_132 {dimension_numbers = #tpu.dot_dimension_numbers<[1], [0], [0], [1], [0, 0, 1, 1], [], []>} : vector<48x64xbf16>, vector<64x256xbf16>, vector<48x256xf32> -> vector<48x256xf32>
    %c12_i32_133 = arith.constant 12 : i32
    %185 = tpu.dynamic_rotate %184 by %c12_i32_133 dim 1 : vector<48x256xf32>, i32 -> vector<48x256xf32>
    %186 = arith.addf %181, %185 : vector<48x256xf32>
    %c2_134 = arith.constant 2 : index
    %c0_135 = arith.constant 0 : index
    %c0_136 = arith.constant 0 : index
    %187 = vector.load %arg9[%c2_134, %c0_135, %c0_136] : memref<9x48x64xbf16, #tpu.memory_space<vmem>>, vector<1x48x64xbf16>
    %188 = vector.shape_cast %187 : vector<1x48x64xbf16> to vector<48x64xbf16>
    %cst_137 = arith.constant dense<0.000000e+00> : vector<48x256xf32>
    %189 = tpu.matmul %188, %175, %cst_137 {dimension_numbers = #tpu.dot_dimension_numbers<[1], [0], [0], [1], [0, 0, 1, 1], [], []>} : vector<48x64xbf16>, vector<64x256xbf16>, vector<48x256xf32> -> vector<48x256xf32>
    %c11_i32_138 = arith.constant 11 : i32
    %190 = tpu.dynamic_rotate %189 by %c11_i32_138 dim 1 : vector<48x256xf32>, i32 -> vector<48x256xf32>
    %191 = arith.addf %186, %190 : vector<48x256xf32>
    %c3_139 = arith.constant 3 : index
    %c0_140 = arith.constant 0 : index
    %c0_141 = arith.constant 0 : index
    %192 = vector.load %arg9[%c3_139, %c0_140, %c0_141] : memref<9x48x64xbf16, #tpu.memory_space<vmem>>, vector<1x48x64xbf16>
    %193 = vector.shape_cast %192 : vector<1x48x64xbf16> to vector<48x64xbf16>
    %cst_142 = arith.constant dense<0.000000e+00> : vector<48x256xf32>
    %194 = tpu.matmul %193, %175, %cst_142 {dimension_numbers = #tpu.dot_dimension_numbers<[1], [0], [0], [1], [0, 0, 1, 1], [], []>} : vector<48x64xbf16>, vector<64x256xbf16>, vector<48x256xf32> -> vector<48x256xf32>
    %c1_i32_143 = arith.constant 1 : i32
    %195 = tpu.dynamic_rotate %194 by %c1_i32_143 dim 1 : vector<48x256xf32>, i32 -> vector<48x256xf32>
    %196 = arith.addf %191, %195 : vector<48x256xf32>
    %c4_144 = arith.constant 4 : index
    %c0_145 = arith.constant 0 : index
    %c0_146 = arith.constant 0 : index
    %197 = vector.load %arg9[%c4_144, %c0_145, %c0_146] : memref<9x48x64xbf16, #tpu.memory_space<vmem>>, vector<1x48x64xbf16>
    %198 = vector.shape_cast %197 : vector<1x48x64xbf16> to vector<48x64xbf16>
    %cst_147 = arith.constant dense<0.000000e+00> : vector<48x256xf32>
    %199 = tpu.matmul %198, %175, %cst_147 {dimension_numbers = #tpu.dot_dimension_numbers<[1], [0], [0], [1], [0, 0, 1, 1], [], []>} : vector<48x64xbf16>, vector<64x256xbf16>, vector<48x256xf32> -> vector<48x256xf32>
    %200 = arith.addf %196, %199 : vector<48x256xf32>
    %c5_148 = arith.constant 5 : index
    %c0_149 = arith.constant 0 : index
    %c0_150 = arith.constant 0 : index
    %201 = vector.load %arg9[%c5_148, %c0_149, %c0_150] : memref<9x48x64xbf16, #tpu.memory_space<vmem>>, vector<1x48x64xbf16>
    %202 = vector.shape_cast %201 : vector<1x48x64xbf16> to vector<48x64xbf16>
    %cst_151 = arith.constant dense<0.000000e+00> : vector<48x256xf32>
    %203 = tpu.matmul %202, %175, %cst_151 {dimension_numbers = #tpu.dot_dimension_numbers<[1], [0], [0], [1], [0, 0, 1, 1], [], []>} : vector<48x64xbf16>, vector<64x256xbf16>, vector<48x256xf32> -> vector<48x256xf32>
    %c255_i32_152 = arith.constant 255 : i32
    %204 = tpu.dynamic_rotate %203 by %c255_i32_152 dim 1 : vector<48x256xf32>, i32 -> vector<48x256xf32>
    %205 = arith.addf %200, %204 : vector<48x256xf32>
    %c6_153 = arith.constant 6 : index
    %c0_154 = arith.constant 0 : index
    %c0_155 = arith.constant 0 : index
    %206 = vector.load %arg9[%c6_153, %c0_154, %c0_155] : memref<9x48x64xbf16, #tpu.memory_space<vmem>>, vector<1x48x64xbf16>
    %207 = vector.shape_cast %206 : vector<1x48x64xbf16> to vector<48x64xbf16>
    %cst_156 = arith.constant dense<0.000000e+00> : vector<48x256xf32>
    %208 = tpu.matmul %207, %175, %cst_156 {dimension_numbers = #tpu.dot_dimension_numbers<[1], [0], [0], [1], [0, 0, 1, 1], [], []>} : vector<48x64xbf16>, vector<64x256xbf16>, vector<48x256xf32> -> vector<48x256xf32>
    %c245_i32_157 = arith.constant 245 : i32
    %209 = tpu.dynamic_rotate %208 by %c245_i32_157 dim 1 : vector<48x256xf32>, i32 -> vector<48x256xf32>
    %210 = arith.addf %205, %209 : vector<48x256xf32>
    %c7_158 = arith.constant 7 : index
    %c0_159 = arith.constant 0 : index
    %c0_160 = arith.constant 0 : index
    %211 = vector.load %arg9[%c7_158, %c0_159, %c0_160] : memref<9x48x64xbf16, #tpu.memory_space<vmem>>, vector<1x48x64xbf16>
    %212 = vector.shape_cast %211 : vector<1x48x64xbf16> to vector<48x64xbf16>
    %cst_161 = arith.constant dense<0.000000e+00> : vector<48x256xf32>
    %213 = tpu.matmul %212, %175, %cst_161 {dimension_numbers = #tpu.dot_dimension_numbers<[1], [0], [0], [1], [0, 0, 1, 1], [], []>} : vector<48x64xbf16>, vector<64x256xbf16>, vector<48x256xf32> -> vector<48x256xf32>
    %c244_i32_162 = arith.constant 244 : i32
    %214 = tpu.dynamic_rotate %213 by %c244_i32_162 dim 1 : vector<48x256xf32>, i32 -> vector<48x256xf32>
    %215 = arith.addf %210, %214 : vector<48x256xf32>
    %c8_163 = arith.constant 8 : index
    %c0_164 = arith.constant 0 : index
    %c0_165 = arith.constant 0 : index
    %216 = vector.load %arg9[%c8_163, %c0_164, %c0_165] : memref<9x48x64xbf16, #tpu.memory_space<vmem>>, vector<1x48x64xbf16>
    %217 = vector.shape_cast %216 : vector<1x48x64xbf16> to vector<48x64xbf16>
    %cst_166 = arith.constant dense<0.000000e+00> : vector<48x256xf32>
    %218 = tpu.matmul %217, %175, %cst_166 {dimension_numbers = #tpu.dot_dimension_numbers<[1], [0], [0], [1], [0, 0, 1, 1], [], []>} : vector<48x64xbf16>, vector<64x256xbf16>, vector<48x256xf32> -> vector<48x256xf32>
    %c243_i32_167 = arith.constant 243 : i32
    %219 = tpu.dynamic_rotate %218 by %c243_i32_167 dim 1 : vector<48x256xf32>, i32 -> vector<48x256xf32>
    %220 = arith.addf %215, %219 : vector<48x256xf32>
    %c0_168 = arith.constant 0 : index
    %c0_169 = arith.constant 0 : index
    %221 = vector.load %arg10[%c0_168, %c0_169] : memref<48x1xf32, #tpu.memory_space<vmem>>, vector<48x1xf32>
    %222 = vector.broadcast %221 : vector<48x1xf32> to vector<48x256xf32>
    %223 = arith.addf %220, %222 : vector<48x256xf32>
    %224 = arith.addf %223, %130 : vector<48x256xf32>
    %cst_170 = arith.constant 1.275000e+02 : f32
    %225 = vector.broadcast %cst_170 : f32 to vector<48x256xf32>
    %226 = arith.mulf %224, %225 : vector<48x256xf32>
    %c0_171 = arith.constant 0 : index
    %c0_172 = arith.constant 0 : index
    %227 = vector.load %arg13[%c0_171, %c0_172] : memref<48x1xf32, #tpu.memory_space<vmem>>, vector<48x1xf32>
    %228 = vector.broadcast %227 : vector<48x1xf32> to vector<48x256xf32>
    %229 = arith.addf %226, %228 : vector<48x256xf32>
    %c0_173 = arith.constant 0 : index
    %c0_174 = arith.constant 0 : index
    %c0_175 = arith.constant 0 : index
    %230 = vector.load %arg14[%c0_173, %c0_174, %c0_175] : memref<1x48x256xf32, #tpu.memory_space<vmem>>, vector<1x48x256xf32>
    %231 = vector.shape_cast %230 : vector<1x48x256xf32> to vector<48x256xf32>
    %232 = vector.shape_cast %229 : vector<48x256xf32> to vector<1x48x256xf32>
    tpu.vector_store %arg14[%c0_173, %c0_174, %c0_175], %232 {strides = array<i32>} : memref<1x48x256xf32, #tpu.memory_space<vmem>>, vector<1x48x256xf32>,
    return
  }
  func.func @transform_0(%arg0: i32) -> (i32, i32, i32) {
    %c0_i32 = arith.constant 0 : i32
    %c0_i32_0 = arith.constant 0 : i32
    %c0_i32_1 = arith.constant 0 : i32
    return %arg0, %c0_i32, %c0_i32_0 : i32, i32, i32
  }
  func.func @transform_1(%arg0: i32) -> (i32, i32) {
    %c0_i32 = arith.constant 0 : i32
    %c0_i32_0 = arith.constant 0 : i32
    %c0_i32_1 = arith.constant 0 : i32
    return %c0_i32, %c0_i32_0 : i32, i32
  }
  func.func @transform_2(%arg0: i32) -> (i32, i32, i32) {
    %c0_i32 = arith.constant 0 : i32
    %c0_i32_0 = arith.constant 0 : i32
    %c0_i32_1 = arith.constant 0 : i32
    %c0_i32_2 = arith.constant 0 : i32
    return %c0_i32, %c0_i32_0, %c0_i32_1 : i32, i32, i32
  }
  func.func @transform_3(%arg0: i32) -> (i32, i32) {
    %c0_i32 = arith.constant 0 : i32
    %c0_i32_0 = arith.constant 0 : i32
    %c0_i32_1 = arith.constant 0 : i32
    return %c0_i32, %c0_i32_0 : i32, i32
  }
  func.func @transform_4(%arg0: i32) -> (i32, i32, i32) {
    %c0_i32 = arith.constant 0 : i32
    %c0_i32_0 = arith.constant 0 : i32
    %c0_i32_1 = arith.constant 0 : i32
    %c0_i32_2 = arith.constant 0 : i32
    return %c0_i32, %c0_i32_0, %c0_i32_1 : i32, i32, i32
  }
  func.func @transform_5(%arg0: i32) -> (i32, i32, i32) {
    %c0_i32 = arith.constant 0 : i32
    %c0_i32_0 = arith.constant 0 : i32
    %c0_i32_1 = arith.constant 0 : i32
    %c0_i32_2 = arith.constant 0 : i32
    return %c0_i32, %c0_i32_0, %c0_i32_1 : i32, i32, i32
  }
  func.func @transform_6(%arg0: i32) -> (i32, i32, i32) {
    %c0_i32 = arith.constant 0 : i32
    %c0_i32_0 = arith.constant 0 : i32
    %c0_i32_1 = arith.constant 0 : i32
    %c0_i32_2 = arith.constant 0 : i32
    return %c0_i32, %c0_i32_0, %c0_i32_1 : i32, i32, i32
  }
  func.func @transform_7(%arg0: i32) -> (i32, i32, i32) {
    %c0_i32 = arith.constant 0 : i32
    %c0_i32_0 = arith.constant 0 : i32
    %c0_i32_1 = arith.constant 0 : i32
    %c0_i32_2 = arith.constant 0 : i32
    return %c0_i32, %c0_i32_0, %c0_i32_1 : i32, i32, i32
  }
  func.func @transform_8(%arg0: i32) -> (i32, i32, i32) {
    %c0_i32 = arith.constant 0 : i32
    %c0_i32_0 = arith.constant 0 : i32
    %c0_i32_1 = arith.constant 0 : i32
    %c0_i32_2 = arith.constant 0 : i32
    return %c0_i32, %c0_i32_0, %c0_i32_1 : i32, i32, i32
  }
  func.func @transform_9(%arg0: i32) -> (i32, i32) {
    %c0_i32 = arith.constant 0 : i32
    %c0_i32_0 = arith.constant 0 : i32
    %c0_i32_1 = arith.constant 0 : i32
    return %c0_i32, %c0_i32_0 : i32, i32
  }
  func.func @transform_10(%arg0: i32) -> (i32, i32, i32) {
    %c0_i32 = arith.constant 0 : i32
    %c0_i32_0 = arith.constant 0 : i32
    %c0_i32_1 = arith.constant 0 : i32
    %c0_i32_2 = arith.constant 0 : i32
    return %c0_i32, %c0_i32_0, %c0_i32_1 : i32, i32, i32
  }
  func.func @transform_11(%arg0: i32) -> (i32, i32) {
    %c0_i32 = arith.constant 0 : i32
    %c0_i32_0 = arith.constant 0 : i32
    %c0_i32_1 = arith.constant 0 : i32
    return %c0_i32, %c0_i32_0 : i32, i32
  }
  func.func @transform_12(%arg0: i32) -> (i32, i32) {
    %c0_i32 = arith.constant 0 : i32
    %c0_i32_0 = arith.constant 0 : i32
    %c0_i32_1 = arith.constant 0 : i32
    return %c0_i32, %c0_i32_0 : i32, i32
  }
  func.func @transform_13(%arg0: i32) -> (i32, i32, i32) {
    %c0_i32 = arith.constant 0 : i32
    %c0_i32_0 = arith.constant 0 : i32
    %c0_i32_1 = arith.constant 0 : i32
    return %arg0, %c0_i32, %c0_i32_0 : i32, i32, i32
  }
}

</mosaic_0001>

<llo_original>
// kernel: model_forward.1
$region0: #{model_forward.1}
  #allocation0 [shape = 'u32[]', space=smem, size = 0x4, offset = 0x4, fixed_abs, tag = 'smem constant byte address 0x4 - core index']
  #allocation1 [shape = 'u32[72,128]{1,0:T(1,128)}', space=vmem, size = 0x9000, scoped, tag = 'internal scratch']
  %s0 = inlined_call_operand.vmem [shape: f32[2,3,256], index: 0, kind: input, shape index: {}]
  %s1 = inlined_call_operand.vmem [shape: f32[1,256], index: 1, kind: input, shape index: {}]
  %s2 = inlined_call_operand.vmem [shape: f32[9,64,3], index: 2, kind: input, shape index: {}]
  %s3 = inlined_call_operand.vmem [shape: f32[64,1], index: 3, kind: input, shape index: {}]
  %s4 = inlined_call_operand.vmem [shape: bf16[8,72,64], index: 4, kind: input, shape index: {}]
  %s5 = inlined_call_operand.vmem [shape: f32[8,8,1], index: 5, kind: input, shape index: {}]
  %s6 = inlined_call_operand.vmem [shape: bf16[8,64,72], index: 6, kind: input, shape index: {}]
  %s7 = inlined_call_operand.vmem [shape: f32[8,64,1], index: 7, kind: input, shape index: {}]
  %s8 = inlined_call_operand.vmem [shape: bf16[9,48,64], index: 8, kind: input, shape index: {}]
  %s9 = inlined_call_operand.vmem [shape: f32[48,1], index: 9, kind: input, shape index: {}]
  %s10 = inlined_call_operand.vmem [shape: f32[25,48,3], index: 10, kind: input, shape index: {}]
  %s11 = inlined_call_operand.vmem [shape: f32[48,1], index: 11, kind: input, shape index: {}]
  %s12 = inlined_call_operand.vmem [shape: f32[48,1], index: 12, kind: input, shape index: {}]
  %s13 = inlined_call_operand.vmem [shape: f32[2,48,256], index: 13, kind: output, shape index: {}]
  %s14 = sld [smem:[#allocation0]]
  $region92: #{model_forward.1} parent=0
    _
  %s16 = ssub.s32 1, %s14
  %s17 = scalar_select 0, %s16, %s14
  loop: start=0, step=1, limit=4
  $region2: #{model_forward.1} parent=0 // loop_pre_header
    _
  $region3: #{model_forward.1} parent=0 // loop_header
    %s19 = sphi 0, %s23
    %p20 = scmp.ge.s32.totalorder %s19, 4
    %s29 = sphi 0, %s31
    %s32 = sphi 0, %s29
    %s33 = sphi 0, %s32
    %s49 = sphi 0, %s33
    %s53 = sphi 0, %s53
    %s55 = sphi 0, %s53
    %s56 = sphi 0, %s55
    %s70 = sphi 0, %s56
    %s74 = sphi 0, %s74
    %s76 = sphi 0, %s74
    %s77 = sphi 0, %s76
    %s91 = sphi 0, %s77
    %s95 = sphi 0, %s95
    %s97 = sphi 0, %s95
    %s98 = sphi 0, %s97
    %s112 = sphi 0, %s98
    %s116 = sphi 0, %s116
    %s118 = sphi 0, %s116
    %s119 = sphi 0, %s118
    %s133 = sphi 0, %s119
    %s137 = sphi 0, %s137
    %s139 = sphi 0, %s137
    %s140 = sphi 0, %s139
    %s154 = sphi 0, %s140
    %s158 = sphi 0, %s158
    %s160 = sphi 0, %s158
    %s161 = sphi 0, %s160
    %s175 = sphi 0, %s161
    %s179 = sphi 0, %s179
    %s181 = sphi 0, %s179
    %s182 = sphi 0, %s181
    %s196 = sphi 0, %s182
    %s200 = sphi 0, %s200
    %s202 = sphi 0, %s200
    %s203 = sphi 0, %s202
    %s217 = sphi 0, %s203
    %s221 = sphi 0, %s221
    %s223 = sphi 0, %s221
    %s224 = sphi 0, %s223
    %s238 = sphi 0, %s224
    %s242 = sphi 0, %s242
    %s244 = sphi 0, %s242
    %s245 = sphi 0, %s244
    %s259 = sphi 0, %s245
    %s263 = sphi 0, %s263
    %s265 = sphi 0, %s263
    %s266 = sphi 0, %s265
    %s280 = sphi 0, %s266
    %s284 = sphi 0, %s284
    %s286 = sphi 0, %s284
    %s287 = sphi 0, %s286
    %s301 = sphi 0, %s287
    %s307 = sphi 0, %s309
    %s310 = sphi 0, %s307
    %s311 = sphi 0, %s310
    %s327 = sphi 0, %s311
  $region4: #{model_forward.1} parent=0 // loop_header_branch
    %22 = sbr.rel (%p20) target = $region8
  $region5: #{model_forward.1} parent=0 // loop_body
    %s24 = ssub.s32 %s19, 1
    %s25 = ssub.s32 %s19, 2
    %s26 = sadd.s32 %s19, 1
    %s27 = ssub.s32 %s19, %s26
    %p28 = scmp.eq.s32.totalorder %s27, 0
    %s30 = sadd.s32 %s29, 1
    %s31 = scalar_select %p28, %s29, %s30
    %p34 = pneg %p28
    %p35 = scmp.eq.s32.totalorder %s19, 1
    %p36 = por %p34, %p35
    %p37 = scmp.ne.s32.totalorder %s29, %s32
    %p38 = scmp.eq.s32.totalorder %s19, 0
    %p39 = por %p37, %p38
    %p40 = scmp.ne.s32.totalorder %s29, %s32
    %p41 = scmp.eq.s32.totalorder %s24, 1
    %p42 = por %p40, %p41
    %p43 = scmp.ne.s32.totalorder %s32, %s33
    %p44 = scmp.eq.s32.totalorder %s24, 0
    %p45 = por %p43, %p44
    %p46 = scmp.ne.s32.totalorder %s32, %s33
    %p47 = scmp.eq.s32.totalorder %s25, 1
    %p48 = por %p46, %p47
    %p50 = scmp.ne.s32.totalorder %s33, %s49
    %p51 = scmp.eq.s32.totalorder %s25, 0
    %p52 = por %p50, %p51
    %s54 = sadd.s32 %s53, 1
    %p57 = scmp.eq.s32.totalorder %s19, 1
    %p58 = scmp.ne.s32.totalorder %s53, %s55
    %p59 = scmp.eq.s32.totalorder %s19, 0
    %p60 = por %p58, %p59
    %p61 = scmp.ne.s32.totalorder %s53, %s55
    %p62 = scmp.eq.s32.totalorder %s24, 1
    %p63 = por %p61, %p62
    %p64 = scmp.ne.s32.totalorder %s55, %s56
    %p65 = scmp.eq.s32.totalorder %s24, 0
    %p66 = por %p64, %p65
    %p67 = scmp.ne.s32.totalorder %s55, %s56
    %p68 = scmp.eq.s32.totalorder %s25, 1
    %p69 = por %p67, %p68
    %p71 = scmp.ne.s32.totalorder %s56, %s70
    %p72 = scmp.eq.s32.totalorder %s25, 0
    %p73 = por %p71, %p72
    %s75 = sadd.s32 %s74, 1
    %p78 = scmp.eq.s32.totalorder %s19, 1
    %p79 = scmp.ne.s32.totalorder %s74, %s76
    %p80 = scmp.eq.s32.totalorder %s19, 0
    %p81 = por %p79, %p80
    %p82 = scmp.ne.s32.totalorder %s74, %s76
    %p83 = scmp.eq.s32.totalorder %s24, 1
    %p84 = por %p82, %p83
    %p85 = scmp.ne.s32.totalorder %s76, %s77
    %p86 = scmp.eq.s32.totalorder %s24, 0
    %p87 = por %p85, %p86
    %p88 = scmp.ne.s32.totalorder %s76, %s77
    %p89 = scmp.eq.s32.totalorder %s25, 1
    %p90 = por %p88, %p89
    %p92 = scmp.ne.s32.totalorder %s77, %s91
    %p93 = scmp.eq.s32.totalorder %s25, 0
    %p94 = por %p92, %p93
    %s96 = sadd.s32 %s95, 1
    %p99 = scmp.eq.s32.totalorder %s19, 1
    %p100 = scmp.ne.s32.totalorder %s95, %s97
    %p101 = scmp.eq.s32.totalorder %s19, 0
    %p102 = por %p100, %p101
    %p103 = scmp.ne.s32.totalorder %s95, %s97
    %p104 = scmp.eq.s32.totalorder %s24, 1
    %p105 = por %p103, %p104
    %p106 = scmp.ne.s32.totalorder %s97, %s98
    %p107 = scmp.eq.s32.totalorder %s24, 0
    %p108 = por %p106, %p107
    %p109 = scmp.ne.s32.totalorder %s97, %s98
    %p110 = scmp.eq.s32.totalorder %s25, 1
    %p111 = por %p109, %p110
    %p113 = scmp.ne.s32.totalorder %s98, %s112
    %p114 = scmp.eq.s32.totalorder %s25, 0
    %p115 = por %p113, %p114
    %s117 = sadd.s32 %s116, 1
    %p120 = scmp.eq.s32.totalorder %s19, 1
    %p121 = scmp.ne.s32.totalorder %s116, %s118
    %p122 = scmp.eq.s32.totalorder %s19, 0
    %p123 = por %p121, %p122
    %p124 = scmp.ne.s32.totalorder %s116, %s118
    %p125 = scmp.eq.s32.totalorder %s24, 1
    %p126 = por %p124, %p125
    %p127 = scmp.ne.s32.totalorder %s118, %s119
    %p128 = scmp.eq.s32.totalorder %s24, 0
    %p129 = por %p127, %p128
    %p130 = scmp.ne.s32.totalorder %s118, %s119
    %p131 = scmp.eq.s32.totalorder %s25, 1
    %p132 = por %p130, %p131
    %p134 = scmp.ne.s32.totalorder %s119, %s133
    %p135 = scmp.eq.s32.totalorder %s25, 0
    %p136 = por %p134, %p135
    %s138 = sadd.s32 %s137, 1
    %p141 = scmp.eq.s32.totalorder %s19, 1
    %p142 = scmp.ne.s32.totalorder %s137, %s139
    %p143 = scmp.eq.s32.totalorder %s19, 0
    %p144 = por %p142, %p143
    %p145 = scmp.ne.s32.totalorder %s137, %s139
    %p146 = scmp.eq.s32.totalorder %s24, 1
    %p147 = por %p145, %p146
    %p148 = scmp.ne.s32.totalorder %s139, %s140
    %p149 = scmp.eq.s32.totalorder %s24, 0
    %p150 = por %p148, %p149
    %p151 = scmp.ne.s32.totalorder %s139, %s140
    %p152 = scmp.eq.s32.totalorder %s25, 1
    %p153 = por %p151, %p152
    %p155 = scmp.ne.s32.totalorder %s140, %s154
    %p156 = scmp.eq.s32.totalorder %s25, 0
    %p157 = por %p155, %p156
    %s159 = sadd.s32 %s158, 1
    %p162 = scmp.eq.s32.totalorder %s19, 1
    %p163 = scmp.ne.s32.totalorder %s158, %s160
    %p164 = scmp.eq.s32.totalorder %s19, 0
    %p165 = por %p163, %p164
    %p166 = scmp.ne.s32.totalorder %s158, %s160
    %p167 = scmp.eq.s32.totalorder %s24, 1
    %p168 = por %p166, %p167
    %p169 = scmp.ne.s32.totalorder %s160, %s161
    %p170 = scmp.eq.s32.totalorder %s24, 0
    %p171 = por %p169, %p170
    %p172 = scmp.ne.s32.totalorder %s160, %s161
    %p173 = scmp.eq.s32.totalorder %s25, 1
    %p174 = por %p172, %p173
    %p176 = scmp.ne.s32.totalorder %s161, %s175
    %p177 = scmp.eq.s32.totalorder %s25, 0
    %p178 = por %p176, %p177
    %s180 = sadd.s32 %s179, 1
    %p183 = scmp.eq.s32.totalorder %s19, 1
    %p184 = scmp.ne.s32.totalorder %s179, %s181
    %p185 = scmp.eq.s32.totalorder %s19, 0
    %p186 = por %p184, %p185
    %p187 = scmp.ne.s32.totalorder %s179, %s181
    %p188 = scmp.eq.s32.totalorder %s24, 1
    %p189 = por %p187, %p188
    %p190 = scmp.ne.s32.totalorder %s181, %s182
    %p191 = scmp.eq.s32.totalorder %s24, 0
    %p192 = por %p190, %p191
    %p193 = scmp.ne.s32.totalorder %s181, %s182
    %p194 = scmp.eq.s32.totalorder %s25, 1
    %p195 = por %p193, %p194
    %p197 = scmp.ne.s32.totalorder %s182, %s196
    %p198 = scmp.eq.s32.totalorder %s25, 0
    %p199 = por %p197, %p198
    %s201 = sadd.s32 %s200, 1
    %p204 = scmp.eq.s32.totalorder %s19, 1
    %p205 = scmp.ne.s32.totalorder %s200, %s202
    %p206 = scmp.eq.s32.totalorder %s19, 0
    %p207 = por %p205, %p206
    %p208 = scmp.ne.s32.totalorder %s200, %s202
    %p209 = scmp.eq.s32.totalorder %s24, 1
    %p210 = por %p208, %p209
    %p211 = scmp.ne.s32.totalorder %s202, %s203
    %p212 = scmp.eq.s32.totalorder %s24, 0
    %p213 = por %p211, %p212
    %p214 = scmp.ne.s32.totalorder %s202, %s203
    %p215 = scmp.eq.s32.totalorder %s25, 1
    %p216 = por %p214, %p215
    %p218 = scmp.ne.s32.totalorder %s203, %s217
    %p219 = scmp.eq.s32.totalorder %s25, 0
    %p220 = por %p218, %p219
    %s222 = sadd.s32 %s221, 1
    %p225 = scmp.eq.s32.totalorder %s19, 1
    %p226 = scmp.ne.s32.totalorder %s221, %s223
    %p227 = scmp.eq.s32.totalorder %s19, 0
    %p228 = por %p226, %p227
    %p229 = scmp.ne.s32.totalorder %s221, %s223
    %p230 = scmp.eq.s32.totalorder %s24, 1
    %p231 = por %p229, %p230
    %p232 = scmp.ne.s32.totalorder %s223, %s224
    %p233 = scmp.eq.s32.totalorder %s24, 0
    %p234 = por %p232, %p233
    %p235 = scmp.ne.s32.totalorder %s223, %s224
    %p236 = scmp.eq.s32.totalorder %s25, 1
    %p237 = por %p235, %p236
    %p239 = scmp.ne.s32.totalorder %s224, %s238
    %p240 = scmp.eq.s32.totalorder %s25, 0
    %p241 = por %p239, %p240
    %s243 = sadd.s32 %s242, 1
    %p246 = scmp.eq.s32.totalorder %s19, 1
    %p247 = scmp.ne.s32.totalorder %s242, %s244
    %p248 = scmp.eq.s32.totalorder %s19, 0
    %p249 = por %p247, %p248
    %p250 = scmp.ne.s32.totalorder %s242, %s244
    %p251 = scmp.eq.s32.totalorder %s24, 1
    %p252 = por %p250, %p251
    %p253 = scmp.ne.s32.totalorder %s244, %s245
    %p254 = scmp.eq.s32.totalorder %s24, 0
    %p255 = por %p253, %p254
    %p256 = scmp.ne.s32.totalorder %s244, %s245
    %p257 = scmp.eq.s32.totalorder %s25, 1
    %p258 = por %p256, %p257
    %p260 = scmp.ne.s32.totalorder %s245, %s259
    %p261 = scmp.eq.s32.totalorder %s25, 0
    %p262 = por %p260, %p261
    %s264 = sadd.s32 %s263, 1
    %p267 = scmp.eq.s32.totalorder %s19, 1
    %p268 = scmp.ne.s32.totalorder %s263, %s265
    %p269 = scmp.eq.s32.totalorder %s19, 0
    %p270 = por %p268, %p269
    %p271 = scmp.ne.s32.totalorder %s263, %s265
    %p272 = scmp.eq.s32.totalorder %s24, 1
    %p273 = por %p271, %p272
    %p274 = scmp.ne.s32.totalorder %s265, %s266
    %p275 = scmp.eq.s32.totalorder %s24, 0
    %p276 = por %p274, %p275
    %p277 = scmp.ne.s32.totalorder %s265, %s266
    %p278 = scmp.eq.s32.totalorder %s25, 1
    %p279 = por %p277, %p278
    %p281 = scmp.ne.s32.totalorder %s266, %s280
    %p282 = scmp.eq.s32.totalorder %s25, 0
    %p283 = por %p281, %p282
    %s285 = sadd.s32 %s284, 1
    %p288 = scmp.eq.s32.totalorder %s19, 1
    %p289 = scmp.ne.s32.totalorder %s284, %s286
    %p290 = scmp.eq.s32.totalorder %s19, 0
    %p291 = por %p289, %p290
    %p292 = scmp.ne.s32.totalorder %s284, %s286
    %p293 = scmp.eq.s32.totalorder %s24, 1
    %p294 = por %p292, %p293
    %p295 = scmp.ne.s32.totalorder %s286, %s287
    %p296 = scmp.eq.s32.totalorder %s24, 0
    %p297 = por %p295, %p296
    %p298 = scmp.ne.s32.totalorder %s286, %s287
    %p299 = scmp.eq.s32.totalorder %s25, 1
    %p300 = por %p298, %p299
    %p302 = scmp.ne.s32.totalorder %s287, %s301
    %p303 = scmp.eq.s32.totalorder %s25, 0
    %p304 = por %p302, %p303
    %s305 = ssub.s32 %s19, %s26
    %p306 = scmp.eq.s32.totalorder %s305, 0
    %s308 = sadd.s32 %s307, 1
    %s309 = scalar_select %p306, %s307, %s308
    %p312 = pneg %p306
    %p313 = scmp.eq.s32.totalorder %s19, 1
    %p314 = por %p312, %p313
    %p315 = scmp.ne.s32.totalorder %s307, %s310
    %p316 = scmp.eq.s32.totalorder %s19, 0
    %p317 = por %p315, %p316
    %p318 = scmp.ne.s32.totalorder %s307, %s310
    %p319 = scmp.eq.s32.totalorder %s24, 1
    %p320 = por %p318, %p319
    %p321 = scmp.ne.s32.totalorder %s310, %s311
    %p322 = scmp.eq.s32.totalorder %s24, 0
    %p323 = por %p321, %p322
    %p324 = scmp.ne.s32.totalorder %s310, %s311
    %p325 = scmp.eq.s32.totalorder %s25, 1
    %p326 = por %p324, %p325
    %p328 = scmp.ne.s32.totalorder %s311, %s327
    %p329 = scmp.eq.s32.totalorder %s25, 0
    %p330 = por %p328, %p329
    %p331 = scmp.le.s32.totalorder 1, %s19
    %p332 = scmp.lt.s32.totalorder %s19, 3
    %p333 = pnand %p331, %p332
    %p334 = pneg %p333
    // Predicated region
    $region9: #{model_forward.1} parent=5 // pred_check
      _
    $region10: #{model_forward.1} parent=5 // pred_check_branch
      %336 = sbr.rel (%p333) target = $region12
    $region11: #{model_forward.1} parent=5 // pred_region
      %s337 = ssub.s32 %s19, 1
      // Predicated region
      $region13: #{model_forward.1} parent=11 // pred_check
        %p338 = pneg %p66
      $region14: #{model_forward.1} parent=11 // pred_check_branch
        %340 = sbr.rel (%p338) target = $region16
      $region15: #{model_forward.1} parent=11 // pred_region
        _
      $region16: #{model_forward.1} parent=11 // pred_fallthru
        _
      // Predicated region
      $region17: #{model_forward.1} parent=11 // pred_check
        %p341 = pneg %p87
      $region18: #{model_forward.1} parent=11 // pred_check_branch
        %343 = sbr.rel (%p341) target = $region20
      $region19: #{model_forward.1} parent=11 // pred_region
        _
      $region20: #{model_forward.1} parent=11 // pred_fallthru
        _
      // Predicated region
      $region21: #{model_forward.1} parent=11 // pred_check
        %p344 = pneg %p108
      $region22: #{model_forward.1} parent=11 // pred_check_branch
        %346 = sbr.rel (%p344) target = $region24
      $region23: #{model_forward.1} parent=11 // pred_region
        _
      $region24: #{model_forward.1} parent=11 // pred_fallthru
        _
      // Predicated region
      $region25: #{model_forward.1} parent=11 // pred_check
        %p347 = pneg %p129
      $region26: #{model_forward.1} parent=11 // pred_check_branch
        %349 = sbr.rel (%p347) target = $region28
      $region27: #{model_forward.1} parent=11 // pred_region
        _
      $region28: #{model_forward.1} parent=11 // pred_fallthru
        _
      // Predicated region
      $region29: #{model_forward.1} parent=11 // pred_check
        %p350 = pneg %p150
      $region30: #{model_forward.1} parent=11 // pred_check_branch
        %352 = sbr.rel (%p350) target = $region32
      $region31: #{model_forward.1} parent=11 // pred_region
        _
      $region32: #{model_forward.1} parent=11 // pred_fallthru
        _
      // Predicated region
      $region33: #{model_forward.1} parent=11 // pred_check
        %p353 = pneg %p171
      $region34: #{model_forward.1} parent=11 // pred_check_branch
        %355 = sbr.rel (%p353) target = $region36
      $region35: #{model_forward.1} parent=11 // pred_region
        _
      $region36: #{model_forward.1} parent=11 // pred_fallthru
        _
      // Predicated region
      $region37: #{model_forward.1} parent=11 // pred_check
        %p356 = pneg %p192
      $region38: #{model_forward.1} parent=11 // pred_check_branch
        %358 = sbr.rel (%p356) target = $region40
      $region39: #{model_forward.1} parent=11 // pred_region
        _
      $region40: #{model_forward.1} parent=11 // pred_fallthru
        _
      // Predicated region
      $region41: #{model_forward.1} parent=11 // pred_check
        %p359 = pneg %p213
      $region42: #{model_forward.1} parent=11 // pred_check_branch
        %361 = sbr.rel (%p359) target = $region44
      $region43: #{model_forward.1} parent=11 // pred_region
        _
      $region44: #{model_forward.1} parent=11 // pred_fallthru
        _
      // Predicated region
      $region45: #{model_forward.1} parent=11 // pred_check
        %p362 = pneg %p234
      $region46: #{model_forward.1} parent=11 // pred_check_branch
        %364 = sbr.rel (%p362) target = $region48
      $region47: #{model_forward.1} parent=11 // pred_region
        _
      $region48: #{model_forward.1} parent=11 // pred_fallthru
        _
      // Predicated region
      $region49: #{model_forward.1} parent=11 // pred_check
        %p365 = pneg %p255
      $region50: #{model_forward.1} parent=11 // pred_check_branch
        %367 = sbr.rel (%p365) target = $region52
      $region51: #{model_forward.1} parent=11 // pred_region
        _
      $region52: #{model_forward.1} parent=11 // pred_fallthru
        _
      // Predicated region
      $region53: #{model_forward.1} parent=11 // pred_check
        %p368 = pneg %p276
      $region54: #{model_forward.1} parent=11 // pred_check_branch
        %370 = sbr.rel (%p368) target = $region56
      $region55: #{model_forward.1} parent=11 // pred_region
        _
      $region56: #{model_forward.1} parent=11 // pred_fallthru
        _
      // Predicated region
      $region57: #{model_forward.1} parent=11 // pred_check
        %p371 = pneg %p297
      $region58: #{model_forward.1} parent=11 // pred_check_branch
        %373 = sbr.rel (%p371) target = $region60
      $region59: #{model_forward.1} parent=11 // pred_region
        _
      $region60: #{model_forward.1} parent=11 // pred_fallthru
        _
    $region12: #{model_forward.1} parent=5 // pred_fallthru
      _
    %p374 = scmp.lt.s32.totalorder %s19, 2
    // Predicated region
    $region61: #{model_forward.1} parent=5 // pred_check
      %p375 = pneg %p374
    $region62: #{model_forward.1} parent=5 // pred_check_branch
      %377 = sbr.rel (%p375) target = $region64
    $region63: #{model_forward.1} parent=5 // pred_region
      // Predicated region
      $region65: #{model_forward.1} parent=63 // pred_check
        %p378 = pneg %p39
      $region66: #{model_forward.1} parent=63 // pred_check_branch
        %380 = sbr.rel (%p378) target = $region68
      $region67: #{model_forward.1} parent=63 // pred_region
        %p381 = scmp.lt.s32.totalorder %s19, 1
        %s382 = scalar_select %p381, %s19, 1
        %s383 = smul.addr %s382, 2
        %s384 = smul.addr %s383, 4
        %s385 = scalar_lea.vmem %s0, %s384
      $region68: #{model_forward.1} parent=63 // pred_fallthru
        _
    $region64: #{model_forward.1} parent=5 // pred_fallthru
      _
    %p386 = scmp.le.s32.totalorder 1, %s19
    %p387 = scmp.lt.s32.totalorder %s19, 3
    %p388 = pnand %p386, %p387
    %p389 = pneg %p388
    // Predicated region
    $region69: #{model_forward.1} parent=5 // pred_check
      _
    $region70: #{model_forward.1} parent=5 // pred_check_branch
      %391 = sbr.rel (%p388) target = $region72
    $region71: #{model_forward.1} parent=5 // pred_region
      %s392 = ssub.s32 %s19, 1
      %p393 = scmp.lt.s32.totalorder %s24, 1
      %s394 = scalar_select %p393, %s24, 1
      %s395 = smul.addr %s394, 2
      %s396 = smul.addr %s395, 4
      %s397 = scalar_lea.vmem %s0, %s396
      %p398 = pneg %p45
      %p399 = pneg %p42
      %p400 = pneg %p66
      %p401 = pneg %p63
      %p402 = pneg %p87
      %p403 = pneg %p84
      %p404 = pneg %p108
      %p405 = pneg %p105
      %p406 = pneg %p129
      %p407 = pneg %p126
      %p408 = pneg %p150
      %p409 = pneg %p147
      %p410 = pneg %p171
      %p411 = pneg %p168
      %p412 = pneg %p192
      %p413 = pneg %p189
      %p414 = pneg %p213
      %p415 = pneg %p210
      %p416 = pneg %p234
      %p417 = pneg %p231
      %p418 = pneg %p255
      %p419 = pneg %p252
      %p420 = pneg %p276
      %p421 = pneg %p273
      %p422 = pneg %p297
      %p423 = pneg %p294
      %p424 = pneg %p323
      %p425 = pneg %p320
      %p426 = scmp.lt.s32.totalorder %s24, 1
      %s427 = scalar_select %p426, %s24, 1
      %s428 = smul.addr %s427, 12
      %s429 = smul.addr %s428, 8
      %s430 = scalar_lea.vmem %s13, %s429
      %p431 = scmp.lt.s32.totalorder %s24, 1
      %s432 = scalar_select %p431, %s24, 1
      %s433 = smul.addr %s432, 2
      %s434 = smul.addr %s433, 4
      %s435 = scalar_lea.vmem %s0, %s434
      %p436 = scmp.lt.s32.totalorder %s24, 1
      %s437 = scalar_select %p436, %s24, 1
      %s438 = smul.addr %s437, 12
      %s439 = smul.addr %s438, 8
      %s440 = scalar_lea.vmem %s13, %s439
      %v442 = vld [vmem:[%s435] sm:$0x77]
      %v443 = vld [vmem:[%s1] sm:$0x3]
      %445 = vst [vmem:[#allocation1] ss:$2 sm:$0xff] %v442
      %v446 = vld.sshfl [vmem:[#allocation1] sm:$0xff pattern:$0x75316420]
      %v447 = vld.sshfl [vmem:[#allocation1 + $0x8] sm:$0xff pattern:$0x75316420]
      %450 = vrot.lane.b32.xlu0 %v446, 26
      %v451 = vpop.permute.xlu0 %450
      %452 = vrot.lane.b32.xlu0 %v447, 26
      %v453 = vpop.permute.xlu0 %452
      %v454 = vlaneseq
      %v455 = vand.u32 %v454, 127
      %vm456 = vcmp.lt.s32.totalorder %v455, 26
      %v457 = vsel %vm456, %v451, %v453
      %v458 = vsel %vm456, %v453, %v451
      %459 = vst [vmem:[#allocation1] ss:$2 sm:$0xff] %v442
      %v460 = vld.sshfl [vmem:[#allocation1] sm:$0xff pattern:$0x75316420]
      %v461 = vld.sshfl [vmem:[#allocation1 + $0x8] sm:$0xff pattern:$0x75316420]
      %464 = vrot.lane.b32.xlu0 %v460, 25
      %v465 = vpop.permute.xlu0 %464
      %466 = vrot.lane.b32.xlu0 %v461, 25
      %v467 = vpop.permute.xlu0 %466
      %vm468 = vcmp.lt.s32.totalorder %v455, 25
      %v469 = vsel %vm468, %v465, %v467
      %v470 = vsel %vm468, %v467, %v465
      %471 = vst [vmem:[#allocation1] ss:$2 sm:$0xff] %v442
      %v472 = vld.sshfl [vmem:[#allocation1] sm:$0xff pattern:$0x75316420]
      %v473 = vld.sshfl [vmem:[#allocation1 + $0x8] sm:$0xff pattern:$0x75316420]
      %476 = vrot.lane.b32.xlu0 %v472, 24
      %v477 = vpop.permute.xlu0 %476
      %478 = vrot.lane.b32.xlu0 %v473, 24
      %v479 = vpop.permute.xlu0 %478
      %vm480 = vcmp.lt.s32.totalorder %v455, 24
      %v481 = vsel %vm480, %v477, %v479
      %v482 = vsel %vm480, %v479, %v477
      %483 = vst [vmem:[#allocation1] ss:$2 sm:$0xff] %v442
      %v484 = vld.sshfl [vmem:[#allocation1] sm:$0xff pattern:$0x75316420]
      %v485 = vld.sshfl [vmem:[#allocation1 + $0x8] sm:$0xff pattern:$0x75316420]
      %488 = vrot.lane.b32.xlu0 %v484, 23
      %v489 = vpop.permute.xlu0 %488
      %490 = vrot.lane.b32.xlu0 %v485, 23
      %v491 = vpop.permute.xlu0 %490
      %vm492 = vcmp.lt.s32.totalorder %v455, 23
      %v493 = vsel %vm492, %v489, %v491
      %v494 = vsel %vm492, %v491, %v489
      %495 = vst [vmem:[#allocation1] ss:$2 sm:$0xff] %v442
      %v496 = vld.sshfl [vmem:[#allocation1] sm:$0xff pattern:$0x75316420]
      %v497 = vld.sshfl [vmem:[#allocation1 + $0x8] sm:$0xff pattern:$0x75316420]
      %500 = vrot.lane.b32.xlu0 %v496, 22
      %v501 = vpop.permute.xlu0 %500
      %502 = vrot.lane.b32.xlu0 %v497, 22
      %v503 = vpop.permute.xlu0 %502
      %vm504 = vcmp.lt.s32.totalorder %v455, 22
      %v505 = vsel %vm504, %v501, %v503
      %v506 = vsel %vm504, %v503, %v501
      %507 = vst [vmem:[#allocation1] ss:$2 sm:$0xff] %v442
      %v508 = vld.sshfl [vmem:[#allocation1] sm:$0xff pattern:$0x75316420]
      %v509 = vld.sshfl [vmem:[#allocation1 + $0x8] sm:$0xff pattern:$0x75316420]
      %512 = vrot.lane.b32.xlu0 %v508, 14
      %v513 = vpop.permute.xlu0 %512
      %514 = vrot.lane.b32.xlu0 %v509, 14
      %v515 = vpop.permute.xlu0 %514
      %vm516 = vcmp.lt.s32.totalorder %v455, 14
      %v517 = vsel %vm516, %v513, %v515
      %v518 = vsel %vm516, %v515, %v513
      %519 = vst [vmem:[#allocation1] ss:$2 sm:$0xff] %v442
      %v520 = vld.sshfl [vmem:[#allocation1] sm:$0xff pattern:$0x75316420]
      %v521 = vld.sshfl [vmem:[#allocation1 + $0x8] sm:$0xff pattern:$0x75316420]
      %524 = vrot.lane.b32.xlu0 %v520, 13
      %v525 = vpop.permute.xlu0 %524
      %526 = vrot.lane.b32.xlu0 %v521, 13
      %v527 = vpop.permute.xlu0 %526
      %vm528 = vcmp.lt.s32.totalorder %v455, 13
      %v529 = vsel %vm528, %v525, %v527
      %v530 = vsel %vm528, %v527, %v525
      %531 = vst [vmem:[#allocation1] ss:$2 sm:$0xff] %v442
      %v532 = vld.sshfl [vmem:[#allocation1] sm:$0xff pattern:$0x75316420]
      %v533 = vld.sshfl [vmem:[#allocation1 + $0x8] sm:$0xff pattern:$0x75316420]
      %536 = vrot.lane.b32.xlu0 %v532, 12
      %v537 = vpop.permute.xlu0 %536
      %538 = vrot.lane.b32.xlu0 %v533, 12
      %v539 = vpop.permute.xlu0 %538
      %vm540 = vcmp.lt.s32.totalorder %v455, 12
      %v541 = vsel %vm540, %v537, %v539
      %v542 = vsel %vm540, %v539, %v537
      %543 = vst [vmem:[#allocation1] ss:$2 sm:$0xff] %v442
      %v544 = vld.sshfl [vmem:[#allocation1] sm:$0xff pattern:$0x75316420]
      %v545 = vld.sshfl [vmem:[#allocation1 + $0x8] sm:$0xff pattern:$0x75316420]
      %548 = vrot.lane.b32.xlu0 %v544, 11
      %v549 = vpop.permute.xlu0 %548
      %550 = vrot.lane.b32.xlu0 %v545, 11
      %v551 = vpop.permute.xlu0 %550
      %vm552 = vcmp.lt.s32.totalorder %v455, 11
      %v553 = vsel %vm552, %v549, %v551
      %v554 = vsel %vm552, %v551, %v549
      %555 = vst [vmem:[#allocation1] ss:$2 sm:$0xff] %v442
      %v556 = vld.sshfl [vmem:[#allocation1] sm:$0xff pattern:$0x75316420]
      %v557 = vld.sshfl [vmem:[#allocation1 + $0x8] sm:$0xff pattern:$0x75316420]
      %560 = vrot.lane.b32.xlu0 %v556, 10
      %v561 = vpop.permute.xlu0 %560
      %562 = vrot.lane.b32.xlu0 %v557, 10
      %v563 = vpop.permute.xlu0 %562
      %vm564 = vcmp.lt.s32.totalorder %v455, 10
      %v565 = vsel %vm564, %v561, %v563
      %v566 = vsel %vm564, %v563, %v561
      %567 = vst [vmem:[#allocation1] ss:$2 sm:$0xff] %v442
      %v568 = vld.sshfl [vmem:[#allocation1] sm:$0xff pattern:$0x75316420]
      %v569 = vld.sshfl [vmem:[#allocation1 + $0x8] sm:$0xff pattern:$0x75316420]
      %572 = vrot.lane.b32.xlu0 %v568, 2
      %v573 = vpop.permute.xlu0 %572
      %574 = vrot.lane.b32.xlu0 %v569, 2
      %v575 = vpop.permute.xlu0 %574
      %vm576 = vcmp.lt.s32.totalorder %v455, 2
      %v577 = vsel %vm576, %v573, %v575
      %v578 = vsel %vm576, %v575, %v573
      %579 = vst [vmem:[#allocation1] ss:$2 sm:$0xff] %v442
      %v580 = vld.sshfl [vmem:[#allocation1] sm:$0xff pattern:$0x75316420]
      %v581 = vld.sshfl [vmem:[#allocation1 + $0x8] sm:$0xff pattern:$0x75316420]
      %584 = vrot.lane.b32.xlu0 %v580, 1
      %v585 = vpop.permute.xlu0 %584
      %586 = vrot.lane.b32.xlu0 %v581, 1
      %v587 = vpop.permute.xlu0 %586
      %vm588 = vcmp.lt.s32.totalorder %v455, 1
      %v589 = vsel %vm588, %v585, %v587
      %v590 = vsel %vm588, %v587, %v585
      %591 = vst [vmem:[#allocation1] ss:$2 sm:$0xff] %v442
      %v592 = vld.sshfl [vmem:[#allocation1] sm:$0xff pattern:$0x75316420]
      %v593 = vld.sshfl [vmem:[#allocation1 + $0x8] sm:$0xff pattern:$0x75316420]
      %596 = vrot.lane.b32.xlu0 %v592, 127
      %v597 = vpop.permute.xlu0 %596
      %598 = vrot.lane.b32.xlu0 %v593, 127
      %v599 = vpop.permute.xlu0 %598
      %vm600 = vcmp.lt.s32.totalorder %v455, 127
      %v601 = vsel %vm600, %v597, %v599
      %v602 = vsel %vm600, %v599, %v597
      %603 = vst [vmem:[#allocation1] ss:$2 sm:$0xff] %v442
      %v604 = vld.sshfl [vmem:[#allocation1] sm:$0xff pattern:$0x75316420]
      %v605 = vld.sshfl [vmem:[#allocation1 + $0x8] sm:$0xff pattern:$0x75316420]
      %608 = vrot.lane.b32.xlu0 %v604, 126
      %v609 = vpop.permute.xlu0 %608
      %610 = vrot.lane.b32.xlu0 %v605, 126
      %v611 = vpop.permute.xlu0 %610
      %vm612 = vcmp.lt.s32.totalorder %v455, 126
      %v613 = vsel %vm612, %v609, %v611
      %v614 = vsel %vm612, %v611, %v609
      %615 = vst [vmem:[#allocation1] ss:$2 sm:$0xff] %v442
      %v616 = vld.sshfl [vmem:[#allocation1] sm:$0xff pattern:$0x75316420]
      %v617 = vld.sshfl [vmem:[#allocation1 + $0x8] sm:$0xff pattern:$0x75316420]
      %620 = vrot.lane.b32.xlu0 %v616, 118
      %v621 = vpop.permute.xlu0 %620
      %622 = vrot.lane.b32.xlu0 %v617, 118
      %v623 = vpop.permute.xlu0 %622
      %vm624 = vcmp.lt.s32.totalorder %v455, 118
      %v625 = vsel %vm624, %v621, %v623
      %v626 = vsel %vm624, %v623, %v621
      %627 = vst [vmem:[#allocation1] ss:$2 sm:$0xff] %v442
      %v628 = vld.sshfl [vmem:[#allocation1] sm:$0xff pattern:$0x75316420]
      %v629 = vld.sshfl [vmem:[#allocation1 + $0x8] sm:$0xff pattern:$0x75316420]
      %632 = vrot.lane.b32.xlu0 %v628, 117
      %v633 = vpop.permute.xlu0 %632
      %634 = vrot.lane.b32.xlu0 %v629, 117
      %v635 = vpop.permute.xlu0 %634
      %vm636 = vcmp.lt.s32.totalorder %v455, 117
      %v637 = vsel %vm636, %v633, %v635
      %v638 = vsel %vm636, %v635, %v633
      %639 = vst [vmem:[#allocation1] ss:$2 sm:$0xff] %v442
      %v640 = vld.sshfl [vmem:[#allocation1] sm:$0xff pattern:$0x75316420]
      %v641 = vld.sshfl [vmem:[#allocation1 + $0x8] sm:$0xff pattern:$0x75316420]
      %644 = vrot.lane.b32.xlu0 %v640, 116
      %v645 = vpop.permute.xlu0 %644
      %646 = vrot.lane.b32.xlu0 %v641, 116
      %v647 = vpop.permute.xlu0 %646
      %vm648 = vcmp.lt.s32.totalorder %v455, 116
      %v649 = vsel %vm648, %v645, %v647
      %v650 = vsel %vm648, %v647, %v645
      %651 = vst [vmem:[#allocation1] ss:$2 sm:$0xff] %v442
      %v652 = vld.sshfl [vmem:[#allocation1] sm:$0xff pattern:$0x75316420]
      %v653 = vld.sshfl [vmem:[#allocation1 + $0x8] sm:$0xff pattern:$0x75316420]
      %656 = vrot.lane.b32.xlu0 %v652, 115
      %v657 = vpop.permute.xlu0 %656
      %658 = vrot.lane.b32.xlu0 %v653, 115
      %v659 = vpop.permute.xlu0 %658
      %vm660 = vcmp.lt.s32.totalorder %v455, 115
      %v661 = vsel %vm660, %v657, %v659
      %v662 = vsel %vm660, %v659, %v657
      %663 = vst [vmem:[#allocation1] ss:$2 sm:$0xff] %v442
      %v664 = vld.sshfl [vmem:[#allocation1] sm:$0xff pattern:$0x75316420]
      %v665 = vld.sshfl [vmem:[#allocation1 + $0x8] sm:$0xff pattern:$0x75316420]
      %668 = vrot.lane.b32.xlu0 %v664, 114
      %v669 = vpop.permute.xlu0 %668
      %670 = vrot.lane.b32.xlu0 %v665, 114
      %v671 = vpop.permute.xlu0 %670
      %vm672 = vcmp.lt.s32.totalorder %v455, 114
      %v673 = vsel %vm672, %v669, %v671
      %v674 = vsel %vm672, %v671, %v669
      %675 = vst [vmem:[#allocation1] ss:$2 sm:$0xff] %v442
      %v676 = vld.sshfl [vmem:[#allocation1] sm:$0xff pattern:$0x75316420]
      %v677 = vld.sshfl [vmem:[#allocation1 + $0x8] sm:$0xff pattern:$0x75316420]
      %680 = vrot.lane.b32.xlu0 %v676, 106
      %v681 = vpop.permute.xlu0 %680
      %682 = vrot.lane.b32.xlu0 %v677, 106
      %v683 = vpop.permute.xlu0 %682
      %vm684 = vcmp.lt.s32.totalorder %v455, 106
      %v685 = vsel %vm684, %v681, %v683
      %v686 = vsel %vm684, %v683, %v681
      %687 = vst [vmem:[#allocation1] ss:$2 sm:$0xff] %v442
      %v688 = vld.sshfl [vmem:[#allocation1] sm:$0xff pattern:$0x75316420]
      %v689 = vld.sshfl [vmem:[#allocation1 + $0x8] sm:$0xff pattern:$0x75316420]
      %692 = vrot.lane.b32.xlu0 %v688, 105
      %v693 = vpop.permute.xlu0 %692
      %694 = vrot.lane.b32.xlu0 %v689, 105
      %v695 = vpop.permute.xlu0 %694
      %vm696 = vcmp.lt.s32.totalorder %v455, 105
      %v697 = vsel %vm696, %v693, %v695
      %v698 = vsel %vm696, %v695, %v693
      %699 = vst [vmem:[#allocation1] ss:$2 sm:$0xff] %v442
      %v700 = vld.sshfl [vmem:[#allocation1] sm:$0xff pattern:$0x75316420]
      %v701 = vld.sshfl [vmem:[#allocation1 + $0x8] sm:$0xff pattern:$0x75316420]
      %704 = vrot.lane.b32.xlu0 %v700, 104
      %v705 = vpop.permute.xlu0 %704
      %706 = vrot.lane.b32.xlu0 %v701, 104
      %v707 = vpop.permute.xlu0 %706
      %vm708 = vcmp.lt.s32.totalorder %v455, 104
      %v709 = vsel %vm708, %v705, %v707
      %v710 = vsel %vm708, %v707, %v705
      %711 = vst [vmem:[#allocation1] ss:$2 sm:$0xff] %v442
      %v712 = vld.sshfl [vmem:[#allocation1] sm:$0xff pattern:$0x75316420]
      %v713 = vld.sshfl [vmem:[#allocation1 + $0x8] sm:$0xff pattern:$0x75316420]
      %716 = vrot.lane.b32.xlu0 %v712, 103
      %v717 = vpop.permute.xlu0 %716
      %718 = vrot.lane.b32.xlu0 %v713, 103
      %v719 = vpop.permute.xlu0 %718
      %vm720 = vcmp.lt.s32.totalorder %v455, 103
      %v721 = vsel %vm720, %v717, %v719
      %v722 = vsel %vm720, %v719, %v717
      %723 = vst [vmem:[#allocation1] ss:$2 sm:$0xff] %v442
      %v724 = vld.sshfl [vmem:[#allocation1] sm:$0xff pattern:$0x75316420]
      %v725 = vld.sshfl [vmem:[#allocation1 + $0x8] sm:$0xff pattern:$0x75316420]
      %728 = vrot.lane.b32.xlu0 %v724, 102
      %v729 = vpop.permute.xlu0 %728
      %730 = vrot.lane.b32.xlu0 %v725, 102
      %v731 = vpop.permute.xlu0 %730
      %vm732 = vcmp.lt.s32.totalorder %v455, 102
      %v733 = vsel %vm732, %v729, %v731
      %v734 = vsel %vm732, %v731, %v729
      %v735 = vld [vmem:[%s10] sm:$0xff]
      %v736 = vld [vmem:[%s10 + $0x8] sm:$0xff]
      %v737 = vld [vmem:[%s10 + $0x10] sm:$0xff]
      %v738 = vld [vmem:[%s10 + $0x18] sm:$0xff]
      %v739 = vld [vmem:[%s10 + $0x20] sm:$0xff]
      %v740 = vld [vmem:[%s10 + $0x28] sm:$0xff]
      %s741 = scalar_lea.vmem %s10, 48
      %v742 = vld [vmem:[%s741] sm:$0xff]
      %v743 = vld [vmem:[%s741 + $0x8] sm:$0xff]
      %v744 = vld [vmem:[%s741 + $0x10] sm:$0xff]
      %v745 = vld [vmem:[%s741 + $0x18] sm:$0xff]
      %v746 = vld [vmem:[%s741 + $0x20] sm:$0xff]
      %v747 = vld [vmem:[%s741 + $0x28] sm:$0xff]
      %vm748 = vcmask 23552
      %v750 = vsel %vm748, %v742, 0
      %v753 = vsel %vm748, %v743, 0
      %v756 = vsel %vm748, %v744, 0
      %v759 = vsel %vm748, %v745, 0
      %v762 = vsel %vm748, %v746, 0
      %v765 = vsel %vm748, %v747, 0
      %vm767 = vcmask 1042432
      %v769 = vsel %vm767, %v470, 0
      %v772 = vsel %vm767, %v469, 0
      %774 = vmatpush.msra.mxu0 0.0
      %775 = vmatpush.msra.mxu0 0.0
      %776 = vmatpush.msra.mxu0 0.0
      %777 = vmatpush.msra.mxu0 0.0
      %778 = vmatpush.msra.mxu0 0.0
      %779 = vmatpush.msra.mxu0 0.0
      %780 = vmatpush.msra.mxu0 0.0
      %781 = vmatpush.msra.mxu0 0.0
      %782 = vmatpush.msra.mxu0 0.0
      %783 = vmatpush.msra.mxu0 0.0
      %784 = vmatpush.msra.mxu0 0.0
      %785 = vmatpush.msra.mxu0 0.0
      %786 = vmatpush.msra.mxu0 0.0
      %787 = vmatpush.msra.mxu0 0.0
      %788 = vmatpush.msra.mxu0 0.0
      %789 = vmatpush.msra.mxu0 %v769
      %790 = vmatmul.f32.gmra.mxu0 %v750
      %v791 = vpop.f32.mrf.mxu0
      %v792 = vadd.f32 0.0, %v791
      %793 = vmatmul.f32.gmra.mxu0 %v753
      %v794 = vpop.f32.mrf.mxu0
      %v795 = vadd.f32 0.0, %v794
      %796 = vmatmul.f32.gmra.mxu0 %v756
      %v797 = vpop.f32.mrf.mxu0
      %v798 = vadd.f32 0.0, %v797
      %799 = vmatmul.f32.gmra.mxu0 %v759
      %v800 = vpop.f32.mrf.mxu0
      %v801 = vadd.f32 0.0, %v800
      %802 = vmatmul.f32.gmra.mxu0 %v762
      %v803 = vpop.f32.mrf.mxu0
      %v804 = vadd.f32 0.0, %v803
      %805 = vmatmul.f32.gmra.mxu0 %v765
      %v806 = vpop.f32.mrf.mxu0
      %v807 = vadd.f32 0.0, %v806
      %808 = vdwg.mxu0
      %809 = vmatpush.msra.mxu0 0.0
      %810 = vmatpush.msra.mxu0 0.0
      %811 = vmatpush.msra.mxu0 0.0
      %812 = vmatpush.msra.mxu0 0.0
      %813 = vmatpush.msra.mxu0 0.0
      %814 = vmatpush.msra.mxu0 0.0
      %815 = vmatpush.msra.mxu0 0.0
      %816 = vmatpush.msra.mxu0 0.0
      %817 = vmatpush.msra.mxu0 0.0
      %818 = vmatpush.msra.mxu0 0.0
      %819 = vmatpush.msra.mxu0 0.0
      %820 = vmatpush.msra.mxu0 0.0
      %821 = vmatpush.msra.mxu0 0.0
      %822 = vmatpush.msra.mxu0 0.0
      %823 = vmatpush.msra.mxu0 0.0
      %824 = vmatpush.msra.mxu0 %v772
      %825 = vmatmul.f32.gmra.mxu0 %v750
      %v826 = vpop.f32.mrf.mxu0
      %v827 = vadd.f32 0.0, %v826
      %828 = vmatmul.f32.gmra.mxu0 %v753
      %v829 = vpop.f32.mrf.mxu0
      %v830 = vadd.f32 0.0, %v829
      %831 = vmatmul.f32.gmra.mxu0 %v756
      %v832 = vpop.f32.mrf.mxu0
      %v833 = vadd.f32 0.0, %v832
      %834 = vmatmul.f32.gmra.mxu0 %v759
      %v835 = vpop.f32.mrf.mxu0
      %v836 = vadd.f32 0.0, %v835
      %837 = vmatmul.f32.gmra.mxu0 %v762
      %v838 = vpop.f32.mrf.mxu0
      %v839 = vadd.f32 0.0, %v838
      %840 = vmatmul.f32.gmra.mxu0 %v765
      %v841 = vpop.f32.mrf.mxu0
      %v842 = vadd.f32 0.0, %v841
      %843 = vdwg.mxu0
      %v845 = vsel %vm748, %v735, 0
      %v848 = vsel %vm748, %v736, 0
      %v851 = vsel %vm748, %v737, 0
      %v854 = vsel %vm748, %v738, 0
      %v857 = vsel %vm748, %v739, 0
      %v860 = vsel %vm748, %v740, 0
      %v863 = vsel %vm767, %v458, 0
      %v866 = vsel %vm767, %v457, 0
      %868 = vmatpush.msra.mxu0 0.0
      %869 = vmatpush.msra.mxu0 0.0
      %870 = vmatpush.msra.mxu0 0.0
      %871 = vmatpush.msra.mxu0 0.0
      %872 = vmatpush.msra.mxu0 0.0
      %873 = vmatpush.msra.mxu0 0.0
      %874 = vmatpush.msra.mxu0 0.0
      %875 = vmatpush.msra.mxu0 0.0
      %876 = vmatpush.msra.mxu0 0.0
      %877 = vmatpush.msra.mxu0 0.0
      %878 = vmatpush.msra.mxu0 0.0
      %879 = vmatpush.msra.mxu0 0.0
      %880 = vmatpush.msra.mxu0 0.0
      %881 = vmatpush.msra.mxu0 0.0
      %882 = vmatpush.msra.mxu0 0.0
      %883 = vmatpush.msra.mxu0 %v863
      %884 = vmatmul.f32.gmra.mxu0 %v845
      %v885 = vpop.f32.mrf.mxu0
      %v886 = vadd.f32 %v792, %v885
      %887 = vmatmul.f32.gmra.mxu0 %v848
      %v888 = vpop.f32.mrf.mxu0
      %v889 = vadd.f32 %v795, %v888
      %890 = vmatmul.f32.gmra.mxu0 %v851
      %v891 = vpop.f32.mrf.mxu0
      %v892 = vadd.f32 %v798, %v891
      %893 = vmatmul.f32.gmra.mxu0 %v854
      %v894 = vpop.f32.mrf.mxu0
      %v895 = vadd.f32 %v801, %v894
      %896 = vmatmul.f32.gmra.mxu0 %v857
      %v897 = vpop.f32.mrf.mxu0
      %v898 = vadd.f32 %v804, %v897
      %899 = vmatmul.f32.gmra.mxu0 %v860
      %v900 = vpop.f32.mrf.mxu0
      %v901 = vadd.f32 %v807, %v900
      %902 = vdwg.mxu0
      %903 = vmatpush.msra.mxu0 0.0
      %904 = vmatpush.msra.mxu0 0.0
      %905 = vmatpush.msra.mxu0 0.0
      %906 = vmatpush.msra.mxu0 0.0
      %907 = vmatpush.msra.mxu0 0.0
      %908 = vmatpush.msra.mxu0 0.0
      %909 = vmatpush.msra.mxu0 0.0
      %910 = vmatpush.msra.mxu0 0.0
      %911 = vmatpush.msra.mxu0 0.0
      %912 = vmatpush.msra.mxu0 0.0
      %913 = vmatpush.msra.mxu0 0.0
      %914 = vmatpush.msra.mxu0 0.0
      %915 = vmatpush.msra.mxu0 0.0
      %916 = vmatpush.msra.mxu0 0.0
      %917 = vmatpush.msra.mxu0 0.0
      %918 = vmatpush.msra.mxu0 %v866
      %919 = vmatmul.f32.gmra.mxu0 %v845
      %v920 = vpop.f32.mrf.mxu0
      %v921 = vadd.f32 %v827, %v920
      %922 = vmatmul.f32.gmra.mxu0 %v848
      %v923 = vpop.f32.mrf.mxu0
      %v924 = vadd.f32 %v830, %v923
      %925 = vmatmul.f32.gmra.mxu0 %v851
      %v926 = vpop.f32.mrf.mxu0
      %v927 = vadd.f32 %v833, %v926
      %928 = vmatmul.f32.gmra.mxu0 %v854
      %v929 = vpop.f32.mrf.mxu0
      %v930 = vadd.f32 %v836, %v929
      %931 = vmatmul.f32.gmra.mxu0 %v857
      %v932 = vpop.f32.mrf.mxu0
      %v933 = vadd.f32 %v839, %v932
      %934 = vmatmul.f32.gmra.mxu0 %v860
      %v935 = vpop.f32.mrf.mxu0
      %v936 = vadd.f32 %v842, %v935
      %937 = vdwg.mxu0
      %s938 = scalar_lea.vmem %s10, 96
      %v939 = vld [vmem:[%s938] sm:$0xff]
      %v940 = vld [vmem:[%s938 + $0x8] sm:$0xff]
      %v941 = vld [vmem:[%s938 + $0x10] sm:$0xff]
      %v942 = vld [vmem:[%s938 + $0x18] sm:$0xff]
      %v943 = vld [vmem:[%s938 + $0x20] sm:$0xff]
      %v944 = vld [vmem:[%s938 + $0x28] sm:$0xff]
      %v946 = vsel %vm748, %v939, 0
      %v949 = vsel %vm748, %v940, 0
      %v952 = vsel %vm748, %v941, 0
      %v955 = vsel %vm748, %v942, 0
      %v958 = vsel %vm748, %v943, 0
      %v961 = vsel %vm748, %v944, 0
      %v964 = vsel %vm767, %v482, 0
      %v967 = vsel %vm767, %v481, 0
      %969 = vmatpush.msra.mxu0 0.0
      %970 = vmatpush.msra.mxu0 0.0
      %971 = vmatpush.msra.mxu0 0.0
      %972 = vmatpush.msra.mxu0 0.0
      %973 = vmatpush.msra.mxu0 0.0
      %974 = vmatpush.msra.mxu0 0.0
      %975 = vmatpush.msra.mxu0 0.0
      %976 = vmatpush.msra.mxu0 0.0
      %977 = vmatpush.msra.mxu0 0.0
      %978 = vmatpush.msra.mxu0 0.0
      %979 = vmatpush.msra.mxu0 0.0
      %980 = vmatpush.msra.mxu0 0.0
      %981 = vmatpush.msra.mxu0 0.0
      %982 = vmatpush.msra.mxu0 0.0
      %983 = vmatpush.msra.mxu0 0.0
      %984 = vmatpush.msra.mxu0 %v964
      %985 = vmatmul.f32.gmra.mxu0 %v946
      %v986 = vpop.f32.mrf.mxu0
      %v987 = vadd.f32 0.0, %v986
      %988 = vmatmul.f32.gmra.mxu0 %v949
      %v989 = vpop.f32.mrf.mxu0
      %v990 = vadd.f32 0.0, %v989
      %991 = vmatmul.f32.gmra.mxu0 %v952
      %v992 = vpop.f32.mrf.mxu0
      %v993 = vadd.f32 0.0, %v992
      %994 = vmatmul.f32.gmra.mxu0 %v955
      %v995 = vpop.f32.mrf.mxu0
      %v996 = vadd.f32 0.0, %v995
      %997 = vmatmul.f32.gmra.mxu0 %v958
      %v998 = vpop.f32.mrf.mxu0
      %v999 = vadd.f32 0.0, %v998
      %1000 = vmatmul.f32.gmra.mxu0 %v961
      %v1001 = vpop.f32.mrf.mxu0
      %v1002 = vadd.f32 0.0, %v1001
      %1003 = vdwg.mxu0
      %1004 = vmatpush.msra.mxu0 0.0
      %1005 = vmatpush.msra.mxu0 0.0
      %1006 = vmatpush.msra.mxu0 0.0
      %1007 = vmatpush.msra.mxu0 0.0
      %1008 = vmatpush.msra.mxu0 0.0
      %1009 = vmatpush.msra.mxu0 0.0
      %1010 = vmatpush.msra.mxu0 0.0
      %1011 = vmatpush.msra.mxu0 0.0
      %1012 = vmatpush.msra.mxu0 0.0
      %1013 = vmatpush.msra.mxu0 0.0
      %1014 = vmatpush.msra.mxu0 0.0
      %1015 = vmatpush.msra.mxu0 0.0
      %1016 = vmatpush.msra.mxu0 0.0
      %1017 = vmatpush.msra.mxu0 0.0
      %1018 = vmatpush.msra.mxu0 0.0
      %1019 = vmatpush.msra.mxu0 %v967
      %1020 = vmatmul.f32.gmra.mxu0 %v946
      %v1021 = vpop.f32.mrf.mxu0
      %v1022 = vadd.f32 0.0, %v1021
      %1023 = vmatmul.f32.gmra.mxu0 %v949
      %v1024 = vpop.f32.mrf.mxu0
      %v1025 = vadd.f32 0.0, %v1024
      %1026 = vmatmul.f32.gmra.mxu0 %v952
      %v1027 = vpop.f32.mrf.mxu0
      %v1028 = vadd.f32 0.0, %v1027
      %1029 = vmatmul.f32.gmra.mxu0 %v955
      %v1030 = vpop.f32.mrf.mxu0
      %v1031 = vadd.f32 0.0, %v1030
      %1032 = vmatmul.f32.gmra.mxu0 %v958
      %v1033 = vpop.f32.mrf.mxu0
      %v1034 = vadd.f32 0.0, %v1033
      %1035 = vmatmul.f32.gmra.mxu0 %v961
      %v1036 = vpop.f32.mrf.mxu0
      %v1037 = vadd.f32 0.0, %v1036
      %1038 = vdwg.mxu0
      %v1039 = vadd.f32 %v886, %v987
      %v1040 = vadd.f32 %v921, %v1022
      %v1041 = vadd.f32 %v889, %v990
      %v1042 = vadd.f32 %v924, %v1025
      %v1043 = vadd.f32 %v892, %v993
      %v1044 = vadd.f32 %v927, %v1028
      %v1045 = vadd.f32 %v895, %v996
      %v1046 = vadd.f32 %v930, %v1031
      %v1047 = vadd.f32 %v898, %v999
      %v1048 = vadd.f32 %v933, %v1034
      %v1049 = vadd.f32 %v901, %v1002
      %v1050 = vadd.f32 %v936, %v1037
      %s1051 = scalar_lea.vmem %s10, 144
      %v1052 = vld [vmem:[%s1051] sm:$0xff]
      %v1053 = vld [vmem:[%s1051 + $0x8] sm:$0xff]
      %v1054 = vld [vmem:[%s1051 + $0x10] sm:$0xff]
      %v1055 = vld [vmem:[%s1051 + $0x18] sm:$0xff]
      %v1056 = vld [vmem:[%s1051 + $0x20] sm:$0xff]
      %v1057 = vld [vmem:[%s1051 + $0x28] sm:$0xff]
      %v1059 = vsel %vm748, %v1052, 0
      %v1062 = vsel %vm748, %v1053, 0
      %v1065 = vsel %vm748, %v1054, 0
      %v1068 = vsel %vm748, %v1055, 0
      %v1071 = vsel %vm748, %v1056, 0
      %v1074 = vsel %vm748, %v1057, 0
      %v1077 = vsel %vm767, %v494, 0
      %v1080 = vsel %vm767, %v493, 0
      %1082 = vmatpush.msra.mxu0 0.0
      %1083 = vmatpush.msra.mxu0 0.0
      %1084 = vmatpush.msra.mxu0 0.0
      %1085 = vmatpush.msra.mxu0 0.0
      %1086 = vmatpush.msra.mxu0 0.0
      %1087 = vmatpush.msra.mxu0 0.0
      %1088 = vmatpush.msra.mxu0 0.0
      %1089 = vmatpush.msra.mxu0 0.0
      %1090 = vmatpush.msra.mxu0 0.0
      %1091 = vmatpush.msra.mxu0 0.0
      %1092 = vmatpush.msra.mxu0 0.0
      %1093 = vmatpush.msra.mxu0 0.0
      %1094 = vmatpush.msra.mxu0 0.0
      %1095 = vmatpush.msra.mxu0 0.0
      %1096 = vmatpush.msra.mxu0 0.0
      %1097 = vmatpush.msra.mxu0 %v1077
      %1098 = vmatmul.f32.gmra.mxu0 %v1059
      %v1099 = vpop.f32.mrf.mxu0
      %v1100 = vadd.f32 0.0, %v1099
      %1101 = vmatmul.f32.gmra.mxu0 %v1062
      %v1102 = vpop.f32.mrf.mxu0
      %v1103 = vadd.f32 0.0, %v1102
      %1104 = vmatmul.f32.gmra.mxu0 %v1065
      %v1105 = vpop.f32.mrf.mxu0
      %v1106 = vadd.f32 0.0, %v1105
      %1107 = vmatmul.f32.gmra.mxu0 %v1068
      %v1108 = vpop.f32.mrf.mxu0
      %v1109 = vadd.f32 0.0, %v1108
      %1110 = vmatmul.f32.gmra.mxu0 %v1071
      %v1111 = vpop.f32.mrf.mxu0
      %v1112 = vadd.f32 0.0, %v1111
      %1113 = vmatmul.f32.gmra.mxu0 %v1074
      %v1114 = vpop.f32.mrf.mxu0
      %v1115 = vadd.f32 0.0, %v1114
      %1116 = vdwg.mxu0
      %1117 = vmatpush.msra.mxu0 0.0
      %1118 = vmatpush.msra.mxu0 0.0
      %1119 = vmatpush.msra.mxu0 0.0
      %1120 = vmatpush.msra.mxu0 0.0
      %1121 = vmatpush.msra.mxu0 0.0
      %1122 = vmatpush.msra.mxu0 0.0
      %1123 = vmatpush.msra.mxu0 0.0
      %1124 = vmatpush.msra.mxu0 0.0
      %1125 = vmatpush.msra.mxu0 0.0
      %1126 = vmatpush.msra.mxu0 0.0
      %1127 = vmatpush.msra.mxu0 0.0
      %1128 = vmatpush.msra.mxu0 0.0
      %1129 = vmatpush.msra.mxu0 0.0
      %1130 = vmatpush.msra.mxu0 0.0
      %1131 = vmatpush.msra.mxu0 0.0
      %1132 = vmatpush.msra.mxu0 %v1080
      %1133 = vmatmul.f32.gmra.mxu0 %v1059
      %v1134 = vpop.f32.mrf.mxu0
      %v1135 = vadd.f32 0.0, %v1134
      %1136 = vmatmul.f32.gmra.mxu0 %v1062
      %v1137 = vpop.f32.mrf.mxu0
      %v1138 = vadd.f32 0.0, %v1137
      %1139 = vmatmul.f32.gmra.mxu0 %v1065
      %v1140 = vpop.f32.mrf.mxu0
      %v1141 = vadd.f32 0.0, %v1140
      %1142 = vmatmul.f32.gmra.mxu0 %v1068
      %v1143 = vpop.f32.mrf.mxu0
      %v1144 = vadd.f32 0.0, %v1143
      %1145 = vmatmul.f32.gmra.mxu0 %v1071
      %v1146 = vpop.f32.mrf.mxu0
      %v1147 = vadd.f32 0.0, %v1146
      %1148 = vmatmul.f32.gmra.mxu0 %v1074
      %v1149 = vpop.f32.mrf.mxu0
      %v1150 = vadd.f32 0.0, %v1149
      %1151 = vdwg.mxu0
      %v1152 = vadd.f32 %v1039, %v1100
      %v1153 = vadd.f32 %v1040, %v1135
      %v1154 = vadd.f32 %v1041, %v1103
      %v1155 = vadd.f32 %v1042, %v1138
      %v1156 = vadd.f32 %v1043, %v1106
      %v1157 = vadd.f32 %v1044, %v1141
      %v1158 = vadd.f32 %v1045, %v1109
      %v1159 = vadd.f32 %v1046, %v1144
      %v1160 = vadd.f32 %v1047, %v1112
      %v1161 = vadd.f32 %v1048, %v1147
      %v1162 = vadd.f32 %v1049, %v1115
      %v1163 = vadd.f32 %v1050, %v1150
      %s1164 = scalar_lea.vmem %s10, 192
      %v1165 = vld [vmem:[%s1164] sm:$0xff]
      %v1166 = vld [vmem:[%s1164 + $0x8] sm:$0xff]
      %v1167 = vld [vmem:[%s1164 + $0x10] sm:$0xff]
      %v1168 = vld [vmem:[%s1164 + $0x18] sm:$0xff]
      %v1169 = vld [vmem:[%s1164 + $0x20] sm:$0xff]
      %v1170 = vld [vmem:[%s1164 + $0x28] sm:$0xff]
      %v1172 = vsel %vm748, %v1165, 0
      %v1175 = vsel %vm748, %v1166, 0
      %v1178 = vsel %vm748, %v1167, 0
      %v1181 = vsel %vm748, %v1168, 0
      %v1184 = vsel %vm748, %v1169, 0
      %v1187 = vsel %vm748, %v1170, 0
      %v1190 = vsel %vm767, %v506, 0
      %v1193 = vsel %vm767, %v505, 0
      %1195 = vmatpush.msra.mxu0 0.0
      %1196 = vmatpush.msra.mxu0 0.0
      %1197 = vmatpush.msra.mxu0 0.0
      %1198 = vmatpush.msra.mxu0 0.0
      %1199 = vmatpush.msra.mxu0 0.0
      %1200 = vmatpush.msra.mxu0 0.0
      %1201 = vmatpush.msra.mxu0 0.0
      %1202 = vmatpush.msra.mxu0 0.0
      %1203 = vmatpush.msra.mxu0 0.0
      %1204 = vmatpush.msra.mxu0 0.0
      %1205 = vmatpush.msra.mxu0 0.0
      %1206 = vmatpush.msra.mxu0 0.0
      %1207 = vmatpush.msra.mxu0 0.0
      %1208 = vmatpush.msra.mxu0 0.0
      %1209 = vmatpush.msra.mxu0 0.0
      %1210 = vmatpush.msra.mxu0 %v1190
      %1211 = vmatmul.f32.gmra.mxu0 %v1172
      %v1212 = vpop.f32.mrf.mxu0
      %v1213 = vadd.f32 0.0, %v1212
      %1214 = vmatmul.f32.gmra.mxu0 %v1175
      %v1215 = vpop.f32.mrf.mxu0
      %v1216 = vadd.f32 0.0, %v1215
      %1217 = vmatmul.f32.gmra.mxu0 %v1178
      %v1218 = vpop.f32.mrf.mxu0
      %v1219 = vadd.f32 0.0, %v1218
      %1220 = vmatmul.f32.gmra.mxu0 %v1181
      %v1221 = vpop.f32.mrf.mxu0
      %v1222 = vadd.f32 0.0, %v1221
      %1223 = vmatmul.f32.gmra.mxu0 %v1184
      %v1224 = vpop.f32.mrf.mxu0
      %v1225 = vadd.f32 0.0, %v1224
      %1226 = vmatmul.f32.gmra.mxu0 %v1187
      %v1227 = vpop.f32.mrf.mxu0
      %v1228 = vadd.f32 0.0, %v1227
      %1229 = vdwg.mxu0
      %1230 = vmatpush.msra.mxu0 0.0
      %1231 = vmatpush.msra.mxu0 0.0
      %1232 = vmatpush.msra.mxu0 0.0
      %1233 = vmatpush.msra.mxu0 0.0
      %1234 = vmatpush.msra.mxu0 0.0
      %1235 = vmatpush.msra.mxu0 0.0
      %1236 = vmatpush.msra.mxu0 0.0
      %1237 = vmatpush.msra.mxu0 0.0
      %1238 = vmatpush.msra.mxu0 0.0
      %1239 = vmatpush.msra.mxu0 0.0
      %1240 = vmatpush.msra.mxu0 0.0
      %1241 = vmatpush.msra.mxu0 0.0
      %1242 = vmatpush.msra.mxu0 0.0
      %1243 = vmatpush.msra.mxu0 0.0
      %1244 = vmatpush.msra.mxu0 0.0
      %1245 = vmatpush.msra.mxu0 %v1193
      %1246 = vmatmul.f32.gmra.mxu0 %v1172
      %v1247 = vpop.f32.mrf.mxu0
      %v1248 = vadd.f32 0.0, %v1247
      %1249 = vmatmul.f32.gmra.mxu0 %v1175
      %v1250 = vpop.f32.mrf.mxu0
      %v1251 = vadd.f32 0.0, %v1250
      %1252 = vmatmul.f32.gmra.mxu0 %v1178
      %v1253 = vpop.f32.mrf.mxu0
      %v1254 = vadd.f32 0.0, %v1253
      %1255 = vmatmul.f32.gmra.mxu0 %v1181
      %v1256 = vpop.f32.mrf.mxu0
      %v1257 = vadd.f32 0.0, %v1256
      %1258 = vmatmul.f32.gmra.mxu0 %v1184
      %v1259 = vpop.f32.mrf.mxu0
      %v1260 = vadd.f32 0.0, %v1259
      %1261 = vmatmul.f32.gmra.mxu0 %v1187
      %v1262 = vpop.f32.mrf.mxu0
      %v1263 = vadd.f32 0.0, %v1262
      %1264 = vdwg.mxu0
      %v1265 = vadd.f32 %v1152, %v1213
      %v1266 = vadd.f32 %v1153, %v1248
      %v1267 = vadd.f32 %v1154, %v1216
      %v1268 = vadd.f32 %v1155, %v1251
      %v1269 = vadd.f32 %v1156, %v1219
      %v1270 = vadd.f32 %v1157, %v1254
      %v1271 = vadd.f32 %v1158, %v1222
      %v1272 = vadd.f32 %v1159, %v1257
      %v1273 = vadd.f32 %v1160, %v1225
      %v1274 = vadd.f32 %v1161, %v1260
      %v1275 = vadd.f32 %v1162, %v1228
      %v1276 = vadd.f32 %v1163, %v1263
      %s1277 = scalar_lea.vmem %s10, 240
      %v1278 = vld [vmem:[%s1277] sm:$0xff]
      %v1279 = vld [vmem:[%s1277 + $0x8] sm:$0xff]
      %v1280 = vld [vmem:[%s1277 + $0x10] sm:$0xff]
      %v1281 = vld [vmem:[%s1277 + $0x18] sm:$0xff]
      %v1282 = vld [vmem:[%s1277 + $0x20] sm:$0xff]
      %v1283 = vld [vmem:[%s1277 + $0x28] sm:$0xff]
      %v1285 = vsel %vm748, %v1278, 0
      %v1288 = vsel %vm748, %v1279, 0
      %v1291 = vsel %vm748, %v1280, 0
      %v1294 = vsel %vm748, %v1281, 0
      %v1297 = vsel %vm748, %v1282, 0
      %v1300 = vsel %vm748, %v1283, 0
      %v1303 = vsel %vm767, %v518, 0
      %v1306 = vsel %vm767, %v517, 0
      %1308 = vmatpush.msra.mxu0 0.0
      %1309 = vmatpush.msra.mxu0 0.0
      %1310 = vmatpush.msra.mxu0 0.0
      %1311 = vmatpush.msra.mxu0 0.0
      %1312 = vmatpush.msra.mxu0 0.0
      %1313 = vmatpush.msra.mxu0 0.0
      %1314 = vmatpush.msra.mxu0 0.0
      %1315 = vmatpush.msra.mxu0 0.0
      %1316 = vmatpush.msra.mxu0 0.0
      %1317 = vmatpush.msra.mxu0 0.0
      %1318 = vmatpush.msra.mxu0 0.0
      %1319 = vmatpush.msra.mxu0 0.0
      %1320 = vmatpush.msra.mxu0 0.0
      %1321 = vmatpush.msra.mxu0 0.0
      %1322 = vmatpush.msra.mxu0 0.0
      %1323 = vmatpush.msra.mxu0 %v1303
      %1324 = vmatmul.f32.gmra.mxu0 %v1285
      %v1325 = vpop.f32.mrf.mxu0
      %v1326 = vadd.f32 0.0, %v1325
      %1327 = vmatmul.f32.gmra.mxu0 %v1288
      %v1328 = vpop.f32.mrf.mxu0
      %v1329 = vadd.f32 0.0, %v1328
      %1330 = vmatmul.f32.gmra.mxu0 %v1291
      %v1331 = vpop.f32.mrf.mxu0
      %v1332 = vadd.f32 0.0, %v1331
      %1333 = vmatmul.f32.gmra.mxu0 %v1294
      %v1334 = vpop.f32.mrf.mxu0
      %v1335 = vadd.f32 0.0, %v1334
      %1336 = vmatmul.f32.gmra.mxu0 %v1297
      %v1337 = vpop.f32.mrf.mxu0
      %v1338 = vadd.f32 0.0, %v1337
      %1339 = vmatmul.f32.gmra.mxu0 %v1300
      %v1340 = vpop.f32.mrf.mxu0
      %v1341 = vadd.f32 0.0, %v1340
      %1342 = vdwg.mxu0
      %1343 = vmatpush.msra.mxu0 0.0
      %1344 = vmatpush.msra.mxu0 0.0
      %1345 = vmatpush.msra.mxu0 0.0
      %1346 = vmatpush.msra.mxu0 0.0
      %1347 = vmatpush.msra.mxu0 0.0
      %1348 = vmatpush.msra.mxu0 0.0
      %1349 = vmatpush.msra.mxu0 0.0
      %1350 = vmatpush.msra.mxu0 0.0
      %1351 = vmatpush.msra.mxu0 0.0
      %1352 = vmatpush.msra.mxu0 0.0
      %1353 = vmatpush.msra.mxu0 0.0
      %1354 = vmatpush.msra.mxu0 0.0
      %1355 = vmatpush.msra.mxu0 0.0
      %1356 = vmatpush.msra.mxu0 0.0
      %1357 = vmatpush.msra.mxu0 0.0
      %1358 = vmatpush.msra.mxu0 %v1306
      %1359 = vmatmul.f32.gmra.mxu0 %v1285
      %v1360 = vpop.f32.mrf.mxu0
      %v1361 = vadd.f32 0.0, %v1360
      %1362 = vmatmul.f32.gmra.mxu0 %v1288
      %v1363 = vpop.f32.mrf.mxu0
      %v1364 = vadd.f32 0.0, %v1363
      %1365 = vmatmul.f32.gmra.mxu0 %v1291
      %v1366 = vpop.f32.mrf.mxu0
      %v1367 = vadd.f32 0.0, %v1366
      %1368 = vmatmul.f32.gmra.mxu0 %v1294
      %v1369 = vpop.f32.mrf.mxu0
      %v1370 = vadd.f32 0.0, %v1369
      %1371 = vmatmul.f32.gmra.mxu0 %v1297
      %v1372 = vpop.f32.mrf.mxu0
      %v1373 = vadd.f32 0.0, %v1372
      %1374 = vmatmul.f32.gmra.mxu0 %v1300
      %v1375 = vpop.f32.mrf.mxu0
      %v1376 = vadd.f32 0.0, %v1375
      %1377 = vdwg.mxu0
      %v1378 = vadd.f32 %v1265, %v1326
      %v1379 = vadd.f32 %v1266, %v1361
      %v1380 = vadd.f32 %v1267, %v1329
      %v1381 = vadd.f32 %v1268, %v1364
      %v1382 = vadd.f32 %v1269, %v1332
      %v1383 = vadd.f32 %v1270, %v1367
      %v1384 = vadd.f32 %v1271, %v1335
      %v1385 = vadd.f32 %v1272, %v1370
      %v1386 = vadd.f32 %v1273, %v1338
      %v1387 = vadd.f32 %v1274, %v1373
      %v1388 = vadd.f32 %v1275, %v1341
      %v1389 = vadd.f32 %v1276, %v1376
      %s1390 = scalar_lea.vmem %s10, 288
      %v1391 = vld [vmem:[%s1390] sm:$0xff]
      %v1392 = vld [vmem:[%s1390 + $0x8] sm:$0xff]
      %v1393 = vld [vmem:[%s1390 + $0x10] sm:$0xff]
      %v1394 = vld [vmem:[%s1390 + $0x18] sm:$0xff]
      %v1395 = vld [vmem:[%s1390 + $0x20] sm:$0xff]
      %v1396 = vld [vmem:[%s1390 + $0x28] sm:$0xff]
      %v1398 = vsel %vm748, %v1391, 0
      %v1401 = vsel %vm748, %v1392, 0
      %v1404 = vsel %vm748, %v1393, 0
      %v1407 = vsel %vm748, %v1394, 0
      %v1410 = vsel %vm748, %v1395, 0
      %v1413 = vsel %vm748, %v1396, 0
      %v1416 = vsel %vm767, %v530, 0
      %v1419 = vsel %vm767, %v529, 0
      %1421 = vmatpush.msra.mxu0 0.0
      %1422 = vmatpush.msra.mxu0 0.0
      %1423 = vmatpush.msra.mxu0 0.0
      %1424 = vmatpush.msra.mxu0 0.0
      %1425 = vmatpush.msra.mxu0 0.0
      %1426 = vmatpush.msra.mxu0 0.0
      %1427 = vmatpush.msra.mxu0 0.0
      %1428 = vmatpush.msra.mxu0 0.0
      %1429 = vmatpush.msra.mxu0 0.0
      %1430 = vmatpush.msra.mxu0 0.0
      %1431 = vmatpush.msra.mxu0 0.0
      %1432 = vmatpush.msra.mxu0 0.0
      %1433 = vmatpush.msra.mxu0 0.0
      %1434 = vmatpush.msra.mxu0 0.0
      %1435 = vmatpush.msra.mxu0 0.0
      %1436 = vmatpush.msra.mxu0 %v1416
      %1437 = vmatmul.f32.gmra.mxu0 %v1398
      %v1438 = vpop.f32.mrf.mxu0
      %v1439 = vadd.f32 0.0, %v1438
      %1440 = vmatmul.f32.gmra.mxu0 %v1401
      %v1441 = vpop.f32.mrf.mxu0
      %v1442 = vadd.f32 0.0, %v1441
      %1443 = vmatmul.f32.gmra.mxu0 %v1404
      %v1444 = vpop.f32.mrf.mxu0
      %v1445 = vadd.f32 0.0, %v1444
      %1446 = vmatmul.f32.gmra.mxu0 %v1407
      %v1447 = vpop.f32.mrf.mxu0
      %v1448 = vadd.f32 0.0, %v1447
      %1449 = vmatmul.f32.gmra.mxu0 %v1410
      %v1450 = vpop.f32.mrf.mxu0
      %v1451 = vadd.f32 0.0, %v1450
      %1452 = vmatmul.f32.gmra.mxu0 %v1413
      %v1453 = vpop.f32.mrf.mxu0
      %v1454 = vadd.f32 0.0, %v1453
      %1455 = vdwg.mxu0
      %1456 = vmatpush.msra.mxu0 0.0
      %1457 = vmatpush.msra.mxu0 0.0
      %1458 = vmatpush.msra.mxu0 0.0
      %1459 = vmatpush.msra.mxu0 0.0
      %1460 = vmatpush.msra.mxu0 0.0
      %1461 = vmatpush.msra.mxu0 0.0
      %1462 = vmatpush.msra.mxu0 0.0
      %1463 = vmatpush.msra.mxu0 0.0
      %1464 = vmatpush.msra.mxu0 0.0
      %1465 = vmatpush.msra.mxu0 0.0
      %1466 = vmatpush.msra.mxu0 0.0
      %1467 = vmatpush.msra.mxu0 0.0
      %1468 = vmatpush.msra.mxu0 0.0
      %1469 = vmatpush.msra.mxu0 0.0
      %1470 = vmatpush.msra.mxu0 0.0
      %1471 = vmatpush.msra.mxu0 %v1419
      %1472 = vmatmul.f32.gmra.mxu0 %v1398
      %v1473 = vpop.f32.mrf.mxu0
      %v1474 = vadd.f32 0.0, %v1473
      %1475 = vmatmul.f32.gmra.mxu0 %v1401
      %v1476 = vpop.f32.mrf.mxu0
      %v1477 = vadd.f32 0.0, %v1476
      %1478 = vmatmul.f32.gmra.mxu0 %v1404
      %v1479 = vpop.f32.mrf.mxu0
      %v1480 = vadd.f32 0.0, %v1479
      %1481 = vmatmul.f32.gmra.mxu0 %v1407
      %v1482 = vpop.f32.mrf.mxu0
      %v1483 = vadd.f32 0.0, %v1482
      %1484 = vmatmul.f32.gmra.mxu0 %v1410
      %v1485 = vpop.f32.mrf.mxu0
      %v1486 = vadd.f32 0.0, %v1485
      %1487 = vmatmul.f32.gmra.mxu0 %v1413
      %v1488 = vpop.f32.mrf.mxu0
      %v1489 = vadd.f32 0.0, %v1488
      %1490 = vdwg.mxu0
      %v1491 = vadd.f32 %v1378, %v1439
      %v1492 = vadd.f32 %v1379, %v1474
      %v1493 = vadd.f32 %v1380, %v1442
      %v1494 = vadd.f32 %v1381, %v1477
      %v1495 = vadd.f32 %v1382, %v1445
      %v1496 = vadd.f32 %v1383, %v1480
      %v1497 = vadd.f32 %v1384, %v1448
      %v1498 = vadd.f32 %v1385, %v1483
      %v1499 = vadd.f32 %v1386, %v1451
      %v1500 = vadd.f32 %v1387, %v1486
      %v1501 = vadd.f32 %v1388, %v1454
      %v1502 = vadd.f32 %v1389, %v1489
      %s1503 = scalar_lea.vmem %s10, 336
      %v1504 = vld [vmem:[%s1503] sm:$0xff]
      %v1505 = vld [vmem:[%s1503 + $0x8] sm:$0xff]
      %v1506 = vld [vmem:[%s1503 + $0x10] sm:$0xff]
      %v1507 = vld [vmem:[%s1503 + $0x18] sm:$0xff]
      %v1508 = vld [vmem:[%s1503 + $0x20] sm:$0xff]
      %v1509 = vld [vmem:[%s1503 + $0x28] sm:$0xff]
      %v1511 = vsel %vm748, %v1504, 0
      %v1514 = vsel %vm748, %v1505, 0
      %v1517 = vsel %vm748, %v1506, 0
      %v1520 = vsel %vm748, %v1507, 0
      %v1523 = vsel %vm748, %v1508, 0
      %v1526 = vsel %vm748, %v1509, 0
      %v1529 = vsel %vm767, %v542, 0
      %v1532 = vsel %vm767, %v541, 0
      %1534 = vmatpush.msra.mxu0 0.0
      %1535 = vmatpush.msra.mxu0 0.0
      %1536 = vmatpush.msra.mxu0 0.0
      %1537 = vmatpush.msra.mxu0 0.0
      %1538 = vmatpush.msra.mxu0 0.0
      %1539 = vmatpush.msra.mxu0 0.0
      %1540 = vmatpush.msra.mxu0 0.0
      %1541 = vmatpush.msra.mxu0 0.0
      %1542 = vmatpush.msra.mxu0 0.0
      %1543 = vmatpush.msra.mxu0 0.0
      %1544 = vmatpush.msra.mxu0 0.0
      %1545 = vmatpush.msra.mxu0 0.0
      %1546 = vmatpush.msra.mxu0 0.0
      %1547 = vmatpush.msra.mxu0 0.0
      %1548 = vmatpush.msra.mxu0 0.0
      %1549 = vmatpush.msra.mxu0 %v1529
      %1550 = vmatmul.f32.gmra.mxu0 %v1511
      %v1551 = vpop.f32.mrf.mxu0
      %v1552 = vadd.f32 0.0, %v1551
      %1553 = vmatmul.f32.gmra.mxu0 %v1514
      %v1554 = vpop.f32.mrf.mxu0
      %v1555 = vadd.f32 0.0, %v1554
      %1556 = vmatmul.f32.gmra.mxu0 %v1517
      %v1557 = vpop.f32.mrf.mxu0
      %v1558 = vadd.f32 0.0, %v1557
      %1559 = vmatmul.f32.gmra.mxu0 %v1520
      %v1560 = vpop.f32.mrf.mxu0
      %v1561 = vadd.f32 0.0, %v1560
      %1562 = vmatmul.f32.gmra.mxu0 %v1523
      %v1563 = vpop.f32.mrf.mxu0
      %v1564 = vadd.f32 0.0, %v1563
      %1565 = vmatmul.f32.gmra.mxu0 %v1526
      %v1566 = vpop.f32.mrf.mxu0
      %v1567 = vadd.f32 0.0, %v1566
      %1568 = vdwg.mxu0
      %1569 = vmatpush.msra.mxu0 0.0
      %1570 = vmatpush.msra.mxu0 0.0
      %1571 = vmatpush.msra.mxu0 0.0
      %1572 = vmatpush.msra.mxu0 0.0
      %1573 = vmatpush.msra.mxu0 0.0
      %1574 = vmatpush.msra.mxu0 0.0
      %1575 = vmatpush.msra.mxu0 0.0
      %1576 = vmatpush.msra.mxu0 0.0
      %1577 = vmatpush.msra.mxu0 0.0
      %1578 = vmatpush.msra.mxu0 0.0
      %1579 = vmatpush.msra.mxu0 0.0
      %1580 = vmatpush.msra.mxu0 0.0
      %1581 = vmatpush.msra.mxu0 0.0
      %1582 = vmatpush.msra.mxu0 0.0
      %1583 = vmatpush.msra.mxu0 0.0
      %1584 = vmatpush.msra.mxu0 %v1532
      %1585 = vmatmul.f32.gmra.mxu0 %v1511
      %v1586 = vpop.f32.mrf.mxu0
      %v1587 = vadd.f32 0.0, %v1586
      %1588 = vmatmul.f32.gmra.mxu0 %v1514
      %v1589 = vpop.f32.mrf.mxu0
      %v1590 = vadd.f32 0.0, %v1589
      %1591 = vmatmul.f32.gmra.mxu0 %v1517
      %v1592 = vpop.f32.mrf.mxu0
      %v1593 = vadd.f32 0.0, %v1592
      %1594 = vmatmul.f32.gmra.mxu0 %v1520
      %v1595 = vpop.f32.mrf.mxu0
      %v1596 = vadd.f32 0.0, %v1595
      %1597 = vmatmul.f32.gmra.mxu0 %v1523
      %v1598 = vpop.f32.mrf.mxu0
      %v1599 = vadd.f32 0.0, %v1598
      %1600 = vmatmul.f32.gmra.mxu0 %v1526
      %v1601 = vpop.f32.mrf.mxu0
      %v1602 = vadd.f32 0.0, %v1601
      %1603 = vdwg.mxu0
      %v1604 = vadd.f32 %v1491, %v1552
      %v1605 = vadd.f32 %v1492, %v1587
      %v1606 = vadd.f32 %v1493, %v1555
      %v1607 = vadd.f32 %v1494, %v1590
      %v1608 = vadd.f32 %v1495, %v1558
      %v1609 = vadd.f32 %v1496, %v1593
      %v1610 = vadd.f32 %v1497, %v1561
      %v1611 = vadd.f32 %v1498, %v1596
      %v1612 = vadd.f32 %v1499, %v1564
      %v1613 = vadd.f32 %v1500, %v1599
      %v1614 = vadd.f32 %v1501, %v1567
      %v1615 = vadd.f32 %v1502, %v1602
      %s1616 = scalar_lea.vmem %s10, 384
      %v1617 = vld [vmem:[%s1616] sm:$0xff]
      %v1618 = vld [vmem:[%s1616 + $0x8] sm:$0xff]
      %v1619 = vld [vmem:[%s1616 + $0x10] sm:$0xff]
      %v1620 = vld [vmem:[%s1616 + $0x18] sm:$0xff]
      %v1621 = vld [vmem:[%s1616 + $0x20] sm:$0xff]
      %v1622 = vld [vmem:[%s1616 + $0x28] sm:$0xff]
      %v1624 = vsel %vm748, %v1617, 0
      %v1627 = vsel %vm748, %v1618, 0
      %v1630 = vsel %vm748, %v1619, 0
      %v1633 = vsel %vm748, %v1620, 0
      %v1636 = vsel %vm748, %v1621, 0
      %v1639 = vsel %vm748, %v1622, 0
      %v1642 = vsel %vm767, %v554, 0
      %v1645 = vsel %vm767, %v553, 0
      %1647 = vmatpush.msra.mxu0 0.0
      %1648 = vmatpush.msra.mxu0 0.0
      %1649 = vmatpush.msra.mxu0 0.0
      %1650 = vmatpush.msra.mxu0 0.0
      %1651 = vmatpush.msra.mxu0 0.0
      %1652 = vmatpush.msra.mxu0 0.0
      %1653 = vmatpush.msra.mxu0 0.0
      %1654 = vmatpush.msra.mxu0 0.0
      %1655 = vmatpush.msra.mxu0 0.0
      %1656 = vmatpush.msra.mxu0 0.0
      %1657 = vmatpush.msra.mxu0 0.0
      %1658 = vmatpush.msra.mxu0 0.0
      %1659 = vmatpush.msra.mxu0 0.0
      %1660 = vmatpush.msra.mxu0 0.0
      %1661 = vmatpush.msra.mxu0 0.0
      %1662 = vmatpush.msra.mxu0 %v1642
      %1663 = vmatmul.f32.gmra.mxu0 %v1624
      %v1664 = vpop.f32.mrf.mxu0
      %v1665 = vadd.f32 0.0, %v1664
      %1666 = vmatmul.f32.gmra.mxu0 %v1627
      %v1667 = vpop.f32.mrf.mxu0
      %v1668 = vadd.f32 0.0, %v1667
      %1669 = vmatmul.f32.gmra.mxu0 %v1630
      %v1670 = vpop.f32.mrf.mxu0
      %v1671 = vadd.f32 0.0, %v1670
      %1672 = vmatmul.f32.gmra.mxu0 %v1633
      %v1673 = vpop.f32.mrf.mxu0
      %v1674 = vadd.f32 0.0, %v1673
      %1675 = vmatmul.f32.gmra.mxu0 %v1636
      %v1676 = vpop.f32.mrf.mxu0
      %v1677 = vadd.f32 0.0, %v1676
      %1678 = vmatmul.f32.gmra.mxu0 %v1639
      %v1679 = vpop.f32.mrf.mxu0
      %v1680 = vadd.f32 0.0, %v1679
      %1681 = vdwg.mxu0
      %1682 = vmatpush.msra.mxu0 0.0
      %1683 = vmatpush.msra.mxu0 0.0
      %1684 = vmatpush.msra.mxu0 0.0
      %1685 = vmatpush.msra.mxu0 0.0
      %1686 = vmatpush.msra.mxu0 0.0
      %1687 = vmatpush.msra.mxu0 0.0
      %1688 = vmatpush.msra.mxu0 0.0
      %1689 = vmatpush.msra.mxu0 0.0
      %1690 = vmatpush.msra.mxu0 0.0
      %1691 = vmatpush.msra.mxu0 0.0
      %1692 = vmatpush.msra.mxu0 0.0
      %1693 = vmatpush.msra.mxu0 0.0
      %1694 = vmatpush.msra.mxu0 0.0
      %1695 = vmatpush.msra.mxu0 0.0
      %1696 = vmatpush.msra.mxu0 0.0
      %1697 = vmatpush.msra.mxu0 %v1645
      %1698 = vmatmul.f32.gmra.mxu0 %v1624
      %v1699 = vpop.f32.mrf.mxu0
      %v1700 = vadd.f32 0.0, %v1699
      %1701 = vmatmul.f32.gmra.mxu0 %v1627
      %v1702 = vpop.f32.mrf.mxu0
      %v1703 = vadd.f32 0.0, %v1702
      %1704 = vmatmul.f32.gmra.mxu0 %v1630
      %v1705 = vpop.f32.mrf.mxu0
      %v1706 = vadd.f32 0.0, %v1705
      %1707 = vmatmul.f32.gmra.mxu0 %v1633
      %v1708 = vpop.f32.mrf.mxu0
      %v1709 = vadd.f32 0.0, %v1708
      %1710 = vmatmul.f32.gmra.mxu0 %v1636
      %v1711 = vpop.f32.mrf.mxu0
      %v1712 = vadd.f32 0.0, %v1711
      %1713 = vmatmul.f32.gmra.mxu0 %v1639
      %v1714 = vpop.f32.mrf.mxu0
      %v1715 = vadd.f32 0.0, %v1714
      %1716 = vdwg.mxu0
      %v1717 = vadd.f32 %v1604, %v1665
      %v1718 = vadd.f32 %v1605, %v1700
      %v1719 = vadd.f32 %v1606, %v1668
      %v1720 = vadd.f32 %v1607, %v1703
      %v1721 = vadd.f32 %v1608, %v1671
      %v1722 = vadd.f32 %v1609, %v1706
      %v1723 = vadd.f32 %v1610, %v1674
      %v1724 = vadd.f32 %v1611, %v1709
      %v1725 = vadd.f32 %v1612, %v1677
      %v1726 = vadd.f32 %v1613, %v1712
      %v1727 = vadd.f32 %v1614, %v1680
      %v1728 = vadd.f32 %v1615, %v1715
      %s1729 = scalar_lea.vmem %s10, 432
      %v1730 = vld [vmem:[%s1729] sm:$0xff]
      %v1731 = vld [vmem:[%s1729 + $0x8] sm:$0xff]
      %v1732 = vld [vmem:[%s1729 + $0x10] sm:$0xff]
      %v1733 = vld [vmem:[%s1729 + $0x18] sm:$0xff]
      %v1734 = vld [vmem:[%s1729 + $0x20] sm:$0xff]
      %v1735 = vld [vmem:[%s1729 + $0x28] sm:$0xff]
      %v1737 = vsel %vm748, %v1730, 0
      %v1740 = vsel %vm748, %v1731, 0
      %v1743 = vsel %vm748, %v1732, 0
      %v1746 = vsel %vm748, %v1733, 0
      %v1749 = vsel %vm748, %v1734, 0
      %v1752 = vsel %vm748, %v1735, 0
      %v1755 = vsel %vm767, %v566, 0
      %v1758 = vsel %vm767, %v565, 0
      %1760 = vmatpush.msra.mxu0 0.0
      %1761 = vmatpush.msra.mxu0 0.0
      %1762 = vmatpush.msra.mxu0 0.0
      %1763 = vmatpush.msra.mxu0 0.0
      %1764 = vmatpush.msra.mxu0 0.0
      %1765 = vmatpush.msra.mxu0 0.0
      %1766 = vmatpush.msra.mxu0 0.0
      %1767 = vmatpush.msra.mxu0 0.0
      %1768 = vmatpush.msra.mxu0 0.0
      %1769 = vmatpush.msra.mxu0 0.0
      %1770 = vmatpush.msra.mxu0 0.0
      %1771 = vmatpush.msra.mxu0 0.0
      %1772 = vmatpush.msra.mxu0 0.0
      %1773 = vmatpush.msra.mxu0 0.0
      %1774 = vmatpush.msra.mxu0 0.0
      %1775 = vmatpush.msra.mxu0 %v1755
      %1776 = vmatmul.f32.gmra.mxu0 %v1737
      %v1777 = vpop.f32.mrf.mxu0
      %v1778 = vadd.f32 0.0, %v1777
      %1779 = vmatmul.f32.gmra.mxu0 %v1740
      %v1780 = vpop.f32.mrf.mxu0
      %v1781 = vadd.f32 0.0, %v1780
      %1782 = vmatmul.f32.gmra.mxu0 %v1743
      %v1783 = vpop.f32.mrf.mxu0
      %v1784 = vadd.f32 0.0, %v1783
      %1785 = vmatmul.f32.gmra.mxu0 %v1746
      %v1786 = vpop.f32.mrf.mxu0
      %v1787 = vadd.f32 0.0, %v1786
      %1788 = vmatmul.f32.gmra.mxu0 %v1749
      %v1789 = vpop.f32.mrf.mxu0
      %v1790 = vadd.f32 0.0, %v1789
      %1791 = vmatmul.f32.gmra.mxu0 %v1752
      %v1792 = vpop.f32.mrf.mxu0
      %v1793 = vadd.f32 0.0, %v1792
      %1794 = vdwg.mxu0
      %1795 = vmatpush.msra.mxu0 0.0
      %1796 = vmatpush.msra.mxu0 0.0
      %1797 = vmatpush.msra.mxu0 0.0
      %1798 = vmatpush.msra.mxu0 0.0
      %1799 = vmatpush.msra.mxu0 0.0
      %1800 = vmatpush.msra.mxu0 0.0
      %1801 = vmatpush.msra.mxu0 0.0
      %1802 = vmatpush.msra.mxu0 0.0
      %1803 = vmatpush.msra.mxu0 0.0
      %1804 = vmatpush.msra.mxu0 0.0
      %1805 = vmatpush.msra.mxu0 0.0
      %1806 = vmatpush.msra.mxu0 0.0
      %1807 = vmatpush.msra.mxu0 0.0
      %1808 = vmatpush.msra.mxu0 0.0
      %1809 = vmatpush.msra.mxu0 0.0
      %1810 = vmatpush.msra.mxu0 %v1758
      %1811 = vmatmul.f32.gmra.mxu0 %v1737
      %v1812 = vpop.f32.mrf.mxu0
      %v1813 = vadd.f32 0.0, %v1812
      %1814 = vmatmul.f32.gmra.mxu0 %v1740
      %v1815 = vpop.f32.mrf.mxu0
      %v1816 = vadd.f32 0.0, %v1815
      %1817 = vmatmul.f32.gmra.mxu0 %v1743
      %v1818 = vpop.f32.mrf.mxu0
      %v1819 = vadd.f32 0.0, %v1818
      %1820 = vmatmul.f32.gmra.mxu0 %v1746
      %v1821 = vpop.f32.mrf.mxu0
      %v1822 = vadd.f32 0.0, %v1821
      %1823 = vmatmul.f32.gmra.mxu0 %v1749
      %v1824 = vpop.f32.mrf.mxu0
      %v1825 = vadd.f32 0.0, %v1824
      %1826 = vmatmul.f32.gmra.mxu0 %v1752
      %v1827 = vpop.f32.mrf.mxu0
      %v1828 = vadd.f32 0.0, %v1827
      %1829 = vdwg.mxu0
      %v1830 = vadd.f32 %v1717, %v1778
      %v1831 = vadd.f32 %v1718, %v1813
      %v1832 = vadd.f32 %v1719, %v1781
      %v1833 = vadd.f32 %v1720, %v1816
      %v1834 = vadd.f32 %v1721, %v1784
      %v1835 = vadd.f32 %v1722, %v1819
      %v1836 = vadd.f32 %v1723, %v1787
      %v1837 = vadd.f32 %v1724, %v1822
      %v1838 = vadd.f32 %v1725, %v1790
      %v1839 = vadd.f32 %v1726, %v1825
      %v1840 = vadd.f32 %v1727, %v1793
      %v1841 = vadd.f32 %v1728, %v1828
      %s1842 = scalar_lea.vmem %s10, 480
      %v1843 = vld [vmem:[%s1842] sm:$0xff]
      %v1844 = vld [vmem:[%s1842 + $0x8] sm:$0xff]
      %v1845 = vld [vmem:[%s1842 + $0x10] sm:$0xff]
      %v1846 = vld [vmem:[%s1842 + $0x18] sm:$0xff]
      %v1847 = vld [vmem:[%s1842 + $0x20] sm:$0xff]
      %v1848 = vld [vmem:[%s1842 + $0x28] sm:$0xff]
      %v1850 = vsel %vm748, %v1843, 0
      %v1853 = vsel %vm748, %v1844, 0
      %v1856 = vsel %vm748, %v1845, 0
      %v1859 = vsel %vm748, %v1846, 0
      %v1862 = vsel %vm748, %v1847, 0
      %v1865 = vsel %vm748, %v1848, 0
      %v1868 = vsel %vm767, %v578, 0
      %v1871 = vsel %vm767, %v577, 0
      %1873 = vmatpush.msra.mxu0 0.0
      %1874 = vmatpush.msra.mxu0 0.0
      %1875 = vmatpush.msra.mxu0 0.0
      %1876 = vmatpush.msra.mxu0 0.0
      %1877 = vmatpush.msra.mxu0 0.0
      %1878 = vmatpush.msra.mxu0 0.0
      %1879 = vmatpush.msra.mxu0 0.0
      %1880 = vmatpush.msra.mxu0 0.0
      %1881 = vmatpush.msra.mxu0 0.0
      %1882 = vmatpush.msra.mxu0 0.0
      %1883 = vmatpush.msra.mxu0 0.0
      %1884 = vmatpush.msra.mxu0 0.0
      %1885 = vmatpush.msra.mxu0 0.0
      %1886 = vmatpush.msra.mxu0 0.0
      %1887 = vmatpush.msra.mxu0 0.0
      %1888 = vmatpush.msra.mxu0 %v1868
      %1889 = vmatmul.f32.gmra.mxu0 %v1850
      %v1890 = vpop.f32.mrf.mxu0
      %v1891 = vadd.f32 0.0, %v1890
      %1892 = vmatmul.f32.gmra.mxu0 %v1853
      %v1893 = vpop.f32.mrf.mxu0
      %v1894 = vadd.f32 0.0, %v1893
      %1895 = vmatmul.f32.gmra.mxu0 %v1856
      %v1896 = vpop.f32.mrf.mxu0
      %v1897 = vadd.f32 0.0, %v1896
      %1898 = vmatmul.f32.gmra.mxu0 %v1859
      %v1899 = vpop.f32.mrf.mxu0
      %v1900 = vadd.f32 0.0, %v1899
      %1901 = vmatmul.f32.gmra.mxu0 %v1862
      %v1902 = vpop.f32.mrf.mxu0
      %v1903 = vadd.f32 0.0, %v1902
      %1904 = vmatmul.f32.gmra.mxu0 %v1865
      %v1905 = vpop.f32.mrf.mxu0
      %v1906 = vadd.f32 0.0, %v1905
      %1907 = vdwg.mxu0
      %1908 = vmatpush.msra.mxu0 0.0
      %1909 = vmatpush.msra.mxu0 0.0
      %1910 = vmatpush.msra.mxu0 0.0
      %1911 = vmatpush.msra.mxu0 0.0
      %1912 = vmatpush.msra.mxu0 0.0
      %1913 = vmatpush.msra.mxu0 0.0
      %1914 = vmatpush.msra.mxu0 0.0
      %1915 = vmatpush.msra.mxu0 0.0
      %1916 = vmatpush.msra.mxu0 0.0
      %1917 = vmatpush.msra.mxu0 0.0
      %1918 = vmatpush.msra.mxu0 0.0
      %1919 = vmatpush.msra.mxu0 0.0
      %1920 = vmatpush.msra.mxu0 0.0
      %1921 = vmatpush.msra.mxu0 0.0
      %1922 = vmatpush.msra.mxu0 0.0
      %1923 = vmatpush.msra.mxu0 %v1871
      %1924 = vmatmul.f32.gmra.mxu0 %v1850
      %v1925 = vpop.f32.mrf.mxu0
      %v1926 = vadd.f32 0.0, %v1925
      %1927 = vmatmul.f32.gmra.mxu0 %v1853
      %v1928 = vpop.f32.mrf.mxu0
      %v1929 = vadd.f32 0.0, %v1928
      %1930 = vmatmul.f32.gmra.mxu0 %v1856
      %v1931 = vpop.f32.mrf.mxu0
      %v1932 = vadd.f32 0.0, %v1931
      %1933 = vmatmul.f32.gmra.mxu0 %v1859
      %v1934 = vpop.f32.mrf.mxu0
      %v1935 = vadd.f32 0.0, %v1934
      %1936 = vmatmul.f32.gmra.mxu0 %v1862
      %v1937 = vpop.f32.mrf.mxu0
      %v1938 = vadd.f32 0.0, %v1937
      %1939 = vmatmul.f32.gmra.mxu0 %v1865
      %v1940 = vpop.f32.mrf.mxu0
      %v1941 = vadd.f32 0.0, %v1940
      %1942 = vdwg.mxu0
      %v1943 = vadd.f32 %v1830, %v1891
      %v1944 = vadd.f32 %v1831, %v1926
      %v1945 = vadd.f32 %v1832, %v1894
      %v1946 = vadd.f32 %v1833, %v1929
      %v1947 = vadd.f32 %v1834, %v1897
      %v1948 = vadd.f32 %v1835, %v1932
      %v1949 = vadd.f32 %v1836, %v1900
      %v1950 = vadd.f32 %v1837, %v1935
      %v1951 = vadd.f32 %v1838, %v1903
      %v1952 = vadd.f32 %v1839, %v1938
      %v1953 = vadd.f32 %v1840, %v1906
      %v1954 = vadd.f32 %v1841, %v1941
      %s1955 = scalar_lea.vmem %s10, 528
      %v1956 = vld [vmem:[%s1955] sm:$0xff]
      %v1957 = vld [vmem:[%s1955 + $0x8] sm:$0xff]
      %v1958 = vld [vmem:[%s1955 + $0x10] sm:$0xff]
      %v1959 = vld [vmem:[%s1955 + $0x18] sm:$0xff]
      %v1960 = vld [vmem:[%s1955 + $0x20] sm:$0xff]
      %v1961 = vld [vmem:[%s1955 + $0x28] sm:$0xff]
      %v1963 = vsel %vm748, %v1956, 0
      %v1966 = vsel %vm748, %v1957, 0
      %v1969 = vsel %vm748, %v1958, 0
      %v1972 = vsel %vm748, %v1959, 0
      %v1975 = vsel %vm748, %v1960, 0
      %v1978 = vsel %vm748, %v1961, 0
      %v1981 = vsel %vm767, %v590, 0
      %v1984 = vsel %vm767, %v589, 0
      %1986 = vmatpush.msra.mxu0 0.0
      %1987 = vmatpush.msra.mxu0 0.0
      %1988 = vmatpush.msra.mxu0 0.0
      %1989 = vmatpush.msra.mxu0 0.0
      %1990 = vmatpush.msra.mxu0 0.0
      %1991 = vmatpush.msra.mxu0 0.0
      %1992 = vmatpush.msra.mxu0 0.0
      %1993 = vmatpush.msra.mxu0 0.0
      %1994 = vmatpush.msra.mxu0 0.0
      %1995 = vmatpush.msra.mxu0 0.0
      %1996 = vmatpush.msra.mxu0 0.0
      %1997 = vmatpush.msra.mxu0 0.0
      %1998 = vmatpush.msra.mxu0 0.0
      %1999 = vmatpush.msra.mxu0 0.0
      %2000 = vmatpush.msra.mxu0 0.0
      %2001 = vmatpush.msra.mxu0 %v1981
      %2002 = vmatmul.f32.gmra.mxu0 %v1963
      %v2003 = vpop.f32.mrf.mxu0
      %v2004 = vadd.f32 0.0, %v2003
      %2005 = vmatmul.f32.gmra.mxu0 %v1966
      %v2006 = vpop.f32.mrf.mxu0
      %v2007 = vadd.f32 0.0, %v2006
      %2008 = vmatmul.f32.gmra.mxu0 %v1969
      %v2009 = vpop.f32.mrf.mxu0
      %v2010 = vadd.f32 0.0, %v2009
      %2011 = vmatmul.f32.gmra.mxu0 %v1972
      %v2012 = vpop.f32.mrf.mxu0
      %v2013 = vadd.f32 0.0, %v2012
      %2014 = vmatmul.f32.gmra.mxu0 %v1975
      %v2015 = vpop.f32.mrf.mxu0
      %v2016 = vadd.f32 0.0, %v2015
      %2017 = vmatmul.f32.gmra.mxu0 %v1978
      %v2018 = vpop.f32.mrf.mxu0
      %v2019 = vadd.f32 0.0, %v2018
      %2020 = vdwg.mxu0
      %2021 = vmatpush.msra.mxu0 0.0
      %2022 = vmatpush.msra.mxu0 0.0
      %2023 = vmatpush.msra.mxu0 0.0
      %2024 = vmatpush.msra.mxu0 0.0
      %2025 = vmatpush.msra.mxu0 0.0
      %2026 = vmatpush.msra.mxu0 0.0
      %2027 = vmatpush.msra.mxu0 0.0
      %2028 = vmatpush.msra.mxu0 0.0
      %2029 = vmatpush.msra.mxu0 0.0
      %2030 = vmatpush.msra.mxu0 0.0
      %2031 = vmatpush.msra.mxu0 0.0
      %2032 = vmatpush.msra.mxu0 0.0
      %2033 = vmatpush.msra.mxu0 0.0
      %2034 = vmatpush.msra.mxu0 0.0
      %2035 = vmatpush.msra.mxu0 0.0
      %2036 = vmatpush.msra.mxu0 %v1984
      %2037 = vmatmul.f32.gmra.mxu0 %v1963
      %v2038 = vpop.f32.mrf.mxu0
      %v2039 = vadd.f32 0.0, %v2038
      %2040 = vmatmul.f32.gmra.mxu0 %v1966
      %v2041 = vpop.f32.mrf.mxu0
      %v2042 = vadd.f32 0.0, %v2041
      %2043 = vmatmul.f32.gmra.mxu0 %v1969
      %v2044 = vpop.f32.mrf.mxu0
      %v2045 = vadd.f32 0.0, %v2044
      %2046 = vmatmul.f32.gmra.mxu0 %v1972
      %v2047 = vpop.f32.mrf.mxu0
      %v2048 = vadd.f32 0.0, %v2047
      %2049 = vmatmul.f32.gmra.mxu0 %v1975
      %v2050 = vpop.f32.mrf.mxu0
      %v2051 = vadd.f32 0.0, %v2050
      %2052 = vmatmul.f32.gmra.mxu0 %v1978
      %v2053 = vpop.f32.mrf.mxu0
      %v2054 = vadd.f32 0.0, %v2053
      %2055 = vdwg.mxu0
      %v2056 = vadd.f32 %v1943, %v2004
      %v2057 = vadd.f32 %v1944, %v2039
      %v2058 = vadd.f32 %v1945, %v2007
      %v2059 = vadd.f32 %v1946, %v2042
      %v2060 = vadd.f32 %v1947, %v2010
      %v2061 = vadd.f32 %v1948, %v2045
      %v2062 = vadd.f32 %v1949, %v2013
      %v2063 = vadd.f32 %v1950, %v2048
      %v2064 = vadd.f32 %v1951, %v2016
      %v2065 = vadd.f32 %v1952, %v2051
      %v2066 = vadd.f32 %v1953, %v2019
      %v2067 = vadd.f32 %v1954, %v2054
      %s2068 = scalar_lea.vmem %s10, 576
      %v2069 = vld [vmem:[%s2068] sm:$0xff]
      %v2070 = vld [vmem:[%s2068 + $0x8] sm:$0xff]
      %v2071 = vld [vmem:[%s2068 + $0x10] sm:$0xff]
      %v2072 = vld [vmem:[%s2068 + $0x18] sm:$0xff]
      %v2073 = vld [vmem:[%s2068 + $0x20] sm:$0xff]
      %v2074 = vld [vmem:[%s2068 + $0x28] sm:$0xff]
      %2075 = vst [vmem:[#allocation1] ss:$2 sm:$0xff] %v442
      %v2076 = vld.sshfl [vmem:[#allocation1] sm:$0xff pattern:$0x75316420]
      %v2077 = vld.sshfl [vmem:[#allocation1 + $0x8] sm:$0xff pattern:$0x75316420]
      %v2079 = vsel %vm748, %v2069, 0
      %v2082 = vsel %vm748, %v2070, 0
      %v2085 = vsel %vm748, %v2071, 0
      %v2088 = vsel %vm748, %v2072, 0
      %v2091 = vsel %vm748, %v2073, 0
      %v2094 = vsel %vm748, %v2074, 0
      %v2096 = vsel %vm767, %v2076, 0
      %v2098 = vsel %vm767, %v2077, 0
      %2100 = vmatpush.msra.mxu0 0.0
      %2101 = vmatpush.msra.mxu0 0.0
      %2102 = vmatpush.msra.mxu0 0.0
      %2103 = vmatpush.msra.mxu0 0.0
      %2104 = vmatpush.msra.mxu0 0.0
      %2105 = vmatpush.msra.mxu0 0.0
      %2106 = vmatpush.msra.mxu0 0.0
      %2107 = vmatpush.msra.mxu0 0.0
      %2108 = vmatpush.msra.mxu0 0.0
      %2109 = vmatpush.msra.mxu0 0.0
      %2110 = vmatpush.msra.mxu0 0.0
      %2111 = vmatpush.msra.mxu0 0.0
      %2112 = vmatpush.msra.mxu0 0.0
      %2113 = vmatpush.msra.mxu0 0.0
      %2114 = vmatpush.msra.mxu0 0.0
      %2115 = vmatpush.msra.mxu0 %v2096
      %2116 = vmatmul.f32.gmra.mxu0 %v2079
      %v2117 = vpop.f32.mrf.mxu0
      %v2118 = vadd.f32 0.0, %v2117
      %2119 = vmatmul.f32.gmra.mxu0 %v2082
      %v2120 = vpop.f32.mrf.mxu0
      %v2121 = vadd.f32 0.0, %v2120
      %2122 = vmatmul.f32.gmra.mxu0 %v2085
      %v2123 = vpop.f32.mrf.mxu0
      %v2124 = vadd.f32 0.0, %v2123
      %2125 = vmatmul.f32.gmra.mxu0 %v2088
      %v2126 = vpop.f32.mrf.mxu0
      %v2127 = vadd.f32 0.0, %v2126
      %2128 = vmatmul.f32.gmra.mxu0 %v2091
      %v2129 = vpop.f32.mrf.mxu0
      %v2130 = vadd.f32 0.0, %v2129
      %2131 = vmatmul.f32.gmra.mxu0 %v2094
      %v2132 = vpop.f32.mrf.mxu0
      %v2133 = vadd.f32 0.0, %v2132
      %2134 = vdwg.mxu0
      %2135 = vmatpush.msra.mxu0 0.0
      %2136 = vmatpush.msra.mxu0 0.0
      %2137 = vmatpush.msra.mxu0 0.0
      %2138 = vmatpush.msra.mxu0 0.0
      %2139 = vmatpush.msra.mxu0 0.0
      %2140 = vmatpush.msra.mxu0 0.0
      %2141 = vmatpush.msra.mxu0 0.0
      %2142 = vmatpush.msra.mxu0 0.0
      %2143 = vmatpush.msra.mxu0 0.0
      %2144 = vmatpush.msra.mxu0 0.0
      %2145 = vmatpush.msra.mxu0 0.0
      %2146 = vmatpush.msra.mxu0 0.0
      %2147 = vmatpush.msra.mxu0 0.0
      %2148 = vmatpush.msra.mxu0 0.0
      %2149 = vmatpush.msra.mxu0 0.0
      %2150 = vmatpush.msra.mxu0 %v2098
      %2151 = vmatmul.f32.gmra.mxu0 %v2079
      %v2152 = vpop.f32.mrf.mxu0
      %v2153 = vadd.f32 0.0, %v2152
      %2154 = vmatmul.f32.gmra.mxu0 %v2082
      %v2155 = vpop.f32.mrf.mxu0
      %v2156 = vadd.f32 0.0, %v2155
      %2157 = vmatmul.f32.gmra.mxu0 %v2085
      %v2158 = vpop.f32.mrf.mxu0
      %v2159 = vadd.f32 0.0, %v2158
      %2160 = vmatmul.f32.gmra.mxu0 %v2088
      %v2161 = vpop.f32.mrf.mxu0
      %v2162 = vadd.f32 0.0, %v2161
      %2163 = vmatmul.f32.gmra.mxu0 %v2091
      %v2164 = vpop.f32.mrf.mxu0
      %v2165 = vadd.f32 0.0, %v2164
      %2166 = vmatmul.f32.gmra.mxu0 %v2094
      %v2167 = vpop.f32.mrf.mxu0
      %v2168 = vadd.f32 0.0, %v2167
      %2169 = vdwg.mxu0
      %v2170 = vadd.f32 %v2056, %v2118
      %v2171 = vadd.f32 %v2057, %v2153
      %v2172 = vadd.f32 %v2058, %v2121
      %v2173 = vadd.f32 %v2059, %v2156
      %v2174 = vadd.f32 %v2060, %v2124
      %v2175 = vadd.f32 %v2061, %v2159
      %v2176 = vadd.f32 %v2062, %v2127
      %v2177 = vadd.f32 %v2063, %v2162
      %v2178 = vadd.f32 %v2064, %v2130
      %v2179 = vadd.f32 %v2065, %v2165
      %v2180 = vadd.f32 %v2066, %v2133
      %v2181 = vadd.f32 %v2067, %v2168
      %s2182 = scalar_lea.vmem %s10, 624
      %v2183 = vld [vmem:[%s2182] sm:$0xff]
      %v2184 = vld [vmem:[%s2182 + $0x8] sm:$0xff]
      %v2185 = vld [vmem:[%s2182 + $0x10] sm:$0xff]
      %v2186 = vld [vmem:[%s2182 + $0x18] sm:$0xff]
      %v2187 = vld [vmem:[%s2182 + $0x20] sm:$0xff]
      %v2188 = vld [vmem:[%s2182 + $0x28] sm:$0xff]
      %v2190 = vsel %vm748, %v2183, 0
      %v2193 = vsel %vm748, %v2184, 0
      %v2196 = vsel %vm748, %v2185, 0
      %v2199 = vsel %vm748, %v2186, 0
      %v2202 = vsel %vm748, %v2187, 0
      %v2205 = vsel %vm748, %v2188, 0
      %v2208 = vsel %vm767, %v601, 0
      %v2211 = vsel %vm767, %v602, 0
      %2213 = vmatpush.msra.mxu0 0.0
      %2214 = vmatpush.msra.mxu0 0.0
      %2215 = vmatpush.msra.mxu0 0.0
      %2216 = vmatpush.msra.mxu0 0.0
      %2217 = vmatpush.msra.mxu0 0.0
      %2218 = vmatpush.msra.mxu0 0.0
      %2219 = vmatpush.msra.mxu0 0.0
      %2220 = vmatpush.msra.mxu0 0.0
      %2221 = vmatpush.msra.mxu0 0.0
      %2222 = vmatpush.msra.mxu0 0.0
      %2223 = vmatpush.msra.mxu0 0.0
      %2224 = vmatpush.msra.mxu0 0.0
      %2225 = vmatpush.msra.mxu0 0.0
      %2226 = vmatpush.msra.mxu0 0.0
      %2227 = vmatpush.msra.mxu0 0.0
      %2228 = vmatpush.msra.mxu0 %v2208
      %2229 = vmatmul.f32.gmra.mxu0 %v2190
      %v2230 = vpop.f32.mrf.mxu0
      %v2231 = vadd.f32 0.0, %v2230
      %2232 = vmatmul.f32.gmra.mxu0 %v2193
      %v2233 = vpop.f32.mrf.mxu0
      %v2234 = vadd.f32 0.0, %v2233
      %2235 = vmatmul.f32.gmra.mxu0 %v2196
      %v2236 = vpop.f32.mrf.mxu0
      %v2237 = vadd.f32 0.0, %v2236
      %2238 = vmatmul.f32.gmra.mxu0 %v2199
      %v2239 = vpop.f32.mrf.mxu0
      %v2240 = vadd.f32 0.0, %v2239
      %2241 = vmatmul.f32.gmra.mxu0 %v2202
      %v2242 = vpop.f32.mrf.mxu0
      %v2243 = vadd.f32 0.0, %v2242
      %2244 = vmatmul.f32.gmra.mxu0 %v2205
      %v2245 = vpop.f32.mrf.mxu0
      %v2246 = vadd.f32 0.0, %v2245
      %2247 = vdwg.mxu0
      %2248 = vmatpush.msra.mxu0 0.0
      %2249 = vmatpush.msra.mxu0 0.0
      %2250 = vmatpush.msra.mxu0 0.0
      %2251 = vmatpush.msra.mxu0 0.0
      %2252 = vmatpush.msra.mxu0 0.0
      %2253 = vmatpush.msra.mxu0 0.0
      %2254 = vmatpush.msra.mxu0 0.0
      %2255 = vmatpush.msra.mxu0 0.0
      %2256 = vmatpush.msra.mxu0 0.0
      %2257 = vmatpush.msra.mxu0 0.0
      %2258 = vmatpush.msra.mxu0 0.0
      %2259 = vmatpush.msra.mxu0 0.0
      %2260 = vmatpush.msra.mxu0 0.0
      %2261 = vmatpush.msra.mxu0 0.0
      %2262 = vmatpush.msra.mxu0 0.0
      %2263 = vmatpush.msra.mxu0 %v2211
      %2264 = vmatmul.f32.gmra.mxu0 %v2190
      %v2265 = vpop.f32.mrf.mxu0
      %v2266 = vadd.f32 0.0, %v2265
      %2267 = vmatmul.f32.gmra.mxu0 %v2193
      %v2268 = vpop.f32.mrf.mxu0
      %v2269 = vadd.f32 0.0, %v2268
      %2270 = vmatmul.f32.gmra.mxu0 %v2196
      %v2271 = vpop.f32.mrf.mxu0
      %v2272 = vadd.f32 0.0, %v2271
      %2273 = vmatmul.f32.gmra.mxu0 %v2199
      %v2274 = vpop.f32.mrf.mxu0
      %v2275 = vadd.f32 0.0, %v2274
      %2276 = vmatmul.f32.gmra.mxu0 %v2202
      %v2277 = vpop.f32.mrf.mxu0
      %v2278 = vadd.f32 0.0, %v2277
      %2279 = vmatmul.f32.gmra.mxu0 %v2205
      %v2280 = vpop.f32.mrf.mxu0
      %v2281 = vadd.f32 0.0, %v2280
      %2282 = vdwg.mxu0
      %v2283 = vadd.f32 %v2170, %v2231
      %v2284 = vadd.f32 %v2171, %v2266
      %v2285 = vadd.f32 %v2172, %v2234
      %v2286 = vadd.f32 %v2173, %v2269
      %v2287 = vadd.f32 %v2174, %v2237
      %v2288 = vadd.f32 %v2175, %v2272
      %v2289 = vadd.f32 %v2176, %v2240
      %v2290 = vadd.f32 %v2177, %v2275
      %v2291 = vadd.f32 %v2178, %v2243
      %v2292 = vadd.f32 %v2179, %v2278
      %v2293 = vadd.f32 %v2180, %v2246
      %v2294 = vadd.f32 %v2181, %v2281
      %s2295 = scalar_lea.vmem %s10, 672
      %v2296 = vld [vmem:[%s2295] sm:$0xff]
      %v2297 = vld [vmem:[%s2295 + $0x8] sm:$0xff]
      %v2298 = vld [vmem:[%s2295 + $0x10] sm:$0xff]
      %v2299 = vld [vmem:[%s2295 + $0x18] sm:$0xff]
      %v2300 = vld [vmem:[%s2295 + $0x20] sm:$0xff]
      %v2301 = vld [vmem:[%s2295 + $0x28] sm:$0xff]
      %v2303 = vsel %vm748, %v2296, 0
      %v2306 = vsel %vm748, %v2297, 0
      %v2309 = vsel %vm748, %v2298, 0
      %v2312 = vsel %vm748, %v2299, 0
      %v2315 = vsel %vm748, %v2300, 0
      %v2318 = vsel %vm748, %v2301, 0
      %v2321 = vsel %vm767, %v613, 0
      %v2324 = vsel %vm767, %v614, 0
      %2326 = vmatpush.msra.mxu0 0.0
      %2327 = vmatpush.msra.mxu0 0.0
      %2328 = vmatpush.msra.mxu0 0.0
      %2329 = vmatpush.msra.mxu0 0.0
      %2330 = vmatpush.msra.mxu0 0.0
      %2331 = vmatpush.msra.mxu0 0.0
      %2332 = vmatpush.msra.mxu0 0.0
      %2333 = vmatpush.msra.mxu0 0.0
      %2334 = vmatpush.msra.mxu0 0.0
      %2335 = vmatpush.msra.mxu0 0.0
      %2336 = vmatpush.msra.mxu0 0.0
      %2337 = vmatpush.msra.mxu0 0.0
      %2338 = vmatpush.msra.mxu0 0.0
      %2339 = vmatpush.msra.mxu0 0.0
      %2340 = vmatpush.msra.mxu0 0.0
      %2341 = vmatpush.msra.mxu0 %v2321
      %2342 = vmatmul.f32.gmra.mxu0 %v2303
      %v2343 = vpop.f32.mrf.mxu0
      %v2344 = vadd.f32 0.0, %v2343
      %2345 = vmatmul.f32.gmra.mxu0 %v2306
      %v2346 = vpop.f32.mrf.mxu0
      %v2347 = vadd.f32 0.0, %v2346
      %2348 = vmatmul.f32.gmra.mxu0 %v2309
      %v2349 = vpop.f32.mrf.mxu0
      %v2350 = vadd.f32 0.0, %v2349
      %2351 = vmatmul.f32.gmra.mxu0 %v2312
      %v2352 = vpop.f32.mrf.mxu0
      %v2353 = vadd.f32 0.0, %v2352
      %2354 = vmatmul.f32.gmra.mxu0 %v2315
      %v2355 = vpop.f32.mrf.mxu0
      %v2356 = vadd.f32 0.0, %v2355
      %2357 = vmatmul.f32.gmra.mxu0 %v2318
      %v2358 = vpop.f32.mrf.mxu0
      %v2359 = vadd.f32 0.0, %v2358
      %2360 = vdwg.mxu0
      %2361 = vmatpush.msra.mxu0 0.0
      %2362 = vmatpush.msra.mxu0 0.0
      %2363 = vmatpush.msra.mxu0 0.0
      %2364 = vmatpush.msra.mxu0 0.0
      %2365 = vmatpush.msra.mxu0 0.0
      %2366 = vmatpush.msra.mxu0 0.0
      %2367 = vmatpush.msra.mxu0 0.0
      %2368 = vmatpush.msra.mxu0 0.0
      %2369 = vmatpush.msra.mxu0 0.0
      %2370 = vmatpush.msra.mxu0 0.0
      %2371 = vmatpush.msra.mxu0 0.0
      %2372 = vmatpush.msra.mxu0 0.0
      %2373 = vmatpush.msra.mxu0 0.0
      %2374 = vmatpush.msra.mxu0 0.0
      %2375 = vmatpush.msra.mxu0 0.0
      %2376 = vmatpush.msra.mxu0 %v2324
      %2377 = vmatmul.f32.gmra.mxu0 %v2303
      %v2378 = vpop.f32.mrf.mxu0
      %v2379 = vadd.f32 0.0, %v2378
      %2380 = vmatmul.f32.gmra.mxu0 %v2306
      %v2381 = vpop.f32.mrf.mxu0
      %v2382 = vadd.f32 0.0, %v2381
      %2383 = vmatmul.f32.gmra.mxu0 %v2309
      %v2384 = vpop.f32.mrf.mxu0
      %v2385 = vadd.f32 0.0, %v2384
      %2386 = vmatmul.f32.gmra.mxu0 %v2312
      %v2387 = vpop.f32.mrf.mxu0
      %v2388 = vadd.f32 0.0, %v2387
      %2389 = vmatmul.f32.gmra.mxu0 %v2315
      %v2390 = vpop.f32.mrf.mxu0
      %v2391 = vadd.f32 0.0, %v2390
      %2392 = vmatmul.f32.gmra.mxu0 %v2318
      %v2393 = vpop.f32.mrf.mxu0
      %v2394 = vadd.f32 0.0, %v2393
      %2395 = vdwg.mxu0
      %v2396 = vadd.f32 %v2283, %v2344
      %v2397 = vadd.f32 %v2284, %v2379
      %v2398 = vadd.f32 %v2285, %v2347
      %v2399 = vadd.f32 %v2286, %v2382
      %v2400 = vadd.f32 %v2287, %v2350
      %v2401 = vadd.f32 %v2288, %v2385
      %v2402 = vadd.f32 %v2289, %v2353
      %v2403 = vadd.f32 %v2290, %v2388
      %v2404 = vadd.f32 %v2291, %v2356
      %v2405 = vadd.f32 %v2292, %v2391
      %v2406 = vadd.f32 %v2293, %v2359
      %v2407 = vadd.f32 %v2294, %v2394
      %s2408 = scalar_lea.vmem %s10, 720
      %v2409 = vld [vmem:[%s2408] sm:$0xff]
      %v2410 = vld [vmem:[%s2408 + $0x8] sm:$0xff]
      %v2411 = vld [vmem:[%s2408 + $0x10] sm:$0xff]
      %v2412 = vld [vmem:[%s2408 + $0x18] sm:$0xff]
      %v2413 = vld [vmem:[%s2408 + $0x20] sm:$0xff]
      %v2414 = vld [vmem:[%s2408 + $0x28] sm:$0xff]
      %v2416 = vsel %vm748, %v2409, 0
      %v2419 = vsel %vm748, %v2410, 0
      %v2422 = vsel %vm748, %v2411, 0
      %v2425 = vsel %vm748, %v2412, 0
      %v2428 = vsel %vm748, %v2413, 0
      %v2431 = vsel %vm748, %v2414, 0
      %v2434 = vsel %vm767, %v625, 0
      %v2437 = vsel %vm767, %v626, 0
      %2439 = vmatpush.msra.mxu0 0.0
      %2440 = vmatpush.msra.mxu0 0.0
      %2441 = vmatpush.msra.mxu0 0.0
      %2442 = vmatpush.msra.mxu0 0.0
      %2443 = vmatpush.msra.mxu0 0.0
      %2444 = vmatpush.msra.mxu0 0.0
      %2445 = vmatpush.msra.mxu0 0.0
      %2446 = vmatpush.msra.mxu0 0.0
      %2447 = vmatpush.msra.mxu0 0.0
      %2448 = vmatpush.msra.mxu0 0.0
      %2449 = vmatpush.msra.mxu0 0.0
      %2450 = vmatpush.msra.mxu0 0.0
      %2451 = vmatpush.msra.mxu0 0.0
      %2452 = vmatpush.msra.mxu0 0.0
      %2453 = vmatpush.msra.mxu0 0.0
      %2454 = vmatpush.msra.mxu0 %v2434
      %2455 = vmatmul.f32.gmra.mxu0 %v2416
      %v2456 = vpop.f32.mrf.mxu0
      %v2457 = vadd.f32 0.0, %v2456
      %2458 = vmatmul.f32.gmra.mxu0 %v2419
      %v2459 = vpop.f32.mrf.mxu0
      %v2460 = vadd.f32 0.0, %v2459
      %2461 = vmatmul.f32.gmra.mxu0 %v2422
      %v2462 = vpop.f32.mrf.mxu0
      %v2463 = vadd.f32 0.0, %v2462
      %2464 = vmatmul.f32.gmra.mxu0 %v2425
      %v2465 = vpop.f32.mrf.mxu0
      %v2466 = vadd.f32 0.0, %v2465
      %2467 = vmatmul.f32.gmra.mxu0 %v2428
      %v2468 = vpop.f32.mrf.mxu0
      %v2469 = vadd.f32 0.0, %v2468
      %2470 = vmatmul.f32.gmra.mxu0 %v2431
      %v2471 = vpop.f32.mrf.mxu0
      %v2472 = vadd.f32 0.0, %v2471
      %2473 = vdwg.mxu0
      %2474 = vmatpush.msra.mxu0 0.0
      %2475 = vmatpush.msra.mxu0 0.0
      %2476 = vmatpush.msra.mxu0 0.0
      %2477 = vmatpush.msra.mxu0 0.0
      %2478 = vmatpush.msra.mxu0 0.0
      %2479 = vmatpush.msra.mxu0 0.0
      %2480 = vmatpush.msra.mxu0 0.0
      %2481 = vmatpush.msra.mxu0 0.0
      %2482 = vmatpush.msra.mxu0 0.0
      %2483 = vmatpush.msra.mxu0 0.0
      %2484 = vmatpush.msra.mxu0 0.0
      %2485 = vmatpush.msra.mxu0 0.0
      %2486 = vmatpush.msra.mxu0 0.0
      %2487 = vmatpush.msra.mxu0 0.0
      %2488 = vmatpush.msra.mxu0 0.0
      %2489 = vmatpush.msra.mxu0 %v2437
      %2490 = vmatmul.f32.gmra.mxu0 %v2416
      %v2491 = vpop.f32.mrf.mxu0
      %v2492 = vadd.f32 0.0, %v2491
      %2493 = vmatmul.f32.gmra.mxu0 %v2419
      %v2494 = vpop.f32.mrf.mxu0
      %v2495 = vadd.f32 0.0, %v2494
      %2496 = vmatmul.f32.gmra.mxu0 %v2422
      %v2497 = vpop.f32.mrf.mxu0
      %v2498 = vadd.f32 0.0, %v2497
      %2499 = vmatmul.f32.gmra.mxu0 %v2425
      %v2500 = vpop.f32.mrf.mxu0
      %v2501 = vadd.f32 0.0, %v2500
      %2502 = vmatmul.f32.gmra.mxu0 %v2428
      %v2503 = vpop.f32.mrf.mxu0
      %v2504 = vadd.f32 0.0, %v2503
      %2505 = vmatmul.f32.gmra.mxu0 %v2431
      %v2506 = vpop.f32.mrf.mxu0
      %v2507 = vadd.f32 0.0, %v2506
      %2508 = vdwg.mxu0
      %v2509 = vadd.f32 %v2396, %v2457
      %v2510 = vadd.f32 %v2397, %v2492
      %v2511 = vadd.f32 %v2398, %v2460
      %v2512 = vadd.f32 %v2399, %v2495
      %v2513 = vadd.f32 %v2400, %v2463
      %v2514 = vadd.f32 %v2401, %v2498
      %v2515 = vadd.f32 %v2402, %v2466
      %v2516 = vadd.f32 %v2403, %v2501
      %v2517 = vadd.f32 %v2404, %v2469
      %v2518 = vadd.f32 %v2405, %v2504
      %v2519 = vadd.f32 %v2406, %v2472
      %v2520 = vadd.f32 %v2407, %v2507
      %s2521 = scalar_lea.vmem %s10, 768
      %v2522 = vld [vmem:[%s2521] sm:$0xff]
      %v2523 = vld [vmem:[%s2521 + $0x8] sm:$0xff]
      %v2524 = vld [vmem:[%s2521 + $0x10] sm:$0xff]
      %v2525 = vld [vmem:[%s2521 + $0x18] sm:$0xff]
      %v2526 = vld [vmem:[%s2521 + $0x20] sm:$0xff]
      %v2527 = vld [vmem:[%s2521 + $0x28] sm:$0xff]
      %v2529 = vsel %vm748, %v2522, 0
      %v2532 = vsel %vm748, %v2523, 0
      %v2535 = vsel %vm748, %v2524, 0
      %v2538 = vsel %vm748, %v2525, 0
      %v2541 = vsel %vm748, %v2526, 0
      %v2544 = vsel %vm748, %v2527, 0
      %v2547 = vsel %vm767, %v637, 0
      %v2550 = vsel %vm767, %v638, 0
      %2552 = vmatpush.msra.mxu0 0.0
      %2553 = vmatpush.msra.mxu0 0.0
      %2554 = vmatpush.msra.mxu0 0.0
      %2555 = vmatpush.msra.mxu0 0.0
      %2556 = vmatpush.msra.mxu0 0.0
      %2557 = vmatpush.msra.mxu0 0.0
      %2558 = vmatpush.msra.mxu0 0.0
      %2559 = vmatpush.msra.mxu0 0.0
      %2560 = vmatpush.msra.mxu0 0.0
      %2561 = vmatpush.msra.mxu0 0.0
      %2562 = vmatpush.msra.mxu0 0.0
      %2563 = vmatpush.msra.mxu0 0.0
      %2564 = vmatpush.msra.mxu0 0.0
      %2565 = vmatpush.msra.mxu0 0.0
      %2566 = vmatpush.msra.mxu0 0.0
      %2567 = vmatpush.msra.mxu0 %v2547
      %2568 = vmatmul.f32.gmra.mxu0 %v2529
      %v2569 = vpop.f32.mrf.mxu0
      %v2570 = vadd.f32 0.0, %v2569
      %2571 = vmatmul.f32.gmra.mxu0 %v2532
      %v2572 = vpop.f32.mrf.mxu0
      %v2573 = vadd.f32 0.0, %v2572
      %2574 = vmatmul.f32.gmra.mxu0 %v2535
      %v2575 = vpop.f32.mrf.mxu0
      %v2576 = vadd.f32 0.0, %v2575
      %2577 = vmatmul.f32.gmra.mxu0 %v2538
      %v2578 = vpop.f32.mrf.mxu0
      %v2579 = vadd.f32 0.0, %v2578
      %2580 = vmatmul.f32.gmra.mxu0 %v2541
      %v2581 = vpop.f32.mrf.mxu0
      %v2582 = vadd.f32 0.0, %v2581
      %2583 = vmatmul.f32.gmra.mxu0 %v2544
      %v2584 = vpop.f32.mrf.mxu0
      %v2585 = vadd.f32 0.0, %v2584
      %2586 = vdwg.mxu0
      %2587 = vmatpush.msra.mxu0 0.0
      %2588 = vmatpush.msra.mxu0 0.0
      %2589 = vmatpush.msra.mxu0 0.0
      %2590 = vmatpush.msra.mxu0 0.0
      %2591 = vmatpush.msra.mxu0 0.0
      %2592 = vmatpush.msra.mxu0 0.0
      %2593 = vmatpush.msra.mxu0 0.0
      %2594 = vmatpush.msra.mxu0 0.0
      %2595 = vmatpush.msra.mxu0 0.0
      %2596 = vmatpush.msra.mxu0 0.0
      %2597 = vmatpush.msra.mxu0 0.0
      %2598 = vmatpush.msra.mxu0 0.0
      %2599 = vmatpush.msra.mxu0 0.0
      %2600 = vmatpush.msra.mxu0 0.0
      %2601 = vmatpush.msra.mxu0 0.0
      %2602 = vmatpush.msra.mxu0 %v2550
      %2603 = vmatmul.f32.gmra.mxu0 %v2529
      %v2604 = vpop.f32.mrf.mxu0
      %v2605 = vadd.f32 0.0, %v2604
      %2606 = vmatmul.f32.gmra.mxu0 %v2532
      %v2607 = vpop.f32.mrf.mxu0
      %v2608 = vadd.f32 0.0, %v2607
      %2609 = vmatmul.f32.gmra.mxu0 %v2535
      %v2610 = vpop.f32.mrf.mxu0
      %v2611 = vadd.f32 0.0, %v2610
      %2612 = vmatmul.f32.gmra.mxu0 %v2538
      %v2613 = vpop.f32.mrf.mxu0
      %v2614 = vadd.f32 0.0, %v2613
      %2615 = vmatmul.f32.gmra.mxu0 %v2541
      %v2616 = vpop.f32.mrf.mxu0
      %v2617 = vadd.f32 0.0, %v2616
      %2618 = vmatmul.f32.gmra.mxu0 %v2544
      %v2619 = vpop.f32.mrf.mxu0
      %v2620 = vadd.f32 0.0, %v2619
      %2621 = vdwg.mxu0
      %v2622 = vadd.f32 %v2509, %v2570
      %v2623 = vadd.f32 %v2510, %v2605
      %v2624 = vadd.f32 %v2511, %v2573
      %v2625 = vadd.f32 %v2512, %v2608
      %v2626 = vadd.f32 %v2513, %v2576
      %v2627 = vadd.f32 %v2514, %v2611
      %v2628 = vadd.f32 %v2515, %v2579
      %v2629 = vadd.f32 %v2516, %v2614
      %v2630 = vadd.f32 %v2517, %v2582
      %v2631 = vadd.f32 %v2518, %v2617
      %v2632 = vadd.f32 %v2519, %v2585
      %v2633 = vadd.f32 %v2520, %v2620
      %s2634 = scalar_lea.vmem %s10, 816
      %v2635 = vld [vmem:[%s2634] sm:$0xff]
      %v2636 = vld [vmem:[%s2634 + $0x8] sm:$0xff]
      %v2637 = vld [vmem:[%s2634 + $0x10] sm:$0xff]
      %v2638 = vld [vmem:[%s2634 + $0x18] sm:$0xff]
      %v2639 = vld [vmem:[%s2634 + $0x20] sm:$0xff]
      %v2640 = vld [vmem:[%s2634 + $0x28] sm:$0xff]
      %v2642 = vsel %vm748, %v2635, 0
      %v2645 = vsel %vm748, %v2636, 0
      %v2648 = vsel %vm748, %v2637, 0
      %v2651 = vsel %vm748, %v2638, 0
      %v2654 = vsel %vm748, %v2639, 0
      %v2657 = vsel %vm748, %v2640, 0
      %v2660 = vsel %vm767, %v649, 0
      %v2663 = vsel %vm767, %v650, 0
      %2665 = vmatpush.msra.mxu0 0.0
      %2666 = vmatpush.msra.mxu0 0.0
      %2667 = vmatpush.msra.mxu0 0.0
      %2668 = vmatpush.msra.mxu0 0.0
      %2669 = vmatpush.msra.mxu0 0.0
      %2670 = vmatpush.msra.mxu0 0.0
      %2671 = vmatpush.msra.mxu0 0.0
      %2672 = vmatpush.msra.mxu0 0.0
      %2673 = vmatpush.msra.mxu0 0.0
      %2674 = vmatpush.msra.mxu0 0.0
      %2675 = vmatpush.msra.mxu0 0.0
      %2676 = vmatpush.msra.mxu0 0.0
      %2677 = vmatpush.msra.mxu0 0.0
      %2678 = vmatpush.msra.mxu0 0.0
      %2679 = vmatpush.msra.mxu0 0.0
      %2680 = vmatpush.msra.mxu0 %v2660
      %2681 = vmatmul.f32.gmra.mxu0 %v2642
      %v2682 = vpop.f32.mrf.mxu0
      %v2683 = vadd.f32 0.0, %v2682
      %2684 = vmatmul.f32.gmra.mxu0 %v2645
      %v2685 = vpop.f32.mrf.mxu0
      %v2686 = vadd.f32 0.0, %v2685
      %2687 = vmatmul.f32.gmra.mxu0 %v2648
      %v2688 = vpop.f32.mrf.mxu0
      %v2689 = vadd.f32 0.0, %v2688
      %2690 = vmatmul.f32.gmra.mxu0 %v2651
      %v2691 = vpop.f32.mrf.mxu0
      %v2692 = vadd.f32 0.0, %v2691
      %2693 = vmatmul.f32.gmra.mxu0 %v2654
      %v2694 = vpop.f32.mrf.mxu0
      %v2695 = vadd.f32 0.0, %v2694
      %2696 = vmatmul.f32.gmra.mxu0 %v2657
      %v2697 = vpop.f32.mrf.mxu0
      %v2698 = vadd.f32 0.0, %v2697
      %2699 = vdwg.mxu0
      %2700 = vmatpush.msra.mxu0 0.0
      %2701 = vmatpush.msra.mxu0 0.0
      %2702 = vmatpush.msra.mxu0 0.0
      %2703 = vmatpush.msra.mxu0 0.0
      %2704 = vmatpush.msra.mxu0 0.0
      %2705 = vmatpush.msra.mxu0 0.0
      %2706 = vmatpush.msra.mxu0 0.0
      %2707 = vmatpush.msra.mxu0 0.0
      %2708 = vmatpush.msra.mxu0 0.0
      %2709 = vmatpush.msra.mxu0 0.0
      %2710 = vmatpush.msra.mxu0 0.0
      %2711 = vmatpush.msra.mxu0 0.0
      %2712 = vmatpush.msra.mxu0 0.0
      %2713 = vmatpush.msra.mxu0 0.0
      %2714 = vmatpush.msra.mxu0 0.0
      %2715 = vmatpush.msra.mxu0 %v2663
      %2716 = vmatmul.f32.gmra.mxu0 %v2642
      %v2717 = vpop.f32.mrf.mxu0
      %v2718 = vadd.f32 0.0, %v2717
      %2719 = vmatmul.f32.gmra.mxu0 %v2645
      %v2720 = vpop.f32.mrf.mxu0
      %v2721 = vadd.f32 0.0, %v2720
      %2722 = vmatmul.f32.gmra.mxu0 %v2648
      %v2723 = vpop.f32.mrf.mxu0
      %v2724 = vadd.f32 0.0, %v2723
      %2725 = vmatmul.f32.gmra.mxu0 %v2651
      %v2726 = vpop.f32.mrf.mxu0
      %v2727 = vadd.f32 0.0, %v2726
      %2728 = vmatmul.f32.gmra.mxu0 %v2654
      %v2729 = vpop.f32.mrf.mxu0
      %v2730 = vadd.f32 0.0, %v2729
      %2731 = vmatmul.f32.gmra.mxu0 %v2657
      %v2732 = vpop.f32.mrf.mxu0
      %v2733 = vadd.f32 0.0, %v2732
      %2734 = vdwg.mxu0
      %v2735 = vadd.f32 %v2622, %v2683
      %v2736 = vadd.f32 %v2623, %v2718
      %v2737 = vadd.f32 %v2624, %v2686
      %v2738 = vadd.f32 %v2625, %v2721
      %v2739 = vadd.f32 %v2626, %v2689
      %v2740 = vadd.f32 %v2627, %v2724
      %v2741 = vadd.f32 %v2628, %v2692
      %v2742 = vadd.f32 %v2629, %v2727
      %v2743 = vadd.f32 %v2630, %v2695
      %v2744 = vadd.f32 %v2631, %v2730
      %v2745 = vadd.f32 %v2632, %v2698
      %v2746 = vadd.f32 %v2633, %v2733
      %s2747 = scalar_lea.vmem %s10, 864
      %v2748 = vld [vmem:[%s2747] sm:$0xff]
      %v2749 = vld [vmem:[%s2747 + $0x8] sm:$0xff]
      %v2750 = vld [vmem:[%s2747 + $0x10] sm:$0xff]
      %v2751 = vld [vmem:[%s2747 + $0x18] sm:$0xff]
      %v2752 = vld [vmem:[%s2747 + $0x20] sm:$0xff]
      %v2753 = vld [vmem:[%s2747 + $0x28] sm:$0xff]
      %v2755 = vsel %vm748, %v2748, 0
      %v2758 = vsel %vm748, %v2749, 0
      %v2761 = vsel %vm748, %v2750, 0
      %v2764 = vsel %vm748, %v2751, 0
      %v2767 = vsel %vm748, %v2752, 0
      %v2770 = vsel %vm748, %v2753, 0
      %v2773 = vsel %vm767, %v661, 0
      %v2776 = vsel %vm767, %v662, 0
      %2778 = vmatpush.msra.mxu0 0.0
      %2779 = vmatpush.msra.mxu0 0.0
      %2780 = vmatpush.msra.mxu0 0.0
      %2781 = vmatpush.msra.mxu0 0.0
      %2782 = vmatpush.msra.mxu0 0.0
      %2783 = vmatpush.msra.mxu0 0.0
      %2784 = vmatpush.msra.mxu0 0.0
      %2785 = vmatpush.msra.mxu0 0.0
      %2786 = vmatpush.msra.mxu0 0.0
      %2787 = vmatpush.msra.mxu0 0.0
      %2788 = vmatpush.msra.mxu0 0.0
      %2789 = vmatpush.msra.mxu0 0.0
      %2790 = vmatpush.msra.mxu0 0.0
      %2791 = vmatpush.msra.mxu0 0.0
      %2792 = vmatpush.msra.mxu0 0.0
      %2793 = vmatpush.msra.mxu0 %v2773
      %2794 = vmatmul.f32.gmra.mxu0 %v2755
      %v2795 = vpop.f32.mrf.mxu0
      %v2796 = vadd.f32 0.0, %v2795
      %2797 = vmatmul.f32.gmra.mxu0 %v2758
      %v2798 = vpop.f32.mrf.mxu0
      %v2799 = vadd.f32 0.0, %v2798
      %2800 = vmatmul.f32.gmra.mxu0 %v2761
      %v2801 = vpop.f32.mrf.mxu0
      %v2802 = vadd.f32 0.0, %v2801
      %2803 = vmatmul.f32.gmra.mxu0 %v2764
      %v2804 = vpop.f32.mrf.mxu0
      %v2805 = vadd.f32 0.0, %v2804
      %2806 = vmatmul.f32.gmra.mxu0 %v2767
      %v2807 = vpop.f32.mrf.mxu0
      %v2808 = vadd.f32 0.0, %v2807
      %2809 = vmatmul.f32.gmra.mxu0 %v2770
      %v2810 = vpop.f32.mrf.mxu0
      %v2811 = vadd.f32 0.0, %v2810
      %2812 = vdwg.mxu0
      %2813 = vmatpush.msra.mxu0 0.0
      %2814 = vmatpush.msra.mxu0 0.0
      %2815 = vmatpush.msra.mxu0 0.0
      %2816 = vmatpush.msra.mxu0 0.0
      %2817 = vmatpush.msra.mxu0 0.0
      %2818 = vmatpush.msra.mxu0 0.0
      %2819 = vmatpush.msra.mxu0 0.0
      %2820 = vmatpush.msra.mxu0 0.0
      %2821 = vmatpush.msra.mxu0 0.0
      %2822 = vmatpush.msra.mxu0 0.0
      %2823 = vmatpush.msra.mxu0 0.0
      %2824 = vmatpush.msra.mxu0 0.0
      %2825 = vmatpush.msra.mxu0 0.0
      %2826 = vmatpush.msra.mxu0 0.0
      %2827 = vmatpush.msra.mxu0 0.0
      %2828 = vmatpush.msra.mxu0 %v2776
      %2829 = vmatmul.f32.gmra.mxu0 %v2755
      %v2830 = vpop.f32.mrf.mxu0
      %v2831 = vadd.f32 0.0, %v2830
      %2832 = vmatmul.f32.gmra.mxu0 %v2758
      %v2833 = vpop.f32.mrf.mxu0
      %v2834 = vadd.f32 0.0, %v2833
      %2835 = vmatmul.f32.gmra.mxu0 %v2761
      %v2836 = vpop.f32.mrf.mxu0
      %v2837 = vadd.f32 0.0, %v2836
      %2838 = vmatmul.f32.gmra.mxu0 %v2764
      %v2839 = vpop.f32.mrf.mxu0
      %v2840 = vadd.f32 0.0, %v2839
      %2841 = vmatmul.f32.gmra.mxu0 %v2767
      %v2842 = vpop.f32.mrf.mxu0
      %v2843 = vadd.f32 0.0, %v2842
      %2844 = vmatmul.f32.gmra.mxu0 %v2770
      %v2845 = vpop.f32.mrf.mxu0
      %v2846 = vadd.f32 0.0, %v2845
      %2847 = vdwg.mxu0
      %v2848 = vadd.f32 %v2735, %v2796
      %v2849 = vadd.f32 %v2736, %v2831
      %v2850 = vadd.f32 %v2737, %v2799
      %v2851 = vadd.f32 %v2738, %v2834
      %v2852 = vadd.f32 %v2739, %v2802
      %v2853 = vadd.f32 %v2740, %v2837
      %v2854 = vadd.f32 %v2741, %v2805
      %v2855 = vadd.f32 %v2742, %v2840
      %v2856 = vadd.f32 %v2743, %v2808
      %v2857 = vadd.f32 %v2744, %v2843
      %v2858 = vadd.f32 %v2745, %v2811
      %v2859 = vadd.f32 %v2746, %v2846
      %s2860 = scalar_lea.vmem %s10, 912
      %v2861 = vld [vmem:[%s2860] sm:$0xff]
      %v2862 = vld [vmem:[%s2860 + $0x8] sm:$0xff]
      %v2863 = vld [vmem:[%s2860 + $0x10] sm:$0xff]
      %v2864 = vld [vmem:[%s2860 + $0x18] sm:$0xff]
      %v2865 = vld [vmem:[%s2860 + $0x20] sm:$0xff]
      %v2866 = vld [vmem:[%s2860 + $0x28] sm:$0xff]
      %v2868 = vsel %vm748, %v2861, 0
      %v2871 = vsel %vm748, %v2862, 0
      %v2874 = vsel %vm748, %v2863, 0
      %v2877 = vsel %vm748, %v2864, 0
      %v2880 = vsel %vm748, %v2865, 0
      %v2883 = vsel %vm748, %v2866, 0
      %v2886 = vsel %vm767, %v673, 0
      %v2889 = vsel %vm767, %v674, 0
      %2891 = vmatpush.msra.mxu0 0.0
      %2892 = vmatpush.msra.mxu0 0.0
      %2893 = vmatpush.msra.mxu0 0.0
      %2894 = vmatpush.msra.mxu0 0.0
      %2895 = vmatpush.msra.mxu0 0.0
      %2896 = vmatpush.msra.mxu0 0.0
      %2897 = vmatpush.msra.mxu0 0.0
      %2898 = vmatpush.msra.mxu0 0.0
      %2899 = vmatpush.msra.mxu0 0.0
      %2900 = vmatpush.msra.mxu0 0.0
      %2901 = vmatpush.msra.mxu0 0.0
      %2902 = vmatpush.msra.mxu0 0.0
      %2903 = vmatpush.msra.mxu0 0.0
      %2904 = vmatpush.msra.mxu0 0.0
      %2905 = vmatpush.msra.mxu0 0.0
      %2906 = vmatpush.msra.mxu0 %v2886
      %2907 = vmatmul.f32.gmra.mxu0 %v2868
      %v2908 = vpop.f32.mrf.mxu0
      %v2909 = vadd.f32 0.0, %v2908
      %2910 = vmatmul.f32.gmra.mxu0 %v2871
      %v2911 = vpop.f32.mrf.mxu0
      %v2912 = vadd.f32 0.0, %v2911
      %2913 = vmatmul.f32.gmra.mxu0 %v2874
      %v2914 = vpop.f32.mrf.mxu0
      %v2915 = vadd.f32 0.0, %v2914
      %2916 = vmatmul.f32.gmra.mxu0 %v2877
      %v2917 = vpop.f32.mrf.mxu0
      %v2918 = vadd.f32 0.0, %v2917
      %2919 = vmatmul.f32.gmra.mxu0 %v2880
      %v2920 = vpop.f32.mrf.mxu0
      %v2921 = vadd.f32 0.0, %v2920
      %2922 = vmatmul.f32.gmra.mxu0 %v2883
      %v2923 = vpop.f32.mrf.mxu0
      %v2924 = vadd.f32 0.0, %v2923
      %2925 = vdwg.mxu0
      %2926 = vmatpush.msra.mxu0 0.0
      %2927 = vmatpush.msra.mxu0 0.0
      %2928 = vmatpush.msra.mxu0 0.0
      %2929 = vmatpush.msra.mxu0 0.0
      %2930 = vmatpush.msra.mxu0 0.0
      %2931 = vmatpush.msra.mxu0 0.0
      %2932 = vmatpush.msra.mxu0 0.0
      %2933 = vmatpush.msra.mxu0 0.0
      %2934 = vmatpush.msra.mxu0 0.0
      %2935 = vmatpush.msra.mxu0 0.0
      %2936 = vmatpush.msra.mxu0 0.0
      %2937 = vmatpush.msra.mxu0 0.0
      %2938 = vmatpush.msra.mxu0 0.0
      %2939 = vmatpush.msra.mxu0 0.0
      %2940 = vmatpush.msra.mxu0 0.0
      %2941 = vmatpush.msra.mxu0 %v2889
      %2942 = vmatmul.f32.gmra.mxu0 %v2868
      %v2943 = vpop.f32.mrf.mxu0
      %v2944 = vadd.f32 0.0, %v2943
      %2945 = vmatmul.f32.gmra.mxu0 %v2871
      %v2946 = vpop.f32.mrf.mxu0
      %v2947 = vadd.f32 0.0, %v2946
      %2948 = vmatmul.f32.gmra.mxu0 %v2874
      %v2949 = vpop.f32.mrf.mxu0
      %v2950 = vadd.f32 0.0, %v2949
      %2951 = vmatmul.f32.gmra.mxu0 %v2877
      %v2952 = vpop.f32.mrf.mxu0
      %v2953 = vadd.f32 0.0, %v2952
      %2954 = vmatmul.f32.gmra.mxu0 %v2880
      %v2955 = vpop.f32.mrf.mxu0
      %v2956 = vadd.f32 0.0, %v2955
      %2957 = vmatmul.f32.gmra.mxu0 %v2883
      %v2958 = vpop.f32.mrf.mxu0
      %v2959 = vadd.f32 0.0, %v2958
      %2960 = vdwg.mxu0
      %v2961 = vadd.f32 %v2848, %v2909
      %v2962 = vadd.f32 %v2849, %v2944
      %v2963 = vadd.f32 %v2850, %v2912
      %v2964 = vadd.f32 %v2851, %v2947
      %v2965 = vadd.f32 %v2852, %v2915
      %v2966 = vadd.f32 %v2853, %v2950
      %v2967 = vadd.f32 %v2854, %v2918
      %v2968 = vadd.f32 %v2855, %v2953
      %v2969 = vadd.f32 %v2856, %v2921
      %v2970 = vadd.f32 %v2857, %v2956
      %v2971 = vadd.f32 %v2858, %v2924
      %v2972 = vadd.f32 %v2859, %v2959
      %s2973 = scalar_lea.vmem %s10, 960
      %v2974 = vld [vmem:[%s2973] sm:$0xff]
      %v2975 = vld [vmem:[%s2973 + $0x8] sm:$0xff]
      %v2976 = vld [vmem:[%s2973 + $0x10] sm:$0xff]
      %v2977 = vld [vmem:[%s2973 + $0x18] sm:$0xff]
      %v2978 = vld [vmem:[%s2973 + $0x20] sm:$0xff]
      %v2979 = vld [vmem:[%s2973 + $0x28] sm:$0xff]
      %v2981 = vsel %vm748, %v2974, 0
      %v2984 = vsel %vm748, %v2975, 0
      %v2987 = vsel %vm748, %v2976, 0
      %v2990 = vsel %vm748, %v2977, 0
      %v2993 = vsel %vm748, %v2978, 0
      %v2996 = vsel %vm748, %v2979, 0
      %v2999 = vsel %vm767, %v685, 0
      %v3002 = vsel %vm767, %v686, 0
      %3004 = vmatpush.msra.mxu0 0.0
      %3005 = vmatpush.msra.mxu0 0.0
      %3006 = vmatpush.msra.mxu0 0.0
      %3007 = vmatpush.msra.mxu0 0.0
      %3008 = vmatpush.msra.mxu0 0.0
      %3009 = vmatpush.msra.mxu0 0.0
      %3010 = vmatpush.msra.mxu0 0.0
      %3011 = vmatpush.msra.mxu0 0.0
      %3012 = vmatpush.msra.mxu0 0.0
      %3013 = vmatpush.msra.mxu0 0.0
      %3014 = vmatpush.msra.mxu0 0.0
      %3015 = vmatpush.msra.mxu0 0.0
      %3016 = vmatpush.msra.mxu0 0.0
      %3017 = vmatpush.msra.mxu0 0.0
      %3018 = vmatpush.msra.mxu0 0.0
      %3019 = vmatpush.msra.mxu0 %v2999
      %3020 = vmatmul.f32.gmra.mxu0 %v2981
      %v3021 = vpop.f32.mrf.mxu0
      %v3022 = vadd.f32 0.0, %v3021
      %3023 = vmatmul.f32.gmra.mxu0 %v2984
      %v3024 = vpop.f32.mrf.mxu0
      %v3025 = vadd.f32 0.0, %v3024
      %3026 = vmatmul.f32.gmra.mxu0 %v2987
      %v3027 = vpop.f32.mrf.mxu0
      %v3028 = vadd.f32 0.0, %v3027
      %3029 = vmatmul.f32.gmra.mxu0 %v2990
      %v3030 = vpop.f32.mrf.mxu0
      %v3031 = vadd.f32 0.0, %v3030
      %3032 = vmatmul.f32.gmra.mxu0 %v2993
      %v3033 = vpop.f32.mrf.mxu0
      %v3034 = vadd.f32 0.0, %v3033
      %3035 = vmatmul.f32.gmra.mxu0 %v2996
      %v3036 = vpop.f32.mrf.mxu0
      %v3037 = vadd.f32 0.0, %v3036
      %3038 = vdwg.mxu0
      %3039 = vmatpush.msra.mxu0 0.0
      %3040 = vmatpush.msra.mxu0 0.0
      %3041 = vmatpush.msra.mxu0 0.0
      %3042 = vmatpush.msra.mxu0 0.0
      %3043 = vmatpush.msra.mxu0 0.0
      %3044 = vmatpush.msra.mxu0 0.0
      %3045 = vmatpush.msra.mxu0 0.0
      %3046 = vmatpush.msra.mxu0 0.0
      %3047 = vmatpush.msra.mxu0 0.0
      %3048 = vmatpush.msra.mxu0 0.0
      %3049 = vmatpush.msra.mxu0 0.0
      %3050 = vmatpush.msra.mxu0 0.0
      %3051 = vmatpush.msra.mxu0 0.0
      %3052 = vmatpush.msra.mxu0 0.0
      %3053 = vmatpush.msra.mxu0 0.0
      %3054 = vmatpush.msra.mxu0 %v3002
      %3055 = vmatmul.f32.gmra.mxu0 %v2981
      %v3056 = vpop.f32.mrf.mxu0
      %v3057 = vadd.f32 0.0, %v3056
      %3058 = vmatmul.f32.gmra.mxu0 %v2984
      %v3059 = vpop.f32.mrf.mxu0
      %v3060 = vadd.f32 0.0, %v3059
      %3061 = vmatmul.f32.gmra.mxu0 %v2987
      %v3062 = vpop.f32.mrf.mxu0
      %v3063 = vadd.f32 0.0, %v3062
      %3064 = vmatmul.f32.gmra.mxu0 %v2990
      %v3065 = vpop.f32.mrf.mxu0
      %v3066 = vadd.f32 0.0, %v3065
      %3067 = vmatmul.f32.gmra.mxu0 %v2993
      %v3068 = vpop.f32.mrf.mxu0
      %v3069 = vadd.f32 0.0, %v3068
      %3070 = vmatmul.f32.gmra.mxu0 %v2996
      %v3071 = vpop.f32.mrf.mxu0
      %v3072 = vadd.f32 0.0, %v3071
      %3073 = vdwg.mxu0
      %v3074 = vadd.f32 %v2961, %v3022
      %v3075 = vadd.f32 %v2962, %v3057
      %v3076 = vadd.f32 %v2963, %v3025
      %v3077 = vadd.f32 %v2964, %v3060
      %v3078 = vadd.f32 %v2965, %v3028
      %v3079 = vadd.f32 %v2966, %v3063
      %v3080 = vadd.f32 %v2967, %v3031
      %v3081 = vadd.f32 %v2968, %v3066
      %v3082 = vadd.f32 %v2969, %v3034
      %v3083 = vadd.f32 %v2970, %v3069
      %v3084 = vadd.f32 %v2971, %v3037
      %v3085 = vadd.f32 %v2972, %v3072
      %s3086 = scalar_lea.vmem %s10, 1008
      %v3087 = vld [vmem:[%s3086] sm:$0xff]
      %v3088 = vld [vmem:[%s3086 + $0x8] sm:$0xff]
      %v3089 = vld [vmem:[%s3086 + $0x10] sm:$0xff]
      %v3090 = vld [vmem:[%s3086 + $0x18] sm:$0xff]
      %v3091 = vld [vmem:[%s3086 + $0x20] sm:$0xff]
      %v3092 = vld [vmem:[%s3086 + $0x28] sm:$0xff]
      %v3094 = vsel %vm748, %v3087, 0
      %v3097 = vsel %vm748, %v3088, 0
      %v3100 = vsel %vm748, %v3089, 0
      %v3103 = vsel %vm748, %v3090, 0
      %v3106 = vsel %vm748, %v3091, 0
      %v3109 = vsel %vm748, %v3092, 0
      %v3112 = vsel %vm767, %v697, 0
      %v3115 = vsel %vm767, %v698, 0
      %3117 = vmatpush.msra.mxu0 0.0
      %3118 = vmatpush.msra.mxu0 0.0
      %3119 = vmatpush.msra.mxu0 0.0
      %3120 = vmatpush.msra.mxu0 0.0
      %3121 = vmatpush.msra.mxu0 0.0
      %3122 = vmatpush.msra.mxu0 0.0
      %3123 = vmatpush.msra.mxu0 0.0
      %3124 = vmatpush.msra.mxu0 0.0
      %3125 = vmatpush.msra.mxu0 0.0
      %3126 = vmatpush.msra.mxu0 0.0
      %3127 = vmatpush.msra.mxu0 0.0
      %3128 = vmatpush.msra.mxu0 0.0
      %3129 = vmatpush.msra.mxu0 0.0
      %3130 = vmatpush.msra.mxu0 0.0
      %3131 = vmatpush.msra.mxu0 0.0
      %3132 = vmatpush.msra.mxu0 %v3112
      %3133 = vmatmul.f32.gmra.mxu0 %v3094
      %v3134 = vpop.f32.mrf.mxu0
      %v3135 = vadd.f32 0.0, %v3134
      %3136 = vmatmul.f32.gmra.mxu0 %v3097
      %v3137 = vpop.f32.mrf.mxu0
      %v3138 = vadd.f32 0.0, %v3137
      %3139 = vmatmul.f32.gmra.mxu0 %v3100
      %v3140 = vpop.f32.mrf.mxu0
      %v3141 = vadd.f32 0.0, %v3140
      %3142 = vmatmul.f32.gmra.mxu0 %v3103
      %v3143 = vpop.f32.mrf.mxu0
      %v3144 = vadd.f32 0.0, %v3143
      %3145 = vmatmul.f32.gmra.mxu0 %v3106
      %v3146 = vpop.f32.mrf.mxu0
      %v3147 = vadd.f32 0.0, %v3146
      %3148 = vmatmul.f32.gmra.mxu0 %v3109
      %v3149 = vpop.f32.mrf.mxu0
      %v3150 = vadd.f32 0.0, %v3149
      %3151 = vdwg.mxu0
      %3152 = vmatpush.msra.mxu0 0.0
      %3153 = vmatpush.msra.mxu0 0.0
      %3154 = vmatpush.msra.mxu0 0.0
      %3155 = vmatpush.msra.mxu0 0.0
      %3156 = vmatpush.msra.mxu0 0.0
      %3157 = vmatpush.msra.mxu0 0.0
      %3158 = vmatpush.msra.mxu0 0.0
      %3159 = vmatpush.msra.mxu0 0.0
      %3160 = vmatpush.msra.mxu0 0.0
      %3161 = vmatpush.msra.mxu0 0.0
      %3162 = vmatpush.msra.mxu0 0.0
      %3163 = vmatpush.msra.mxu0 0.0
      %3164 = vmatpush.msra.mxu0 0.0
      %3165 = vmatpush.msra.mxu0 0.0
      %3166 = vmatpush.msra.mxu0 0.0
      %3167 = vmatpush.msra.mxu0 %v3115
      %3168 = vmatmul.f32.gmra.mxu0 %v3094
      %v3169 = vpop.f32.mrf.mxu0
      %v3170 = vadd.f32 0.0, %v3169
      %3171 = vmatmul.f32.gmra.mxu0 %v3097
      %v3172 = vpop.f32.mrf.mxu0
      %v3173 = vadd.f32 0.0, %v3172
      %3174 = vmatmul.f32.gmra.mxu0 %v3100
      %v3175 = vpop.f32.mrf.mxu0
      %v3176 = vadd.f32 0.0, %v3175
      %3177 = vmatmul.f32.gmra.mxu0 %v3103
      %v3178 = vpop.f32.mrf.mxu0
      %v3179 = vadd.f32 0.0, %v3178
      %3180 = vmatmul.f32.gmra.mxu0 %v3106
      %v3181 = vpop.f32.mrf.mxu0
      %v3182 = vadd.f32 0.0, %v3181
      %3183 = vmatmul.f32.gmra.mxu0 %v3109
      %v3184 = vpop.f32.mrf.mxu0
      %v3185 = vadd.f32 0.0, %v3184
      %3186 = vdwg.mxu0
      %v3187 = vadd.f32 %v3074, %v3135
      %v3188 = vadd.f32 %v3075, %v3170
      %v3189 = vadd.f32 %v3076, %v3138
      %v3190 = vadd.f32 %v3077, %v3173
      %v3191 = vadd.f32 %v3078, %v3141
      %v3192 = vadd.f32 %v3079, %v3176
      %v3193 = vadd.f32 %v3080, %v3144
      %v3194 = vadd.f32 %v3081, %v3179
      %v3195 = vadd.f32 %v3082, %v3147
      %v3196 = vadd.f32 %v3083, %v3182
      %v3197 = vadd.f32 %v3084, %v3150
      %v3198 = vadd.f32 %v3085, %v3185
      %s3199 = scalar_lea.vmem %s10, 1056
      %v3200 = vld [vmem:[%s3199] sm:$0xff]
      %v3201 = vld [vmem:[%s3199 + $0x8] sm:$0xff]
      %v3202 = vld [vmem:[%s3199 + $0x10] sm:$0xff]
      %v3203 = vld [vmem:[%s3199 + $0x18] sm:$0xff]
      %v3204 = vld [vmem:[%s3199 + $0x20] sm:$0xff]
      %v3205 = vld [vmem:[%s3199 + $0x28] sm:$0xff]
      %v3207 = vsel %vm748, %v3200, 0
      %v3210 = vsel %vm748, %v3201, 0
      %v3213 = vsel %vm748, %v3202, 0
      %v3216 = vsel %vm748, %v3203, 0
      %v3219 = vsel %vm748, %v3204, 0
      %v3222 = vsel %vm748, %v3205, 0
      %v3225 = vsel %vm767, %v709, 0
      %v3228 = vsel %vm767, %v710, 0
      %3230 = vmatpush.msra.mxu0 0.0
      %3231 = vmatpush.msra.mxu0 0.0
      %3232 = vmatpush.msra.mxu0 0.0
      %3233 = vmatpush.msra.mxu0 0.0
      %3234 = vmatpush.msra.mxu0 0.0
      %3235 = vmatpush.msra.mxu0 0.0
      %3236 = vmatpush.msra.mxu0 0.0
      %3237 = vmatpush.msra.mxu0 0.0
      %3238 = vmatpush.msra.mxu0 0.0
      %3239 = vmatpush.msra.mxu0 0.0
      %3240 = vmatpush.msra.mxu0 0.0
      %3241 = vmatpush.msra.mxu0 0.0
      %3242 = vmatpush.msra.mxu0 0.0
      %3243 = vmatpush.msra.mxu0 0.0
      %3244 = vmatpush.msra.mxu0 0.0
      %3245 = vmatpush.msra.mxu0 %v3225
      %3246 = vmatmul.f32.gmra.mxu0 %v3207
      %v3247 = vpop.f32.mrf.mxu0
      %v3248 = vadd.f32 0.0, %v3247
      %3249 = vmatmul.f32.gmra.mxu0 %v3210
      %v3250 = vpop.f32.mrf.mxu0
      %v3251 = vadd.f32 0.0, %v3250
      %3252 = vmatmul.f32.gmra.mxu0 %v3213
      %v3253 = vpop.f32.mrf.mxu0
      %v3254 = vadd.f32 0.0, %v3253
      %3255 = vmatmul.f32.gmra.mxu0 %v3216
      %v3256 = vpop.f32.mrf.mxu0
      %v3257 = vadd.f32 0.0, %v3256
      %3258 = vmatmul.f32.gmra.mxu0 %v3219
      %v3259 = vpop.f32.mrf.mxu0
      %v3260 = vadd.f32 0.0, %v3259
      %3261 = vmatmul.f32.gmra.mxu0 %v3222
      %v3262 = vpop.f32.mrf.mxu0
      %v3263 = vadd.f32 0.0, %v3262
      %3264 = vdwg.mxu0
      %3265 = vmatpush.msra.mxu0 0.0
      %3266 = vmatpush.msra.mxu0 0.0
      %3267 = vmatpush.msra.mxu0 0.0
      %3268 = vmatpush.msra.mxu0 0.0
      %3269 = vmatpush.msra.mxu0 0.0
      %3270 = vmatpush.msra.mxu0 0.0
      %3271 = vmatpush.msra.mxu0 0.0
      %3272 = vmatpush.msra.mxu0 0.0
      %3273 = vmatpush.msra.mxu0 0.0
      %3274 = vmatpush.msra.mxu0 0.0
      %3275 = vmatpush.msra.mxu0 0.0
      %3276 = vmatpush.msra.mxu0 0.0
      %3277 = vmatpush.msra.mxu0 0.0
      %3278 = vmatpush.msra.mxu0 0.0
      %3279 = vmatpush.msra.mxu0 0.0
      %3280 = vmatpush.msra.mxu0 %v3228
      %3281 = vmatmul.f32.gmra.mxu0 %v3207
      %v3282 = vpop.f32.mrf.mxu0
      %v3283 = vadd.f32 0.0, %v3282
      %3284 = vmatmul.f32.gmra.mxu0 %v3210
      %v3285 = vpop.f32.mrf.mxu0
      %v3286 = vadd.f32 0.0, %v3285
      %3287 = vmatmul.f32.gmra.mxu0 %v3213
      %v3288 = vpop.f32.mrf.mxu0
      %v3289 = vadd.f32 0.0, %v3288
      %3290 = vmatmul.f32.gmra.mxu0 %v3216
      %v3291 = vpop.f32.mrf.mxu0
      %v3292 = vadd.f32 0.0, %v3291
      %3293 = vmatmul.f32.gmra.mxu0 %v3219
      %v3294 = vpop.f32.mrf.mxu0
      %v3295 = vadd.f32 0.0, %v3294
      %3296 = vmatmul.f32.gmra.mxu0 %v3222
      %v3297 = vpop.f32.mrf.mxu0
      %v3298 = vadd.f32 0.0, %v3297
      %3299 = vdwg.mxu0
      %v3300 = vadd.f32 %v3187, %v3248
      %v3301 = vadd.f32 %v3188, %v3283
      %v3302 = vadd.f32 %v3189, %v3251
      %v3303 = vadd.f32 %v3190, %v3286
      %v3304 = vadd.f32 %v3191, %v3254
      %v3305 = vadd.f32 %v3192, %v3289
      %v3306 = vadd.f32 %v3193, %v3257
      %v3307 = vadd.f32 %v3194, %v3292
      %v3308 = vadd.f32 %v3195, %v3260
      %v3309 = vadd.f32 %v3196, %v3295
      %v3310 = vadd.f32 %v3197, %v3263
      %v3311 = vadd.f32 %v3198, %v3298
      %s3312 = scalar_lea.vmem %s10, 1104
      %v3313 = vld [vmem:[%s3312] sm:$0xff]
      %v3314 = vld [vmem:[%s3312 + $0x8] sm:$0xff]
      %v3315 = vld [vmem:[%s3312 + $0x10] sm:$0xff]
      %v3316 = vld [vmem:[%s3312 + $0x18] sm:$0xff]
      %v3317 = vld [vmem:[%s3312 + $0x20] sm:$0xff]
      %v3318 = vld [vmem:[%s3312 + $0x28] sm:$0xff]
      %v3320 = vsel %vm748, %v3313, 0
      %v3323 = vsel %vm748, %v3314, 0
      %v3326 = vsel %vm748, %v3315, 0
      %v3329 = vsel %vm748, %v3316, 0
      %v3332 = vsel %vm748, %v3317, 0
      %v3335 = vsel %vm748, %v3318, 0
      %v3338 = vsel %vm767, %v721, 0
      %v3341 = vsel %vm767, %v722, 0
      %3343 = vmatpush.msra.mxu0 0.0
      %3344 = vmatpush.msra.mxu0 0.0
      %3345 = vmatpush.msra.mxu0 0.0
      %3346 = vmatpush.msra.mxu0 0.0
      %3347 = vmatpush.msra.mxu0 0.0
      %3348 = vmatpush.msra.mxu0 0.0
      %3349 = vmatpush.msra.mxu0 0.0
      %3350 = vmatpush.msra.mxu0 0.0
      %3351 = vmatpush.msra.mxu0 0.0
      %3352 = vmatpush.msra.mxu0 0.0
      %3353 = vmatpush.msra.mxu0 0.0
      %3354 = vmatpush.msra.mxu0 0.0
      %3355 = vmatpush.msra.mxu0 0.0
      %3356 = vmatpush.msra.mxu0 0.0
      %3357 = vmatpush.msra.mxu0 0.0
      %3358 = vmatpush.msra.mxu0 %v3338
      %3359 = vmatmul.f32.gmra.mxu0 %v3320
      %v3360 = vpop.f32.mrf.mxu0
      %v3361 = vadd.f32 0.0, %v3360
      %3362 = vmatmul.f32.gmra.mxu0 %v3323
      %v3363 = vpop.f32.mrf.mxu0
      %v3364 = vadd.f32 0.0, %v3363
      %3365 = vmatmul.f32.gmra.mxu0 %v3326
      %v3366 = vpop.f32.mrf.mxu0
      %v3367 = vadd.f32 0.0, %v3366
      %3368 = vmatmul.f32.gmra.mxu0 %v3329
      %v3369 = vpop.f32.mrf.mxu0
      %v3370 = vadd.f32 0.0, %v3369
      %3371 = vmatmul.f32.gmra.mxu0 %v3332
      %v3372 = vpop.f32.mrf.mxu0
      %v3373 = vadd.f32 0.0, %v3372
      %3374 = vmatmul.f32.gmra.mxu0 %v3335
      %v3375 = vpop.f32.mrf.mxu0
      %v3376 = vadd.f32 0.0, %v3375
      %3377 = vdwg.mxu0
      %3378 = vmatpush.msra.mxu0 0.0
      %3379 = vmatpush.msra.mxu0 0.0
      %3380 = vmatpush.msra.mxu0 0.0
      %3381 = vmatpush.msra.mxu0 0.0
      %3382 = vmatpush.msra.mxu0 0.0
      %3383 = vmatpush.msra.mxu0 0.0
      %3384 = vmatpush.msra.mxu0 0.0
      %3385 = vmatpush.msra.mxu0 0.0
      %3386 = vmatpush.msra.mxu0 0.0
      %3387 = vmatpush.msra.mxu0 0.0
      %3388 = vmatpush.msra.mxu0 0.0
      %3389 = vmatpush.msra.mxu0 0.0
      %3390 = vmatpush.msra.mxu0 0.0
      %3391 = vmatpush.msra.mxu0 0.0
      %3392 = vmatpush.msra.mxu0 0.0
      %3393 = vmatpush.msra.mxu0 %v3341
      %3394 = vmatmul.f32.gmra.mxu0 %v3320
      %v3395 = vpop.f32.mrf.mxu0
      %v3396 = vadd.f32 0.0, %v3395
      %3397 = vmatmul.f32.gmra.mxu0 %v3323
      %v3398 = vpop.f32.mrf.mxu0
      %v3399 = vadd.f32 0.0, %v3398
      %3400 = vmatmul.f32.gmra.mxu0 %v3326
      %v3401 = vpop.f32.mrf.mxu0
      %v3402 = vadd.f32 0.0, %v3401
      %3403 = vmatmul.f32.gmra.mxu0 %v3329
      %v3404 = vpop.f32.mrf.mxu0
      %v3405 = vadd.f32 0.0, %v3404
      %3406 = vmatmul.f32.gmra.mxu0 %v3332
      %v3407 = vpop.f32.mrf.mxu0
      %v3408 = vadd.f32 0.0, %v3407
      %3409 = vmatmul.f32.gmra.mxu0 %v3335
      %v3410 = vpop.f32.mrf.mxu0
      %v3411 = vadd.f32 0.0, %v3410
      %3412 = vdwg.mxu0
      %v3413 = vadd.f32 %v3300, %v3361
      %v3414 = vadd.f32 %v3301, %v3396
      %v3415 = vadd.f32 %v3302, %v3364
      %v3416 = vadd.f32 %v3303, %v3399
      %v3417 = vadd.f32 %v3304, %v3367
      %v3418 = vadd.f32 %v3305, %v3402
      %v3419 = vadd.f32 %v3306, %v3370
      %v3420 = vadd.f32 %v3307, %v3405
      %v3421 = vadd.f32 %v3308, %v3373
      %v3422 = vadd.f32 %v3309, %v3408
      %v3423 = vadd.f32 %v3310, %v3376
      %v3424 = vadd.f32 %v3311, %v3411
      %s3425 = scalar_lea.vmem %s10, 1152
      %v3426 = vld [vmem:[%s3425] sm:$0xff]
      %v3427 = vld [vmem:[%s3425 + $0x8] sm:$0xff]
      %v3428 = vld [vmem:[%s3425 + $0x10] sm:$0xff]
      %v3429 = vld [vmem:[%s3425 + $0x18] sm:$0xff]
      %v3430 = vld [vmem:[%s3425 + $0x20] sm:$0xff]
      %v3431 = vld [vmem:[%s3425 + $0x28] sm:$0xff]
      %v3433 = vsel %vm748, %v3426, 0
      %v3436 = vsel %vm748, %v3427, 0
      %v3439 = vsel %vm748, %v3428, 0
      %v3442 = vsel %vm748, %v3429, 0
      %v3445 = vsel %vm748, %v3430, 0
      %v3448 = vsel %vm748, %v3431, 0
      %v3451 = vsel %vm767, %v733, 0
      %v3454 = vsel %vm767, %v734, 0
      %3456 = vmatpush.msra.mxu0 0.0
      %3457 = vmatpush.msra.mxu0 0.0
      %3458 = vmatpush.msra.mxu0 0.0
      %3459 = vmatpush.msra.mxu0 0.0
      %3460 = vmatpush.msra.mxu0 0.0
      %3461 = vmatpush.msra.mxu0 0.0
      %3462 = vmatpush.msra.mxu0 0.0
      %3463 = vmatpush.msra.mxu0 0.0
      %3464 = vmatpush.msra.mxu0 0.0
      %3465 = vmatpush.msra.mxu0 0.0
      %3466 = vmatpush.msra.mxu0 0.0
      %3467 = vmatpush.msra.mxu0 0.0
      %3468 = vmatpush.msra.mxu0 0.0
      %3469 = vmatpush.msra.mxu0 0.0
      %3470 = vmatpush.msra.mxu0 0.0
      %3471 = vmatpush.msra.mxu0 %v3451
      %3472 = vmatmul.f32.gmra.mxu0 %v3433
      %v3473 = vpop.f32.mrf.mxu0
      %v3474 = vadd.f32 0.0, %v3473
      %3475 = vmatmul.f32.gmra.mxu0 %v3436
      %v3476 = vpop.f32.mrf.mxu0
      %v3477 = vadd.f32 0.0, %v3476
      %3478 = vmatmul.f32.gmra.mxu0 %v3439
      %v3479 = vpop.f32.mrf.mxu0
      %v3480 = vadd.f32 0.0, %v3479
      %3481 = vmatmul.f32.gmra.mxu0 %v3442
      %v3482 = vpop.f32.mrf.mxu0
      %v3483 = vadd.f32 0.0, %v3482
      %3484 = vmatmul.f32.gmra.mxu0 %v3445
      %v3485 = vpop.f32.mrf.mxu0
      %v3486 = vadd.f32 0.0, %v3485
      %3487 = vmatmul.f32.gmra.mxu0 %v3448
      %v3488 = vpop.f32.mrf.mxu0
      %v3489 = vadd.f32 0.0, %v3488
      %3490 = vdwg.mxu0
      %3491 = vmatpush.msra.mxu0 0.0
      %3492 = vmatpush.msra.mxu0 0.0
      %3493 = vmatpush.msra.mxu0 0.0
      %3494 = vmatpush.msra.mxu0 0.0
      %3495 = vmatpush.msra.mxu0 0.0
      %3496 = vmatpush.msra.mxu0 0.0
      %3497 = vmatpush.msra.mxu0 0.0
      %3498 = vmatpush.msra.mxu0 0.0
      %3499 = vmatpush.msra.mxu0 0.0
      %3500 = vmatpush.msra.mxu0 0.0
      %3501 = vmatpush.msra.mxu0 0.0
      %3502 = vmatpush.msra.mxu0 0.0
      %3503 = vmatpush.msra.mxu0 0.0
      %3504 = vmatpush.msra.mxu0 0.0
      %3505 = vmatpush.msra.mxu0 0.0
      %3506 = vmatpush.msra.mxu0 %v3454
      %3507 = vmatmul.f32.gmra.mxu0 %v3433
      %v3508 = vpop.f32.mrf.mxu0
      %v3509 = vadd.f32 0.0, %v3508
      %3510 = vmatmul.f32.gmra.mxu0 %v3436
      %v3511 = vpop.f32.mrf.mxu0
      %v3512 = vadd.f32 0.0, %v3511
      %3513 = vmatmul.f32.gmra.mxu0 %v3439
      %v3514 = vpop.f32.mrf.mxu0
      %v3515 = vadd.f32 0.0, %v3514
      %3516 = vmatmul.f32.gmra.mxu0 %v3442
      %v3517 = vpop.f32.mrf.mxu0
      %v3518 = vadd.f32 0.0, %v3517
      %3519 = vmatmul.f32.gmra.mxu0 %v3445
      %v3520 = vpop.f32.mrf.mxu0
      %v3521 = vadd.f32 0.0, %v3520
      %3522 = vmatmul.f32.gmra.mxu0 %v3448
      %v3523 = vpop.f32.mrf.mxu0
      %v3524 = vadd.f32 0.0, %v3523
      %3525 = vdwg.mxu0
      %v3526 = vadd.f32 %v3413, %v3474
      %v3527 = vadd.f32 %v3414, %v3509
      %v3528 = vadd.f32 %v3415, %v3477
      %v3529 = vadd.f32 %v3416, %v3512
      %v3530 = vadd.f32 %v3417, %v3480
      %v3531 = vadd.f32 %v3418, %v3515
      %v3532 = vadd.f32 %v3419, %v3483
      %v3533 = vadd.f32 %v3420, %v3518
      %v3534 = vadd.f32 %v3421, %v3486
      %v3535 = vadd.f32 %v3422, %v3521
      %v3536 = vadd.f32 %v3423, %v3489
      %v3537 = vadd.f32 %v3424, %v3524
      %v3538 = vld [vmem:[%s11] sm:$0xff]
      %v3539 = vld [vmem:[%s11 + $0x8] sm:$0xff]
      %v3540 = vld [vmem:[%s11 + $0x10] sm:$0xff]
      %v3541 = vld [vmem:[%s11 + $0x18] sm:$0xff]
      %v3542 = vld [vmem:[%s11 + $0x20] sm:$0xff]
      %v3543 = vld [vmem:[%s11 + $0x28] sm:$0xff]
      %3545 = vset.pattern.permute.xlu0 0
      %3546 = vperm.xlu0 %3545, %v3538
      %v3547 = vpop.permute.xlu0 %3546
      %3550 = vset.pattern.permute.xlu0 0
      %3551 = vperm.xlu0 %3550, %v3539
      %v3552 = vpop.permute.xlu0 %3551
      %3555 = vset.pattern.permute.xlu0 0
      %3556 = vperm.xlu0 %3555, %v3540
      %v3557 = vpop.permute.xlu0 %3556
      %3560 = vset.pattern.permute.xlu0 0
      %3561 = vperm.xlu0 %3560, %v3541
      %v3562 = vpop.permute.xlu0 %3561
      %3565 = vset.pattern.permute.xlu0 0
      %3566 = vperm.xlu0 %3565, %v3542
      %v3567 = vpop.permute.xlu0 %3566
      %3570 = vset.pattern.permute.xlu0 0
      %3571 = vperm.xlu0 %3570, %v3543
      %v3572 = vpop.permute.xlu0 %3571
      %v3574 = vadd.f32 %v3526, %v3547
      %v3575 = vadd.f32 %v3527, %v3547
      %v3576 = vadd.f32 %v3528, %v3552
      %v3577 = vadd.f32 %v3529, %v3552
      %v3578 = vadd.f32 %v3530, %v3557
      %v3579 = vadd.f32 %v3531, %v3557
      %v3580 = vadd.f32 %v3532, %v3562
      %v3581 = vadd.f32 %v3533, %v3562
      %v3582 = vadd.f32 %v3534, %v3567
      %v3583 = vadd.f32 %v3535, %v3567
      %v3584 = vadd.f32 %v3536, %v3572
      %v3585 = vadd.f32 %v3537, %v3572
      %v3586 = vld [vmem:[%s2] sm:$0xff]
      %v3587 = vld [vmem:[%s2 + $0x8] sm:$0xff]
      %v3588 = vld [vmem:[%s2 + $0x10] sm:$0xff]
      %v3589 = vld [vmem:[%s2 + $0x18] sm:$0xff]
      %v3590 = vld [vmem:[%s2 + $0x20] sm:$0xff]
      %v3591 = vld [vmem:[%s2 + $0x28] sm:$0xff]
      %v3592 = vld [vmem:[%s2 + $0x30] sm:$0xff]
      %v3593 = vld [vmem:[%s2 + $0x38] sm:$0xff]
      %s3594 = scalar_lea.vmem %s2, 64
      %v3595 = vld [vmem:[%s3594] sm:$0xff]
      %v3596 = vld [vmem:[%s3594 + $0x8] sm:$0xff]
      %v3597 = vld [vmem:[%s3594 + $0x10] sm:$0xff]
      %v3598 = vld [vmem:[%s3594 + $0x18] sm:$0xff]
      %v3599 = vld [vmem:[%s3594 + $0x20] sm:$0xff]
      %v3600 = vld [vmem:[%s3594 + $0x28] sm:$0xff]
      %v3601 = vld [vmem:[%s3594 + $0x30] sm:$0xff]
      %v3602 = vld [vmem:[%s3594 + $0x38] sm:$0xff]
      %v3604 = vsel %vm748, %v3595, 0
      %v3607 = vsel %vm748, %v3596, 0
      %v3610 = vsel %vm748, %v3597, 0
      %v3613 = vsel %vm748, %v3598, 0
      %v3616 = vsel %vm748, %v3599, 0
      %v3619 = vsel %vm748, %v3600, 0
      %v3622 = vsel %vm748, %v3601, 0
      %v3625 = vsel %vm748, %v3602, 0
      %3627 = vmatpush.msra.mxu0 0.0
      %3628 = vmatpush.msra.mxu0 0.0
      %3629 = vmatpush.msra.mxu0 0.0
      %3630 = vmatpush.msra.mxu0 0.0
      %3631 = vmatpush.msra.mxu0 0.0
      %3632 = vmatpush.msra.mxu0 0.0
      %3633 = vmatpush.msra.mxu0 0.0
      %3634 = vmatpush.msra.mxu0 0.0
      %3635 = vmatpush.msra.mxu0 0.0
      %3636 = vmatpush.msra.mxu0 0.0
      %3637 = vmatpush.msra.mxu0 0.0
      %3638 = vmatpush.msra.mxu0 0.0
      %3639 = vmatpush.msra.mxu0 0.0
      %3640 = vmatpush.msra.mxu0 0.0
      %3641 = vmatpush.msra.mxu0 0.0
      %3642 = vmatpush.msra.mxu0 %v1529
      %3643 = vmatmul.f32.gmra.mxu0 %v3604
      %v3644 = vpop.f32.mrf.mxu0
      %v3645 = vadd.f32 0.0, %v3644
      %3646 = vmatmul.f32.gmra.mxu0 %v3607
      %v3647 = vpop.f32.mrf.mxu0
      %v3648 = vadd.f32 0.0, %v3647
      %3649 = vmatmul.f32.gmra.mxu0 %v3610
      %v3650 = vpop.f32.mrf.mxu0
      %v3651 = vadd.f32 0.0, %v3650
      %3652 = vmatmul.f32.gmra.mxu0 %v3613
      %v3653 = vpop.f32.mrf.mxu0
      %v3654 = vadd.f32 0.0, %v3653
      %3655 = vmatmul.f32.gmra.mxu0 %v3616
      %v3656 = vpop.f32.mrf.mxu0
      %v3657 = vadd.f32 0.0, %v3656
      %3658 = vmatmul.f32.gmra.mxu0 %v3619
      %v3659 = vpop.f32.mrf.mxu0
      %v3660 = vadd.f32 0.0, %v3659
      %3661 = vmatmul.f32.gmra.mxu0 %v3622
      %v3662 = vpop.f32.mrf.mxu0
      %v3663 = vadd.f32 0.0, %v3662
      %3664 = vmatmul.f32.gmra.mxu0 %v3625
      %v3665 = vpop.f32.mrf.mxu0
      %v3666 = vadd.f32 0.0, %v3665
      %3667 = vdwg.mxu0
      %3668 = vmatpush.msra.mxu0 0.0
      %3669 = vmatpush.msra.mxu0 0.0
      %3670 = vmatpush.msra.mxu0 0.0
      %3671 = vmatpush.msra.mxu0 0.0
      %3672 = vmatpush.msra.mxu0 0.0
      %3673 = vmatpush.msra.mxu0 0.0
      %3674 = vmatpush.msra.mxu0 0.0
      %3675 = vmatpush.msra.mxu0 0.0
      %3676 = vmatpush.msra.mxu0 0.0
      %3677 = vmatpush.msra.mxu0 0.0
      %3678 = vmatpush.msra.mxu0 0.0
      %3679 = vmatpush.msra.mxu0 0.0
      %3680 = vmatpush.msra.mxu0 0.0
      %3681 = vmatpush.msra.mxu0 0.0
      %3682 = vmatpush.msra.mxu0 0.0
      %3683 = vmatpush.msra.mxu0 %v1532
      %3684 = vmatmul.f32.gmra.mxu0 %v3604
      %v3685 = vpop.f32.mrf.mxu0
      %v3686 = vadd.f32 0.0, %v3685
      %3687 = vmatmul.f32.gmra.mxu0 %v3607
      %v3688 = vpop.f32.mrf.mxu0
      %v3689 = vadd.f32 0.0, %v3688
      %3690 = vmatmul.f32.gmra.mxu0 %v3610
      %v3691 = vpop.f32.mrf.mxu0
      %v3692 = vadd.f32 0.0, %v3691
      %3693 = vmatmul.f32.gmra.mxu0 %v3613
      %v3694 = vpop.f32.mrf.mxu0
      %v3695 = vadd.f32 0.0, %v3694
      %3696 = vmatmul.f32.gmra.mxu0 %v3616
      %v3697 = vpop.f32.mrf.mxu0
      %v3698 = vadd.f32 0.0, %v3697
      %3699 = vmatmul.f32.gmra.mxu0 %v3619
      %v3700 = vpop.f32.mrf.mxu0
      %v3701 = vadd.f32 0.0, %v3700
      %3702 = vmatmul.f32.gmra.mxu0 %v3622
      %v3703 = vpop.f32.mrf.mxu0
      %v3704 = vadd.f32 0.0, %v3703
      %3705 = vmatmul.f32.gmra.mxu0 %v3625
      %v3706 = vpop.f32.mrf.mxu0
      %v3707 = vadd.f32 0.0, %v3706
      %3708 = vdwg.mxu0
      %v3710 = vsel %vm748, %v3586, 0
      %v3713 = vsel %vm748, %v3587, 0
      %v3716 = vsel %vm748, %v3588, 0
      %v3719 = vsel %vm748, %v3589, 0
      %v3722 = vsel %vm748, %v3590, 0
      %v3725 = vsel %vm748, %v3591, 0
      %v3728 = vsel %vm748, %v3592, 0
      %v3731 = vsel %vm748, %v3593, 0
      %3733 = vmatpush.msra.mxu0 0.0
      %3734 = vmatpush.msra.mxu0 0.0
      %3735 = vmatpush.msra.mxu0 0.0
      %3736 = vmatpush.msra.mxu0 0.0
      %3737 = vmatpush.msra.mxu0 0.0
      %3738 = vmatpush.msra.mxu0 0.0
      %3739 = vmatpush.msra.mxu0 0.0
      %3740 = vmatpush.msra.mxu0 0.0
      %3741 = vmatpush.msra.mxu0 0.0
      %3742 = vmatpush.msra.mxu0 0.0
      %3743 = vmatpush.msra.mxu0 0.0
      %3744 = vmatpush.msra.mxu0 0.0
      %3745 = vmatpush.msra.mxu0 0.0
      %3746 = vmatpush.msra.mxu0 0.0
      %3747 = vmatpush.msra.mxu0 0.0
      %3748 = vmatpush.msra.mxu0 %v1416
      %3749 = vmatmul.f32.gmra.mxu0 %v3710
      %v3750 = vpop.f32.mrf.mxu0
      %v3751 = vadd.f32 %v3645, %v3750
      %3752 = vmatmul.f32.gmra.mxu0 %v3713
      %v3753 = vpop.f32.mrf.mxu0
      %v3754 = vadd.f32 %v3648, %v3753
      %3755 = vmatmul.f32.gmra.mxu0 %v3716
      %v3756 = vpop.f32.mrf.mxu0
      %v3757 = vadd.f32 %v3651, %v3756
      %3758 = vmatmul.f32.gmra.mxu0 %v3719
      %v3759 = vpop.f32.mrf.mxu0
      %v3760 = vadd.f32 %v3654, %v3759
      %3761 = vmatmul.f32.gmra.mxu0 %v3722
      %v3762 = vpop.f32.mrf.mxu0
      %v3763 = vadd.f32 %v3657, %v3762
      %3764 = vmatmul.f32.gmra.mxu0 %v3725
      %v3765 = vpop.f32.mrf.mxu0
      %v3766 = vadd.f32 %v3660, %v3765
      %3767 = vmatmul.f32.gmra.mxu0 %v3728
      %v3768 = vpop.f32.mrf.mxu0
      %v3769 = vadd.f32 %v3663, %v3768
      %3770 = vmatmul.f32.gmra.mxu0 %v3731
      %v3771 = vpop.f32.mrf.mxu0
      %v3772 = vadd.f32 %v3666, %v3771
      %3773 = vdwg.mxu0
      %3774 = vmatpush.msra.mxu0 0.0
      %3775 = vmatpush.msra.mxu0 0.0
      %3776 = vmatpush.msra.mxu0 0.0
      %3777 = vmatpush.msra.mxu0 0.0
      %3778 = vmatpush.msra.mxu0 0.0
      %3779 = vmatpush.msra.mxu0 0.0
      %3780 = vmatpush.msra.mxu0 0.0
      %3781 = vmatpush.msra.mxu0 0.0
      %3782 = vmatpush.msra.mxu0 0.0
      %3783 = vmatpush.msra.mxu0 0.0
      %3784 = vmatpush.msra.mxu0 0.0
      %3785 = vmatpush.msra.mxu0 0.0
      %3786 = vmatpush.msra.mxu0 0.0
      %3787 = vmatpush.msra.mxu0 0.0
      %3788 = vmatpush.msra.mxu0 0.0
      %3789 = vmatpush.msra.mxu0 %v1419
      %3790 = vmatmul.f32.gmra.mxu0 %v3710
      %v3791 = vpop.f32.mrf.mxu0
      %v3792 = vadd.f32 %v3686, %v3791
      %3793 = vmatmul.f32.gmra.mxu0 %v3713
      %v3794 = vpop.f32.mrf.mxu0
      %v3795 = vadd.f32 %v3689, %v3794
      %3796 = vmatmul.f32.gmra.mxu0 %v3716
      %v3797 = vpop.f32.mrf.mxu0
      %v3798 = vadd.f32 %v3692, %v3797
      %3799 = vmatmul.f32.gmra.mxu0 %v3719
      %v3800 = vpop.f32.mrf.mxu0
      %v3801 = vadd.f32 %v3695, %v3800
      %3802 = vmatmul.f32.gmra.mxu0 %v3722
      %v3803 = vpop.f32.mrf.mxu0
      %v3804 = vadd.f32 %v3698, %v3803
      %3805 = vmatmul.f32.gmra.mxu0 %v3725
      %v3806 = vpop.f32.mrf.mxu0
      %v3807 = vadd.f32 %v3701, %v3806
      %3808 = vmatmul.f32.gmra.mxu0 %v3728
      %v3809 = vpop.f32.mrf.mxu0
      %v3810 = vadd.f32 %v3704, %v3809
      %3811 = vmatmul.f32.gmra.mxu0 %v3731
      %v3812 = vpop.f32.mrf.mxu0
      %v3813 = vadd.f32 %v3707, %v3812
      %3814 = vdwg.mxu0
      %s3815 = scalar_lea.vmem %s2, 128
      %v3816 = vld [vmem:[%s3815] sm:$0xff]
      %v3817 = vld [vmem:[%s3815 + $0x8] sm:$0xff]
      %v3818 = vld [vmem:[%s3815 + $0x10] sm:$0xff]
      %v3819 = vld [vmem:[%s3815 + $0x18] sm:$0xff]
      %v3820 = vld [vmem:[%s3815 + $0x20] sm:$0xff]
      %v3821 = vld [vmem:[%s3815 + $0x28] sm:$0xff]
      %v3822 = vld [vmem:[%s3815 + $0x30] sm:$0xff]
      %v3823 = vld [vmem:[%s3815 + $0x38] sm:$0xff]
      %v3825 = vsel %vm748, %v3816, 0
      %v3828 = vsel %vm748, %v3817, 0
      %v3831 = vsel %vm748, %v3818, 0
      %v3834 = vsel %vm748, %v3819, 0
      %v3837 = vsel %vm748, %v3820, 0
      %v3840 = vsel %vm748, %v3821, 0
      %v3843 = vsel %vm748, %v3822, 0
      %v3846 = vsel %vm748, %v3823, 0
      %3848 = vmatpush.msra.mxu0 0.0
      %3849 = vmatpush.msra.mxu0 0.0
      %3850 = vmatpush.msra.mxu0 0.0
      %3851 = vmatpush.msra.mxu0 0.0
      %3852 = vmatpush.msra.mxu0 0.0
      %3853 = vmatpush.msra.mxu0 0.0
      %3854 = vmatpush.msra.mxu0 0.0
      %3855 = vmatpush.msra.mxu0 0.0
      %3856 = vmatpush.msra.mxu0 0.0
      %3857 = vmatpush.msra.mxu0 0.0
      %3858 = vmatpush.msra.mxu0 0.0
      %3859 = vmatpush.msra.mxu0 0.0
      %3860 = vmatpush.msra.mxu0 0.0
      %3861 = vmatpush.msra.mxu0 0.0
      %3862 = vmatpush.msra.mxu0 0.0
      %3863 = vmatpush.msra.mxu0 %v1642
      %3864 = vmatmul.f32.gmra.mxu0 %v3825
      %v3865 = vpop.f32.mrf.mxu0
      %v3866 = vadd.f32 0.0, %v3865
      %3867 = vmatmul.f32.gmra.mxu0 %v3828
      %v3868 = vpop.f32.mrf.mxu0
      %v3869 = vadd.f32 0.0, %v3868
      %3870 = vmatmul.f32.gmra.mxu0 %v3831
      %v3871 = vpop.f32.mrf.mxu0
      %v3872 = vadd.f32 0.0, %v3871
      %3873 = vmatmul.f32.gmra.mxu0 %v3834
      %v3874 = vpop.f32.mrf.mxu0
      %v3875 = vadd.f32 0.0, %v3874
      %3876 = vmatmul.f32.gmra.mxu0 %v3837
      %v3877 = vpop.f32.mrf.mxu0
      %v3878 = vadd.f32 0.0, %v3877
      %3879 = vmatmul.f32.gmra.mxu0 %v3840
      %v3880 = vpop.f32.mrf.mxu0
      %v3881 = vadd.f32 0.0, %v3880
      %3882 = vmatmul.f32.gmra.mxu0 %v3843
      %v3883 = vpop.f32.mrf.mxu0
      %v3884 = vadd.f32 0.0, %v3883
      %3885 = vmatmul.f32.gmra.mxu0 %v3846
      %v3886 = vpop.f32.mrf.mxu0
      %v3887 = vadd.f32 0.0, %v3886
      %3888 = vdwg.mxu0
      %3889 = vmatpush.msra.mxu0 0.0
      %3890 = vmatpush.msra.mxu0 0.0
      %3891 = vmatpush.msra.mxu0 0.0
      %3892 = vmatpush.msra.mxu0 0.0
      %3893 = vmatpush.msra.mxu0 0.0
      %3894 = vmatpush.msra.mxu0 0.0
      %3895 = vmatpush.msra.mxu0 0.0
      %3896 = vmatpush.msra.mxu0 0.0
      %3897 = vmatpush.msra.mxu0 0.0
      %3898 = vmatpush.msra.mxu0 0.0
      %3899 = vmatpush.msra.mxu0 0.0
      %3900 = vmatpush.msra.mxu0 0.0
      %3901 = vmatpush.msra.mxu0 0.0
      %3902 = vmatpush.msra.mxu0 0.0
      %3903 = vmatpush.msra.mxu0 0.0
      %3904 = vmatpush.msra.mxu0 %v1645
      %3905 = vmatmul.f32.gmra.mxu0 %v3825
      %v3906 = vpop.f32.mrf.mxu0
      %v3907 = vadd.f32 0.0, %v3906
      %3908 = vmatmul.f32.gmra.mxu0 %v3828
      %v3909 = vpop.f32.mrf.mxu0
      %v3910 = vadd.f32 0.0, %v3909
      %3911 = vmatmul.f32.gmra.mxu0 %v3831
      %v3912 = vpop.f32.mrf.mxu0
      %v3913 = vadd.f32 0.0, %v3912
      %3914 = vmatmul.f32.gmra.mxu0 %v3834
      %v3915 = vpop.f32.mrf.mxu0
      %v3916 = vadd.f32 0.0, %v3915
      %3917 = vmatmul.f32.gmra.mxu0 %v3837
      %v3918 = vpop.f32.mrf.mxu0
      %v3919 = vadd.f32 0.0, %v3918
      %3920 = vmatmul.f32.gmra.mxu0 %v3840
      %v3921 = vpop.f32.mrf.mxu0
      %v3922 = vadd.f32 0.0, %v3921
      %3923 = vmatmul.f32.gmra.mxu0 %v3843
      %v3924 = vpop.f32.mrf.mxu0
      %v3925 = vadd.f32 0.0, %v3924
      %3926 = vmatmul.f32.gmra.mxu0 %v3846
      %v3927 = vpop.f32.mrf.mxu0
      %v3928 = vadd.f32 0.0, %v3927
      %3929 = vdwg.mxu0
      %v3930 = vadd.f32 %v3751, %v3866
      %v3931 = vadd.f32 %v3792, %v3907
      %v3932 = vadd.f32 %v3754, %v3869
      %v3933 = vadd.f32 %v3795, %v3910
      %v3934 = vadd.f32 %v3757, %v3872
      %v3935 = vadd.f32 %v3798, %v3913
      %v3936 = vadd.f32 %v3760, %v3875
      %v3937 = vadd.f32 %v3801, %v3916
      %v3938 = vadd.f32 %v3763, %v3878
      %v3939 = vadd.f32 %v3804, %v3919
      %v3940 = vadd.f32 %v3766, %v3881
      %v3941 = vadd.f32 %v3807, %v3922
      %v3942 = vadd.f32 %v3769, %v3884
      %v3943 = vadd.f32 %v3810, %v3925
      %v3944 = vadd.f32 %v3772, %v3887
      %v3945 = vadd.f32 %v3813, %v3928
      %s3946 = scalar_lea.vmem %s2, 192
      %v3947 = vld [vmem:[%s3946] sm:$0xff]
      %v3948 = vld [vmem:[%s3946 + $0x8] sm:$0xff]
      %v3949 = vld [vmem:[%s3946 + $0x10] sm:$0xff]
      %v3950 = vld [vmem:[%s3946 + $0x18] sm:$0xff]
      %v3951 = vld [vmem:[%s3946 + $0x20] sm:$0xff]
      %v3952 = vld [vmem:[%s3946 + $0x28] sm:$0xff]
      %v3953 = vld [vmem:[%s3946 + $0x30] sm:$0xff]
      %v3954 = vld [vmem:[%s3946 + $0x38] sm:$0xff]
      %v3956 = vsel %vm748, %v3947, 0
      %v3959 = vsel %vm748, %v3948, 0
      %v3962 = vsel %vm748, %v3949, 0
      %v3965 = vsel %vm748, %v3950, 0
      %v3968 = vsel %vm748, %v3951, 0
      %v3971 = vsel %vm748, %v3952, 0
      %v3974 = vsel %vm748, %v3953, 0
      %v3977 = vsel %vm748, %v3954, 0
      %3979 = vmatpush.msra.mxu0 0.0
      %3980 = vmatpush.msra.mxu0 0.0
      %3981 = vmatpush.msra.mxu0 0.0
      %3982 = vmatpush.msra.mxu0 0.0
      %3983 = vmatpush.msra.mxu0 0.0
      %3984 = vmatpush.msra.mxu0 0.0
      %3985 = vmatpush.msra.mxu0 0.0
      %3986 = vmatpush.msra.mxu0 0.0
      %3987 = vmatpush.msra.mxu0 0.0
      %3988 = vmatpush.msra.mxu0 0.0
      %3989 = vmatpush.msra.mxu0 0.0
      %3990 = vmatpush.msra.mxu0 0.0
      %3991 = vmatpush.msra.mxu0 0.0
      %3992 = vmatpush.msra.mxu0 0.0
      %3993 = vmatpush.msra.mxu0 0.0
      %3994 = vmatpush.msra.mxu0 %v1981
      %3995 = vmatmul.f32.gmra.mxu0 %v3956
      %v3996 = vpop.f32.mrf.mxu0
      %v3997 = vadd.f32 0.0, %v3996
      %3998 = vmatmul.f32.gmra.mxu0 %v3959
      %v3999 = vpop.f32.mrf.mxu0
      %v4000 = vadd.f32 0.0, %v3999
      %4001 = vmatmul.f32.gmra.mxu0 %v3962
      %v4002 = vpop.f32.mrf.mxu0
      %v4003 = vadd.f32 0.0, %v4002
      %4004 = vmatmul.f32.gmra.mxu0 %v3965
      %v4005 = vpop.f32.mrf.mxu0
      %v4006 = vadd.f32 0.0, %v4005
      %4007 = vmatmul.f32.gmra.mxu0 %v3968
      %v4008 = vpop.f32.mrf.mxu0
      %v4009 = vadd.f32 0.0, %v4008
      %4010 = vmatmul.f32.gmra.mxu0 %v3971
      %v4011 = vpop.f32.mrf.mxu0
      %v4012 = vadd.f32 0.0, %v4011
      %4013 = vmatmul.f32.gmra.mxu0 %v3974
      %v4014 = vpop.f32.mrf.mxu0
      %v4015 = vadd.f32 0.0, %v4014
      %4016 = vmatmul.f32.gmra.mxu0 %v3977
      %v4017 = vpop.f32.mrf.mxu0
      %v4018 = vadd.f32 0.0, %v4017
      %4019 = vdwg.mxu0
      %4020 = vmatpush.msra.mxu0 0.0
      %4021 = vmatpush.msra.mxu0 0.0
      %4022 = vmatpush.msra.mxu0 0.0
      %4023 = vmatpush.msra.mxu0 0.0
      %4024 = vmatpush.msra.mxu0 0.0
      %4025 = vmatpush.msra.mxu0 0.0
      %4026 = vmatpush.msra.mxu0 0.0
      %4027 = vmatpush.msra.mxu0 0.0
      %4028 = vmatpush.msra.mxu0 0.0
      %4029 = vmatpush.msra.mxu0 0.0
      %4030 = vmatpush.msra.mxu0 0.0
      %4031 = vmatpush.msra.mxu0 0.0
      %4032 = vmatpush.msra.mxu0 0.0
      %4033 = vmatpush.msra.mxu0 0.0
      %4034 = vmatpush.msra.mxu0 0.0
      %4035 = vmatpush.msra.mxu0 %v1984
      %4036 = vmatmul.f32.gmra.mxu0 %v3956
      %v4037 = vpop.f32.mrf.mxu0
      %v4038 = vadd.f32 0.0, %v4037
      %4039 = vmatmul.f32.gmra.mxu0 %v3959
      %v4040 = vpop.f32.mrf.mxu0
      %v4041 = vadd.f32 0.0, %v4040
      %4042 = vmatmul.f32.gmra.mxu0 %v3962
      %v4043 = vpop.f32.mrf.mxu0
      %v4044 = vadd.f32 0.0, %v4043
      %4045 = vmatmul.f32.gmra.mxu0 %v3965
      %v4046 = vpop.f32.mrf.mxu0
      %v4047 = vadd.f32 0.0, %v4046
      %4048 = vmatmul.f32.gmra.mxu0 %v3968
      %v4049 = vpop.f32.mrf.mxu0
      %v4050 = vadd.f32 0.0, %v4049
      %4051 = vmatmul.f32.gmra.mxu0 %v3971
      %v4052 = vpop.f32.mrf.mxu0
      %v4053 = vadd.f32 0.0, %v4052
      %4054 = vmatmul.f32.gmra.mxu0 %v3974
      %v4055 = vpop.f32.mrf.mxu0
      %v4056 = vadd.f32 0.0, %v4055
      %4057 = vmatmul.f32.gmra.mxu0 %v3977
      %v4058 = vpop.f32.mrf.mxu0
      %v4059 = vadd.f32 0.0, %v4058
      %4060 = vdwg.mxu0
      %v4061 = vadd.f32 %v3930, %v3997
      %v4062 = vadd.f32 %v3931, %v4038
      %v4063 = vadd.f32 %v3932, %v4000
      %v4064 = vadd.f32 %v3933, %v4041
      %v4065 = vadd.f32 %v3934, %v4003
      %v4066 = vadd.f32 %v3935, %v4044
      %v4067 = vadd.f32 %v3936, %v4006
      %v4068 = vadd.f32 %v3937, %v4047
      %v4069 = vadd.f32 %v3938, %v4009
      %v4070 = vadd.f32 %v3939, %v4050
      %v4071 = vadd.f32 %v3940, %v4012
      %v4072 = vadd.f32 %v3941, %v4053
      %v4073 = vadd.f32 %v3942, %v4015
      %v4074 = vadd.f32 %v3943, %v4056
      %v4075 = vadd.f32 %v3944, %v4018
      %v4076 = vadd.f32 %v3945, %v4059
      %s4077 = scalar_lea.vmem %s2, 256
      %v4078 = vld [vmem:[%s4077] sm:$0xff]
      %v4079 = vld [vmem:[%s4077 + $0x8] sm:$0xff]
      %v4080 = vld [vmem:[%s4077 + $0x10] sm:$0xff]
      %v4081 = vld [vmem:[%s4077 + $0x18] sm:$0xff]
      %v4082 = vld [vmem:[%s4077 + $0x20] sm:$0xff]
      %v4083 = vld [vmem:[%s4077 + $0x28] sm:$0xff]
      %v4084 = vld [vmem:[%s4077 + $0x30] sm:$0xff]
      %v4085 = vld [vmem:[%s4077 + $0x38] sm:$0xff]
      %4086 = vst [vmem:[#allocation1] ss:$2 sm:$0xff] %v442
      %v4087 = vld.sshfl [vmem:[#allocation1] sm:$0xff pattern:$0x75316420]
      %v4088 = vld.sshfl [vmem:[#allocation1 + $0x8] sm:$0xff pattern:$0x75316420]
      %v4090 = vsel %vm748, %v4078, 0
      %v4093 = vsel %vm748, %v4079, 0
      %v4096 = vsel %vm748, %v4080, 0
      %v4099 = vsel %vm748, %v4081, 0
      %v4102 = vsel %vm748, %v4082, 0
      %v4105 = vsel %vm748, %v4083, 0
      %v4108 = vsel %vm748, %v4084, 0
      %v4111 = vsel %vm748, %v4085, 0
      %v4113 = vsel %vm767, %v4087, 0
      %v4115 = vsel %vm767, %v4088, 0
      %4117 = vmatpush.msra.mxu0 0.0
      %4118 = vmatpush.msra.mxu0 0.0
      %4119 = vmatpush.msra.mxu0 0.0
      %4120 = vmatpush.msra.mxu0 0.0
      %4121 = vmatpush.msra.mxu0 0.0
      %4122 = vmatpush.msra.mxu0 0.0
      %4123 = vmatpush.msra.mxu0 0.0
      %4124 = vmatpush.msra.mxu0 0.0
      %4125 = vmatpush.msra.mxu0 0.0
      %4126 = vmatpush.msra.mxu0 0.0
      %4127 = vmatpush.msra.mxu0 0.0
      %4128 = vmatpush.msra.mxu0 0.0
      %4129 = vmatpush.msra.mxu0 0.0
      %4130 = vmatpush.msra.mxu0 0.0
      %4131 = vmatpush.msra.mxu0 0.0
      %4132 = vmatpush.msra.mxu0 %v4113
      %4133 = vmatmul.f32.gmra.mxu0 %v4090
      %v4134 = vpop.f32.mrf.mxu0
      %v4135 = vadd.f32 0.0, %v4134
      %4136 = vmatmul.f32.gmra.mxu0 %v4093
      %v4137 = vpop.f32.mrf.mxu0
      %v4138 = vadd.f32 0.0, %v4137
      %4139 = vmatmul.f32.gmra.mxu0 %v4096
      %v4140 = vpop.f32.mrf.mxu0
      %v4141 = vadd.f32 0.0, %v4140
      %4142 = vmatmul.f32.gmra.mxu0 %v4099
      %v4143 = vpop.f32.mrf.mxu0
      %v4144 = vadd.f32 0.0, %v4143
      %4145 = vmatmul.f32.gmra.mxu0 %v4102
      %v4146 = vpop.f32.mrf.mxu0
      %v4147 = vadd.f32 0.0, %v4146
      %4148 = vmatmul.f32.gmra.mxu0 %v4105
      %v4149 = vpop.f32.mrf.mxu0
      %v4150 = vadd.f32 0.0, %v4149
      %4151 = vmatmul.f32.gmra.mxu0 %v4108
      %v4152 = vpop.f32.mrf.mxu0
      %v4153 = vadd.f32 0.0, %v4152
      %4154 = vmatmul.f32.gmra.mxu0 %v4111
      %v4155 = vpop.f32.mrf.mxu0
      %v4156 = vadd.f32 0.0, %v4155
      %4157 = vdwg.mxu0
      %4158 = vmatpush.msra.mxu0 0.0
      %4159 = vmatpush.msra.mxu0 0.0
      %4160 = vmatpush.msra.mxu0 0.0
      %4161 = vmatpush.msra.mxu0 0.0
      %4162 = vmatpush.msra.mxu0 0.0
      %4163 = vmatpush.msra.mxu0 0.0
      %4164 = vmatpush.msra.mxu0 0.0
      %4165 = vmatpush.msra.mxu0 0.0
      %4166 = vmatpush.msra.mxu0 0.0
      %4167 = vmatpush.msra.mxu0 0.0
      %4168 = vmatpush.msra.mxu0 0.0
      %4169 = vmatpush.msra.mxu0 0.0
      %4170 = vmatpush.msra.mxu0 0.0
      %4171 = vmatpush.msra.mxu0 0.0
      %4172 = vmatpush.msra.mxu0 0.0
      %4173 = vmatpush.msra.mxu0 %v4115
      %4174 = vmatmul.f32.gmra.mxu0 %v4090
      %v4175 = vpop.f32.mrf.mxu0
      %v4176 = vadd.f32 0.0, %v4175
      %4177 = vmatmul.f32.gmra.mxu0 %v4093
      %v4178 = vpop.f32.mrf.mxu0
      %v4179 = vadd.f32 0.0, %v4178
      %4180 = vmatmul.f32.gmra.mxu0 %v4096
      %v4181 = vpop.f32.mrf.mxu0
      %v4182 = vadd.f32 0.0, %v4181
      %4183 = vmatmul.f32.gmra.mxu0 %v4099
      %v4184 = vpop.f32.mrf.mxu0
      %v4185 = vadd.f32 0.0, %v4184
      %4186 = vmatmul.f32.gmra.mxu0 %v4102
      %v4187 = vpop.f32.mrf.mxu0
      %v4188 = vadd.f32 0.0, %v4187
      %4189 = vmatmul.f32.gmra.mxu0 %v4105
      %v4190 = vpop.f32.mrf.mxu0
      %v4191 = vadd.f32 0.0, %v4190
      %4192 = vmatmul.f32.gmra.mxu0 %v4108
      %v4193 = vpop.f32.mrf.mxu0
      %v4194 = vadd.f32 0.0, %v4193
      %4195 = vmatmul.f32.gmra.mxu0 %v4111
      %v4196 = vpop.f32.mrf.mxu0
      %v4197 = vadd.f32 0.0, %v4196
      %4198 = vdwg.mxu0
      %v4199 = vadd.f32 %v4061, %v4135
      %v4200 = vadd.f32 %v4062, %v4176
      %v4201 = vadd.f32 %v4063, %v4138
      %v4202 = vadd.f32 %v4064, %v4179
      %v4203 = vadd.f32 %v4065, %v4141
      %v4204 = vadd.f32 %v4066, %v4182
      %v4205 = vadd.f32 %v4067, %v4144
      %v4206 = vadd.f32 %v4068, %v4185
      %v4207 = vadd.f32 %v4069, %v4147
      %v4208 = vadd.f32 %v4070, %v4188
      %v4209 = vadd.f32 %v4071, %v4150
      %v4210 = vadd.f32 %v4072, %v4191
      %v4211 = vadd.f32 %v4073, %v4153
      %v4212 = vadd.f32 %v4074, %v4194
      %v4213 = vadd.f32 %v4075, %v4156
      %v4214 = vadd.f32 %v4076, %v4197
      %s4215 = scalar_lea.vmem %s2, 320
      %v4216 = vld [vmem:[%s4215] sm:$0xff]
      %v4217 = vld [vmem:[%s4215 + $0x8] sm:$0xff]
      %v4218 = vld [vmem:[%s4215 + $0x10] sm:$0xff]
      %v4219 = vld [vmem:[%s4215 + $0x18] sm:$0xff]
      %v4220 = vld [vmem:[%s4215 + $0x20] sm:$0xff]
      %v4221 = vld [vmem:[%s4215 + $0x28] sm:$0xff]
      %v4222 = vld [vmem:[%s4215 + $0x30] sm:$0xff]
      %v4223 = vld [vmem:[%s4215 + $0x38] sm:$0xff]
      %v4225 = vsel %vm748, %v4216, 0
      %v4228 = vsel %vm748, %v4217, 0
      %v4231 = vsel %vm748, %v4218, 0
      %v4234 = vsel %vm748, %v4219, 0
      %v4237 = vsel %vm748, %v4220, 0
      %v4240 = vsel %vm748, %v4221, 0
      %v4243 = vsel %vm748, %v4222, 0
      %v4246 = vsel %vm748, %v4223, 0
      %4248 = vmatpush.msra.mxu0 0.0
      %4249 = vmatpush.msra.mxu0 0.0
      %4250 = vmatpush.msra.mxu0 0.0
      %4251 = vmatpush.msra.mxu0 0.0
      %4252 = vmatpush.msra.mxu0 0.0
      %4253 = vmatpush.msra.mxu0 0.0
      %4254 = vmatpush.msra.mxu0 0.0
      %4255 = vmatpush.msra.mxu0 0.0
      %4256 = vmatpush.msra.mxu0 0.0
      %4257 = vmatpush.msra.mxu0 0.0
      %4258 = vmatpush.msra.mxu0 0.0
      %4259 = vmatpush.msra.mxu0 0.0
      %4260 = vmatpush.msra.mxu0 0.0
      %4261 = vmatpush.msra.mxu0 0.0
      %4262 = vmatpush.msra.mxu0 0.0
      %4263 = vmatpush.msra.mxu0 %v2208
      %4264 = vmatmul.f32.gmra.mxu0 %v4225
      %v4265 = vpop.f32.mrf.mxu0
      %v4266 = vadd.f32 0.0, %v4265
      %4267 = vmatmul.f32.gmra.mxu0 %v4228
      %v4268 = vpop.f32.mrf.mxu0
      %v4269 = vadd.f32 0.0, %v4268
      %4270 = vmatmul.f32.gmra.mxu0 %v4231
      %v4271 = vpop.f32.mrf.mxu0
      %v4272 = vadd.f32 0.0, %v4271
      %4273 = vmatmul.f32.gmra.mxu0 %v4234
      %v4274 = vpop.f32.mrf.mxu0
      %v4275 = vadd.f32 0.0, %v4274
      %4276 = vmatmul.f32.gmra.mxu0 %v4237
      %v4277 = vpop.f32.mrf.mxu0
      %v4278 = vadd.f32 0.0, %v4277
      %4279 = vmatmul.f32.gmra.mxu0 %v4240
      %v4280 = vpop.f32.mrf.mxu0
      %v4281 = vadd.f32 0.0, %v4280
      %4282 = vmatmul.f32.gmra.mxu0 %v4243
      %v4283 = vpop.f32.mrf.mxu0
      %v4284 = vadd.f32 0.0, %v4283
      %4285 = vmatmul.f32.gmra.mxu0 %v4246
      %v4286 = vpop.f32.mrf.mxu0
      %v4287 = vadd.f32 0.0, %v4286
      %4288 = vdwg.mxu0
      %4289 = vmatpush.msra.mxu0 0.0
      %4290 = vmatpush.msra.mxu0 0.0
      %4291 = vmatpush.msra.mxu0 0.0
      %4292 = vmatpush.msra.mxu0 0.0
      %4293 = vmatpush.msra.mxu0 0.0
      %4294 = vmatpush.msra.mxu0 0.0
      %4295 = vmatpush.msra.mxu0 0.0
      %4296 = vmatpush.msra.mxu0 0.0
      %4297 = vmatpush.msra.mxu0 0.0
      %4298 = vmatpush.msra.mxu0 0.0
      %4299 = vmatpush.msra.mxu0 0.0
      %4300 = vmatpush.msra.mxu0 0.0
      %4301 = vmatpush.msra.mxu0 0.0
      %4302 = vmatpush.msra.mxu0 0.0
      %4303 = vmatpush.msra.mxu0 0.0
      %4304 = vmatpush.msra.mxu0 %v2211
      %4305 = vmatmul.f32.gmra.mxu0 %v4225
      %v4306 = vpop.f32.mrf.mxu0
      %v4307 = vadd.f32 0.0, %v4306
      %4308 = vmatmul.f32.gmra.mxu0 %v4228
      %v4309 = vpop.f32.mrf.mxu0
      %v4310 = vadd.f32 0.0, %v4309
      %4311 = vmatmul.f32.gmra.mxu0 %v4231
      %v4312 = vpop.f32.mrf.mxu0
      %v4313 = vadd.f32 0.0, %v4312
      %4314 = vmatmul.f32.gmra.mxu0 %v4234
      %v4315 = vpop.f32.mrf.mxu0
      %v4316 = vadd.f32 0.0, %v4315
      %4317 = vmatmul.f32.gmra.mxu0 %v4237
      %v4318 = vpop.f32.mrf.mxu0
      %v4319 = vadd.f32 0.0, %v4318
      %4320 = vmatmul.f32.gmra.mxu0 %v4240
      %v4321 = vpop.f32.mrf.mxu0
      %v4322 = vadd.f32 0.0, %v4321
      %4323 = vmatmul.f32.gmra.mxu0 %v4243
      %v4324 = vpop.f32.mrf.mxu0
      %v4325 = vadd.f32 0.0, %v4324
      %4326 = vmatmul.f32.gmra.mxu0 %v4246
      %v4327 = vpop.f32.mrf.mxu0
      %v4328 = vadd.f32 0.0, %v4327
      %4329 = vdwg.mxu0
      %v4330 = vadd.f32 %v4199, %v4266
      %v4331 = vadd.f32 %v4200, %v4307
      %v4332 = vadd.f32 %v4201, %v4269
      %v4333 = vadd.f32 %v4202, %v4310
      %v4334 = vadd.f32 %v4203, %v4272
      %v4335 = vadd.f32 %v4204, %v4313
      %v4336 = vadd.f32 %v4205, %v4275
      %v4337 = vadd.f32 %v4206, %v4316
      %v4338 = vadd.f32 %v4207, %v4278
      %v4339 = vadd.f32 %v4208, %v4319
      %v4340 = vadd.f32 %v4209, %v4281
      %v4341 = vadd.f32 %v4210, %v4322
      %v4342 = vadd.f32 %v4211, %v4284
      %v4343 = vadd.f32 %v4212, %v4325
      %v4344 = vadd.f32 %v4213, %v4287
      %v4345 = vadd.f32 %v4214, %v4328
      %s4346 = scalar_lea.vmem %s2, 384
      %v4347 = vld [vmem:[%s4346] sm:$0xff]
      %v4348 = vld [vmem:[%s4346 + $0x8] sm:$0xff]
      %v4349 = vld [vmem:[%s4346 + $0x10] sm:$0xff]
      %v4350 = vld [vmem:[%s4346 + $0x18] sm:$0xff]
      %v4351 = vld [vmem:[%s4346 + $0x20] sm:$0xff]
      %v4352 = vld [vmem:[%s4346 + $0x28] sm:$0xff]
      %v4353 = vld [vmem:[%s4346 + $0x30] sm:$0xff]
      %v4354 = vld [vmem:[%s4346 + $0x38] sm:$0xff]
      %v4356 = vsel %vm748, %v4347, 0
      %v4359 = vsel %vm748, %v4348, 0
      %v4362 = vsel %vm748, %v4349, 0
      %v4365 = vsel %vm748, %v4350, 0
      %v4368 = vsel %vm748, %v4351, 0
      %v4371 = vsel %vm748, %v4352, 0
      %v4374 = vsel %vm748, %v4353, 0
      %v4377 = vsel %vm748, %v4354, 0
      %4379 = vmatpush.msra.mxu0 0.0
      %4380 = vmatpush.msra.mxu0 0.0
      %4381 = vmatpush.msra.mxu0 0.0
      %4382 = vmatpush.msra.mxu0 0.0
      %4383 = vmatpush.msra.mxu0 0.0
      %4384 = vmatpush.msra.mxu0 0.0
      %4385 = vmatpush.msra.mxu0 0.0
      %4386 = vmatpush.msra.mxu0 0.0
      %4387 = vmatpush.msra.mxu0 0.0
      %4388 = vmatpush.msra.mxu0 0.0
      %4389 = vmatpush.msra.mxu0 0.0
      %4390 = vmatpush.msra.mxu0 0.0
      %4391 = vmatpush.msra.mxu0 0.0
      %4392 = vmatpush.msra.mxu0 0.0
      %4393 = vmatpush.msra.mxu0 0.0
      %4394 = vmatpush.msra.mxu0 %v2547
      %4395 = vmatmul.f32.gmra.mxu0 %v4356
      %v4396 = vpop.f32.mrf.mxu0
      %v4397 = vadd.f32 0.0, %v4396
      %4398 = vmatmul.f32.gmra.mxu0 %v4359
      %v4399 = vpop.f32.mrf.mxu0
      %v4400 = vadd.f32 0.0, %v4399
      %4401 = vmatmul.f32.gmra.mxu0 %v4362
      %v4402 = vpop.f32.mrf.mxu0
      %v4403 = vadd.f32 0.0, %v4402
      %4404 = vmatmul.f32.gmra.mxu0 %v4365
      %v4405 = vpop.f32.mrf.mxu0
      %v4406 = vadd.f32 0.0, %v4405
      %4407 = vmatmul.f32.gmra.mxu0 %v4368
      %v4408 = vpop.f32.mrf.mxu0
      %v4409 = vadd.f32 0.0, %v4408
      %4410 = vmatmul.f32.gmra.mxu0 %v4371
      %v4411 = vpop.f32.mrf.mxu0
      %v4412 = vadd.f32 0.0, %v4411
      %4413 = vmatmul.f32.gmra.mxu0 %v4374
      %v4414 = vpop.f32.mrf.mxu0
      %v4415 = vadd.f32 0.0, %v4414
      %4416 = vmatmul.f32.gmra.mxu0 %v4377
      %v4417 = vpop.f32.mrf.mxu0
      %v4418 = vadd.f32 0.0, %v4417
      %4419 = vdwg.mxu0
      %4420 = vmatpush.msra.mxu0 0.0
      %4421 = vmatpush.msra.mxu0 0.0
      %4422 = vmatpush.msra.mxu0 0.0
      %4423 = vmatpush.msra.mxu0 0.0
      %4424 = vmatpush.msra.mxu0 0.0
      %4425 = vmatpush.msra.mxu0 0.0
      %4426 = vmatpush.msra.mxu0 0.0
      %4427 = vmatpush.msra.mxu0 0.0
      %4428 = vmatpush.msra.mxu0 0.0
      %4429 = vmatpush.msra.mxu0 0.0
      %4430 = vmatpush.msra.mxu0 0.0
      %4431 = vmatpush.msra.mxu0 0.0
      %4432 = vmatpush.msra.mxu0 0.0
      %4433 = vmatpush.msra.mxu0 0.0
      %4434 = vmatpush.msra.mxu0 0.0
      %4435 = vmatpush.msra.mxu0 %v2550
      %4436 = vmatmul.f32.gmra.mxu0 %v4356
      %v4437 = vpop.f32.mrf.mxu0
      %v4438 = vadd.f32 0.0, %v4437
      %4439 = vmatmul.f32.gmra.mxu0 %v4359
      %v4440 = vpop.f32.mrf.mxu0
      %v4441 = vadd.f32 0.0, %v4440
      %4442 = vmatmul.f32.gmra.mxu0 %v4362
      %v4443 = vpop.f32.mrf.mxu0
      %v4444 = vadd.f32 0.0, %v4443
      %4445 = vmatmul.f32.gmra.mxu0 %v4365
      %v4446 = vpop.f32.mrf.mxu0
      %v4447 = vadd.f32 0.0, %v4446
      %4448 = vmatmul.f32.gmra.mxu0 %v4368
      %v4449 = vpop.f32.mrf.mxu0
      %v4450 = vadd.f32 0.0, %v4449
      %4451 = vmatmul.f32.gmra.mxu0 %v4371
      %v4452 = vpop.f32.mrf.mxu0
      %v4453 = vadd.f32 0.0, %v4452
      %4454 = vmatmul.f32.gmra.mxu0 %v4374
      %v4455 = vpop.f32.mrf.mxu0
      %v4456 = vadd.f32 0.0, %v4455
      %4457 = vmatmul.f32.gmra.mxu0 %v4377
      %v4458 = vpop.f32.mrf.mxu0
      %v4459 = vadd.f32 0.0, %v4458
      %4460 = vdwg.mxu0
      %v4461 = vadd.f32 %v4330, %v4397
      %v4462 = vadd.f32 %v4331, %v4438
      %v4463 = vadd.f32 %v4332, %v4400
      %v4464 = vadd.f32 %v4333, %v4441
      %v4465 = vadd.f32 %v4334, %v4403
      %v4466 = vadd.f32 %v4335, %v4444
      %v4467 = vadd.f32 %v4336, %v4406
      %v4468 = vadd.f32 %v4337, %v4447
      %v4469 = vadd.f32 %v4338, %v4409
      %v4470 = vadd.f32 %v4339, %v4450
      %v4471 = vadd.f32 %v4340, %v4412
      %v4472 = vadd.f32 %v4341, %v4453
      %v4473 = vadd.f32 %v4342, %v4415
      %v4474 = vadd.f32 %v4343, %v4456
      %v4475 = vadd.f32 %v4344, %v4418
      %v4476 = vadd.f32 %v4345, %v4459
      %s4477 = scalar_lea.vmem %s2, 448
      %v4478 = vld [vmem:[%s4477] sm:$0xff]
      %v4479 = vld [vmem:[%s4477 + $0x8] sm:$0xff]
      %v4480 = vld [vmem:[%s4477 + $0x10] sm:$0xff]
      %v4481 = vld [vmem:[%s4477 + $0x18] sm:$0xff]
      %v4482 = vld [vmem:[%s4477 + $0x20] sm:$0xff]
      %v4483 = vld [vmem:[%s4477 + $0x28] sm:$0xff]
      %v4484 = vld [vmem:[%s4477 + $0x30] sm:$0xff]
      %v4485 = vld [vmem:[%s4477 + $0x38] sm:$0xff]
      %v4487 = vsel %vm748, %v4478, 0
      %v4490 = vsel %vm748, %v4479, 0
      %v4493 = vsel %vm748, %v4480, 0
      %v4496 = vsel %vm748, %v4481, 0
      %v4499 = vsel %vm748, %v4482, 0
      %v4502 = vsel %vm748, %v4483, 0
      %v4505 = vsel %vm748, %v4484, 0
      %v4508 = vsel %vm748, %v4485, 0
      %4510 = vmatpush.msra.mxu0 0.0
      %4511 = vmatpush.msra.mxu0 0.0
      %4512 = vmatpush.msra.mxu0 0.0
      %4513 = vmatpush.msra.mxu0 0.0
      %4514 = vmatpush.msra.mxu0 0.0
      %4515 = vmatpush.msra.mxu0 0.0
      %4516 = vmatpush.msra.mxu0 0.0
      %4517 = vmatpush.msra.mxu0 0.0
      %4518 = vmatpush.msra.mxu0 0.0
      %4519 = vmatpush.msra.mxu0 0.0
      %4520 = vmatpush.msra.mxu0 0.0
      %4521 = vmatpush.msra.mxu0 0.0
      %4522 = vmatpush.msra.mxu0 0.0
      %4523 = vmatpush.msra.mxu0 0.0
      %4524 = vmatpush.msra.mxu0 0.0
      %4525 = vmatpush.msra.mxu0 %v2660
      %4526 = vmatmul.f32.gmra.mxu0 %v4487
      %v4527 = vpop.f32.mrf.mxu0
      %v4528 = vadd.f32 0.0, %v4527
      %4529 = vmatmul.f32.gmra.mxu0 %v4490
      %v4530 = vpop.f32.mrf.mxu0
      %v4531 = vadd.f32 0.0, %v4530
      %4532 = vmatmul.f32.gmra.mxu0 %v4493
      %v4533 = vpop.f32.mrf.mxu0
      %v4534 = vadd.f32 0.0, %v4533
      %4535 = vmatmul.f32.gmra.mxu0 %v4496
      %v4536 = vpop.f32.mrf.mxu0
      %v4537 = vadd.f32 0.0, %v4536
      %4538 = vmatmul.f32.gmra.mxu0 %v4499
      %v4539 = vpop.f32.mrf.mxu0
      %v4540 = vadd.f32 0.0, %v4539
      %4541 = vmatmul.f32.gmra.mxu0 %v4502
      %v4542 = vpop.f32.mrf.mxu0
      %v4543 = vadd.f32 0.0, %v4542
      %4544 = vmatmul.f32.gmra.mxu0 %v4505
      %v4545 = vpop.f32.mrf.mxu0
      %v4546 = vadd.f32 0.0, %v4545
      %4547 = vmatmul.f32.gmra.mxu0 %v4508
      %v4548 = vpop.f32.mrf.mxu0
      %v4549 = vadd.f32 0.0, %v4548
      %4550 = vdwg.mxu0
      %4551 = vmatpush.msra.mxu0 0.0
      %4552 = vmatpush.msra.mxu0 0.0
      %4553 = vmatpush.msra.mxu0 0.0
      %4554 = vmatpush.msra.mxu0 0.0
      %4555 = vmatpush.msra.mxu0 0.0
      %4556 = vmatpush.msra.mxu0 0.0
      %4557 = vmatpush.msra.mxu0 0.0
      %4558 = vmatpush.msra.mxu0 0.0
      %4559 = vmatpush.msra.mxu0 0.0
      %4560 = vmatpush.msra.mxu0 0.0
      %4561 = vmatpush.msra.mxu0 0.0
      %4562 = vmatpush.msra.mxu0 0.0
      %4563 = vmatpush.msra.mxu0 0.0
      %4564 = vmatpush.msra.mxu0 0.0
      %4565 = vmatpush.msra.mxu0 0.0
      %4566 = vmatpush.msra.mxu0 %v2663
      %4567 = vmatmul.f32.gmra.mxu0 %v4487
      %v4568 = vpop.f32.mrf.mxu0
      %v4569 = vadd.f32 0.0, %v4568
      %4570 = vmatmul.f32.gmra.mxu0 %v4490
      %v4571 = vpop.f32.mrf.mxu0
      %v4572 = vadd.f32 0.0, %v4571
      %4573 = vmatmul.f32.gmra.mxu0 %v4493
      %v4574 = vpop.f32.mrf.mxu0
      %v4575 = vadd.f32 0.0, %v4574
      %4576 = vmatmul.f32.gmra.mxu0 %v4496
      %v4577 = vpop.f32.mrf.mxu0
      %v4578 = vadd.f32 0.0, %v4577
      %4579 = vmatmul.f32.gmra.mxu0 %v4499
      %v4580 = vpop.f32.mrf.mxu0
      %v4581 = vadd.f32 0.0, %v4580
      %4582 = vmatmul.f32.gmra.mxu0 %v4502
      %v4583 = vpop.f32.mrf.mxu0
      %v4584 = vadd.f32 0.0, %v4583
      %4585 = vmatmul.f32.gmra.mxu0 %v4505
      %v4586 = vpop.f32.mrf.mxu0
      %v4587 = vadd.f32 0.0, %v4586
      %4588 = vmatmul.f32.gmra.mxu0 %v4508
      %v4589 = vpop.f32.mrf.mxu0
      %v4590 = vadd.f32 0.0, %v4589
      %4591 = vdwg.mxu0
      %v4592 = vadd.f32 %v4461, %v4528
      %v4593 = vadd.f32 %v4462, %v4569
      %v4594 = vadd.f32 %v4463, %v4531
      %v4595 = vadd.f32 %v4464, %v4572
      %v4596 = vadd.f32 %v4465, %v4534
      %v4597 = vadd.f32 %v4466, %v4575
      %v4598 = vadd.f32 %v4467, %v4537
      %v4599 = vadd.f32 %v4468, %v4578
      %v4600 = vadd.f32 %v4469, %v4540
      %v4601 = vadd.f32 %v4470, %v4581
      %v4602 = vadd.f32 %v4471, %v4543
      %v4603 = vadd.f32 %v4472, %v4584
      %v4604 = vadd.f32 %v4473, %v4546
      %v4605 = vadd.f32 %v4474, %v4587
      %v4606 = vadd.f32 %v4475, %v4549
      %v4607 = vadd.f32 %v4476, %v4590
      %s4608 = scalar_lea.vmem %s2, 512
      %v4609 = vld [vmem:[%s4608] sm:$0xff]
      %v4610 = vld [vmem:[%s4608 + $0x8] sm:$0xff]
      %v4611 = vld [vmem:[%s4608 + $0x10] sm:$0xff]
      %v4612 = vld [vmem:[%s4608 + $0x18] sm:$0xff]
      %v4613 = vld [vmem:[%s4608 + $0x20] sm:$0xff]
      %v4614 = vld [vmem:[%s4608 + $0x28] sm:$0xff]
      %v4615 = vld [vmem:[%s4608 + $0x30] sm:$0xff]
      %v4616 = vld [vmem:[%s4608 + $0x38] sm:$0xff]
      %v4618 = vsel %vm748, %v4609, 0
      %v4621 = vsel %vm748, %v4610, 0
      %v4624 = vsel %vm748, %v4611, 0
      %v4627 = vsel %vm748, %v4612, 0
      %v4630 = vsel %vm748, %v4613, 0
      %v4633 = vsel %vm748, %v4614, 0
      %v4636 = vsel %vm748, %v4615, 0
      %v4639 = vsel %vm748, %v4616, 0
      %4641 = vmatpush.msra.mxu0 0.0
      %4642 = vmatpush.msra.mxu0 0.0
      %4643 = vmatpush.msra.mxu0 0.0
      %4644 = vmatpush.msra.mxu0 0.0
      %4645 = vmatpush.msra.mxu0 0.0
      %4646 = vmatpush.msra.mxu0 0.0
      %4647 = vmatpush.msra.mxu0 0.0
      %4648 = vmatpush.msra.mxu0 0.0
      %4649 = vmatpush.msra.mxu0 0.0
      %4650 = vmatpush.msra.mxu0 0.0
      %4651 = vmatpush.msra.mxu0 0.0
      %4652 = vmatpush.msra.mxu0 0.0
      %4653 = vmatpush.msra.mxu0 0.0
      %4654 = vmatpush.msra.mxu0 0.0
      %4655 = vmatpush.msra.mxu0 0.0
      %4656 = vmatpush.msra.mxu0 %v2773
      %4657 = vmatmul.f32.gmra.mxu0 %v4618
      %v4658 = vpop.f32.mrf.mxu0
      %v4659 = vadd.f32 0.0, %v4658
      %4660 = vmatmul.f32.gmra.mxu0 %v4621
      %v4661 = vpop.f32.mrf.mxu0
      %v4662 = vadd.f32 0.0, %v4661
      %4663 = vmatmul.f32.gmra.mxu0 %v4624
      %v4664 = vpop.f32.mrf.mxu0
      %v4665 = vadd.f32 0.0, %v4664
      %4666 = vmatmul.f32.gmra.mxu0 %v4627
      %v4667 = vpop.f32.mrf.mxu0
      %v4668 = vadd.f32 0.0, %v4667
      %4669 = vmatmul.f32.gmra.mxu0 %v4630
      %v4670 = vpop.f32.mrf.mxu0
      %v4671 = vadd.f32 0.0, %v4670
      %4672 = vmatmul.f32.gmra.mxu0 %v4633
      %v4673 = vpop.f32.mrf.mxu0
      %v4674 = vadd.f32 0.0, %v4673
      %4675 = vmatmul.f32.gmra.mxu0 %v4636
      %v4676 = vpop.f32.mrf.mxu0
      %v4677 = vadd.f32 0.0, %v4676
      %4678 = vmatmul.f32.gmra.mxu0 %v4639
      %v4679 = vpop.f32.mrf.mxu0
      %v4680 = vadd.f32 0.0, %v4679
      %4681 = vdwg.mxu0
      %4682 = vmatpush.msra.mxu0 0.0
      %4683 = vmatpush.msra.mxu0 0.0
      %4684 = vmatpush.msra.mxu0 0.0
      %4685 = vmatpush.msra.mxu0 0.0
      %4686 = vmatpush.msra.mxu0 0.0
      %4687 = vmatpush.msra.mxu0 0.0
      %4688 = vmatpush.msra.mxu0 0.0
      %4689 = vmatpush.msra.mxu0 0.0
      %4690 = vmatpush.msra.mxu0 0.0
      %4691 = vmatpush.msra.mxu0 0.0
      %4692 = vmatpush.msra.mxu0 0.0
      %4693 = vmatpush.msra.mxu0 0.0
      %4694 = vmatpush.msra.mxu0 0.0
      %4695 = vmatpush.msra.mxu0 0.0
      %4696 = vmatpush.msra.mxu0 0.0
      %4697 = vmatpush.msra.mxu0 %v2776
      %4698 = vmatmul.f32.gmra.mxu0 %v4618
      %v4699 = vpop.f32.mrf.mxu0
      %v4700 = vadd.f32 0.0, %v4699
      %4701 = vmatmul.f32.gmra.mxu0 %v4621
      %v4702 = vpop.f32.mrf.mxu0
      %v4703 = vadd.f32 0.0, %v4702
      %4704 = vmatmul.f32.gmra.mxu0 %v4624
      %v4705 = vpop.f32.mrf.mxu0
      %v4706 = vadd.f32 0.0, %v4705
      %4707 = vmatmul.f32.gmra.mxu0 %v4627
      %v4708 = vpop.f32.mrf.mxu0
      %v4709 = vadd.f32 0.0, %v4708
      %4710 = vmatmul.f32.gmra.mxu0 %v4630
      %v4711 = vpop.f32.mrf.mxu0
      %v4712 = vadd.f32 0.0, %v4711
      %4713 = vmatmul.f32.gmra.mxu0 %v4633
      %v4714 = vpop.f32.mrf.mxu0
      %v4715 = vadd.f32 0.0, %v4714
      %4716 = vmatmul.f32.gmra.mxu0 %v4636
      %v4717 = vpop.f32.mrf.mxu0
      %v4718 = vadd.f32 0.0, %v4717
      %4719 = vmatmul.f32.gmra.mxu0 %v4639
      %v4720 = vpop.f32.mrf.mxu0
      %v4721 = vadd.f32 0.0, %v4720
      %4722 = vdwg.mxu0
      %v4723 = vadd.f32 %v4592, %v4659
      %v4724 = vadd.f32 %v4593, %v4700
      %v4725 = vadd.f32 %v4594, %v4662
      %v4726 = vadd.f32 %v4595, %v4703
      %v4727 = vadd.f32 %v4596, %v4665
      %v4728 = vadd.f32 %v4597, %v4706
      %v4729 = vadd.f32 %v4598, %v4668
      %v4730 = vadd.f32 %v4599, %v4709
      %v4731 = vadd.f32 %v4600, %v4671
      %v4732 = vadd.f32 %v4601, %v4712
      %v4733 = vadd.f32 %v4602, %v4674
      %v4734 = vadd.f32 %v4603, %v4715
      %v4735 = vadd.f32 %v4604, %v4677
      %v4736 = vadd.f32 %v4605, %v4718
      %v4737 = vadd.f32 %v4606, %v4680
      %v4738 = vadd.f32 %v4607, %v4721
      %v4739 = vld [vmem:[%s3] sm:$0xff]
      %v4740 = vld [vmem:[%s3 + $0x8] sm:$0xff]
      %v4741 = vld [vmem:[%s3 + $0x10] sm:$0xff]
      %v4742 = vld [vmem:[%s3 + $0x18] sm:$0xff]
      %v4743 = vld [vmem:[%s3 + $0x20] sm:$0xff]
      %v4744 = vld [vmem:[%s3 + $0x28] sm:$0xff]
      %v4745 = vld [vmem:[%s3 + $0x30] sm:$0xff]
      %v4746 = vld [vmem:[%s3 + $0x38] sm:$0xff]
      %4748 = vset.pattern.permute.xlu0 0
      %4749 = vperm.xlu0 %4748, %v4739
      %v4750 = vpop.permute.xlu0 %4749
      %4753 = vset.pattern.permute.xlu0 0
      %4754 = vperm.xlu0 %4753, %v4740
      %v4755 = vpop.permute.xlu0 %4754
      %4758 = vset.pattern.permute.xlu0 0
      %4759 = vperm.xlu0 %4758, %v4741
      %v4760 = vpop.permute.xlu0 %4759
      %4763 = vset.pattern.permute.xlu0 0
      %4764 = vperm.xlu0 %4763, %v4742
      %v4765 = vpop.permute.xlu0 %4764
      %4768 = vset.pattern.permute.xlu0 0
      %4769 = vperm.xlu0 %4768, %v4743
      %v4770 = vpop.permute.xlu0 %4769
      %4773 = vset.pattern.permute.xlu0 0
      %4774 = vperm.xlu0 %4773, %v4744
      %v4775 = vpop.permute.xlu0 %4774
      %4778 = vset.pattern.permute.xlu0 0
      %4779 = vperm.xlu0 %4778, %v4745
      %v4780 = vpop.permute.xlu0 %4779
      %4783 = vset.pattern.permute.xlu0 0
      %4784 = vperm.xlu0 %4783, %v4746
      %v4785 = vpop.permute.xlu0 %4784
      %v4787 = vadd.f32 %v4723, %v4750
      %v4788 = vadd.f32 %v4724, %v4750
      %v4789 = vadd.f32 %v4725, %v4755
      %v4790 = vadd.f32 %v4726, %v4755
      %v4791 = vadd.f32 %v4727, %v4760
      %v4792 = vadd.f32 %v4728, %v4760
      %v4793 = vadd.f32 %v4729, %v4765
      %v4794 = vadd.f32 %v4730, %v4765
      %v4795 = vadd.f32 %v4731, %v4770
      %v4796 = vadd.f32 %v4732, %v4770
      %v4797 = vadd.f32 %v4733, %v4775
      %v4798 = vadd.f32 %v4734, %v4775
      %v4799 = vadd.f32 %v4735, %v4780
      %v4800 = vadd.f32 %v4736, %v4780
      %v4801 = vadd.f32 %v4737, %v4785
      %v4802 = vadd.f32 %v4738, %v4785
      %v4804 = vperm.slane %v443, 0
      %v4805 = vperm.slane %v443, 1
      %v4808 = vmul.f32 %v4787, %v4804
      %v4809 = vmul.f32 %v4788, %v4805
      %v4810 = vmul.f32 %v4789, %v4804
      %v4811 = vmul.f32 %v4790, %v4805
      %v4812 = vmul.f32 %v4791, %v4804
      %v4813 = vmul.f32 %v4792, %v4805
      %v4814 = vmul.f32 %v4793, %v4804
      %v4815 = vmul.f32 %v4794, %v4805
      %v4816 = vmul.f32 %v4795, %v4804
      %v4817 = vmul.f32 %v4796, %v4805
      %v4818 = vmul.f32 %v4797, %v4804
      %v4819 = vmul.f32 %v4798, %v4805
      %v4820 = vmul.f32 %v4799, %v4804
      %v4821 = vmul.f32 %v4800, %v4805
      %v4822 = vmul.f32 %v4801, %v4804
      %v4823 = vmul.f32 %v4802, %v4805
      loop: start=0, step=1, limit=8
      $region73: #{model_forward.1} parent=71 // loop_pre_header
        _
      $region74: #{model_forward.1} parent=71 // loop_header
        %s4825 = sphi 0, %s4829
        %p4826 = scmp.ge.s32.totalorder %s4825, 8
        %v4830 = vphi %v4808, %v5283
        %v4831 = vphi %v4809, %v5284
        %v4832 = vphi %v4810, %v5285
        %v4833 = vphi %v4811, %v5286
        %v4834 = vphi %v4812, %v5287
        %v4835 = vphi %v4813, %v5288
        %v4836 = vphi %v4814, %v5289
        %v4837 = vphi %v4815, %v5290
        %v4838 = vphi %v4816, %v5291
        %v4839 = vphi %v4817, %v5292
        %v4840 = vphi %v4818, %v5293
        %v4841 = vphi %v4819, %v5294
        %v4842 = vphi %v4820, %v5295
        %v4843 = vphi %v4821, %v5296
        %v4844 = vphi %v4822, %v5297
        %v4845 = vphi %v4823, %v5298
      $region75: #{model_forward.1} parent=71 // loop_header_branch
        %4828 = sbr.rel (%p4826) target = $region79
      $region76: #{model_forward.1} parent=71 // loop_body
        %v4846 = vpack.c.bf16 %v4832, %v4830
        %v4847 = vpack.c.bf16 %v4833, %v4831
        %v4848 = vpack.c.bf16 %v4836, %v4834
        %v4849 = vpack.c.bf16 %v4837, %v4835
        %v4850 = vpack.c.bf16 %v4840, %v4838
        %v4851 = vpack.c.bf16 %v4841, %v4839
        %v4852 = vpack.c.bf16 %v4844, %v4842
        %v4853 = vpack.c.bf16 %v4845, %v4843
        %s4854 = smul.u32 %s4825, 9
        %s4855 = smul.addr %s4854, 4
        %s4856 = scalar_lea.vmem %s4, %s4855
        %v4857 = vld [vmem:[%s4856] sm:$0xf]
        %v4858 = vld [vmem:[%s4856 + $0x4] sm:$0xf]
        %v4859 = vld [vmem:[%s4856 + $0x8] sm:$0xf]
        %v4860 = vld [vmem:[%s4856 + $0xc] sm:$0xf]
        %v4861 = vld [vmem:[%s4856 + $0x10] sm:$0xf]
        %v4862 = vld [vmem:[%s4856 + $0x14] sm:$0xf]
        %v4863 = vld [vmem:[%s4856 + $0x18] sm:$0xf]
        %v4864 = vld [vmem:[%s4856 + $0x1c] sm:$0xf]
        %v4865 = vld [vmem:[%s4856 + $0x20] sm:$0xf]
        %v4875 = vunpack.c.l.b16 %v4857
        %v4876 = vunpack.c.l.b16 %v4858
        %v4877 = vunpack.c.l.b16 %v4859
        %v4878 = vunpack.c.l.b16 %v4860
        %v4879 = vunpack.c.l.b16 %v4861
        %v4880 = vunpack.c.l.b16 %v4862
        %v4881 = vunpack.c.l.b16 %v4863
        %v4882 = vunpack.c.l.b16 %v4864
        %v4883 = vunpack.c.l.b16 %v4865
        %v4884 = vpack.c.b16 %v4876, %v4875
        %v4885 = vpack.c.b16 %v4878, %v4877
        %v4886 = vpack.c.b16 %v4880, %v4879
        %v4887 = vpack.c.b16 %v4882, %v4881
        %v4888 = vpack.c.b16 %v4883, %v4883
        %vm4889 = vcmask 523264
        %v4891 = vsel %vm4889, %v4884, 0
        %v4894 = vsel %vm4889, %v4885, 0
        %v4897 = vsel %vm4889, %v4886, 0
        %v4900 = vsel %vm4889, %v4887, 0
        %v4903 = vsel %vm4889, %v4888, 0
        %4905 = vmatpush.bf16.msra.mxu0 0
        %4906 = vmatpush.bf16.msra.mxu0 0
        %4907 = vmatpush.bf16.msra.mxu0 0
        %4908 = vmatpush.bf16.msra.mxu0 0
        %4909 = vmatpush.bf16.msra.mxu0 %v4852
        %4910 = vmatpush.bf16.msra.mxu0 %v4850
        %4911 = vmatpush.bf16.msra.mxu0 %v4848
        %4912 = vmatpush.bf16.msra.mxu0 %v4846
        %4913 = vmatmul.bf16.gmra.mxu0 %v4891
        %v4914 = vpop.f32.mrf.mxu0
        %v4915 = vadd.f32 0.0, %v4914
        %v4916 = vpop.f32.mrf.mxu0
        %v4917 = vadd.f32 0.0, %v4916
        %4918 = vmatmul.bf16.gmra.mxu0 %v4894
        %v4919 = vpop.f32.mrf.mxu0
        %v4920 = vadd.f32 0.0, %v4919
        %v4921 = vpop.f32.mrf.mxu0
        %v4922 = vadd.f32 0.0, %v4921
        %4923 = vmatmul.bf16.gmra.mxu0 %v4897
        %v4924 = vpop.f32.mrf.mxu0
        %v4925 = vadd.f32 0.0, %v4924
        %v4926 = vpop.f32.mrf.mxu0
        %v4927 = vadd.f32 0.0, %v4926
        %4928 = vmatmul.bf16.gmra.mxu0 %v4900
        %v4929 = vpop.f32.mrf.mxu0
        %v4930 = vadd.f32 0.0, %v4929
        %v4931 = vpop.f32.mrf.mxu0
        %v4932 = vadd.f32 0.0, %v4931
        %4933 = vmatmul.bf16.gmra.mxu0 %v4903
        %v4934 = vpop.f32.mrf.mxu0
        %v4935 = vadd.f32 0.0, %v4934
        %v4936 = vpop.f32.mrf.mxu0
        %4937 = vdwg.mxu0
        %4938 = vmatpush.bf16.msra.mxu0 0
        %4939 = vmatpush.bf16.msra.mxu0 0
        %4940 = vmatpush.bf16.msra.mxu0 0
        %4941 = vmatpush.bf16.msra.mxu0 0
        %4942 = vmatpush.bf16.msra.mxu0 %v4853
        %4943 = vmatpush.bf16.msra.mxu0 %v4851
        %4944 = vmatpush.bf16.msra.mxu0 %v4849
        %4945 = vmatpush.bf16.msra.mxu0 %v4847
        %4946 = vmatmul.bf16.gmra.mxu0 %v4891
        %v4947 = vpop.f32.mrf.mxu0
        %v4948 = vadd.f32 0.0, %v4947
        %v4949 = vpop.f32.mrf.mxu0
        %v4950 = vadd.f32 0.0, %v4949
        %4951 = vmatmul.bf16.gmra.mxu0 %v4894
        %v4952 = vpop.f32.mrf.mxu0
        %v4953 = vadd.f32 0.0, %v4952
        %v4954 = vpop.f32.mrf.mxu0
        %v4955 = vadd.f32 0.0, %v4954
        %4956 = vmatmul.bf16.gmra.mxu0 %v4897
        %v4957 = vpop.f32.mrf.mxu0
        %v4958 = vadd.f32 0.0, %v4957
        %v4959 = vpop.f32.mrf.mxu0
        %v4960 = vadd.f32 0.0, %v4959
        %4961 = vmatmul.bf16.gmra.mxu0 %v4900
        %v4962 = vpop.f32.mrf.mxu0
        %v4963 = vadd.f32 0.0, %v4962
        %v4964 = vpop.f32.mrf.mxu0
        %v4965 = vadd.f32 0.0, %v4964
        %4966 = vmatmul.bf16.gmra.mxu0 %v4903
        %v4967 = vpop.f32.mrf.mxu0
        %v4968 = vadd.f32 0.0, %v4967
        %v4969 = vpop.f32.mrf.mxu0
        %4970 = vdwg.mxu0
        %4971 = vrot.lane.b32.xlu0 %v4915, 13
        %v4972 = vpop.permute.xlu0 %4971
        %4973 = vrot.lane.b32.xlu0 %v4948, 13
        %v4974 = vpop.permute.xlu0 %4973
        %v4975 = vsel %vm528, %v4972, %v4974
        %v4976 = vsel %vm528, %v4974, %v4972
        %v4977 = vadd.f32 %v4976, 0.0
        %v4978 = vadd.f32 %v4975, 0.0
        %4979 = vrot.lane.b32.xlu0 %v4917, 12
        %v4980 = vpop.permute.xlu0 %4979
        %4981 = vrot.lane.b32.xlu0 %v4950, 12
        %v4982 = vpop.permute.xlu0 %4981
        %v4983 = vsel %vm540, %v4980, %v4982
        %v4984 = vsel %vm540, %v4982, %v4980
        %v4985 = vadd.f32 %v4977, %v4984
        %v4986 = vadd.f32 %v4978, %v4983
        %4987 = vrot.lane.b32.xlu0 %v4920, 11
        %v4988 = vpop.permute.xlu0 %4987
        %4989 = vrot.lane.b32.xlu0 %v4953, 11
        %v4990 = vpop.permute.xlu0 %4989
        %v4991 = vsel %vm552, %v4988, %v4990
        %v4992 = vsel %vm552, %v4990, %v4988
        %v4993 = vadd.f32 %v4985, %v4992
        %v4994 = vadd.f32 %v4986, %v4991
        %4995 = vrot.lane.b32.xlu0 %v4922, 1
        %v4996 = vpop.permute.xlu0 %4995
        %4997 = vrot.lane.b32.xlu0 %v4955, 1
        %v4998 = vpop.permute.xlu0 %4997
        %v4999 = vsel %vm588, %v4996, %v4998
        %v5000 = vsel %vm588, %v4998, %v4996
        %v5001 = vadd.f32 %v4993, %v5000
        %v5002 = vadd.f32 %v4994, %v4999
        %v5003 = vadd.f32 %v5001, %v4925
        %v5004 = vadd.f32 %v5002, %v4958
        %5005 = vrot.lane.b32.xlu0 %v4927, 127
        %v5006 = vpop.permute.xlu0 %5005
        %5007 = vrot.lane.b32.xlu0 %v4960, 127
        %v5008 = vpop.permute.xlu0 %5007
        %v5009 = vsel %vm600, %v5006, %v5008
        %v5010 = vsel %vm600, %v5008, %v5006
        %v5011 = vadd.f32 %v5003, %v5009
        %v5012 = vadd.f32 %v5004, %v5010
        %5013 = vrot.lane.b32.xlu0 %v4930, 117
        %v5014 = vpop.permute.xlu0 %5013
        %5015 = vrot.lane.b32.xlu0 %v4963, 117
        %v5016 = vpop.permute.xlu0 %5015
        %v5017 = vsel %vm636, %v5014, %v5016
        %v5018 = vsel %vm636, %v5016, %v5014
        %v5019 = vadd.f32 %v5011, %v5017
        %v5020 = vadd.f32 %v5012, %v5018
        %5021 = vrot.lane.b32.xlu0 %v4932, 116
        %v5022 = vpop.permute.xlu0 %5021
        %5023 = vrot.lane.b32.xlu0 %v4965, 116
        %v5024 = vpop.permute.xlu0 %5023
        %v5025 = vsel %vm648, %v5022, %v5024
        %v5026 = vsel %vm648, %v5024, %v5022
        %v5027 = vadd.f32 %v5019, %v5025
        %v5028 = vadd.f32 %v5020, %v5026
        %5029 = vrot.lane.b32.xlu0 %v4935, 115
        %v5030 = vpop.permute.xlu0 %5029
        %5031 = vrot.lane.b32.xlu0 %v4968, 115
        %v5032 = vpop.permute.xlu0 %5031
        %v5033 = vsel %vm660, %v5030, %v5032
        %v5034 = vsel %vm660, %v5032, %v5030
        %v5035 = vadd.f32 %v5027, %v5033
        %v5036 = vadd.f32 %v5028, %v5034
        %s5037 = smul.u32 %s4825, 8
        %s5038 = scalar_lea.vmem %s5, %s5037
        %v5039 = vld [vmem:[%s5038] sm:$0xff]
        %5041 = vset.pattern.permute.xlu0 0
        %5042 = vperm.xlu0 %5041, %v5039
        %v5043 = vpop.permute.xlu0 %5042
        %v5045 = vadd.f32 %v5035, %v5043
        %v5046 = vadd.f32 %v5036, %v5043
        %v5047 = vmax.f32 %v5045, 0.0
        %v5048 = vmax.f32 %v5046, 0.0
        %v5049 = vmul.f32 %v5047, %v4804
        %v5050 = vmul.f32 %v5048, %v4805
        %5051 = vrot.lane.b32.xlu0 %v5049, 13
        %v5052 = vpop.permute.xlu0 %5051
        %5053 = vrot.lane.b32.xlu0 %v5050, 13
        %v5054 = vpop.permute.xlu0 %5053
        %v5055 = vsel %vm528, %v5052, %v5054
        %v5056 = vsel %vm528, %v5054, %v5052
        %5057 = vrot.lane.b32.xlu0 %v5049, 12
        %v5058 = vpop.permute.xlu0 %5057
        %5059 = vrot.lane.b32.xlu0 %v5050, 12
        %v5060 = vpop.permute.xlu0 %5059
        %v5061 = vsel %vm540, %v5058, %v5060
        %v5062 = vsel %vm540, %v5060, %v5058
        %5063 = vrot.lane.b32.xlu0 %v5049, 11
        %v5064 = vpop.permute.xlu0 %5063
        %5065 = vrot.lane.b32.xlu0 %v5050, 11
        %v5066 = vpop.permute.xlu0 %5065
        %v5067 = vsel %vm552, %v5064, %v5066
        %v5068 = vsel %vm552, %v5066, %v5064
        %5069 = vrot.lane.b32.xlu0 %v5049, 1
        %v5070 = vpop.permute.xlu0 %5069
        %5071 = vrot.lane.b32.xlu0 %v5050, 1
        %v5072 = vpop.permute.xlu0 %5071
        %v5073 = vsel %vm588, %v5070, %v5072
        %v5074 = vsel %vm588, %v5072, %v5070
        %5075 = vrot.lane.b32.xlu0 %v5049, 127
        %v5076 = vpop.permute.xlu0 %5075
        %5077 = vrot.lane.b32.xlu0 %v5050, 127
        %v5078 = vpop.permute.xlu0 %5077
        %v5079 = vsel %vm600, %v5076, %v5078
        %v5080 = vsel %vm600, %v5078, %v5076
        %5081 = vrot.lane.b32.xlu0 %v5049, 117
        %v5082 = vpop.permute.xlu0 %5081
        %5083 = vrot.lane.b32.xlu0 %v5050, 117
        %v5084 = vpop.permute.xlu0 %5083
        %v5085 = vsel %vm636, %v5082, %v5084
        %v5086 = vsel %vm636, %v5084, %v5082
        %5087 = vrot.lane.b32.xlu0 %v5049, 116
        %v5088 = vpop.permute.xlu0 %5087
        %5089 = vrot.lane.b32.xlu0 %v5050, 116
        %v5090 = vpop.permute.xlu0 %5089
        %v5091 = vsel %vm648, %v5088, %v5090
        %v5092 = vsel %vm648, %v5090, %v5088
        %5093 = vrot.lane.b32.xlu0 %v5049, 115
        %v5094 = vpop.permute.xlu0 %5093
        %5095 = vrot.lane.b32.xlu0 %v5050, 115
        %v5096 = vpop.permute.xlu0 %5095
        %v5097 = vsel %vm660, %v5094, %v5096
        %v5098 = vsel %vm660, %v5096, %v5094
        %v5099 = vpack.c.bf16 %v5062, %v5056
        %v5100 = vpack.c.bf16 %v5061, %v5055
        %v5101 = vpack.c.bf16 %v5074, %v5068
        %v5102 = vpack.c.bf16 %v5073, %v5067
        %v5103 = vpack.c.bf16 %v5079, %v5049
        %v5104 = vpack.c.bf16 %v5080, %v5050
        %v5105 = vpack.c.bf16 %v5091, %v5085
        %v5106 = vpack.c.bf16 %v5092, %v5086
        %v5107 = vpack.c.bf16 %v5097, %v5097
        %v5108 = vpack.c.bf16 %v5098, %v5098
        %s5109 = smul.addr %s5037, 4
        %s5110 = scalar_lea.vmem %s6, %s5109
        %v5111 = vld [vmem:[%s5110] sm:$0xf]
        %v5112 = vld [vmem:[%s5110 + $0x4] sm:$0xf]
        %v5113 = vld [vmem:[%s5110 + $0x8] sm:$0xf]
        %v5114 = vld [vmem:[%s5110 + $0xc] sm:$0xf]
        %v5115 = vld [vmem:[%s5110 + $0x10] sm:$0xf]
        %v5116 = vld [vmem:[%s5110 + $0x14] sm:$0xf]
        %v5117 = vld [vmem:[%s5110 + $0x18] sm:$0xf]
        %v5118 = vld [vmem:[%s5110 + $0x1c] sm:$0xf]
        %s5119 = smul.u32 %s4825, 64
        %s5120 = scalar_lea.vmem %s7, %s5119
        %v5121 = vld [vmem:[%s5120] sm:$0xff]
        %v5122 = vld [vmem:[%s5120 + $0x8] sm:$0xff]
        %v5123 = vld [vmem:[%s5120 + $0x10] sm:$0xff]
        %v5124 = vld [vmem:[%s5120 + $0x18] sm:$0xff]
        %v5125 = vld [vmem:[%s5120 + $0x20] sm:$0xff]
        %v5126 = vld [vmem:[%s5120 + $0x28] sm:$0xff]
        %v5127 = vld [vmem:[%s5120 + $0x30] sm:$0xff]
        %v5128 = vld [vmem:[%s5120 + $0x38] sm:$0xff]
        %5130 = vset.pattern.permute.xlu0 0
        %5131 = vperm.xlu0 %5130, %v5121
        %v5132 = vpop.permute.xlu0 %5131
        %5135 = vset.pattern.permute.xlu0 0
        %5136 = vperm.xlu0 %5135, %v5122
        %v5137 = vpop.permute.xlu0 %5136
        %5140 = vset.pattern.permute.xlu0 0
        %5141 = vperm.xlu0 %5140, %v5123
        %v5142 = vpop.permute.xlu0 %5141
        %5145 = vset.pattern.permute.xlu0 0
        %5146 = vperm.xlu0 %5145, %v5124
        %v5147 = vpop.permute.xlu0 %5146
        %5150 = vset.pattern.permute.xlu0 0
        %5151 = vperm.xlu0 %5150, %v5125
        %v5152 = vpop.permute.xlu0 %5151
        %5155 = vset.pattern.permute.xlu0 0
        %5156 = vperm.xlu0 %5155, %v5126
        %v5157 = vpop.permute.xlu0 %5156
        %5160 = vset.pattern.permute.xlu0 0
        %5161 = vperm.xlu0 %5160, %v5127
        %v5162 = vpop.permute.xlu0 %5161
        %5165 = vset.pattern.permute.xlu0 0
        %5166 = vperm.xlu0 %5165, %v5128
        %v5167 = vpop.permute.xlu0 %5166
        %v5177 = vunpack.c.l.b16 %v5111
        %v5178 = vunpack.c.l.b16 %v5112
        %v5179 = vunpack.c.l.b16 %v5113
        %v5180 = vunpack.c.l.b16 %v5114
        %v5181 = vunpack.c.l.b16 %v5115
        %v5182 = vunpack.c.l.b16 %v5116
        %v5183 = vunpack.c.l.b16 %v5117
        %v5184 = vunpack.c.l.b16 %v5118
        %v5185 = vpack.c.b16 %v5178, %v5177
        %v5186 = vpack.c.b16 %v5180, %v5179
        %v5187 = vpack.c.b16 %v5182, %v5181
        %v5188 = vpack.c.b16 %v5184, %v5183
        %vm5189 = vcmask 588800
        %v5191 = vsel %vm5189, %v5185, 0
        %v5194 = vsel %vm5189, %v5186, 0
        %v5197 = vsel %vm5189, %v5187, 0
        %v5200 = vsel %vm5189, %v5188, 0
        %vm5202 = vcmask 1043456
        %v5204 = vsel %vm5202, %v5107, 0
        %v5207 = vsel %vm5202, %v5108, 0
        %5209 = vmatpush.bf16.msra.mxu0 0
        %5210 = vmatpush.bf16.msra.mxu0 0
        %5211 = vmatpush.bf16.msra.mxu0 0
        %5212 = vmatpush.bf16.msra.mxu0 %v5204
        %5213 = vmatpush.bf16.msra.mxu0 %v5105
        %5214 = vmatpush.bf16.msra.mxu0 %v5103
        %5215 = vmatpush.bf16.msra.mxu0 %v5101
        %5216 = vmatpush.bf16.msra.mxu0 %v5099
        %5217 = vmatmul.bf16.gmra.mxu0 %v5191
        %v5218 = vpop.f32.mrf.mxu0
        %v5219 = vadd.f32 %v5132, %v5218
        %v5220 = vpop.f32.mrf.mxu0
        %v5221 = vadd.f32 %v5137, %v5220
        %5222 = vmatmul.bf16.gmra.mxu0 %v5194
        %v5223 = vpop.f32.mrf.mxu0
        %v5224 = vadd.f32 %v5142, %v5223
        %v5225 = vpop.f32.mrf.mxu0
        %v5226 = vadd.f32 %v5147, %v5225
        %5227 = vmatmul.bf16.gmra.mxu0 %v5197
        %v5228 = vpop.f32.mrf.mxu0
        %v5229 = vadd.f32 %v5152, %v5228
        %v5230 = vpop.f32.mrf.mxu0
        %v5231 = vadd.f32 %v5157, %v5230
        %5232 = vmatmul.bf16.gmra.mxu0 %v5200
        %v5233 = vpop.f32.mrf.mxu0
        %v5234 = vadd.f32 %v5162, %v5233
        %v5235 = vpop.f32.mrf.mxu0
        %v5236 = vadd.f32 %v5167, %v5235
        %5237 = vdwg.mxu0
        %5238 = vmatpush.bf16.msra.mxu0 0
        %5239 = vmatpush.bf16.msra.mxu0 0
        %5240 = vmatpush.bf16.msra.mxu0 0
        %5241 = vmatpush.bf16.msra.mxu0 %v5207
        %5242 = vmatpush.bf16.msra.mxu0 %v5106
        %5243 = vmatpush.bf16.msra.mxu0 %v5104
        %5244 = vmatpush.bf16.msra.mxu0 %v5102
        %5245 = vmatpush.bf16.msra.mxu0 %v5100
        %5246 = vmatmul.bf16.gmra.mxu0 %v5191
        %v5247 = vpop.f32.mrf.mxu0
        %v5248 = vadd.f32 %v5132, %v5247
        %v5249 = vpop.f32.mrf.mxu0
        %v5250 = vadd.f32 %v5137, %v5249
        %5251 = vmatmul.bf16.gmra.mxu0 %v5194
        %v5252 = vpop.f32.mrf.mxu0
        %v5253 = vadd.f32 %v5142, %v5252
        %v5254 = vpop.f32.mrf.mxu0
        %v5255 = vadd.f32 %v5147, %v5254
        %5256 = vmatmul.bf16.gmra.mxu0 %v5197
        %v5257 = vpop.f32.mrf.mxu0
        %v5258 = vadd.f32 %v5152, %v5257
        %v5259 = vpop.f32.mrf.mxu0
        %v5260 = vadd.f32 %v5157, %v5259
        %5261 = vmatmul.bf16.gmra.mxu0 %v5200
        %v5262 = vpop.f32.mrf.mxu0
        %v5263 = vadd.f32 %v5162, %v5262
        %v5264 = vpop.f32.mrf.mxu0
        %v5265 = vadd.f32 %v5167, %v5264
        %5266 = vdwg.mxu0
        %v5267 = vadd.f32 %v4830, %v5219
        %v5268 = vadd.f32 %v4831, %v5248
        %v5269 = vadd.f32 %v4832, %v5221
        %v5270 = vadd.f32 %v4833, %v5250
        %v5271 = vadd.f32 %v4834, %v5224
        %v5272 = vadd.f32 %v4835, %v5253
        %v5273 = vadd.f32 %v4836, %v5226
        %v5274 = vadd.f32 %v4837, %v5255
        %v5275 = vadd.f32 %v4838, %v5229
        %v5276 = vadd.f32 %v4839, %v5258
        %v5277 = vadd.f32 %v4840, %v5231
        %v5278 = vadd.f32 %v4841, %v5260
        %v5279 = vadd.f32 %v4842, %v5234
        %v5280 = vadd.f32 %v4843, %v5263
        %v5281 = vadd.f32 %v4844, %v5236
        %v5282 = vadd.f32 %v4845, %v5265
        %v5283 = vmul.f32 %v5267, %v4804
        %v5284 = vmul.f32 %v5268, %v4805
        %v5285 = vmul.f32 %v5269, %v4804
        %v5286 = vmul.f32 %v5270, %v4805
        %v5287 = vmul.f32 %v5271, %v4804
        %v5288 = vmul.f32 %v5272, %v4805
        %v5289 = vmul.f32 %v5273, %v4804
        %v5290 = vmul.f32 %v5274, %v4805
        %v5291 = vmul.f32 %v5275, %v4804
        %v5292 = vmul.f32 %v5276, %v4805
        %v5293 = vmul.f32 %v5277, %v4804
        %v5294 = vmul.f32 %v5278, %v4805
        %v5295 = vmul.f32 %v5279, %v4804
        %v5296 = vmul.f32 %v5280, %v4805
        %v5297 = vmul.f32 %v5281, %v4804
        %v5298 = vmul.f32 %v5282, %v4805
      $region77: #{model_forward.1} parent=71 // loop_footer
        %s4829 = sadd.s32 1, %s4825
      $region78: #{model_forward.1} parent=71 // loop_footer_branch
        %4824 = sbr.rel target = $region74
      $region79: #{model_forward.1} parent=71 // loop_exit
        _
      %v5299 = vpack.c.bf16 %v4832, %v4830
      %v5300 = vpack.c.bf16 %v4833, %v4831
      %v5301 = vpack.c.bf16 %v4836, %v4834
      %v5302 = vpack.c.bf16 %v4837, %v4835
      %v5303 = vpack.c.bf16 %v4840, %v4838
      %v5304 = vpack.c.bf16 %v4841, %v4839
      %v5305 = vpack.c.bf16 %v4844, %v4842
      %v5306 = vpack.c.bf16 %v4845, %v4843
      %v5307 = vld [vmem:[%s8] sm:$0xf]
      %v5308 = vld [vmem:[%s8 + $0x4] sm:$0xf]
      %v5309 = vld [vmem:[%s8 + $0x8] sm:$0xf]
      %v5310 = vld [vmem:[%s8 + $0xc] sm:$0xf]
      %v5311 = vld [vmem:[%s8 + $0x10] sm:$0xf]
      %v5312 = vld [vmem:[%s8 + $0x14] sm:$0xf]
      %v5319 = vunpack.c.l.b16 %v5307
      %v5320 = vunpack.c.l.b16 %v5308
      %v5321 = vunpack.c.l.b16 %v5309
      %v5322 = vunpack.c.l.b16 %v5310
      %v5323 = vunpack.c.l.b16 %v5311
      %v5324 = vunpack.c.l.b16 %v5312
      %v5325 = vpack.c.b16 %v5320, %v5319
      %v5326 = vpack.c.b16 %v5322, %v5321
      %v5327 = vpack.c.b16 %v5324, %v5323
      %vm5328 = vcmask 523264
      %v5330 = vsel %vm5328, %v5325, 0
      %v5333 = vsel %vm5328, %v5326, 0
      %v5336 = vsel %vm5328, %v5327, 0
      %5338 = vmatpush.bf16.msra.mxu0 0
      %5339 = vmatpush.bf16.msra.mxu0 0
      %5340 = vmatpush.bf16.msra.mxu0 0
      %5341 = vmatpush.bf16.msra.mxu0 0
      %5342 = vmatpush.bf16.msra.mxu0 %v5305
      %5343 = vmatpush.bf16.msra.mxu0 %v5303
      %5344 = vmatpush.bf16.msra.mxu0 %v5301
      %5345 = vmatpush.bf16.msra.mxu0 %v5299
      %5346 = vmatmul.bf16.gmra.mxu0 %v5330
      %v5347 = vpop.f32.mrf.mxu0
      %v5348 = vadd.f32 0.0, %v5347
      %v5349 = vpop.f32.mrf.mxu0
      %v5350 = vadd.f32 0.0, %v5349
      %5351 = vmatmul.bf16.gmra.mxu0 %v5333
      %v5352 = vpop.f32.mrf.mxu0
      %v5353 = vadd.f32 0.0, %v5352
      %v5354 = vpop.f32.mrf.mxu0
      %v5355 = vadd.f32 0.0, %v5354
      %5356 = vmatmul.bf16.gmra.mxu0 %v5336
      %v5357 = vpop.f32.mrf.mxu0
      %v5358 = vadd.f32 0.0, %v5357
      %v5359 = vpop.f32.mrf.mxu0
      %v5360 = vadd.f32 0.0, %v5359
      %5361 = vdwg.mxu0
      %5362 = vmatpush.bf16.msra.mxu0 0
      %5363 = vmatpush.bf16.msra.mxu0 0
      %5364 = vmatpush.bf16.msra.mxu0 0
      %5365 = vmatpush.bf16.msra.mxu0 0
      %5366 = vmatpush.bf16.msra.mxu0 %v5306
      %5367 = vmatpush.bf16.msra.mxu0 %v5304
      %5368 = vmatpush.bf16.msra.mxu0 %v5302
      %5369 = vmatpush.bf16.msra.mxu0 %v5300
      %5370 = vmatmul.bf16.gmra.mxu0 %v5330
      %v5371 = vpop.f32.mrf.mxu0
      %v5372 = vadd.f32 0.0, %v5371
      %v5373 = vpop.f32.mrf.mxu0
      %v5374 = vadd.f32 0.0, %v5373
      %5375 = vmatmul.bf16.gmra.mxu0 %v5333
      %v5376 = vpop.f32.mrf.mxu0
      %v5377 = vadd.f32 0.0, %v5376
      %v5378 = vpop.f32.mrf.mxu0
      %v5379 = vadd.f32 0.0, %v5378
      %5380 = vmatmul.bf16.gmra.mxu0 %v5336
      %v5381 = vpop.f32.mrf.mxu0
      %v5382 = vadd.f32 0.0, %v5381
      %v5383 = vpop.f32.mrf.mxu0
      %v5384 = vadd.f32 0.0, %v5383
      %5385 = vdwg.mxu0
      %5386 = vrot.lane.b32.xlu0 %v5348, 13
      %v5387 = vpop.permute.xlu0 %5386
      %5388 = vrot.lane.b32.xlu0 %v5350, 13
      %v5389 = vpop.permute.xlu0 %5388
      %5390 = vrot.lane.b32.xlu0 %v5353, 13
      %v5391 = vpop.permute.xlu0 %5390
      %5392 = vrot.lane.b32.xlu0 %v5355, 13
      %v5393 = vpop.permute.xlu0 %5392
      %5394 = vrot.lane.b32.xlu0 %v5358, 13
      %v5395 = vpop.permute.xlu0 %5394
      %5396 = vrot.lane.b32.xlu0 %v5360, 13
      %v5397 = vpop.permute.xlu0 %5396
      %5398 = vrot.lane.b32.xlu0 %v5372, 13
      %v5399 = vpop.permute.xlu0 %5398
      %5400 = vrot.lane.b32.xlu0 %v5374, 13
      %v5401 = vpop.permute.xlu0 %5400
      %5402 = vrot.lane.b32.xlu0 %v5377, 13
      %v5403 = vpop.permute.xlu0 %5402
      %5404 = vrot.lane.b32.xlu0 %v5379, 13
      %v5405 = vpop.permute.xlu0 %5404
      %5406 = vrot.lane.b32.xlu0 %v5382, 13
      %v5407 = vpop.permute.xlu0 %5406
      %5408 = vrot.lane.b32.xlu0 %v5384, 13
      %v5409 = vpop.permute.xlu0 %5408
      %v5410 = vsel %vm528, %v5387, %v5399
      %v5411 = vsel %vm528, %v5389, %v5401
      %v5412 = vsel %vm528, %v5391, %v5403
      %v5413 = vsel %vm528, %v5393, %v5405
      %v5414 = vsel %vm528, %v5395, %v5407
      %v5415 = vsel %vm528, %v5397, %v5409
      %v5416 = vsel %vm528, %v5399, %v5387
      %v5417 = vsel %vm528, %v5401, %v5389
      %v5418 = vsel %vm528, %v5403, %v5391
      %v5419 = vsel %vm528, %v5405, %v5393
      %v5420 = vsel %vm528, %v5407, %v5395
      %v5421 = vsel %vm528, %v5409, %v5397
      %v5422 = vadd.f32 %v5416, 0.0
      %v5423 = vadd.f32 %v5410, 0.0
      %v5424 = vadd.f32 %v5417, 0.0
      %v5425 = vadd.f32 %v5411, 0.0
      %v5426 = vadd.f32 %v5418, 0.0
      %v5427 = vadd.f32 %v5412, 0.0
      %v5428 = vadd.f32 %v5419, 0.0
      %v5429 = vadd.f32 %v5413, 0.0
      %v5430 = vadd.f32 %v5420, 0.0
      %v5431 = vadd.f32 %v5414, 0.0
      %v5432 = vadd.f32 %v5421, 0.0
      %v5433 = vadd.f32 %v5415, 0.0
      %s5434 = scalar_lea.vmem %s8, 24
      %v5435 = vld [vmem:[%s5434] sm:$0xf]
      %v5436 = vld [vmem:[%s5434 + $0x4] sm:$0xf]
      %v5437 = vld [vmem:[%s5434 + $0x8] sm:$0xf]
      %v5438 = vld [vmem:[%s5434 + $0xc] sm:$0xf]
      %v5439 = vld [vmem:[%s5434 + $0x10] sm:$0xf]
      %v5440 = vld [vmem:[%s5434 + $0x14] sm:$0xf]
      %v5447 = vunpack.c.l.b16 %v5435
      %v5448 = vunpack.c.l.b16 %v5436
      %v5449 = vunpack.c.l.b16 %v5437
      %v5450 = vunpack.c.l.b16 %v5438
      %v5451 = vunpack.c.l.b16 %v5439
      %v5452 = vunpack.c.l.b16 %v5440
      %v5453 = vpack.c.b16 %v5448, %v5447
      %v5454 = vpack.c.b16 %v5450, %v5449
      %v5455 = vpack.c.b16 %v5452, %v5451
      %v5457 = vsel %vm5328, %v5453, 0
      %v5460 = vsel %vm5328, %v5454, 0
      %v5463 = vsel %vm5328, %v5455, 0
      %5465 = vmatpush.bf16.msra.mxu0 0
      %5466 = vmatpush.bf16.msra.mxu0 0
      %5467 = vmatpush.bf16.msra.mxu0 0
      %5468 = vmatpush.bf16.msra.mxu0 0
      %5469 = vmatpush.bf16.msra.mxu0 %v5305
      %5470 = vmatpush.bf16.msra.mxu0 %v5303
      %5471 = vmatpush.bf16.msra.mxu0 %v5301
      %5472 = vmatpush.bf16.msra.mxu0 %v5299
      %5473 = vmatmul.bf16.gmra.mxu0 %v5457
      %v5474 = vpop.f32.mrf.mxu0
      %v5475 = vadd.f32 0.0, %v5474
      %v5476 = vpop.f32.mrf.mxu0
      %v5477 = vadd.f32 0.0, %v5476
      %5478 = vmatmul.bf16.gmra.mxu0 %v5460
      %v5479 = vpop.f32.mrf.mxu0
      %v5480 = vadd.f32 0.0, %v5479
      %v5481 = vpop.f32.mrf.mxu0
      %v5482 = vadd.f32 0.0, %v5481
      %5483 = vmatmul.bf16.gmra.mxu0 %v5463
      %v5484 = vpop.f32.mrf.mxu0
      %v5485 = vadd.f32 0.0, %v5484
      %v5486 = vpop.f32.mrf.mxu0
      %v5487 = vadd.f32 0.0, %v5486
      %5488 = vdwg.mxu0
      %5489 = vmatpush.bf16.msra.mxu0 0
      %5490 = vmatpush.bf16.msra.mxu0 0
      %5491 = vmatpush.bf16.msra.mxu0 0
      %5492 = vmatpush.bf16.msra.mxu0 0
      %5493 = vmatpush.bf16.msra.mxu0 %v5306
      %5494 = vmatpush.bf16.msra.mxu0 %v5304
      %5495 = vmatpush.bf16.msra.mxu0 %v5302
      %5496 = vmatpush.bf16.msra.mxu0 %v5300
      %5497 = vmatmul.bf16.gmra.mxu0 %v5457
      %v5498 = vpop.f32.mrf.mxu0
      %v5499 = vadd.f32 0.0, %v5498
      %v5500 = vpop.f32.mrf.mxu0
      %v5501 = vadd.f32 0.0, %v5500
      %5502 = vmatmul.bf16.gmra.mxu0 %v5460
      %v5503 = vpop.f32.mrf.mxu0
      %v5504 = vadd.f32 0.0, %v5503
      %v5505 = vpop.f32.mrf.mxu0
      %v5506 = vadd.f32 0.0, %v5505
      %5507 = vmatmul.bf16.gmra.mxu0 %v5463
      %v5508 = vpop.f32.mrf.mxu0
      %v5509 = vadd.f32 0.0, %v5508
      %v5510 = vpop.f32.mrf.mxu0
      %v5511 = vadd.f32 0.0, %v5510
      %5512 = vdwg.mxu0
      %5513 = vrot.lane.b32.xlu0 %v5475, 12
      %v5514 = vpop.permute.xlu0 %5513
      %5515 = vrot.lane.b32.xlu0 %v5477, 12
      %v5516 = vpop.permute.xlu0 %5515
      %5517 = vrot.lane.b32.xlu0 %v5480, 12
      %v5518 = vpop.permute.xlu0 %5517
      %5519 = vrot.lane.b32.xlu0 %v5482, 12
      %v5520 = vpop.permute.xlu0 %5519
      %5521 = vrot.lane.b32.xlu0 %v5485, 12
      %v5522 = vpop.permute.xlu0 %5521
      %5523 = vrot.lane.b32.xlu0 %v5487, 12
      %v5524 = vpop.permute.xlu0 %5523
      %5525 = vrot.lane.b32.xlu0 %v5499, 12
      %v5526 = vpop.permute.xlu0 %5525
      %5527 = vrot.lane.b32.xlu0 %v5501, 12
      %v5528 = vpop.permute.xlu0 %5527
      %5529 = vrot.lane.b32.xlu0 %v5504, 12
      %v5530 = vpop.permute.xlu0 %5529
      %5531 = vrot.lane.b32.xlu0 %v5506, 12
      %v5532 = vpop.permute.xlu0 %5531
      %5533 = vrot.lane.b32.xlu0 %v5509, 12
      %v5534 = vpop.permute.xlu0 %5533
      %5535 = vrot.lane.b32.xlu0 %v5511, 12
      %v5536 = vpop.permute.xlu0 %5535
      %v5537 = vsel %vm540, %v5514, %v5526
      %v5538 = vsel %vm540, %v5516, %v5528
      %v5539 = vsel %vm540, %v5518, %v5530
      %v5540 = vsel %vm540, %v5520, %v5532
      %v5541 = vsel %vm540, %v5522, %v5534
      %v5542 = vsel %vm540, %v5524, %v5536
      %v5543 = vsel %vm540, %v5526, %v5514
      %v5544 = vsel %vm540, %v5528, %v5516
      %v5545 = vsel %vm540, %v5530, %v5518
      %v5546 = vsel %vm540, %v5532, %v5520
      %v5547 = vsel %vm540, %v5534, %v5522
      %v5548 = vsel %vm540, %v5536, %v5524
      %v5549 = vadd.f32 %v5422, %v5543
      %v5550 = vadd.f32 %v5423, %v5537
      %v5551 = vadd.f32 %v5424, %v5544
      %v5552 = vadd.f32 %v5425, %v5538
      %v5553 = vadd.f32 %v5426, %v5545
      %v5554 = vadd.f32 %v5427, %v5539
      %v5555 = vadd.f32 %v5428, %v5546
      %v5556 = vadd.f32 %v5429, %v5540
      %v5557 = vadd.f32 %v5430, %v5547
      %v5558 = vadd.f32 %v5431, %v5541
      %v5559 = vadd.f32 %v5432, %v5548
      %v5560 = vadd.f32 %v5433, %v5542
      %s5561 = scalar_lea.vmem %s8, 48
      %v5562 = vld [vmem:[%s5561] sm:$0xf]
      %v5563 = vld [vmem:[%s5561 + $0x4] sm:$0xf]
      %v5564 = vld [vmem:[%s5561 + $0x8] sm:$0xf]
      %v5565 = vld [vmem:[%s5561 + $0xc] sm:$0xf]
      %v5566 = vld [vmem:[%s5561 + $0x10] sm:$0xf]
      %v5567 = vld [vmem:[%s5561 + $0x14] sm:$0xf]
      %v5574 = vunpack.c.l.b16 %v5562
      %v5575 = vunpack.c.l.b16 %v5563
      %v5576 = vunpack.c.l.b16 %v5564
      %v5577 = vunpack.c.l.b16 %v5565
      %v5578 = vunpack.c.l.b16 %v5566
      %v5579 = vunpack.c.l.b16 %v5567
      %v5580 = vpack.c.b16 %v5575, %v5574
      %v5581 = vpack.c.b16 %v5577, %v5576
      %v5582 = vpack.c.b16 %v5579, %v5578
      %v5584 = vsel %vm5328, %v5580, 0
      %v5587 = vsel %vm5328, %v5581, 0
      %v5590 = vsel %vm5328, %v5582, 0
      %5592 = vmatpush.bf16.msra.mxu0 0
      %5593 = vmatpush.bf16.msra.mxu0 0
      %5594 = vmatpush.bf16.msra.mxu0 0
      %5595 = vmatpush.bf16.msra.mxu0 0
      %5596 = vmatpush.bf16.msra.mxu0 %v5305
      %5597 = vmatpush.bf16.msra.mxu0 %v5303
      %5598 = vmatpush.bf16.msra.mxu0 %v5301
      %5599 = vmatpush.bf16.msra.mxu0 %v5299
      %5600 = vmatmul.bf16.gmra.mxu0 %v5584
      %v5601 = vpop.f32.mrf.mxu0
      %v5602 = vadd.f32 0.0, %v5601
      %v5603 = vpop.f32.mrf.mxu0
      %v5604 = vadd.f32 0.0, %v5603
      %5605 = vmatmul.bf16.gmra.mxu0 %v5587
      %v5606 = vpop.f32.mrf.mxu0
      %v5607 = vadd.f32 0.0, %v5606
      %v5608 = vpop.f32.mrf.mxu0
      %v5609 = vadd.f32 0.0, %v5608
      %5610 = vmatmul.bf16.gmra.mxu0 %v5590
      %v5611 = vpop.f32.mrf.mxu0
      %v5612 = vadd.f32 0.0, %v5611
      %v5613 = vpop.f32.mrf.mxu0
      %v5614 = vadd.f32 0.0, %v5613
      %5615 = vdwg.mxu0
      %5616 = vmatpush.bf16.msra.mxu0 0
      %5617 = vmatpush.bf16.msra.mxu0 0
      %5618 = vmatpush.bf16.msra.mxu0 0
      %5619 = vmatpush.bf16.msra.mxu0 0
      %5620 = vmatpush.bf16.msra.mxu0 %v5306
      %5621 = vmatpush.bf16.msra.mxu0 %v5304
      %5622 = vmatpush.bf16.msra.mxu0 %v5302
      %5623 = vmatpush.bf16.msra.mxu0 %v5300
      %5624 = vmatmul.bf16.gmra.mxu0 %v5584
      %v5625 = vpop.f32.mrf.mxu0
      %v5626 = vadd.f32 0.0, %v5625
      %v5627 = vpop.f32.mrf.mxu0
      %v5628 = vadd.f32 0.0, %v5627
      %5629 = vmatmul.bf16.gmra.mxu0 %v5587
      %v5630 = vpop.f32.mrf.mxu0
      %v5631 = vadd.f32 0.0, %v5630
      %v5632 = vpop.f32.mrf.mxu0
      %v5633 = vadd.f32 0.0, %v5632
      %5634 = vmatmul.bf16.gmra.mxu0 %v5590
      %v5635 = vpop.f32.mrf.mxu0
      %v5636 = vadd.f32 0.0, %v5635
      %v5637 = vpop.f32.mrf.mxu0
      %v5638 = vadd.f32 0.0, %v5637
      %5639 = vdwg.mxu0
      %5640 = vrot.lane.b32.xlu0 %v5602, 11
      %v5641 = vpop.permute.xlu0 %5640
      %5642 = vrot.lane.b32.xlu0 %v5604, 11
      %v5643 = vpop.permute.xlu0 %5642
      %5644 = vrot.lane.b32.xlu0 %v5607, 11
      %v5645 = vpop.permute.xlu0 %5644
      %5646 = vrot.lane.b32.xlu0 %v5609, 11
      %v5647 = vpop.permute.xlu0 %5646
      %5648 = vrot.lane.b32.xlu0 %v5612, 11
      %v5649 = vpop.permute.xlu0 %5648
      %5650 = vrot.lane.b32.xlu0 %v5614, 11
      %v5651 = vpop.permute.xlu0 %5650
      %5652 = vrot.lane.b32.xlu0 %v5626, 11
      %v5653 = vpop.permute.xlu0 %5652
      %5654 = vrot.lane.b32.xlu0 %v5628, 11
      %v5655 = vpop.permute.xlu0 %5654
      %5656 = vrot.lane.b32.xlu0 %v5631, 11
      %v5657 = vpop.permute.xlu0 %5656
      %5658 = vrot.lane.b32.xlu0 %v5633, 11
      %v5659 = vpop.permute.xlu0 %5658
      %5660 = vrot.lane.b32.xlu0 %v5636, 11
      %v5661 = vpop.permute.xlu0 %5660
      %5662 = vrot.lane.b32.xlu0 %v5638, 11
      %v5663 = vpop.permute.xlu0 %5662
      %v5664 = vsel %vm552, %v5641, %v5653
      %v5665 = vsel %vm552, %v5643, %v5655
      %v5666 = vsel %vm552, %v5645, %v5657
      %v5667 = vsel %vm552, %v5647, %v5659
      %v5668 = vsel %vm552, %v5649, %v5661
      %v5669 = vsel %vm552, %v5651, %v5663
      %v5670 = vsel %vm552, %v5653, %v5641
      %v5671 = vsel %vm552, %v5655, %v5643
      %v5672 = vsel %vm552, %v5657, %v5645
      %v5673 = vsel %vm552, %v5659, %v5647
      %v5674 = vsel %vm552, %v5661, %v5649
      %v5675 = vsel %vm552, %v5663, %v5651
      %v5676 = vadd.f32 %v5549, %v5670
      %v5677 = vadd.f32 %v5550, %v5664
      %v5678 = vadd.f32 %v5551, %v5671
      %v5679 = vadd.f32 %v5552, %v5665
      %v5680 = vadd.f32 %v5553, %v5672
      %v5681 = vadd.f32 %v5554, %v5666
      %v5682 = vadd.f32 %v5555, %v5673
      %v5683 = vadd.f32 %v5556, %v5667
      %v5684 = vadd.f32 %v5557, %v5674
      %v5685 = vadd.f32 %v5558, %v5668
      %v5686 = vadd.f32 %v5559, %v5675
      %v5687 = vadd.f32 %v5560, %v5669
      %s5688 = scalar_lea.vmem %s8, 72
      %v5689 = vld [vmem:[%s5688] sm:$0xf]
      %v5690 = vld [vmem:[%s5688 + $0x4] sm:$0xf]
      %v5691 = vld [vmem:[%s5688 + $0x8] sm:$0xf]
      %v5692 = vld [vmem:[%s5688 + $0xc] sm:$0xf]
      %v5693 = vld [vmem:[%s5688 + $0x10] sm:$0xf]
      %v5694 = vld [vmem:[%s5688 + $0x14] sm:$0xf]
      %v5701 = vunpack.c.l.b16 %v5689
      %v5702 = vunpack.c.l.b16 %v5690
      %v5703 = vunpack.c.l.b16 %v5691
      %v5704 = vunpack.c.l.b16 %v5692
      %v5705 = vunpack.c.l.b16 %v5693
      %v5706 = vunpack.c.l.b16 %v5694
      %v5707 = vpack.c.b16 %v5702, %v5701
      %v5708 = vpack.c.b16 %v5704, %v5703
      %v5709 = vpack.c.b16 %v5706, %v5705
      %v5711 = vsel %vm5328, %v5707, 0
      %v5714 = vsel %vm5328, %v5708, 0
      %v5717 = vsel %vm5328, %v5709, 0
      %5719 = vmatpush.bf16.msra.mxu0 0
      %5720 = vmatpush.bf16.msra.mxu0 0
      %5721 = vmatpush.bf16.msra.mxu0 0
      %5722 = vmatpush.bf16.msra.mxu0 0
      %5723 = vmatpush.bf16.msra.mxu0 %v5305
      %5724 = vmatpush.bf16.msra.mxu0 %v5303
      %5725 = vmatpush.bf16.msra.mxu0 %v5301
      %5726 = vmatpush.bf16.msra.mxu0 %v5299
      %5727 = vmatmul.bf16.gmra.mxu0 %v5711
      %v5728 = vpop.f32.mrf.mxu0
      %v5729 = vadd.f32 0.0, %v5728
      %v5730 = vpop.f32.mrf.mxu0
      %v5731 = vadd.f32 0.0, %v5730
      %5732 = vmatmul.bf16.gmra.mxu0 %v5714
      %v5733 = vpop.f32.mrf.mxu0
      %v5734 = vadd.f32 0.0, %v5733
      %v5735 = vpop.f32.mrf.mxu0
      %v5736 = vadd.f32 0.0, %v5735
      %5737 = vmatmul.bf16.gmra.mxu0 %v5717
      %v5738 = vpop.f32.mrf.mxu0
      %v5739 = vadd.f32 0.0, %v5738
      %v5740 = vpop.f32.mrf.mxu0
      %v5741 = vadd.f32 0.0, %v5740
      %5742 = vdwg.mxu0
      %5743 = vmatpush.bf16.msra.mxu0 0
      %5744 = vmatpush.bf16.msra.mxu0 0
      %5745 = vmatpush.bf16.msra.mxu0 0
      %5746 = vmatpush.bf16.msra.mxu0 0
      %5747 = vmatpush.bf16.msra.mxu0 %v5306
      %5748 = vmatpush.bf16.msra.mxu0 %v5304
      %5749 = vmatpush.bf16.msra.mxu0 %v5302
      %5750 = vmatpush.bf16.msra.mxu0 %v5300
      %5751 = vmatmul.bf16.gmra.mxu0 %v5711
      %v5752 = vpop.f32.mrf.mxu0
      %v5753 = vadd.f32 0.0, %v5752
      %v5754 = vpop.f32.mrf.mxu0
      %v5755 = vadd.f32 0.0, %v5754
      %5756 = vmatmul.bf16.gmra.mxu0 %v5714
      %v5757 = vpop.f32.mrf.mxu0
      %v5758 = vadd.f32 0.0, %v5757
      %v5759 = vpop.f32.mrf.mxu0
      %v5760 = vadd.f32 0.0, %v5759
      %5761 = vmatmul.bf16.gmra.mxu0 %v5717
      %v5762 = vpop.f32.mrf.mxu0
      %v5763 = vadd.f32 0.0, %v5762
      %v5764 = vpop.f32.mrf.mxu0
      %v5765 = vadd.f32 0.0, %v5764
      %5766 = vdwg.mxu0
      %5767 = vrot.lane.b32.xlu0 %v5729, 1
      %v5768 = vpop.permute.xlu0 %5767
      %5769 = vrot.lane.b32.xlu0 %v5731, 1
      %v5770 = vpop.permute.xlu0 %5769
      %5771 = vrot.lane.b32.xlu0 %v5734, 1
      %v5772 = vpop.permute.xlu0 %5771
      %5773 = vrot.lane.b32.xlu0 %v5736, 1
      %v5774 = vpop.permute.xlu0 %5773
      %5775 = vrot.lane.b32.xlu0 %v5739, 1
      %v5776 = vpop.permute.xlu0 %5775
      %5777 = vrot.lane.b32.xlu0 %v5741, 1
      %v5778 = vpop.permute.xlu0 %5777
      %5779 = vrot.lane.b32.xlu0 %v5753, 1
      %v5780 = vpop.permute.xlu0 %5779
      %5781 = vrot.lane.b32.xlu0 %v5755, 1
      %v5782 = vpop.permute.xlu0 %5781
      %5783 = vrot.lane.b32.xlu0 %v5758, 1
      %v5784 = vpop.permute.xlu0 %5783
      %5785 = vrot.lane.b32.xlu0 %v5760, 1
      %v5786 = vpop.permute.xlu0 %5785
      %5787 = vrot.lane.b32.xlu0 %v5763, 1
      %v5788 = vpop.permute.xlu0 %5787
      %5789 = vrot.lane.b32.xlu0 %v5765, 1
      %v5790 = vpop.permute.xlu0 %5789
      %v5791 = vsel %vm588, %v5768, %v5780
      %v5792 = vsel %vm588, %v5770, %v5782
      %v5793 = vsel %vm588, %v5772, %v5784
      %v5794 = vsel %vm588, %v5774, %v5786
      %v5795 = vsel %vm588, %v5776, %v5788
      %v5796 = vsel %vm588, %v5778, %v5790
      %v5797 = vsel %vm588, %v5780, %v5768
      %v5798 = vsel %vm588, %v5782, %v5770
      %v5799 = vsel %vm588, %v5784, %v5772
      %v5800 = vsel %vm588, %v5786, %v5774
      %v5801 = vsel %vm588, %v5788, %v5776
      %v5802 = vsel %vm588, %v5790, %v5778
      %v5803 = vadd.f32 %v5676, %v5797
      %v5804 = vadd.f32 %v5677, %v5791
      %v5805 = vadd.f32 %v5678, %v5798
      %v5806 = vadd.f32 %v5679, %v5792
      %v5807 = vadd.f32 %v5680, %v5799
      %v5808 = vadd.f32 %v5681, %v5793
      %v5809 = vadd.f32 %v5682, %v5800
      %v5810 = vadd.f32 %v5683, %v5794
      %v5811 = vadd.f32 %v5684, %v5801
      %v5812 = vadd.f32 %v5685, %v5795
      %v5813 = vadd.f32 %v5686, %v5802
      %v5814 = vadd.f32 %v5687, %v5796
      %s5815 = scalar_lea.vmem %s8, 96
      %v5816 = vld [vmem:[%s5815] sm:$0xf]
      %v5817 = vld [vmem:[%s5815 + $0x4] sm:$0xf]
      %v5818 = vld [vmem:[%s5815 + $0x8] sm:$0xf]
      %v5819 = vld [vmem:[%s5815 + $0xc] sm:$0xf]
      %v5820 = vld [vmem:[%s5815 + $0x10] sm:$0xf]
      %v5821 = vld [vmem:[%s5815 + $0x14] sm:$0xf]
      %v5828 = vunpack.c.l.b16 %v5816
      %v5829 = vunpack.c.l.b16 %v5817
      %v5830 = vunpack.c.l.b16 %v5818
      %v5831 = vunpack.c.l.b16 %v5819
      %v5832 = vunpack.c.l.b16 %v5820
      %v5833 = vunpack.c.l.b16 %v5821
      %v5834 = vpack.c.b16 %v5829, %v5828
      %v5835 = vpack.c.b16 %v5831, %v5830
      %v5836 = vpack.c.b16 %v5833, %v5832
      %v5838 = vsel %vm5328, %v5834, 0
      %v5841 = vsel %vm5328, %v5835, 0
      %v5844 = vsel %vm5328, %v5836, 0
      %5846 = vmatpush.bf16.msra.mxu0 0
      %5847 = vmatpush.bf16.msra.mxu0 0
      %5848 = vmatpush.bf16.msra.mxu0 0
      %5849 = vmatpush.bf16.msra.mxu0 0
      %5850 = vmatpush.bf16.msra.mxu0 %v5305
      %5851 = vmatpush.bf16.msra.mxu0 %v5303
      %5852 = vmatpush.bf16.msra.mxu0 %v5301
      %5853 = vmatpush.bf16.msra.mxu0 %v5299
      %5854 = vmatmul.bf16.gmra.mxu0 %v5838
      %v5855 = vpop.f32.mrf.mxu0
      %v5856 = vadd.f32 0.0, %v5855
      %v5857 = vpop.f32.mrf.mxu0
      %v5858 = vadd.f32 0.0, %v5857
      %5859 = vmatmul.bf16.gmra.mxu0 %v5841
      %v5860 = vpop.f32.mrf.mxu0
      %v5861 = vadd.f32 0.0, %v5860
      %v5862 = vpop.f32.mrf.mxu0
      %v5863 = vadd.f32 0.0, %v5862
      %5864 = vmatmul.bf16.gmra.mxu0 %v5844
      %v5865 = vpop.f32.mrf.mxu0
      %v5866 = vadd.f32 0.0, %v5865
      %v5867 = vpop.f32.mrf.mxu0
      %v5868 = vadd.f32 0.0, %v5867
      %5869 = vdwg.mxu0
      %5870 = vmatpush.bf16.msra.mxu0 0
      %5871 = vmatpush.bf16.msra.mxu0 0
      %5872 = vmatpush.bf16.msra.mxu0 0
      %5873 = vmatpush.bf16.msra.mxu0 0
      %5874 = vmatpush.bf16.msra.mxu0 %v5306
      %5875 = vmatpush.bf16.msra.mxu0 %v5304
      %5876 = vmatpush.bf16.msra.mxu0 %v5302
      %5877 = vmatpush.bf16.msra.mxu0 %v5300
      %5878 = vmatmul.bf16.gmra.mxu0 %v5838
      %v5879 = vpop.f32.mrf.mxu0
      %v5880 = vadd.f32 0.0, %v5879
      %v5881 = vpop.f32.mrf.mxu0
      %v5882 = vadd.f32 0.0, %v5881
      %5883 = vmatmul.bf16.gmra.mxu0 %v5841
      %v5884 = vpop.f32.mrf.mxu0
      %v5885 = vadd.f32 0.0, %v5884
      %v5886 = vpop.f32.mrf.mxu0
      %v5887 = vadd.f32 0.0, %v5886
      %5888 = vmatmul.bf16.gmra.mxu0 %v5844
      %v5889 = vpop.f32.mrf.mxu0
      %v5890 = vadd.f32 0.0, %v5889
      %v5891 = vpop.f32.mrf.mxu0
      %v5892 = vadd.f32 0.0, %v5891
      %5893 = vdwg.mxu0
      %v5894 = vadd.f32 %v5803, %v5856
      %v5895 = vadd.f32 %v5804, %v5880
      %v5896 = vadd.f32 %v5805, %v5858
      %v5897 = vadd.f32 %v5806, %v5882
      %v5898 = vadd.f32 %v5807, %v5861
      %v5899 = vadd.f32 %v5808, %v5885
      %v5900 = vadd.f32 %v5809, %v5863
      %v5901 = vadd.f32 %v5810, %v5887
      %v5902 = vadd.f32 %v5811, %v5866
      %v5903 = vadd.f32 %v5812, %v5890
      %v5904 = vadd.f32 %v5813, %v5868
      %v5905 = vadd.f32 %v5814, %v5892
      %s5906 = scalar_lea.vmem %s8, 120
      %v5907 = vld [vmem:[%s5906] sm:$0xf]
      %v5908 = vld [vmem:[%s5906 + $0x4] sm:$0xf]
      %v5909 = vld [vmem:[%s5906 + $0x8] sm:$0xf]
      %v5910 = vld [vmem:[%s5906 + $0xc] sm:$0xf]
      %v5911 = vld [vmem:[%s5906 + $0x10] sm:$0xf]
      %v5912 = vld [vmem:[%s5906 + $0x14] sm:$0xf]
      %v5919 = vunpack.c.l.b16 %v5907
      %v5920 = vunpack.c.l.b16 %v5908
      %v5921 = vunpack.c.l.b16 %v5909
      %v5922 = vunpack.c.l.b16 %v5910
      %v5923 = vunpack.c.l.b16 %v5911
      %v5924 = vunpack.c.l.b16 %v5912
      %v5925 = vpack.c.b16 %v5920, %v5919
      %v5926 = vpack.c.b16 %v5922, %v5921
      %v5927 = vpack.c.b16 %v5924, %v5923
      %v5929 = vsel %vm5328, %v5925, 0
      %v5932 = vsel %vm5328, %v5926, 0
      %v5935 = vsel %vm5328, %v5927, 0
      %5937 = vmatpush.bf16.msra.mxu0 0
      %5938 = vmatpush.bf16.msra.mxu0 0
      %5939 = vmatpush.bf16.msra.mxu0 0
      %5940 = vmatpush.bf16.msra.mxu0 0
      %5941 = vmatpush.bf16.msra.mxu0 %v5305
      %5942 = vmatpush.bf16.msra.mxu0 %v5303
      %5943 = vmatpush.bf16.msra.mxu0 %v5301
      %5944 = vmatpush.bf16.msra.mxu0 %v5299
      %5945 = vmatmul.bf16.gmra.mxu0 %v5929
      %v5946 = vpop.f32.mrf.mxu0
      %v5947 = vadd.f32 0.0, %v5946
      %v5948 = vpop.f32.mrf.mxu0
      %v5949 = vadd.f32 0.0, %v5948
      %5950 = vmatmul.bf16.gmra.mxu0 %v5932
      %v5951 = vpop.f32.mrf.mxu0
      %v5952 = vadd.f32 0.0, %v5951
      %v5953 = vpop.f32.mrf.mxu0
      %v5954 = vadd.f32 0.0, %v5953
      %5955 = vmatmul.bf16.gmra.mxu0 %v5935
      %v5956 = vpop.f32.mrf.mxu0
      %v5957 = vadd.f32 0.0, %v5956
      %v5958 = vpop.f32.mrf.mxu0
      %v5959 = vadd.f32 0.0, %v5958
      %5960 = vdwg.mxu0
      %5961 = vmatpush.bf16.msra.mxu0 0
      %5962 = vmatpush.bf16.msra.mxu0 0
      %5963 = vmatpush.bf16.msra.mxu0 0
      %5964 = vmatpush.bf16.msra.mxu0 0
      %5965 = vmatpush.bf16.msra.mxu0 %v5306
      %5966 = vmatpush.bf16.msra.mxu0 %v5304
      %5967 = vmatpush.bf16.msra.mxu0 %v5302
      %5968 = vmatpush.bf16.msra.mxu0 %v5300
      %5969 = vmatmul.bf16.gmra.mxu0 %v5929
      %v5970 = vpop.f32.mrf.mxu0
      %v5971 = vadd.f32 0.0, %v5970
      %v5972 = vpop.f32.mrf.mxu0
      %v5973 = vadd.f32 0.0, %v5972
      %5974 = vmatmul.bf16.gmra.mxu0 %v5932
      %v5975 = vpop.f32.mrf.mxu0
      %v5976 = vadd.f32 0.0, %v5975
      %v5977 = vpop.f32.mrf.mxu0
      %v5978 = vadd.f32 0.0, %v5977
      %5979 = vmatmul.bf16.gmra.mxu0 %v5935
      %v5980 = vpop.f32.mrf.mxu0
      %v5981 = vadd.f32 0.0, %v5980
      %v5982 = vpop.f32.mrf.mxu0
      %v5983 = vadd.f32 0.0, %v5982
      %5984 = vdwg.mxu0
      %5985 = vrot.lane.b32.xlu0 %v5947, 127
      %v5986 = vpop.permute.xlu0 %5985
      %5987 = vrot.lane.b32.xlu0 %v5949, 127
      %v5988 = vpop.permute.xlu0 %5987
      %5989 = vrot.lane.b32.xlu0 %v5952, 127
      %v5990 = vpop.permute.xlu0 %5989
      %5991 = vrot.lane.b32.xlu0 %v5954, 127
      %v5992 = vpop.permute.xlu0 %5991
      %5993 = vrot.lane.b32.xlu0 %v5957, 127
      %v5994 = vpop.permute.xlu0 %5993
      %5995 = vrot.lane.b32.xlu0 %v5959, 127
      %v5996 = vpop.permute.xlu0 %5995
      %5997 = vrot.lane.b32.xlu0 %v5971, 127
      %v5998 = vpop.permute.xlu0 %5997
      %5999 = vrot.lane.b32.xlu0 %v5973, 127
      %v6000 = vpop.permute.xlu0 %5999
      %6001 = vrot.lane.b32.xlu0 %v5976, 127
      %v6002 = vpop.permute.xlu0 %6001
      %6003 = vrot.lane.b32.xlu0 %v5978, 127
      %v6004 = vpop.permute.xlu0 %6003
      %6005 = vrot.lane.b32.xlu0 %v5981, 127
      %v6006 = vpop.permute.xlu0 %6005
      %6007 = vrot.lane.b32.xlu0 %v5983, 127
      %v6008 = vpop.permute.xlu0 %6007
      %v6009 = vsel %vm600, %v5986, %v5998
      %v6010 = vsel %vm600, %v5988, %v6000
      %v6011 = vsel %vm600, %v5990, %v6002
      %v6012 = vsel %vm600, %v5992, %v6004
      %v6013 = vsel %vm600, %v5994, %v6006
      %v6014 = vsel %vm600, %v5996, %v6008
      %v6015 = vsel %vm600, %v5998, %v5986
      %v6016 = vsel %vm600, %v6000, %v5988
      %v6017 = vsel %vm600, %v6002, %v5990
      %v6018 = vsel %vm600, %v6004, %v5992
      %v6019 = vsel %vm600, %v6006, %v5994
      %v6020 = vsel %vm600, %v6008, %v5996
      %v6021 = vadd.f32 %v5894, %v6009
      %v6022 = vadd.f32 %v5895, %v6015
      %v6023 = vadd.f32 %v5896, %v6010
      %v6024 = vadd.f32 %v5897, %v6016
      %v6025 = vadd.f32 %v5898, %v6011
      %v6026 = vadd.f32 %v5899, %v6017
      %v6027 = vadd.f32 %v5900, %v6012
      %v6028 = vadd.f32 %v5901, %v6018
      %v6029 = vadd.f32 %v5902, %v6013
      %v6030 = vadd.f32 %v5903, %v6019
      %v6031 = vadd.f32 %v5904, %v6014
      %v6032 = vadd.f32 %v5905, %v6020
      %s6033 = scalar_lea.vmem %s8, 144
      %v6034 = vld [vmem:[%s6033] sm:$0xf]
      %v6035 = vld [vmem:[%s6033 + $0x4] sm:$0xf]
      %v6036 = vld [vmem:[%s6033 + $0x8] sm:$0xf]
      %v6037 = vld [vmem:[%s6033 + $0xc] sm:$0xf]
      %v6038 = vld [vmem:[%s6033 + $0x10] sm:$0xf]
      %v6039 = vld [vmem:[%s6033 + $0x14] sm:$0xf]
      %v6046 = vunpack.c.l.b16 %v6034
      %v6047 = vunpack.c.l.b16 %v6035
      %v6048 = vunpack.c.l.b16 %v6036
      %v6049 = vunpack.c.l.b16 %v6037
      %v6050 = vunpack.c.l.b16 %v6038
      %v6051 = vunpack.c.l.b16 %v6039
      %v6052 = vpack.c.b16 %v6047, %v6046
      %v6053 = vpack.c.b16 %v6049, %v6048
      %v6054 = vpack.c.b16 %v6051, %v6050
      %v6056 = vsel %vm5328, %v6052, 0
      %v6059 = vsel %vm5328, %v6053, 0
      %v6062 = vsel %vm5328, %v6054, 0
      %6064 = vmatpush.bf16.msra.mxu0 0
      %6065 = vmatpush.bf16.msra.mxu0 0
      %6066 = vmatpush.bf16.msra.mxu0 0
      %6067 = vmatpush.bf16.msra.mxu0 0
      %6068 = vmatpush.bf16.msra.mxu0 %v5305
      %6069 = vmatpush.bf16.msra.mxu0 %v5303
      %6070 = vmatpush.bf16.msra.mxu0 %v5301
      %6071 = vmatpush.bf16.msra.mxu0 %v5299
      %6072 = vmatmul.bf16.gmra.mxu0 %v6056
      %v6073 = vpop.f32.mrf.mxu0
      %v6074 = vadd.f32 0.0, %v6073
      %v6075 = vpop.f32.mrf.mxu0
      %v6076 = vadd.f32 0.0, %v6075
      %6077 = vmatmul.bf16.gmra.mxu0 %v6059
      %v6078 = vpop.f32.mrf.mxu0
      %v6079 = vadd.f32 0.0, %v6078
      %v6080 = vpop.f32.mrf.mxu0
      %v6081 = vadd.f32 0.0, %v6080
      %6082 = vmatmul.bf16.gmra.mxu0 %v6062
      %v6083 = vpop.f32.mrf.mxu0
      %v6084 = vadd.f32 0.0, %v6083
      %v6085 = vpop.f32.mrf.mxu0
      %v6086 = vadd.f32 0.0, %v6085
      %6087 = vdwg.mxu0
      %6088 = vmatpush.bf16.msra.mxu0 0
      %6089 = vmatpush.bf16.msra.mxu0 0
      %6090 = vmatpush.bf16.msra.mxu0 0
      %6091 = vmatpush.bf16.msra.mxu0 0
      %6092 = vmatpush.bf16.msra.mxu0 %v5306
      %6093 = vmatpush.bf16.msra.mxu0 %v5304
      %6094 = vmatpush.bf16.msra.mxu0 %v5302
      %6095 = vmatpush.bf16.msra.mxu0 %v5300
      %6096 = vmatmul.bf16.gmra.mxu0 %v6056
      %v6097 = vpop.f32.mrf.mxu0
      %v6098 = vadd.f32 0.0, %v6097
      %v6099 = vpop.f32.mrf.mxu0
      %v6100 = vadd.f32 0.0, %v6099
      %6101 = vmatmul.bf16.gmra.mxu0 %v6059
      %v6102 = vpop.f32.mrf.mxu0
      %v6103 = vadd.f32 0.0, %v6102
      %v6104 = vpop.f32.mrf.mxu0
      %v6105 = vadd.f32 0.0, %v6104
      %6106 = vmatmul.bf16.gmra.mxu0 %v6062
      %v6107 = vpop.f32.mrf.mxu0
      %v6108 = vadd.f32 0.0, %v6107
      %v6109 = vpop.f32.mrf.mxu0
      %v6110 = vadd.f32 0.0, %v6109
      %6111 = vdwg.mxu0
      %6112 = vrot.lane.b32.xlu0 %v6074, 117
      %v6113 = vpop.permute.xlu0 %6112
      %6114 = vrot.lane.b32.xlu0 %v6076, 117
      %v6115 = vpop.permute.xlu0 %6114
      %6116 = vrot.lane.b32.xlu0 %v6079, 117
      %v6117 = vpop.permute.xlu0 %6116
      %6118 = vrot.lane.b32.xlu0 %v6081, 117
      %v6119 = vpop.permute.xlu0 %6118
      %6120 = vrot.lane.b32.xlu0 %v6084, 117
      %v6121 = vpop.permute.xlu0 %6120
      %6122 = vrot.lane.b32.xlu0 %v6086, 117
      %v6123 = vpop.permute.xlu0 %6122
      %6124 = vrot.lane.b32.xlu0 %v6098, 117
      %v6125 = vpop.permute.xlu0 %6124
      %6126 = vrot.lane.b32.xlu0 %v6100, 117
      %v6127 = vpop.permute.xlu0 %6126
      %6128 = vrot.lane.b32.xlu0 %v6103, 117
      %v6129 = vpop.permute.xlu0 %6128
      %6130 = vrot.lane.b32.xlu0 %v6105, 117
      %v6131 = vpop.permute.xlu0 %6130
      %6132 = vrot.lane.b32.xlu0 %v6108, 117
      %v6133 = vpop.permute.xlu0 %6132
      %6134 = vrot.lane.b32.xlu0 %v6110, 117
      %v6135 = vpop.permute.xlu0 %6134
      %v6136 = vsel %vm636, %v6113, %v6125
      %v6137 = vsel %vm636, %v6115, %v6127
      %v6138 = vsel %vm636, %v6117, %v6129
      %v6139 = vsel %vm636, %v6119, %v6131
      %v6140 = vsel %vm636, %v6121, %v6133
      %v6141 = vsel %vm636, %v6123, %v6135
      %v6142 = vsel %vm636, %v6125, %v6113
      %v6143 = vsel %vm636, %v6127, %v6115
      %v6144 = vsel %vm636, %v6129, %v6117
      %v6145 = vsel %vm636, %v6131, %v6119
      %v6146 = vsel %vm636, %v6133, %v6121
      %v6147 = vsel %vm636, %v6135, %v6123
      %v6148 = vadd.f32 %v6021, %v6136
      %v6149 = vadd.f32 %v6022, %v6142
      %v6150 = vadd.f32 %v6023, %v6137
      %v6151 = vadd.f32 %v6024, %v6143
      %v6152 = vadd.f32 %v6025, %v6138
      %v6153 = vadd.f32 %v6026, %v6144
      %v6154 = vadd.f32 %v6027, %v6139
      %v6155 = vadd.f32 %v6028, %v6145
      %v6156 = vadd.f32 %v6029, %v6140
      %v6157 = vadd.f32 %v6030, %v6146
      %v6158 = vadd.f32 %v6031, %v6141
      %v6159 = vadd.f32 %v6032, %v6147
      %s6160 = scalar_lea.vmem %s8, 168
      %v6161 = vld [vmem:[%s6160] sm:$0xf]
      %v6162 = vld [vmem:[%s6160 + $0x4] sm:$0xf]
      %v6163 = vld [vmem:[%s6160 + $0x8] sm:$0xf]
      %v6164 = vld [vmem:[%s6160 + $0xc] sm:$0xf]
      %v6165 = vld [vmem:[%s6160 + $0x10] sm:$0xf]
      %v6166 = vld [vmem:[%s6160 + $0x14] sm:$0xf]
      %v6173 = vunpack.c.l.b16 %v6161
      %v6174 = vunpack.c.l.b16 %v6162
      %v6175 = vunpack.c.l.b16 %v6163
      %v6176 = vunpack.c.l.b16 %v6164
      %v6177 = vunpack.c.l.b16 %v6165
      %v6178 = vunpack.c.l.b16 %v6166
      %v6179 = vpack.c.b16 %v6174, %v6173
      %v6180 = vpack.c.b16 %v6176, %v6175
      %v6181 = vpack.c.b16 %v6178, %v6177
      %v6183 = vsel %vm5328, %v6179, 0
      %v6186 = vsel %vm5328, %v6180, 0
      %v6189 = vsel %vm5328, %v6181, 0
      %6191 = vmatpush.bf16.msra.mxu0 0
      %6192 = vmatpush.bf16.msra.mxu0 0
      %6193 = vmatpush.bf16.msra.mxu0 0
      %6194 = vmatpush.bf16.msra.mxu0 0
      %6195 = vmatpush.bf16.msra.mxu0 %v5305
      %6196 = vmatpush.bf16.msra.mxu0 %v5303
      %6197 = vmatpush.bf16.msra.mxu0 %v5301
      %6198 = vmatpush.bf16.msra.mxu0 %v5299
      %6199 = vmatmul.bf16.gmra.mxu0 %v6183
      %v6200 = vpop.f32.mrf.mxu0
      %v6201 = vadd.f32 0.0, %v6200
      %v6202 = vpop.f32.mrf.mxu0
      %v6203 = vadd.f32 0.0, %v6202
      %6204 = vmatmul.bf16.gmra.mxu0 %v6186
      %v6205 = vpop.f32.mrf.mxu0
      %v6206 = vadd.f32 0.0, %v6205
      %v6207 = vpop.f32.mrf.mxu0
      %v6208 = vadd.f32 0.0, %v6207
      %6209 = vmatmul.bf16.gmra.mxu0 %v6189
      %v6210 = vpop.f32.mrf.mxu0
      %v6211 = vadd.f32 0.0, %v6210
      %v6212 = vpop.f32.mrf.mxu0
      %v6213 = vadd.f32 0.0, %v6212
      %6214 = vdwg.mxu0
      %6215 = vmatpush.bf16.msra.mxu0 0
      %6216 = vmatpush.bf16.msra.mxu0 0
      %6217 = vmatpush.bf16.msra.mxu0 0
      %6218 = vmatpush.bf16.msra.mxu0 0
      %6219 = vmatpush.bf16.msra.mxu0 %v5306
      %6220 = vmatpush.bf16.msra.mxu0 %v5304
      %6221 = vmatpush.bf16.msra.mxu0 %v5302
      %6222 = vmatpush.bf16.msra.mxu0 %v5300
      %6223 = vmatmul.bf16.gmra.mxu0 %v6183
      %v6224 = vpop.f32.mrf.mxu0
      %v6225 = vadd.f32 0.0, %v6224
      %v6226 = vpop.f32.mrf.mxu0
      %v6227 = vadd.f32 0.0, %v6226
      %6228 = vmatmul.bf16.gmra.mxu0 %v6186
      %v6229 = vpop.f32.mrf.mxu0
      %v6230 = vadd.f32 0.0, %v6229
      %v6231 = vpop.f32.mrf.mxu0
      %v6232 = vadd.f32 0.0, %v6231
      %6233 = vmatmul.bf16.gmra.mxu0 %v6189
      %v6234 = vpop.f32.mrf.mxu0
      %v6235 = vadd.f32 0.0, %v6234
      %v6236 = vpop.f32.mrf.mxu0
      %v6237 = vadd.f32 0.0, %v6236
      %6238 = vdwg.mxu0
      %6239 = vrot.lane.b32.xlu0 %v6201, 116
      %v6240 = vpop.permute.xlu0 %6239
      %6241 = vrot.lane.b32.xlu0 %v6203, 116
      %v6242 = vpop.permute.xlu0 %6241
      %6243 = vrot.lane.b32.xlu0 %v6206, 116
      %v6244 = vpop.permute.xlu0 %6243
      %6245 = vrot.lane.b32.xlu0 %v6208, 116
      %v6246 = vpop.permute.xlu0 %6245
      %6247 = vrot.lane.b32.xlu0 %v6211, 116
      %v6248 = vpop.permute.xlu0 %6247
      %6249 = vrot.lane.b32.xlu0 %v6213, 116
      %v6250 = vpop.permute.xlu0 %6249
      %6251 = vrot.lane.b32.xlu0 %v6225, 116
      %v6252 = vpop.permute.xlu0 %6251
      %6253 = vrot.lane.b32.xlu0 %v6227, 116
      %v6254 = vpop.permute.xlu0 %6253
      %6255 = vrot.lane.b32.xlu0 %v6230, 116
      %v6256 = vpop.permute.xlu0 %6255
      %6257 = vrot.lane.b32.xlu0 %v6232, 116
      %v6258 = vpop.permute.xlu0 %6257
      %6259 = vrot.lane.b32.xlu0 %v6235, 116
      %v6260 = vpop.permute.xlu0 %6259
      %6261 = vrot.lane.b32.xlu0 %v6237, 116
      %v6262 = vpop.permute.xlu0 %6261
      %v6263 = vsel %vm648, %v6240, %v6252
      %v6264 = vsel %vm648, %v6242, %v6254
      %v6265 = vsel %vm648, %v6244, %v6256
      %v6266 = vsel %vm648, %v6246, %v6258
      %v6267 = vsel %vm648, %v6248, %v6260
      %v6268 = vsel %vm648, %v6250, %v6262
      %v6269 = vsel %vm648, %v6252, %v6240
      %v6270 = vsel %vm648, %v6254, %v6242
      %v6271 = vsel %vm648, %v6256, %v6244
      %v6272 = vsel %vm648, %v6258, %v6246
      %v6273 = vsel %vm648, %v6260, %v6248
      %v6274 = vsel %vm648, %v6262, %v6250
      %v6275 = vadd.f32 %v6148, %v6263
      %v6276 = vadd.f32 %v6149, %v6269
      %v6277 = vadd.f32 %v6150, %v6264
      %v6278 = vadd.f32 %v6151, %v6270
      %v6279 = vadd.f32 %v6152, %v6265
      %v6280 = vadd.f32 %v6153, %v6271
      %v6281 = vadd.f32 %v6154, %v6266
      %v6282 = vadd.f32 %v6155, %v6272
      %v6283 = vadd.f32 %v6156, %v6267
      %v6284 = vadd.f32 %v6157, %v6273
      %v6285 = vadd.f32 %v6158, %v6268
      %v6286 = vadd.f32 %v6159, %v6274
      %s6287 = scalar_lea.vmem %s8, 192
      %v6288 = vld [vmem:[%s6287] sm:$0xf]
      %v6289 = vld [vmem:[%s6287 + $0x4] sm:$0xf]
      %v6290 = vld [vmem:[%s6287 + $0x8] sm:$0xf]
      %v6291 = vld [vmem:[%s6287 + $0xc] sm:$0xf]
      %v6292 = vld [vmem:[%s6287 + $0x10] sm:$0xf]
      %v6293 = vld [vmem:[%s6287 + $0x14] sm:$0xf]
      %v6300 = vunpack.c.l.b16 %v6288
      %v6301 = vunpack.c.l.b16 %v6289
      %v6302 = vunpack.c.l.b16 %v6290
      %v6303 = vunpack.c.l.b16 %v6291
      %v6304 = vunpack.c.l.b16 %v6292
      %v6305 = vunpack.c.l.b16 %v6293
      %v6306 = vpack.c.b16 %v6301, %v6300
      %v6307 = vpack.c.b16 %v6303, %v6302
      %v6308 = vpack.c.b16 %v6305, %v6304
      %v6310 = vsel %vm5328, %v6306, 0
      %v6313 = vsel %vm5328, %v6307, 0
      %v6316 = vsel %vm5328, %v6308, 0
      %6318 = vmatpush.bf16.msra.mxu0 0
      %6319 = vmatpush.bf16.msra.mxu0 0
      %6320 = vmatpush.bf16.msra.mxu0 0
      %6321 = vmatpush.bf16.msra.mxu0 0
      %6322 = vmatpush.bf16.msra.mxu0 %v5305
      %6323 = vmatpush.bf16.msra.mxu0 %v5303
      %6324 = vmatpush.bf16.msra.mxu0 %v5301
      %6325 = vmatpush.bf16.msra.mxu0 %v5299
      %6326 = vmatmul.bf16.gmra.mxu0 %v6310
      %v6327 = vpop.f32.mrf.mxu0
      %v6328 = vadd.f32 0.0, %v6327
      %v6329 = vpop.f32.mrf.mxu0
      %v6330 = vadd.f32 0.0, %v6329
      %6331 = vmatmul.bf16.gmra.mxu0 %v6313
      %v6332 = vpop.f32.mrf.mxu0
      %v6333 = vadd.f32 0.0, %v6332
      %v6334 = vpop.f32.mrf.mxu0
      %v6335 = vadd.f32 0.0, %v6334
      %6336 = vmatmul.bf16.gmra.mxu0 %v6316
      %v6337 = vpop.f32.mrf.mxu0
      %v6338 = vadd.f32 0.0, %v6337
      %v6339 = vpop.f32.mrf.mxu0
      %v6340 = vadd.f32 0.0, %v6339
      %6341 = vdwg.mxu0
      %6342 = vmatpush.bf16.msra.mxu0 0
      %6343 = vmatpush.bf16.msra.mxu0 0
      %6344 = vmatpush.bf16.msra.mxu0 0
      %6345 = vmatpush.bf16.msra.mxu0 0
      %6346 = vmatpush.bf16.msra.mxu0 %v5306
      %6347 = vmatpush.bf16.msra.mxu0 %v5304
      %6348 = vmatpush.bf16.msra.mxu0 %v5302
      %6349 = vmatpush.bf16.msra.mxu0 %v5300
      %6350 = vmatmul.bf16.gmra.mxu0 %v6310
      %v6351 = vpop.f32.mrf.mxu0
      %v6352 = vadd.f32 0.0, %v6351
      %v6353 = vpop.f32.mrf.mxu0
      %v6354 = vadd.f32 0.0, %v6353
      %6355 = vmatmul.bf16.gmra.mxu0 %v6313
      %v6356 = vpop.f32.mrf.mxu0
      %v6357 = vadd.f32 0.0, %v6356
      %v6358 = vpop.f32.mrf.mxu0
      %v6359 = vadd.f32 0.0, %v6358
      %6360 = vmatmul.bf16.gmra.mxu0 %v6316
      %v6361 = vpop.f32.mrf.mxu0
      %v6362 = vadd.f32 0.0, %v6361
      %v6363 = vpop.f32.mrf.mxu0
      %v6364 = vadd.f32 0.0, %v6363
      %6365 = vdwg.mxu0
      %6366 = vrot.lane.b32.xlu0 %v6328, 115
      %v6367 = vpop.permute.xlu0 %6366
      %6368 = vrot.lane.b32.xlu0 %v6330, 115
      %v6369 = vpop.permute.xlu0 %6368
      %6370 = vrot.lane.b32.xlu0 %v6333, 115
      %v6371 = vpop.permute.xlu0 %6370
      %6372 = vrot.lane.b32.xlu0 %v6335, 115
      %v6373 = vpop.permute.xlu0 %6372
      %6374 = vrot.lane.b32.xlu0 %v6338, 115
      %v6375 = vpop.permute.xlu0 %6374
      %6376 = vrot.lane.b32.xlu0 %v6340, 115
      %v6377 = vpop.permute.xlu0 %6376
      %6378 = vrot.lane.b32.xlu0 %v6352, 115
      %v6379 = vpop.permute.xlu0 %6378
      %6380 = vrot.lane.b32.xlu0 %v6354, 115
      %v6381 = vpop.permute.xlu0 %6380
      %6382 = vrot.lane.b32.xlu0 %v6357, 115
      %v6383 = vpop.permute.xlu0 %6382
      %6384 = vrot.lane.b32.xlu0 %v6359, 115
      %v6385 = vpop.permute.xlu0 %6384
      %6386 = vrot.lane.b32.xlu0 %v6362, 115
      %v6387 = vpop.permute.xlu0 %6386
      %6388 = vrot.lane.b32.xlu0 %v6364, 115
      %v6389 = vpop.permute.xlu0 %6388
      %v6390 = vsel %vm660, %v6367, %v6379
      %v6391 = vsel %vm660, %v6369, %v6381
      %v6392 = vsel %vm660, %v6371, %v6383
      %v6393 = vsel %vm660, %v6373, %v6385
      %v6394 = vsel %vm660, %v6375, %v6387
      %v6395 = vsel %vm660, %v6377, %v6389
      %v6396 = vsel %vm660, %v6379, %v6367
      %v6397 = vsel %vm660, %v6381, %v6369
      %v6398 = vsel %vm660, %v6383, %v6371
      %v6399 = vsel %vm660, %v6385, %v6373
      %v6400 = vsel %vm660, %v6387, %v6375
      %v6401 = vsel %vm660, %v6389, %v6377
      %v6402 = vadd.f32 %v6275, %v6390
      %v6403 = vadd.f32 %v6276, %v6396
      %v6404 = vadd.f32 %v6277, %v6391
      %v6405 = vadd.f32 %v6278, %v6397
      %v6406 = vadd.f32 %v6279, %v6392
      %v6407 = vadd.f32 %v6280, %v6398
      %v6408 = vadd.f32 %v6281, %v6393
      %v6409 = vadd.f32 %v6282, %v6399
      %v6410 = vadd.f32 %v6283, %v6394
      %v6411 = vadd.f32 %v6284, %v6400
      %v6412 = vadd.f32 %v6285, %v6395
      %v6413 = vadd.f32 %v6286, %v6401
      %v6414 = vld [vmem:[%s9] sm:$0xff]
      %v6415 = vld [vmem:[%s9 + $0x8] sm:$0xff]
      %v6416 = vld [vmem:[%s9 + $0x10] sm:$0xff]
      %v6417 = vld [vmem:[%s9 + $0x18] sm:$0xff]
      %v6418 = vld [vmem:[%s9 + $0x20] sm:$0xff]
      %v6419 = vld [vmem:[%s9 + $0x28] sm:$0xff]
      %6421 = vset.pattern.permute.xlu0 0
      %6422 = vperm.xlu0 %6421, %v6414
      %v6423 = vpop.permute.xlu0 %6422
      %6426 = vset.pattern.permute.xlu0 0
      %6427 = vperm.xlu0 %6426, %v6415
      %v6428 = vpop.permute.xlu0 %6427
      %6431 = vset.pattern.permute.xlu0 0
      %6432 = vperm.xlu0 %6431, %v6416
      %v6433 = vpop.permute.xlu0 %6432
      %6436 = vset.pattern.permute.xlu0 0
      %6437 = vperm.xlu0 %6436, %v6417
      %v6438 = vpop.permute.xlu0 %6437
      %6441 = vset.pattern.permute.xlu0 0
      %6442 = vperm.xlu0 %6441, %v6418
      %v6443 = vpop.permute.xlu0 %6442
      %6446 = vset.pattern.permute.xlu0 0
      %6447 = vperm.xlu0 %6446, %v6419
      %v6448 = vpop.permute.xlu0 %6447
      %v6450 = vadd.f32 %v6402, %v6423
      %v6451 = vadd.f32 %v6403, %v6423
      %v6452 = vadd.f32 %v6404, %v6428
      %v6453 = vadd.f32 %v6405, %v6428
      %v6454 = vadd.f32 %v6406, %v6433
      %v6455 = vadd.f32 %v6407, %v6433
      %v6456 = vadd.f32 %v6408, %v6438
      %v6457 = vadd.f32 %v6409, %v6438
      %v6458 = vadd.f32 %v6410, %v6443
      %v6459 = vadd.f32 %v6411, %v6443
      %v6460 = vadd.f32 %v6412, %v6448
      %v6461 = vadd.f32 %v6413, %v6448
      %v6462 = vadd.f32 %v6450, %v3574
      %v6463 = vadd.f32 %v6451, %v3575
      %v6464 = vadd.f32 %v6452, %v3576
      %v6465 = vadd.f32 %v6453, %v3577
      %v6466 = vadd.f32 %v6454, %v3578
      %v6467 = vadd.f32 %v6455, %v3579
      %v6468 = vadd.f32 %v6456, %v3580
      %v6469 = vadd.f32 %v6457, %v3581
      %v6470 = vadd.f32 %v6458, %v3582
      %v6471 = vadd.f32 %v6459, %v3583
      %v6472 = vadd.f32 %v6460, %v3584
      %v6473 = vadd.f32 %v6461, %v3585
      %v6474 = vmul.f32 %v6462, 127.5
      %v6475 = vmul.f32 %v6463, 127.5
      %v6476 = vmul.f32 %v6464, 127.5
      %v6477 = vmul.f32 %v6465, 127.5
      %v6478 = vmul.f32 %v6466, 127.5
      %v6479 = vmul.f32 %v6467, 127.5
      %v6480 = vmul.f32 %v6468, 127.5
      %v6481 = vmul.f32 %v6469, 127.5
      %v6482 = vmul.f32 %v6470, 127.5
      %v6483 = vmul.f32 %v6471, 127.5
      %v6484 = vmul.f32 %v6472, 127.5
      %v6485 = vmul.f32 %v6473, 127.5
      %v6486 = vld [vmem:[%s12] sm:$0xff]
      %v6487 = vld [vmem:[%s12 + $0x8] sm:$0xff]
      %v6488 = vld [vmem:[%s12 + $0x10] sm:$0xff]
      %v6489 = vld [vmem:[%s12 + $0x18] sm:$0xff]
      %v6490 = vld [vmem:[%s12 + $0x20] sm:$0xff]
      %v6491 = vld [vmem:[%s12 + $0x28] sm:$0xff]
      %6493 = vset.pattern.permute.xlu0 0
      %6494 = vperm.xlu0 %6493, %v6486
      %v6495 = vpop.permute.xlu0 %6494
      %6498 = vset.pattern.permute.xlu0 0
      %6499 = vperm.xlu0 %6498, %v6487
      %v6500 = vpop.permute.xlu0 %6499
      %6503 = vset.pattern.permute.xlu0 0
      %6504 = vperm.xlu0 %6503, %v6488
      %v6505 = vpop.permute.xlu0 %6504
      %6508 = vset.pattern.permute.xlu0 0
      %6509 = vperm.xlu0 %6508, %v6489
      %v6510 = vpop.permute.xlu0 %6509
      %6513 = vset.pattern.permute.xlu0 0
      %6514 = vperm.xlu0 %6513, %v6490
      %v6515 = vpop.permute.xlu0 %6514
      %6518 = vset.pattern.permute.xlu0 0
      %6519 = vperm.xlu0 %6518, %v6491
      %v6520 = vpop.permute.xlu0 %6519
      %v6522 = vadd.f32 %v6474, %v6495
      %v6523 = vadd.f32 %v6475, %v6495
      %v6524 = vadd.f32 %v6476, %v6500
      %v6525 = vadd.f32 %v6477, %v6500
      %v6526 = vadd.f32 %v6478, %v6505
      %v6527 = vadd.f32 %v6479, %v6505
      %v6528 = vadd.f32 %v6480, %v6510
      %v6529 = vadd.f32 %v6481, %v6510
      %v6530 = vadd.f32 %v6482, %v6515
      %v6531 = vadd.f32 %v6483, %v6515
      %v6532 = vadd.f32 %v6484, %v6520
      %v6533 = vadd.f32 %v6485, %v6520
      %6534 = vst [vmem:[%s440] sm:$0xff] %v6522
      %6535 = vst [vmem:[%s440 + $0x8] sm:$0xff] %v6523
      %6536 = vst [vmem:[%s440 + $0x10] sm:$0xff] %v6524
      %6537 = vst [vmem:[%s440 + $0x18] sm:$0xff] %v6525
      %6538 = vst [vmem:[%s440 + $0x20] sm:$0xff] %v6526
      %6539 = vst [vmem:[%s440 + $0x28] sm:$0xff] %v6527
      %6540 = vst [vmem:[%s440 + $0x30] sm:$0xff] %v6528
      %6541 = vst [vmem:[%s440 + $0x38] sm:$0xff] %v6529
      %6542 = vst [vmem:[%s440 + $0x40] sm:$0xff] %v6530
      %6543 = vst [vmem:[%s440 + $0x48] sm:$0xff] %v6531
      %6544 = vst [vmem:[%s440 + $0x50] sm:$0xff] %v6532
      %6545 = vst [vmem:[%s440 + $0x58] sm:$0xff] %v6533
      %p6546 = scmp.lt.s32.totalorder %s24, 1
      %s6547 = scalar_select %p6546, %s24, 1
      %s6548 = smul.addr %s6547, 12
      %s6549 = smul.addr %s6548, 8
      %s6550 = scalar_lea.vmem %s13, %s6549
      // Predicated region
      $region80: #{model_forward.1} parent=71 // pred_check
        %p6551 = pneg %p320
      $region81: #{model_forward.1} parent=71 // pred_check_branch
        %6553 = sbr.rel (%p6551) target = $region83
      $region82: #{model_forward.1} parent=71 // pred_region
        _
      $region83: #{model_forward.1} parent=71 // pred_fallthru
        _
    $region72: #{model_forward.1} parent=5 // pred_fallthru
      _
    %p6554 = scmp.le.s32.totalorder 2, %s19
    // Predicated region
    $region84: #{model_forward.1} parent=5 // pred_check
      %p6555 = pneg %p6554
    $region85: #{model_forward.1} parent=5 // pred_check_branch
      %6557 = sbr.rel (%p6555) target = $region87
    $region86: #{model_forward.1} parent=5 // pred_region
      %s6558 = ssub.s32 %s19, 2
      // Predicated region
      $region88: #{model_forward.1} parent=86 // pred_check
        %p6559 = pneg %p326
      $region89: #{model_forward.1} parent=86 // pred_check_branch
        %6561 = sbr.rel (%p6559) target = $region91
      $region90: #{model_forward.1} parent=86 // pred_region
        %p6562 = scmp.lt.s32.totalorder %s25, 1
        %s6563 = scalar_select %p6562, %s25, 1
        %s6564 = smul.addr %s6563, 12
        %s6565 = smul.addr %s6564, 8
        %s6566 = scalar_lea.vmem %s13, %s6565
      $region91: #{model_forward.1} parent=86 // pred_fallthru
        _
    $region87: #{model_forward.1} parent=5 // pred_fallthru
      _
  $region6: #{model_forward.1} parent=0 // loop_footer
    %s23 = sadd.s32 1, %s19
  $region7: #{model_forward.1} parent=0 // loop_footer_branch
    %18 = sbr.rel target = $region3
  $region8: #{model_forward.1} parent=0 // loop_exit
    _

</llo_original>
